<compile_context>
chip_gen: v5e
topology: v5e:2x2
jax: 0.10.0
libtpu: 0.0.40
codegen_flags: <defaults>
</compile_context>

<pallas_src>
import numpy as np
import jax
import jax.numpy as jnp
from jax.experimental import pallas as pl
from jax.experimental.pallas import tpu as pltpu

HIDDEN = 128
N_FREQ = 20
EMB_DIM = 6 * N_FREQ          # 120
PE_PAD = 128                  # encoding width padded to one lane tile
OUT_PAD = 8                   # 4 outputs padded to a full sublane group
SUB = 128                     # columns (rows of the model) per in-kernel sub-block


def _make_encoding_mats():
    """A_t: (PE_PAD, 3), phase_t: (PE_PAD, 1) with sin(A_t @ o^T + phase) == posenc(o)^T."""
    exps = np.linspace(0.0, 8.0, N_FREQ)
    freqs = (2.0 ** exps).astype(np.float32)
    A_t = np.zeros((PE_PAD, 3), dtype=np.float32)
    phase_t = np.zeros((PE_PAD, 1), dtype=np.float32)
    for i, f in enumerate(freqs):
        for j in range(3):
            A_t[6 * i + j, j] = f                   # sin rows
            A_t[6 * i + 3 + j, j] = f               # cos rows  (cos x = sin(x + pi/2))
            phase_t[6 * i + 3 + j, 0] = np.pi / 2.0
    return jnp.asarray(A_t), jnp.asarray(phase_t), freqs


def _init_params(key):
    """PyTorch-style uniform(+-1/sqrt(fan_in)) init, deterministic.  W: (in, out)."""
    dims = [(EMB_DIM, HIDDEN)] + [(HIDDEN, HIDDEN)] * 4 + [(HIDDEN, 4)]
    params = []
    for (fan_in, fan_out) in dims:
        key, kw, kb = jax.random.split(key, 3)
        bound = 1.0 / np.sqrt(fan_in)
        W = jax.random.uniform(kw, (fan_in, fan_out), jnp.float32, -bound, bound)
        b = jax.random.uniform(kb, (fan_out,), jnp.float32, -bound, bound)
        params.append((W, b))
    return params


def prepare_params(params):
    """One-time layout/dtype prep for the kernel (feature-major, bf16, padded, packed).

    Returns (w1t, b1, wmid, bmid, w6t, b6):
      w1t  (HIDDEN, PE_PAD) bf16     b1   (HIDDEN, 1) f32
      wmid (4, HIDDEN, HIDDEN) bf16  bmid (4, HIDDEN, 1) f32
      w6t  (OUT_PAD, HIDDEN) bf16    b6   (OUT_PAD, 1) f32
    """
    (W1, b1), mids, (W6, b6) = params[0], params[1:5], params[5]
    w1t = jnp.zeros((HIDDEN, PE_PAD), jnp.float32).at[:, :EMB_DIM].set(W1.T)
    wmid = jnp.stack([W.T for (W, _) in mids])
    bmid = jnp.stack([b.reshape(HIDDEN, 1) for (_, b) in mids])
    w6t = jnp.zeros((OUT_PAD, HIDDEN), jnp.float32).at[:4, :].set(W6.T)
    b6p = jnp.zeros((OUT_PAD, 1), jnp.float32).at[:4, 0].set(b6)
    return (w1t.astype(jnp.bfloat16), b1.reshape(HIDDEN, 1),
            wmid.astype(jnp.bfloat16), bmid,
            w6t.astype(jnp.bfloat16), b6p)


def nerf_kernel(o_ref, a_ref, ph_ref, w1_ref, b1_ref, wmid_ref, bmid_ref,
                w6_ref, b6_ref, out_ref):
    # o_ref: (3, TM) f32; out_ref: (OUT_PAD, TM) f32; weights are VMEM-resident.
    A = a_ref[...]                                   # (PE_PAD, 3) f32
    a0, a1, a2 = A[:, 0:1], A[:, 1:2], A[:, 2:3]     # hoisted out of sub-block loop
    ph = ph_ref[...]                                 # (PE_PAD, 1) f32

    def layer(x, w_ref, b_ref, idx=None):
        w = w_ref[...] if idx is None else w_ref[idx]          # bf16 (H, K)
        b = b_ref[...] if idx is None else b_ref[idx]          # f32  (H, 1)
        y = jnp.dot(w, x.astype(jnp.bfloat16),
                    preferred_element_type=jnp.float32) + b
        return jnp.maximum(y, 0.0)

    n_sub = o_ref.shape[1] // SUB
    # Static unroll: each sub-block chain is independent, letting the sin/VPU
    # chain of one sub-block co-issue with the MXU matmuls of another.
    for s in range(n_sub):
        cols = pl.ds(s * SUB, SUB)
        o = o_ref[:, cols]                           # (3, SUB) f32
        # Positional encoding: three broadcast-FMAs + one sin (no K=3 matmul).
        z = a0 * o[0:1, :] + a1 * o[1:2, :] + a2 * o[2:3, :] + ph   # (PE_PAD, SUB)
        h = jnp.sin(z)                               # f32

        h = layer(h, w1_ref, b1_ref)                 # (HIDDEN, SUB)
        for l in range(4):
            h = layer(h, wmid_ref, bmid_ref, idx=l)

        y = jnp.dot(w6_ref[...], h.astype(jnp.bfloat16),
                    preferred_element_type=jnp.float32) + b6_ref[...]  # (OUT_PAD, SUB)
        row = jax.lax.broadcasted_iota(jnp.int32, y.shape, 0)
        # rows 0..2 -> sigmoid (rgb); row 3 -> relu (sigma); rows 4..7 are padding.
        out_ref[:, cols] = jnp.where(row < 3, jax.nn.sigmoid(y),
                                     jnp.maximum(y, 0.0))


def _choose_tm(N, *, min_steps=4, max_tm=1024):
    """Largest power-of-two row tile (>= SUB) keeping the grid at >= min_steps
    steps.  min_steps=4 keeps both v7x TensorCores fed with >= 2 steps each;
    single-TC chips (v5e/v6e) may pass min_steps=2 for even larger tiles."""
    tm = max_tm
    while tm > SUB and -(-N // tm) < min_steps:
        tm //= 2
    return tm


def nerf_forward(o, enc, prepared, *, tm=None, min_steps=4):
    """o: (N, 3) f32  ->  (c: (N, 3), sigma: (N,))."""
    N = o.shape[0]
    if tm is None:
        tm = _choose_tm(N, min_steps=min_steps)
    assert tm % SUB == 0

    a_t, ph_t = enc
    w1t, b1, wmid, bmid, w6t, b6 = prepared
    weight_args = (a_t, ph_t, w1t, b1, wmid, bmid, w6t, b6)

    # Pad rows to a multiple of tm and go feature-major (lane-dense) once.
    n_pad = -(-N // tm) * tm
    grid = (n_pad // tm,)
    o_t = jnp.zeros((3, n_pad), o.dtype).at[:, :N].set(o.T)

    def full(arr):
        n = arr.ndim
        return pl.BlockSpec(arr.shape, lambda i, n=n: (0,) * n)

    flops = 2 * n_pad * (PE_PAD * HIDDEN + 4 * HIDDEN * HIDDEN + HIDDEN * OUT_PAD)
    transcendentals = n_pad * (PE_PAD + 3)
    bytes_accessed = int(o_t.size * 4 + OUT_PAD * n_pad * 4
                         + sum(int(a.size) * a.dtype.itemsize for a in weight_args))

    out_t = pl.pallas_call(
        nerf_kernel,
        out_shape=jax.ShapeDtypeStruct((OUT_PAD, n_pad), jnp.float32),
        grid_spec=pltpu.PrefetchScalarGridSpec(
            num_scalar_prefetch=0,
            grid=grid,
            in_specs=[pl.BlockSpec((3, tm), lambda i: (0, i))]
                     + [full(a) for a in weight_args],
            out_specs=pl.BlockSpec((OUT_PAD, tm), lambda i: (0, i)),
        ),
        compiler_params=pltpu.CompilerParams(dimension_semantics=("parallel",)),
        cost_estimate=pl.CostEstimate(flops=flops,
                                      transcendentals=transcendentals,
                                      bytes_accessed=bytes_accessed),
    )(o_t, *weight_args)

    c = out_t[:3, :N].T            # (N, 3)
    sigma = out_t[3, :N]           # (N,)
    return c, sigma


def nerf_reference(o, params, freqs):
    """Pure-JAX f32 reference matching the PyTorch forward exactly."""
    embs = []
    for f in freqs:
        embs.append(jnp.sin(o * f))
        embs.append(jnp.cos(o * f))
    h = jnp.concatenate(embs, axis=-1)               # (N, 120)
    for (W, b) in params[:-1]:
        h = jnp.maximum(h @ W + b, 0.0)
    W, b = params[-1]
    h = h @ W + b                                    # (N, 4)
    return jax.nn.sigmoid(h[:, :3]), jnp.maximum(h[:, -1], 0.0)


if __name__ == "__main__":
    key = jax.random.PRNGKey(0)
    key, ko = jax.random.split(key)

    N = 1024                                   # -> tm=256, 4 grid steps (2 per v7x TC)
    o = jax.random.uniform(ko, (N, 3), jnp.float32, -1.0, 1.0)

    a_t, ph_t, freqs = _make_encoding_mats()
    params = _init_params(key)
    prepared = prepare_params(params)          # weight prep hoisted: done once

    c, sigma = nerf_forward(o, (a_t, ph_t), prepared)
    jax.block_until_ready((c, sigma))

    c_ref, sigma_ref = nerf_reference(o, params, freqs)
    # bf16 MXU operands vs pure-f32 reference -> ~1e-2-scale tolerance.
    np.testing.assert_allclose(np.asarray(c), np.asarray(c_ref), atol=2e-2, rtol=2e-2)
    np.testing.assert_allclose(np.asarray(sigma), np.asarray(sigma_ref), atol=2e-2, rtol=2e-2)

    print("KERNEL_OK")
</pallas_src>

<mosaic_0001>
module attributes {stable_mosaic.version = 11 : i64} {
  func.func @nerf_kernel(%arg0: i32, %arg1: memref<3x256xf32, #tpu.memory_space<vmem>>, %arg2: memref<128x3xf32, #tpu.memory_space<vmem>>, %arg3: memref<128x1xf32, #tpu.memory_space<vmem>>, %arg4: memref<128x128xbf16, #tpu.memory_space<vmem>>, %arg5: memref<128x1xf32, #tpu.memory_space<vmem>>, %arg6: memref<4x128x128xbf16, #tpu.memory_space<vmem>>, %arg7: memref<4x128x1xf32, #tpu.memory_space<vmem>>, %arg8: memref<8x128xbf16, #tpu.memory_space<vmem>>, %arg9: memref<8x1xf32, #tpu.memory_space<vmem>>, %arg10: memref<8x256xf32, #tpu.memory_space<vmem>>) attributes {dimension_semantics = [#tpu.dimension_semantics<parallel>], iteration_bounds = array<i64: 4>, scalar_prefetch = 0 : i64, scratch_operands = 0 : i64, tpu.core_type = #tpu.core_type<tc>, window_params = [{transform_indices = @transform_0, window_bounds = array<i64: 3, 256>}, {pipeline_mode = #tpu.pipeline_mode<synchronous>, transform_indices = @transform_1, window_bounds = array<i64: 128, 3>}, {pipeline_mode = #tpu.pipeline_mode<synchronous>, transform_indices = @transform_2, window_bounds = array<i64: 128, 1>}, {pipeline_mode = #tpu.pipeline_mode<synchronous>, transform_indices = @transform_3, window_bounds = array<i64: 128, 128>}, {pipeline_mode = #tpu.pipeline_mode<synchronous>, transform_indices = @transform_4, window_bounds = array<i64: 128, 1>}, {pipeline_mode = #tpu.pipeline_mode<synchronous>, transform_indices = @transform_5, window_bounds = array<i64: 4, 128, 128>}, {pipeline_mode = #tpu.pipeline_mode<synchronous>, transform_indices = @transform_6, window_bounds = array<i64: 4, 128, 1>}, {pipeline_mode = #tpu.pipeline_mode<synchronous>, transform_indices = @transform_7, window_bounds = array<i64: 8, 128>}, {pipeline_mode = #tpu.pipeline_mode<synchronous>, transform_indices = @transform_8, window_bounds = array<i64: 8, 1>}, {transform_indices = @transform_9, window_bounds = array<i64: 8, 256>}]} {
    %c0 = arith.constant 0 : index
    %c0_0 = arith.constant 0 : index
    %0 = vector.load %arg2[%c0, %c0_0] : memref<128x3xf32, #tpu.memory_space<vmem>>, vector<128x3xf32>
    %1 = vector.extract_strided_slice %0 {offsets = [0, 0], sizes = [128, 1], strides = [1, 1]} : vector<128x3xf32> to vector<128x1xf32>
    %2 = vector.extract_strided_slice %0 {offsets = [0, 1], sizes = [128, 1], strides = [1, 1]} : vector<128x3xf32> to vector<128x1xf32>
    %3 = vector.extract_strided_slice %0 {offsets = [0, 2], sizes = [128, 1], strides = [1, 1]} : vector<128x3xf32> to vector<128x1xf32>
    %c0_1 = arith.constant 0 : index
    %c0_2 = arith.constant 0 : index
    %4 = vector.load %arg3[%c0_1, %c0_2] : memref<128x1xf32, #tpu.memory_space<vmem>>, vector<128x1xf32>
    %c0_3 = arith.constant 0 : index
    %c0_4 = arith.constant 0 : index
    %5 = vector.load %arg1[%c0_3, %c0_4] : memref<3x256xf32, #tpu.memory_space<vmem>>, vector<3x128xf32>
    %6 = vector.extract_strided_slice %5 {offsets = [0, 0], sizes = [1, 128], strides = [1, 1]} : vector<3x128xf32> to vector<1x128xf32>
    %7 = vector.broadcast %1 : vector<128x1xf32> to vector<128x128xf32>
    %8 = vector.broadcast %6 : vector<1x128xf32> to vector<128x128xf32>
    %9 = arith.mulf %7, %8 : vector<128x128xf32>
    %10 = vector.extract_strided_slice %5 {offsets = [1, 0], sizes = [1, 128], strides = [1, 1]} : vector<3x128xf32> to vector<1x128xf32>
    %11 = vector.broadcast %2 : vector<128x1xf32> to vector<128x128xf32>
    %12 = vector.broadcast %10 : vector<1x128xf32> to vector<128x128xf32>
    %13 = arith.mulf %11, %12 : vector<128x128xf32>
    %14 = arith.addf %9, %13 : vector<128x128xf32>
    %15 = vector.extract_strided_slice %5 {offsets = [2, 0], sizes = [1, 128], strides = [1, 1]} : vector<3x128xf32> to vector<1x128xf32>
    %16 = vector.broadcast %3 : vector<128x1xf32> to vector<128x128xf32>
    %17 = vector.broadcast %15 : vector<1x128xf32> to vector<128x128xf32>
    %18 = arith.mulf %16, %17 : vector<128x128xf32>
    %19 = arith.addf %14, %18 : vector<128x128xf32>
    %20 = vector.broadcast %4 : vector<128x1xf32> to vector<128x128xf32>
    %21 = arith.addf %19, %20 : vector<128x128xf32>
    %22 = math.sin %21 : vector<128x128xf32>
    %c0_5 = arith.constant 0 : index
    %c0_6 = arith.constant 0 : index
    %23 = vector.load %arg4[%c0_5, %c0_6] : memref<128x128xbf16, #tpu.memory_space<vmem>>, vector<128x128xbf16>
    %c0_7 = arith.constant 0 : index
    %c0_8 = arith.constant 0 : index
    %24 = vector.load %arg5[%c0_7, %c0_8] : memref<128x1xf32, #tpu.memory_space<vmem>>, vector<128x1xf32>
    %25 = arith.truncf %22 : vector<128x128xf32> to vector<128x128xbf16>
    %cst = arith.constant dense<0.000000e+00> : vector<128x128xf32>
    %26 = tpu.matmul %23, %25, %cst {dimension_numbers = #tpu.dot_dimension_numbers<[1], [0], [0], [1], [0, 0, 1, 1], [], []>} : vector<128x128xbf16>, vector<128x128xbf16>, vector<128x128xf32> -> vector<128x128xf32>
    %27 = vector.broadcast %24 : vector<128x1xf32> to vector<128x128xf32>
    %28 = arith.addf %26, %27 : vector<128x128xf32>
    %cst_9 = arith.constant 0.000000e+00 : f32
    %29 = vector.broadcast %cst_9 : f32 to vector<128x128xf32>
    %30 = arith.maximumf %28, %29 : vector<128x128xf32>
    %c0_10 = arith.constant 0 : index
    %c0_11 = arith.constant 0 : index
    %c0_12 = arith.constant 0 : index
    %31 = vector.load %arg6[%c0_10, %c0_11, %c0_12] : memref<4x128x128xbf16, #tpu.memory_space<vmem>>, vector<1x128x128xbf16>
    %32 = vector.shape_cast %31 : vector<1x128x128xbf16> to vector<128x128xbf16>
    %c0_13 = arith.constant 0 : index
    %c0_14 = arith.constant 0 : index
    %c0_15 = arith.constant 0 : index
    %33 = vector.load %arg7[%c0_13, %c0_14, %c0_15] : memref<4x128x1xf32, #tpu.memory_space<vmem>>, vector<1x128x1xf32>
    %34 = vector.shape_cast %33 : vector<1x128x1xf32> to vector<128x1xf32>
    %35 = arith.truncf %30 : vector<128x128xf32> to vector<128x128xbf16>
    %cst_16 = arith.constant dense<0.000000e+00> : vector<128x128xf32>
    %36 = tpu.matmul %32, %35, %cst_16 {dimension_numbers = #tpu.dot_dimension_numbers<[1], [0], [0], [1], [0, 0, 1, 1], [], []>} : vector<128x128xbf16>, vector<128x128xbf16>, vector<128x128xf32> -> vector<128x128xf32>
    %37 = vector.broadcast %34 : vector<128x1xf32> to vector<128x128xf32>
    %38 = arith.addf %36, %37 : vector<128x128xf32>
    %cst_17 = arith.constant 0.000000e+00 : f32
    %39 = vector.broadcast %cst_17 : f32 to vector<128x128xf32>
    %40 = arith.maximumf %38, %39 : vector<128x128xf32>
    %c1 = arith.constant 1 : index
    %c0_18 = arith.constant 0 : index
    %c0_19 = arith.constant 0 : index
    %41 = vector.load %arg6[%c1, %c0_18, %c0_19] : memref<4x128x128xbf16, #tpu.memory_space<vmem>>, vector<1x128x128xbf16>
    %42 = vector.shape_cast %41 : vector<1x128x128xbf16> to vector<128x128xbf16>
    %c1_20 = arith.constant 1 : index
    %c0_21 = arith.constant 0 : index
    %c0_22 = arith.constant 0 : index
    %43 = vector.load %arg7[%c1_20, %c0_21, %c0_22] : memref<4x128x1xf32, #tpu.memory_space<vmem>>, vector<1x128x1xf32>
    %44 = vector.shape_cast %43 : vector<1x128x1xf32> to vector<128x1xf32>
    %45 = arith.truncf %40 : vector<128x128xf32> to vector<128x128xbf16>
    %cst_23 = arith.constant dense<0.000000e+00> : vector<128x128xf32>
    %46 = tpu.matmul %42, %45, %cst_23 {dimension_numbers = #tpu.dot_dimension_numbers<[1], [0], [0], [1], [0, 0, 1, 1], [], []>} : vector<128x128xbf16>, vector<128x128xbf16>, vector<128x128xf32> -> vector<128x128xf32>
    %47 = vector.broadcast %44 : vector<128x1xf32> to vector<128x128xf32>
    %48 = arith.addf %46, %47 : vector<128x128xf32>
    %cst_24 = arith.constant 0.000000e+00 : f32
    %49 = vector.broadcast %cst_24 : f32 to vector<128x128xf32>
    %50 = arith.maximumf %48, %49 : vector<128x128xf32>
    %c2 = arith.constant 2 : index
    %c0_25 = arith.constant 0 : index
    %c0_26 = arith.constant 0 : index
    %51 = vector.load %arg6[%c2, %c0_25, %c0_26] : memref<4x128x128xbf16, #tpu.memory_space<vmem>>, vector<1x128x128xbf16>
    %52 = vector.shape_cast %51 : vector<1x128x128xbf16> to vector<128x128xbf16>
    %c2_27 = arith.constant 2 : index
    %c0_28 = arith.constant 0 : index
    %c0_29 = arith.constant 0 : index
    %53 = vector.load %arg7[%c2_27, %c0_28, %c0_29] : memref<4x128x1xf32, #tpu.memory_space<vmem>>, vector<1x128x1xf32>
    %54 = vector.shape_cast %53 : vector<1x128x1xf32> to vector<128x1xf32>
    %55 = arith.truncf %50 : vector<128x128xf32> to vector<128x128xbf16>
    %cst_30 = arith.constant dense<0.000000e+00> : vector<128x128xf32>
    %56 = tpu.matmul %52, %55, %cst_30 {dimension_numbers = #tpu.dot_dimension_numbers<[1], [0], [0], [1], [0, 0, 1, 1], [], []>} : vector<128x128xbf16>, vector<128x128xbf16>, vector<128x128xf32> -> vector<128x128xf32>
    %57 = vector.broadcast %54 : vector<128x1xf32> to vector<128x128xf32>
    %58 = arith.addf %56, %57 : vector<128x128xf32>
    %cst_31 = arith.constant 0.000000e+00 : f32
    %59 = vector.broadcast %cst_31 : f32 to vector<128x128xf32>
    %60 = arith.maximumf %58, %59 : vector<128x128xf32>
    %c3 = arith.constant 3 : index
    %c0_32 = arith.constant 0 : index
    %c0_33 = arith.constant 0 : index
    %61 = vector.load %arg6[%c3, %c0_32, %c0_33] : memref<4x128x128xbf16, #tpu.memory_space<vmem>>, vector<1x128x128xbf16>
    %62 = vector.shape_cast %61 : vector<1x128x128xbf16> to vector<128x128xbf16>
    %c3_34 = arith.constant 3 : index
    %c0_35 = arith.constant 0 : index
    %c0_36 = arith.constant 0 : index
    %63 = vector.load %arg7[%c3_34, %c0_35, %c0_36] : memref<4x128x1xf32, #tpu.memory_space<vmem>>, vector<1x128x1xf32>
    %64 = vector.shape_cast %63 : vector<1x128x1xf32> to vector<128x1xf32>
    %65 = arith.truncf %60 : vector<128x128xf32> to vector<128x128xbf16>
    %cst_37 = arith.constant dense<0.000000e+00> : vector<128x128xf32>
    %66 = tpu.matmul %62, %65, %cst_37 {dimension_numbers = #tpu.dot_dimension_numbers<[1], [0], [0], [1], [0, 0, 1, 1], [], []>} : vector<128x128xbf16>, vector<128x128xbf16>, vector<128x128xf32> -> vector<128x128xf32>
    %67 = vector.broadcast %64 : vector<128x1xf32> to vector<128x128xf32>
    %68 = arith.addf %66, %67 : vector<128x128xf32>
    %cst_38 = arith.constant 0.000000e+00 : f32
    %69 = vector.broadcast %cst_38 : f32 to vector<128x128xf32>
    %70 = arith.maximumf %68, %69 : vector<128x128xf32>
    %c0_39 = arith.constant 0 : index
    %c0_40 = arith.constant 0 : index
    %71 = vector.load %arg8[%c0_39, %c0_40] : memref<8x128xbf16, #tpu.memory_space<vmem>>, vector<8x128xbf16>
    %72 = arith.truncf %70 : vector<128x128xf32> to vector<128x128xbf16>
    %cst_41 = arith.constant dense<0.000000e+00> : vector<8x128xf32>
    %73 = tpu.matmul %71, %72, %cst_41 {dimension_numbers = #tpu.dot_dimension_numbers<[1], [0], [0], [1], [0, 0, 1, 1], [], []>} : vector<8x128xbf16>, vector<128x128xbf16>, vector<8x128xf32> -> vector<8x128xf32>
    %c0_42 = arith.constant 0 : index
    %c0_43 = arith.constant 0 : index
    %74 = vector.load %arg9[%c0_42, %c0_43] : memref<8x1xf32, #tpu.memory_space<vmem>>, vector<8x1xf32>
    %75 = vector.broadcast %74 : vector<8x1xf32> to vector<8x128xf32>
    %76 = arith.addf %73, %75 : vector<8x128xf32>
    %77 = tpu.iota {dimensions = array<i32: 0>} : vector<8x128xi32>
    %c3_i32 = arith.constant 3 : i32
    %78 = vector.broadcast %c3_i32 : i32 to vector<8x128xi32>
    %79 = arith.cmpi slt, %77, %78 : vector<8x128xi32>
    %80 = arith.negf %76 : vector<8x128xf32>
    %81 = math.exp %80 : vector<8x128xf32>
    %cst_44 = arith.constant 1.000000e+00 : f32
    %82 = vector.broadcast %cst_44 : f32 to vector<8x128xf32>
    %83 = arith.addf %82, %81 : vector<8x128xf32>
    %84 = arith.divf %82, %83 : vector<8x128xf32>
    %cst_45 = arith.constant 0.000000e+00 : f32
    %85 = vector.broadcast %cst_45 : f32 to vector<8x128xf32>
    %86 = arith.maximumf %76, %85 : vector<8x128xf32>
    %87 = arith.select %79, %84, %86 : vector<8x128xi1>, vector<8x128xf32>
    %c0_46 = arith.constant 0 : index
    %c0_47 = arith.constant 0 : index
    %88 = vector.load %arg10[%c0_46, %c0_47] : memref<8x256xf32, #tpu.memory_space<vmem>>, vector<8x128xf32>
    tpu.vector_store %arg10[%c0_46, %c0_47], %87 {strides = array<i32>} : memref<8x256xf32, #tpu.memory_space<vmem>>, vector<8x128xf32>,
    %c0_48 = arith.constant 0 : index
    %c128 = arith.constant 128 : index
    %89 = vector.load %arg1[%c0_48, %c128] : memref<3x256xf32, #tpu.memory_space<vmem>>, vector<3x128xf32>
    %90 = vector.extract_strided_slice %89 {offsets = [0, 0], sizes = [1, 128], strides = [1, 1]} : vector<3x128xf32> to vector<1x128xf32>
    %91 = vector.broadcast %1 : vector<128x1xf32> to vector<128x128xf32>
    %92 = vector.broadcast %90 : vector<1x128xf32> to vector<128x128xf32>
    %93 = arith.mulf %91, %92 : vector<128x128xf32>
    %94 = vector.extract_strided_slice %89 {offsets = [1, 0], sizes = [1, 128], strides = [1, 1]} : vector<3x128xf32> to vector<1x128xf32>
    %95 = vector.broadcast %2 : vector<128x1xf32> to vector<128x128xf32>
    %96 = vector.broadcast %94 : vector<1x128xf32> to vector<128x128xf32>
    %97 = arith.mulf %95, %96 : vector<128x128xf32>
    %98 = arith.addf %93, %97 : vector<128x128xf32>
    %99 = vector.extract_strided_slice %89 {offsets = [2, 0], sizes = [1, 128], strides = [1, 1]} : vector<3x128xf32> to vector<1x128xf32>
    %100 = vector.broadcast %3 : vector<128x1xf32> to vector<128x128xf32>
    %101 = vector.broadcast %99 : vector<1x128xf32> to vector<128x128xf32>
    %102 = arith.mulf %100, %101 : vector<128x128xf32>
    %103 = arith.addf %98, %102 : vector<128x128xf32>
    %104 = vector.broadcast %4 : vector<128x1xf32> to vector<128x128xf32>
    %105 = arith.addf %103, %104 : vector<128x128xf32>
    %106 = math.sin %105 : vector<128x128xf32>
    %c0_49 = arith.constant 0 : index
    %c0_50 = arith.constant 0 : index
    %107 = vector.load %arg4[%c0_49, %c0_50] : memref<128x128xbf16, #tpu.memory_space<vmem>>, vector<128x128xbf16>
    %c0_51 = arith.constant 0 : index
    %c0_52 = arith.constant 0 : index
    %108 = vector.load %arg5[%c0_51, %c0_52] : memref<128x1xf32, #tpu.memory_space<vmem>>, vector<128x1xf32>
    %109 = arith.truncf %106 : vector<128x128xf32> to vector<128x128xbf16>
    %cst_53 = arith.constant dense<0.000000e+00> : vector<128x128xf32>
    %110 = tpu.matmul %107, %109, %cst_53 {dimension_numbers = #tpu.dot_dimension_numbers<[1], [0], [0], [1], [0, 0, 1, 1], [], []>} : vector<128x128xbf16>, vector<128x128xbf16>, vector<128x128xf32> -> vector<128x128xf32>
    %111 = vector.broadcast %108 : vector<128x1xf32> to vector<128x128xf32>
    %112 = arith.addf %110, %111 : vector<128x128xf32>
    %cst_54 = arith.constant 0.000000e+00 : f32
    %113 = vector.broadcast %cst_54 : f32 to vector<128x128xf32>
    %114 = arith.maximumf %112, %113 : vector<128x128xf32>
    %c0_55 = arith.constant 0 : index
    %c0_56 = arith.constant 0 : index
    %c0_57 = arith.constant 0 : index
    %115 = vector.load %arg6[%c0_55, %c0_56, %c0_57] : memref<4x128x128xbf16, #tpu.memory_space<vmem>>, vector<1x128x128xbf16>
    %116 = vector.shape_cast %115 : vector<1x128x128xbf16> to vector<128x128xbf16>
    %c0_58 = arith.constant 0 : index
    %c0_59 = arith.constant 0 : index
    %c0_60 = arith.constant 0 : index
    %117 = vector.load %arg7[%c0_58, %c0_59, %c0_60] : memref<4x128x1xf32, #tpu.memory_space<vmem>>, vector<1x128x1xf32>
    %118 = vector.shape_cast %117 : vector<1x128x1xf32> to vector<128x1xf32>
    %119 = arith.truncf %114 : vector<128x128xf32> to vector<128x128xbf16>
    %cst_61 = arith.constant dense<0.000000e+00> : vector<128x128xf32>
    %120 = tpu.matmul %116, %119, %cst_61 {dimension_numbers = #tpu.dot_dimension_numbers<[1], [0], [0], [1], [0, 0, 1, 1], [], []>} : vector<128x128xbf16>, vector<128x128xbf16>, vector<128x128xf32> -> vector<128x128xf32>
    %121 = vector.broadcast %118 : vector<128x1xf32> to vector<128x128xf32>
    %122 = arith.addf %120, %121 : vector<128x128xf32>
    %cst_62 = arith.constant 0.000000e+00 : f32
    %123 = vector.broadcast %cst_62 : f32 to vector<128x128xf32>
    %124 = arith.maximumf %122, %123 : vector<128x128xf32>
    %c1_63 = arith.constant 1 : index
    %c0_64 = arith.constant 0 : index
    %c0_65 = arith.constant 0 : index
    %125 = vector.load %arg6[%c1_63, %c0_64, %c0_65] : memref<4x128x128xbf16, #tpu.memory_space<vmem>>, vector<1x128x128xbf16>
    %126 = vector.shape_cast %125 : vector<1x128x128xbf16> to vector<128x128xbf16>
    %c1_66 = arith.constant 1 : index
    %c0_67 = arith.constant 0 : index
    %c0_68 = arith.constant 0 : index
    %127 = vector.load %arg7[%c1_66, %c0_67, %c0_68] : memref<4x128x1xf32, #tpu.memory_space<vmem>>, vector<1x128x1xf32>
    %128 = vector.shape_cast %127 : vector<1x128x1xf32> to vector<128x1xf32>
    %129 = arith.truncf %124 : vector<128x128xf32> to vector<128x128xbf16>
    %cst_69 = arith.constant dense<0.000000e+00> : vector<128x128xf32>
    %130 = tpu.matmul %126, %129, %cst_69 {dimension_numbers = #tpu.dot_dimension_numbers<[1], [0], [0], [1], [0, 0, 1, 1], [], []>} : vector<128x128xbf16>, vector<128x128xbf16>, vector<128x128xf32> -> vector<128x128xf32>
    %131 = vector.broadcast %128 : vector<128x1xf32> to vector<128x128xf32>
    %132 = arith.addf %130, %131 : vector<128x128xf32>
    %cst_70 = arith.constant 0.000000e+00 : f32
    %133 = vector.broadcast %cst_70 : f32 to vector<128x128xf32>
    %134 = arith.maximumf %132, %133 : vector<128x128xf32>
    %c2_71 = arith.constant 2 : index
    %c0_72 = arith.constant 0 : index
    %c0_73 = arith.constant 0 : index
    %135 = vector.load %arg6[%c2_71, %c0_72, %c0_73] : memref<4x128x128xbf16, #tpu.memory_space<vmem>>, vector<1x128x128xbf16>
    %136 = vector.shape_cast %135 : vector<1x128x128xbf16> to vector<128x128xbf16>
    %c2_74 = arith.constant 2 : index
    %c0_75 = arith.constant 0 : index
    %c0_76 = arith.constant 0 : index
    %137 = vector.load %arg7[%c2_74, %c0_75, %c0_76] : memref<4x128x1xf32, #tpu.memory_space<vmem>>, vector<1x128x1xf32>
    %138 = vector.shape_cast %137 : vector<1x128x1xf32> to vector<128x1xf32>
    %139 = arith.truncf %134 : vector<128x128xf32> to vector<128x128xbf16>
    %cst_77 = arith.constant dense<0.000000e+00> : vector<128x128xf32>
    %140 = tpu.matmul %136, %139, %cst_77 {dimension_numbers = #tpu.dot_dimension_numbers<[1], [0], [0], [1], [0, 0, 1, 1], [], []>} : vector<128x128xbf16>, vector<128x128xbf16>, vector<128x128xf32> -> vector<128x128xf32>
    %141 = vector.broadcast %138 : vector<128x1xf32> to vector<128x128xf32>
    %142 = arith.addf %140, %141 : vector<128x128xf32>
    %cst_78 = arith.constant 0.000000e+00 : f32
    %143 = vector.broadcast %cst_78 : f32 to vector<128x128xf32>
    %144 = arith.maximumf %142, %143 : vector<128x128xf32>
    %c3_79 = arith.constant 3 : index
    %c0_80 = arith.constant 0 : index
    %c0_81 = arith.constant 0 : index
    %145 = vector.load %arg6[%c3_79, %c0_80, %c0_81] : memref<4x128x128xbf16, #tpu.memory_space<vmem>>, vector<1x128x128xbf16>
    %146 = vector.shape_cast %145 : vector<1x128x128xbf16> to vector<128x128xbf16>
    %c3_82 = arith.constant 3 : index
    %c0_83 = arith.constant 0 : index
    %c0_84 = arith.constant 0 : index
    %147 = vector.load %arg7[%c3_82, %c0_83, %c0_84] : memref<4x128x1xf32, #tpu.memory_space<vmem>>, vector<1x128x1xf32>
    %148 = vector.shape_cast %147 : vector<1x128x1xf32> to vector<128x1xf32>
    %149 = arith.truncf %144 : vector<128x128xf32> to vector<128x128xbf16>
    %cst_85 = arith.constant dense<0.000000e+00> : vector<128x128xf32>
    %150 = tpu.matmul %146, %149, %cst_85 {dimension_numbers = #tpu.dot_dimension_numbers<[1], [0], [0], [1], [0, 0, 1, 1], [], []>} : vector<128x128xbf16>, vector<128x128xbf16>, vector<128x128xf32> -> vector<128x128xf32>
    %151 = vector.broadcast %148 : vector<128x1xf32> to vector<128x128xf32>
    %152 = arith.addf %150, %151 : vector<128x128xf32>
    %cst_86 = arith.constant 0.000000e+00 : f32
    %153 = vector.broadcast %cst_86 : f32 to vector<128x128xf32>
    %154 = arith.maximumf %152, %153 : vector<128x128xf32>
    %c0_87 = arith.constant 0 : index
    %c0_88 = arith.constant 0 : index
    %155 = vector.load %arg8[%c0_87, %c0_88] : memref<8x128xbf16, #tpu.memory_space<vmem>>, vector<8x128xbf16>
    %156 = arith.truncf %154 : vector<128x128xf32> to vector<128x128xbf16>
    %cst_89 = arith.constant dense<0.000000e+00> : vector<8x128xf32>
    %157 = tpu.matmul %155, %156, %cst_89 {dimension_numbers = #tpu.dot_dimension_numbers<[1], [0], [0], [1], [0, 0, 1, 1], [], []>} : vector<8x128xbf16>, vector<128x128xbf16>, vector<8x128xf32> -> vector<8x128xf32>
    %c0_90 = arith.constant 0 : index
    %c0_91 = arith.constant 0 : index
    %158 = vector.load %arg9[%c0_90, %c0_91] : memref<8x1xf32, #tpu.memory_space<vmem>>, vector<8x1xf32>
    %159 = vector.broadcast %158 : vector<8x1xf32> to vector<8x128xf32>
    %160 = arith.addf %157, %159 : vector<8x128xf32>
    %161 = tpu.iota {dimensions = array<i32: 0>} : vector<8x128xi32>
    %c3_i32_92 = arith.constant 3 : i32
    %162 = vector.broadcast %c3_i32_92 : i32 to vector<8x128xi32>
    %163 = arith.cmpi slt, %161, %162 : vector<8x128xi32>
    %164 = arith.negf %160 : vector<8x128xf32>
    %165 = math.exp %164 : vector<8x128xf32>
    %cst_93 = arith.constant 1.000000e+00 : f32
    %166 = vector.broadcast %cst_93 : f32 to vector<8x128xf32>
    %167 = arith.addf %166, %165 : vector<8x128xf32>
    %168 = arith.divf %166, %167 : vector<8x128xf32>
    %cst_94 = arith.constant 0.000000e+00 : f32
    %169 = vector.broadcast %cst_94 : f32 to vector<8x128xf32>
    %170 = arith.maximumf %160, %169 : vector<8x128xf32>
    %171 = arith.select %163, %168, %170 : vector<8x128xi1>, vector<8x128xf32>
    %c0_95 = arith.constant 0 : index
    %c128_96 = arith.constant 128 : index
    %172 = vector.load %arg10[%c0_95, %c128_96] : memref<8x256xf32, #tpu.memory_space<vmem>>, vector<8x128xf32>
    tpu.vector_store %arg10[%c0_95, %c128_96], %171 {strides = array<i32>} : memref<8x256xf32, #tpu.memory_space<vmem>>, vector<8x128xf32>,
    return
  }
  func.func @transform_0(%arg0: i32) -> (i32, i32) {
    %c0_i32 = arith.constant 0 : i32
    %c0_i32_0 = arith.constant 0 : i32
    return %c0_i32, %arg0 : i32, i32
  }
  func.func @transform_1(%arg0: i32) -> (i32, i32) {
    %c0_i32 = arith.constant 0 : i32
    %c0_i32_0 = arith.constant 0 : i32
    %c0_i32_1 = arith.constant 0 : i32
    return %c0_i32, %c0_i32_0 : i32, i32
  }
  func.func @transform_2(%arg0: i32) -> (i32, i32) {
    %c0_i32 = arith.constant 0 : i32
    %c0_i32_0 = arith.constant 0 : i32
    %c0_i32_1 = arith.constant 0 : i32
    return %c0_i32, %c0_i32_0 : i32, i32
  }
  func.func @transform_3(%arg0: i32) -> (i32, i32) {
    %c0_i32 = arith.constant 0 : i32
    %c0_i32_0 = arith.constant 0 : i32
    %c0_i32_1 = arith.constant 0 : i32
    return %c0_i32, %c0_i32_0 : i32, i32
  }
  func.func @transform_4(%arg0: i32) -> (i32, i32) {
    %c0_i32 = arith.constant 0 : i32
    %c0_i32_0 = arith.constant 0 : i32
    %c0_i32_1 = arith.constant 0 : i32
    return %c0_i32, %c0_i32_0 : i32, i32
  }
  func.func @transform_5(%arg0: i32) -> (i32, i32, i32) {
    %c0_i32 = arith.constant 0 : i32
    %c0_i32_0 = arith.constant 0 : i32
    %c0_i32_1 = arith.constant 0 : i32
    %c0_i32_2 = arith.constant 0 : i32
    return %c0_i32, %c0_i32_0, %c0_i32_1 : i32, i32, i32
  }
  func.func @transform_6(%arg0: i32) -> (i32, i32, i32) {
    %c0_i32 = arith.constant 0 : i32
    %c0_i32_0 = arith.constant 0 : i32
    %c0_i32_1 = arith.constant 0 : i32
    %c0_i32_2 = arith.constant 0 : i32
    return %c0_i32, %c0_i32_0, %c0_i32_1 : i32, i32, i32
  }
  func.func @transform_7(%arg0: i32) -> (i32, i32) {
    %c0_i32 = arith.constant 0 : i32
    %c0_i32_0 = arith.constant 0 : i32
    %c0_i32_1 = arith.constant 0 : i32
    return %c0_i32, %c0_i32_0 : i32, i32
  }
  func.func @transform_8(%arg0: i32) -> (i32, i32) {
    %c0_i32 = arith.constant 0 : i32
    %c0_i32_0 = arith.constant 0 : i32
    %c0_i32_1 = arith.constant 0 : i32
    return %c0_i32, %c0_i32_0 : i32, i32
  }
  func.func @transform_9(%arg0: i32) -> (i32, i32) {
    %c0_i32 = arith.constant 0 : i32
    %c0_i32_0 = arith.constant 0 : i32
    return %c0_i32, %arg0 : i32, i32
  }
}

</mosaic_0001>

<llo_original>
// kernel: tpu_custom_call.1
$region0: #{tpu_custom_call.1}
  #allocation0 [shape = 'u32[]', space=smem, size = 0x4, offset = 0x4, fixed_abs, tag = 'smem constant byte address 0x4 - core index']
  #allocation1 [shape = 'u32[72,128]{1,0:T(1,128)}', space=vmem, size = 0x9000, scoped, tag = 'internal scratch']
  %s0 = inlined_call_operand.vmem [shape: f32[3,1024], index: 0, kind: input, shape index: {}]
  %s1 = inlined_call_operand.vmem [shape: f32[128,3], index: 1, kind: input, shape index: {}]
  %s2 = inlined_call_operand.vmem [shape: f32[128,1], index: 2, kind: input, shape index: {}]
  %s3 = inlined_call_operand.vmem [shape: bf16[128,128], index: 3, kind: input, shape index: {}]
  %s4 = inlined_call_operand.vmem [shape: f32[128,1], index: 4, kind: input, shape index: {}]
  %s5 = inlined_call_operand.vmem [shape: bf16[4,128,128], index: 5, kind: input, shape index: {}]
  %s6 = inlined_call_operand.vmem [shape: f32[4,128,1], index: 6, kind: input, shape index: {}]
  %s7 = inlined_call_operand.vmem [shape: bf16[8,128], index: 7, kind: input, shape index: {}]
  %s8 = inlined_call_operand.vmem [shape: f32[8,1], index: 8, kind: input, shape index: {}]
  %s9 = inlined_call_operand.hbm [shape: f32[8,1024], index: 9, kind: output, shape index: {}]
  %s10 = sld [smem:[#allocation0]]
  $region69: #{tpu_custom_call.1} parent=0
    _
  %s12 = ssub.s32 1, %s10
  %s13 = scalar_select 0, %s12, %s10
  $region1: #{tpu_custom_call.1} parent=0
    #allocation2 [shape = 'u8[16384]{0}', space=vmem, size = 0x4000, scoped, tag = 'output window, operand 0']
    #allocation3 [shape = 's32[2]{0}', space=sflag, size = 0x8, scoped, tag = 'scoped memory for tpu_custom_call.1']
    %14 = vsyncpa [#allocation3], 0
    %s15 = scalar_lea.sflag [#allocation3], 1
    %16 = vsyncpa %s15, 0
    loop: start=0, step=1, limit=6
    $region2: #{tpu_custom_call.1} parent=1 // loop_pre_header
      _
    $region3: #{tpu_custom_call.1} parent=1 // loop_header
      %s18 = sphi 0, %s22
      %p19 = scmp.ge.s32.totalorder %s18, 6
      %s28 = sphi 0, %s30
      %s31 = sphi 0, %s28
      %s32 = sphi 0, %s31
      %s48 = sphi 0, %s32
      %s52 = sphi 0, %s52
      %s54 = sphi 0, %s52
      %s55 = sphi 0, %s54
      %s69 = sphi 0, %s55
      %s73 = sphi 0, %s73
      %s75 = sphi 0, %s73
      %s76 = sphi 0, %s75
      %s90 = sphi 0, %s76
      %s94 = sphi 0, %s94
      %s96 = sphi 0, %s94
      %s97 = sphi 0, %s96
      %s111 = sphi 0, %s97
      %s115 = sphi 0, %s115
      %s117 = sphi 0, %s115
      %s118 = sphi 0, %s117
      %s132 = sphi 0, %s118
      %s136 = sphi 0, %s136
      %s138 = sphi 0, %s136
      %s139 = sphi 0, %s138
      %s153 = sphi 0, %s139
      %s157 = sphi 0, %s157
      %s159 = sphi 0, %s157
      %s160 = sphi 0, %s159
      %s174 = sphi 0, %s160
      %s178 = sphi 0, %s178
      %s180 = sphi 0, %s178
      %s181 = sphi 0, %s180
      %s195 = sphi 0, %s181
      %s199 = sphi 0, %s199
      %s201 = sphi 0, %s199
      %s202 = sphi 0, %s201
      %s216 = sphi 0, %s202
      %s222 = sphi 0, %s224
      %s225 = sphi 0, %s222
      %s226 = sphi 0, %s225
      %s242 = sphi 0, %s226
    $region4: #{tpu_custom_call.1} parent=1 // loop_header_branch
      %21 = sbr.rel (%p19) target = $region8
    $region5: #{tpu_custom_call.1} parent=1 // loop_body
      %s23 = ssub.s32 %s18, 1
      %s24 = ssub.s32 %s18, 2
      %s25 = sadd.s32 %s18, 1
      %s26 = ssub.s32 %s18, %s25
      %p27 = scmp.eq.s32.totalorder %s26, 0
      %s29 = sadd.s32 %s28, 1
      %s30 = scalar_select %p27, %s28, %s29
      %p33 = pneg %p27
      %p34 = scmp.eq.s32.totalorder %s18, 3
      %p35 = por %p33, %p34
      %p36 = scmp.ne.s32.totalorder %s28, %s31
      %p37 = scmp.eq.s32.totalorder %s18, 0
      %p38 = por %p36, %p37
      %p39 = scmp.ne.s32.totalorder %s28, %s31
      %p40 = scmp.eq.s32.totalorder %s23, 3
      %p41 = por %p39, %p40
      %p42 = scmp.ne.s32.totalorder %s31, %s32
      %p43 = scmp.eq.s32.totalorder %s23, 0
      %p44 = por %p42, %p43
      %p45 = scmp.ne.s32.totalorder %s31, %s32
      %p46 = scmp.eq.s32.totalorder %s24, 3
      %p47 = por %p45, %p46
      %p49 = scmp.ne.s32.totalorder %s32, %s48
      %p50 = scmp.eq.s32.totalorder %s24, 0
      %p51 = por %p49, %p50
      %s53 = sadd.s32 %s52, 1
      %p56 = scmp.eq.s32.totalorder %s18, 3
      %p57 = scmp.ne.s32.totalorder %s52, %s54
      %p58 = scmp.eq.s32.totalorder %s18, 0
      %p59 = por %p57, %p58
      %p60 = scmp.ne.s32.totalorder %s52, %s54
      %p61 = scmp.eq.s32.totalorder %s23, 3
      %p62 = por %p60, %p61
      %p63 = scmp.ne.s32.totalorder %s54, %s55
      %p64 = scmp.eq.s32.totalorder %s23, 0
      %p65 = por %p63, %p64
      %p66 = scmp.ne.s32.totalorder %s54, %s55
      %p67 = scmp.eq.s32.totalorder %s24, 3
      %p68 = por %p66, %p67
      %p70 = scmp.ne.s32.totalorder %s55, %s69
      %p71 = scmp.eq.s32.totalorder %s24, 0
      %p72 = por %p70, %p71
      %s74 = sadd.s32 %s73, 1
      %p77 = scmp.eq.s32.totalorder %s18, 3
      %p78 = scmp.ne.s32.totalorder %s73, %s75
      %p79 = scmp.eq.s32.totalorder %s18, 0
      %p80 = por %p78, %p79
      %p81 = scmp.ne.s32.totalorder %s73, %s75
      %p82 = scmp.eq.s32.totalorder %s23, 3
      %p83 = por %p81, %p82
      %p84 = scmp.ne.s32.totalorder %s75, %s76
      %p85 = scmp.eq.s32.totalorder %s23, 0
      %p86 = por %p84, %p85
      %p87 = scmp.ne.s32.totalorder %s75, %s76
      %p88 = scmp.eq.s32.totalorder %s24, 3
      %p89 = por %p87, %p88
      %p91 = scmp.ne.s32.totalorder %s76, %s90
      %p92 = scmp.eq.s32.totalorder %s24, 0
      %p93 = por %p91, %p92
      %s95 = sadd.s32 %s94, 1
      %p98 = scmp.eq.s32.totalorder %s18, 3
      %p99 = scmp.ne.s32.totalorder %s94, %s96
      %p100 = scmp.eq.s32.totalorder %s18, 0
      %p101 = por %p99, %p100
      %p102 = scmp.ne.s32.totalorder %s94, %s96
      %p103 = scmp.eq.s32.totalorder %s23, 3
      %p104 = por %p102, %p103
      %p105 = scmp.ne.s32.totalorder %s96, %s97
      %p106 = scmp.eq.s32.totalorder %s23, 0
      %p107 = por %p105, %p106
      %p108 = scmp.ne.s32.totalorder %s96, %s97
      %p109 = scmp.eq.s32.totalorder %s24, 3
      %p110 = por %p108, %p109
      %p112 = scmp.ne.s32.totalorder %s97, %s111
      %p113 = scmp.eq.s32.totalorder %s24, 0
      %p114 = por %p112, %p113
      %s116 = sadd.s32 %s115, 1
      %p119 = scmp.eq.s32.totalorder %s18, 3
      %p120 = scmp.ne.s32.totalorder %s115, %s117
      %p121 = scmp.eq.s32.totalorder %s18, 0
      %p122 = por %p120, %p121
      %p123 = scmp.ne.s32.totalorder %s115, %s117
      %p124 = scmp.eq.s32.totalorder %s23, 3
      %p125 = por %p123, %p124
      %p126 = scmp.ne.s32.totalorder %s117, %s118
      %p127 = scmp.eq.s32.totalorder %s23, 0
      %p128 = por %p126, %p127
      %p129 = scmp.ne.s32.totalorder %s117, %s118
      %p130 = scmp.eq.s32.totalorder %s24, 3
      %p131 = por %p129, %p130
      %p133 = scmp.ne.s32.totalorder %s118, %s132
      %p134 = scmp.eq.s32.totalorder %s24, 0
      %p135 = por %p133, %p134
      %s137 = sadd.s32 %s136, 1
      %p140 = scmp.eq.s32.totalorder %s18, 3
      %p141 = scmp.ne.s32.totalorder %s136, %s138
      %p142 = scmp.eq.s32.totalorder %s18, 0
      %p143 = por %p141, %p142
      %p144 = scmp.ne.s32.totalorder %s136, %s138
      %p145 = scmp.eq.s32.totalorder %s23, 3
      %p146 = por %p144, %p145
      %p147 = scmp.ne.s32.totalorder %s138, %s139
      %p148 = scmp.eq.s32.totalorder %s23, 0
      %p149 = por %p147, %p148
      %p150 = scmp.ne.s32.totalorder %s138, %s139
      %p151 = scmp.eq.s32.totalorder %s24, 3
      %p152 = por %p150, %p151
      %p154 = scmp.ne.s32.totalorder %s139, %s153
      %p155 = scmp.eq.s32.totalorder %s24, 0
      %p156 = por %p154, %p155
      %s158 = sadd.s32 %s157, 1
      %p161 = scmp.eq.s32.totalorder %s18, 3
      %p162 = scmp.ne.s32.totalorder %s157, %s159
      %p163 = scmp.eq.s32.totalorder %s18, 0
      %p164 = por %p162, %p163
      %p165 = scmp.ne.s32.totalorder %s157, %s159
      %p166 = scmp.eq.s32.totalorder %s23, 3
      %p167 = por %p165, %p166
      %p168 = scmp.ne.s32.totalorder %s159, %s160
      %p169 = scmp.eq.s32.totalorder %s23, 0
      %p170 = por %p168, %p169
      %p171 = scmp.ne.s32.totalorder %s159, %s160
      %p172 = scmp.eq.s32.totalorder %s24, 3
      %p173 = por %p171, %p172
      %p175 = scmp.ne.s32.totalorder %s160, %s174
      %p176 = scmp.eq.s32.totalorder %s24, 0
      %p177 = por %p175, %p176
      %s179 = sadd.s32 %s178, 1
      %p182 = scmp.eq.s32.totalorder %s18, 3
      %p183 = scmp.ne.s32.totalorder %s178, %s180
      %p184 = scmp.eq.s32.totalorder %s18, 0
      %p185 = por %p183, %p184
      %p186 = scmp.ne.s32.totalorder %s178, %s180
      %p187 = scmp.eq.s32.totalorder %s23, 3
      %p188 = por %p186, %p187
      %p189 = scmp.ne.s32.totalorder %s180, %s181
      %p190 = scmp.eq.s32.totalorder %s23, 0
      %p191 = por %p189, %p190
      %p192 = scmp.ne.s32.totalorder %s180, %s181
      %p193 = scmp.eq.s32.totalorder %s24, 3
      %p194 = por %p192, %p193
      %p196 = scmp.ne.s32.totalorder %s181, %s195
      %p197 = scmp.eq.s32.totalorder %s24, 0
      %p198 = por %p196, %p197
      %s200 = sadd.s32 %s199, 1
      %p203 = scmp.eq.s32.totalorder %s18, 3
      %p204 = scmp.ne.s32.totalorder %s199, %s201
      %p205 = scmp.eq.s32.totalorder %s18, 0
      %p206 = por %p204, %p205
      %p207 = scmp.ne.s32.totalorder %s199, %s201
      %p208 = scmp.eq.s32.totalorder %s23, 3
      %p209 = por %p207, %p208
      %p210 = scmp.ne.s32.totalorder %s201, %s202
      %p211 = scmp.eq.s32.totalorder %s23, 0
      %p212 = por %p210, %p211
      %p213 = scmp.ne.s32.totalorder %s201, %s202
      %p214 = scmp.eq.s32.totalorder %s24, 3
      %p215 = por %p213, %p214
      %p217 = scmp.ne.s32.totalorder %s202, %s216
      %p218 = scmp.eq.s32.totalorder %s24, 0
      %p219 = por %p217, %p218
      %s220 = ssub.s32 %s18, %s25
      %p221 = scmp.eq.s32.totalorder %s220, 0
      %s223 = sadd.s32 %s222, 1
      %s224 = scalar_select %p221, %s222, %s223
      %p227 = pneg %p221
      %p228 = scmp.eq.s32.totalorder %s18, 3
      %p229 = por %p227, %p228
      %p230 = scmp.ne.s32.totalorder %s222, %s225
      %p231 = scmp.eq.s32.totalorder %s18, 0
      %p232 = por %p230, %p231
      %p233 = scmp.ne.s32.totalorder %s222, %s225
      %p234 = scmp.eq.s32.totalorder %s23, 3
      %p235 = por %p233, %p234
      %p236 = scmp.ne.s32.totalorder %s225, %s226
      %p237 = scmp.eq.s32.totalorder %s23, 0
      %p238 = por %p236, %p237
      %p239 = scmp.ne.s32.totalorder %s225, %s226
      %p240 = scmp.eq.s32.totalorder %s24, 3
      %p241 = por %p239, %p240
      %p243 = scmp.ne.s32.totalorder %s226, %s242
      %p244 = scmp.eq.s32.totalorder %s24, 0
      %p245 = por %p243, %p244
      %p246 = scmp.le.s32.totalorder 1, %s18
      %p247 = scmp.lt.s32.totalorder %s18, 5
      %p248 = pnand %p246, %p247
      %p249 = pneg %p248
      // Predicated region
      $region9: #{tpu_custom_call.1} parent=5 // pred_check
        _
      $region10: #{tpu_custom_call.1} parent=5 // pred_check_branch
        %251 = sbr.rel (%p248) target = $region12
      $region11: #{tpu_custom_call.1} parent=5 // pred_region
        %s252 = ssub.s32 %s18, 1
        // Predicated region
        $region13: #{tpu_custom_call.1} parent=11 // pred_check
          %p253 = pneg %p65
        $region14: #{tpu_custom_call.1} parent=11 // pred_check_branch
          %255 = sbr.rel (%p253) target = $region16
        $region15: #{tpu_custom_call.1} parent=11 // pred_region
          _
        $region16: #{tpu_custom_call.1} parent=11 // pred_fallthru
          _
        // Predicated region
        $region17: #{tpu_custom_call.1} parent=11 // pred_check
          %p256 = pneg %p86
        $region18: #{tpu_custom_call.1} parent=11 // pred_check_branch
          %258 = sbr.rel (%p256) target = $region20
        $region19: #{tpu_custom_call.1} parent=11 // pred_region
          _
        $region20: #{tpu_custom_call.1} parent=11 // pred_fallthru
          _
        // Predicated region
        $region21: #{tpu_custom_call.1} parent=11 // pred_check
          %p259 = pneg %p107
        $region22: #{tpu_custom_call.1} parent=11 // pred_check_branch
          %261 = sbr.rel (%p259) target = $region24
        $region23: #{tpu_custom_call.1} parent=11 // pred_region
          _
        $region24: #{tpu_custom_call.1} parent=11 // pred_fallthru
          _
        // Predicated region
        $region25: #{tpu_custom_call.1} parent=11 // pred_check
          %p262 = pneg %p128
        $region26: #{tpu_custom_call.1} parent=11 // pred_check_branch
          %264 = sbr.rel (%p262) target = $region28
        $region27: #{tpu_custom_call.1} parent=11 // pred_region
          _
        $region28: #{tpu_custom_call.1} parent=11 // pred_fallthru
          _
        // Predicated region
        $region29: #{tpu_custom_call.1} parent=11 // pred_check
          %p265 = pneg %p149
        $region30: #{tpu_custom_call.1} parent=11 // pred_check_branch
          %267 = sbr.rel (%p265) target = $region32
        $region31: #{tpu_custom_call.1} parent=11 // pred_region
          _
        $region32: #{tpu_custom_call.1} parent=11 // pred_fallthru
          _
        // Predicated region
        $region33: #{tpu_custom_call.1} parent=11 // pred_check
          %p268 = pneg %p170
        $region34: #{tpu_custom_call.1} parent=11 // pred_check_branch
          %270 = sbr.rel (%p268) target = $region36
        $region35: #{tpu_custom_call.1} parent=11 // pred_region
          _
        $region36: #{tpu_custom_call.1} parent=11 // pred_fallthru
          _
        // Predicated region
        $region37: #{tpu_custom_call.1} parent=11 // pred_check
          %p271 = pneg %p191
        $region38: #{tpu_custom_call.1} parent=11 // pred_check_branch
          %273 = sbr.rel (%p271) target = $region40
        $region39: #{tpu_custom_call.1} parent=11 // pred_region
          _
        $region40: #{tpu_custom_call.1} parent=11 // pred_fallthru
          _
        // Predicated region
        $region41: #{tpu_custom_call.1} parent=11 // pred_check
          %p274 = pneg %p212
        $region42: #{tpu_custom_call.1} parent=11 // pred_check_branch
          %276 = sbr.rel (%p274) target = $region44
        $region43: #{tpu_custom_call.1} parent=11 // pred_region
          _
        $region44: #{tpu_custom_call.1} parent=11 // pred_fallthru
          _
      $region12: #{tpu_custom_call.1} parent=5 // pred_fallthru
        _
      %p277 = scmp.lt.s32.totalorder %s18, 4
      // Predicated region
      $region45: #{tpu_custom_call.1} parent=5 // pred_check
        %p278 = pneg %p277
      $region46: #{tpu_custom_call.1} parent=5 // pred_check_branch
        %280 = sbr.rel (%p278) target = $region48
      $region47: #{tpu_custom_call.1} parent=5 // pred_region
        // Predicated region
        $region49: #{tpu_custom_call.1} parent=47 // pred_check
          %p281 = pneg %p38
        $region50: #{tpu_custom_call.1} parent=47 // pred_check_branch
          %283 = sbr.rel (%p281) target = $region52
        $region51: #{tpu_custom_call.1} parent=47 // pred_region
          %s284 = smul.u32 2, %s18
          %p285 = scmp.lt.s32.totalorder %s284, 7
          %s286 = scalar_select %p285, %s284, 7
          %s287 = smul.addr %s286, 4
          %s288 = scalar_lea.vmem %s0, %s287
          %s289 = smul.u32 2, %s18
        $region52: #{tpu_custom_call.1} parent=47 // pred_fallthru
          _
      $region48: #{tpu_custom_call.1} parent=5 // pred_fallthru
        _
      %p290 = scmp.le.s32.totalorder 1, %s18
      %p291 = scmp.lt.s32.totalorder %s18, 5
      %p292 = pnand %p290, %p291
      %p293 = pneg %p292
      // Predicated region
      $region53: #{tpu_custom_call.1} parent=5 // pred_check
        _
      $region54: #{tpu_custom_call.1} parent=5 // pred_check_branch
        %295 = sbr.rel (%p292) target = $region56
      $region55: #{tpu_custom_call.1} parent=5 // pred_region
        %s296 = ssub.s32 %s18, 1
        %s297 = smul.u32 2, %s23
        %p298 = scmp.lt.s32.totalorder %s297, 7
        %s299 = scalar_select %p298, %s297, 7
        %s300 = smul.addr %s299, 4
        %s301 = scalar_lea.vmem %s0, %s300
        %p302 = pneg %p44
        %p303 = pneg %p41
        %p304 = pneg %p65
        %p305 = pneg %p62
        %p306 = pneg %p86
        %p307 = pneg %p83
        %p308 = pneg %p107
        %p309 = pneg %p104
        %p310 = pneg %p128
        %p311 = pneg %p125
        %p312 = pneg %p149
        %p313 = pneg %p146
        %p314 = pneg %p170
        %p315 = pneg %p167
        %p316 = pneg %p191
        %p317 = pneg %p188
        %p318 = pneg %p212
        %p319 = pneg %p209
        %p320 = pneg %p238
        %p321 = pneg %p235
        %s322 = sand.u32 %s225, 1
        %s323 = scalar_lea.sflag [#allocation3], %s322
        %s324 = sand.u32 %s225, 1
        %s325 = smul.addr %s324, 16
        %s326 = scalar_lea.vmem [#allocation2], %s325
        %s327 = smul.u32 2, %s23
        %p328 = scmp.lt.s32.totalorder %s327, 7
        %s329 = scalar_select %p328, %s327, 7
        %s330 = smul.addr %s329, 4
        %s331 = scalar_lea.vmem %s0, %s330
        %s332 = smul.u32 2, %s23
        %s333 = smul.u32 2, %s23
        %v334 = vld [vmem:[%s1] sm:$0xff]
        %v335 = vld [vmem:[%s1 + $0x8] sm:$0xff]
        %v336 = vld [vmem:[%s1 + $0x10] sm:$0xff]
        %v337 = vld [vmem:[%s1 + $0x18] sm:$0xff]
        %v338 = vld [vmem:[%s1 + $0x20] sm:$0xff]
        %v339 = vld [vmem:[%s1 + $0x28] sm:$0xff]
        %v340 = vld [vmem:[%s1 + $0x30] sm:$0xff]
        %v341 = vld [vmem:[%s1 + $0x38] sm:$0xff]
        %v342 = vld [vmem:[%s1 + $0x40] sm:$0xff]
        %v343 = vld [vmem:[%s1 + $0x48] sm:$0xff]
        %v344 = vld [vmem:[%s1 + $0x50] sm:$0xff]
        %v345 = vld [vmem:[%s1 + $0x58] sm:$0xff]
        %v346 = vld [vmem:[%s1 + $0x60] sm:$0xff]
        %v347 = vld [vmem:[%s1 + $0x68] sm:$0xff]
        %v348 = vld [vmem:[%s1 + $0x70] sm:$0xff]
        %v349 = vld [vmem:[%s1 + $0x78] sm:$0xff]
        %v350 = vld [vmem:[%s2] sm:$0xff]
        %v351 = vld [vmem:[%s2 + $0x8] sm:$0xff]
        %v352 = vld [vmem:[%s2 + $0x10] sm:$0xff]
        %v353 = vld [vmem:[%s2 + $0x18] sm:$0xff]
        %v354 = vld [vmem:[%s2 + $0x20] sm:$0xff]
        %v355 = vld [vmem:[%s2 + $0x28] sm:$0xff]
        %v356 = vld [vmem:[%s2 + $0x30] sm:$0xff]
        %v357 = vld [vmem:[%s2 + $0x38] sm:$0xff]
        %v358 = vld [vmem:[%s2 + $0x40] sm:$0xff]
        %v359 = vld [vmem:[%s2 + $0x48] sm:$0xff]
        %v360 = vld [vmem:[%s2 + $0x50] sm:$0xff]
        %v361 = vld [vmem:[%s2 + $0x58] sm:$0xff]
        %v362 = vld [vmem:[%s2 + $0x60] sm:$0xff]
        %v363 = vld [vmem:[%s2 + $0x68] sm:$0xff]
        %v364 = vld [vmem:[%s2 + $0x70] sm:$0xff]
        %v365 = vld [vmem:[%s2 + $0x78] sm:$0xff]
        %v366 = vld [vmem:[%s331] sm:$0x7]
        %368 = vset.pattern.permute.xlu0 0
        %369 = vperm.xlu0 %368, %v334
        %v370 = vpop.permute.xlu0 %369
        %373 = vset.pattern.permute.xlu0 0
        %374 = vperm.xlu0 %373, %v335
        %v375 = vpop.permute.xlu0 %374
        %378 = vset.pattern.permute.xlu0 0
        %379 = vperm.xlu0 %378, %v336
        %v380 = vpop.permute.xlu0 %379
        %383 = vset.pattern.permute.xlu0 0
        %384 = vperm.xlu0 %383, %v337
        %v385 = vpop.permute.xlu0 %384
        %388 = vset.pattern.permute.xlu0 0
        %389 = vperm.xlu0 %388, %v338
        %v390 = vpop.permute.xlu0 %389
        %393 = vset.pattern.permute.xlu0 0
        %394 = vperm.xlu0 %393, %v339
        %v395 = vpop.permute.xlu0 %394
        %398 = vset.pattern.permute.xlu0 0
        %399 = vperm.xlu0 %398, %v340
        %v400 = vpop.permute.xlu0 %399
        %403 = vset.pattern.permute.xlu0 0
        %404 = vperm.xlu0 %403, %v341
        %v405 = vpop.permute.xlu0 %404
        %408 = vset.pattern.permute.xlu0 0
        %409 = vperm.xlu0 %408, %v342
        %v410 = vpop.permute.xlu0 %409
        %413 = vset.pattern.permute.xlu0 0
        %414 = vperm.xlu0 %413, %v343
        %v415 = vpop.permute.xlu0 %414
        %418 = vset.pattern.permute.xlu0 0
        %419 = vperm.xlu0 %418, %v344
        %v420 = vpop.permute.xlu0 %419
        %423 = vset.pattern.permute.xlu0 0
        %424 = vperm.xlu0 %423, %v345
        %v425 = vpop.permute.xlu0 %424
        %428 = vset.pattern.permute.xlu0 0
        %429 = vperm.xlu0 %428, %v346
        %v430 = vpop.permute.xlu0 %429
        %433 = vset.pattern.permute.xlu0 0
        %434 = vperm.xlu0 %433, %v347
        %v435 = vpop.permute.xlu0 %434
        %438 = vset.pattern.permute.xlu0 0
        %439 = vperm.xlu0 %438, %v348
        %v440 = vpop.permute.xlu0 %439
        %443 = vset.pattern.permute.xlu0 0
        %444 = vperm.xlu0 %443, %v349
        %v445 = vpop.permute.xlu0 %444
        %v447 = vperm.slane %v366, 0
        %v448 = vmul.f32 %v370, %v447
        %v449 = vmul.f32 %v375, %v447
        %v450 = vmul.f32 %v380, %v447
        %v451 = vmul.f32 %v385, %v447
        %v452 = vmul.f32 %v390, %v447
        %v453 = vmul.f32 %v395, %v447
        %v454 = vmul.f32 %v400, %v447
        %v455 = vmul.f32 %v405, %v447
        %v456 = vmul.f32 %v410, %v447
        %v457 = vmul.f32 %v415, %v447
        %v458 = vmul.f32 %v420, %v447
        %v459 = vmul.f32 %v425, %v447
        %v460 = vmul.f32 %v430, %v447
        %v461 = vmul.f32 %v435, %v447
        %v462 = vmul.f32 %v440, %v447
        %v463 = vmul.f32 %v445, %v447
        %464 = vset.pattern.permute.xlu0 1
        %465 = vperm.xlu0 %464, %v334
        %v466 = vpop.permute.xlu0 %465
        %468 = vset.pattern.permute.xlu0 1
        %469 = vperm.xlu0 %468, %v335
        %v470 = vpop.permute.xlu0 %469
        %472 = vset.pattern.permute.xlu0 1
        %473 = vperm.xlu0 %472, %v336
        %v474 = vpop.permute.xlu0 %473
        %476 = vset.pattern.permute.xlu0 1
        %477 = vperm.xlu0 %476, %v337
        %v478 = vpop.permute.xlu0 %477
        %480 = vset.pattern.permute.xlu0 1
        %481 = vperm.xlu0 %480, %v338
        %v482 = vpop.permute.xlu0 %481
        %484 = vset.pattern.permute.xlu0 1
        %485 = vperm.xlu0 %484, %v339
        %v486 = vpop.permute.xlu0 %485
        %488 = vset.pattern.permute.xlu0 1
        %489 = vperm.xlu0 %488, %v340
        %v490 = vpop.permute.xlu0 %489
        %492 = vset.pattern.permute.xlu0 1
        %493 = vperm.xlu0 %492, %v341
        %v494 = vpop.permute.xlu0 %493
        %496 = vset.pattern.permute.xlu0 1
        %497 = vperm.xlu0 %496, %v342
        %v498 = vpop.permute.xlu0 %497
        %500 = vset.pattern.permute.xlu0 1
        %501 = vperm.xlu0 %500, %v343
        %v502 = vpop.permute.xlu0 %501
        %504 = vset.pattern.permute.xlu0 1
        %505 = vperm.xlu0 %504, %v344
        %v506 = vpop.permute.xlu0 %505
        %508 = vset.pattern.permute.xlu0 1
        %509 = vperm.xlu0 %508, %v345
        %v510 = vpop.permute.xlu0 %509
        %512 = vset.pattern.permute.xlu0 1
        %513 = vperm.xlu0 %512, %v346
        %v514 = vpop.permute.xlu0 %513
        %516 = vset.pattern.permute.xlu0 1
        %517 = vperm.xlu0 %516, %v347
        %v518 = vpop.permute.xlu0 %517
        %520 = vset.pattern.permute.xlu0 1
        %521 = vperm.xlu0 %520, %v348
        %v522 = vpop.permute.xlu0 %521
        %524 = vset.pattern.permute.xlu0 1
        %525 = vperm.xlu0 %524, %v349
        %v526 = vpop.permute.xlu0 %525
        %v528 = vperm.slane %v366, 1
        %v529 = vmul.f32 %v466, %v528
        %v530 = vmul.f32 %v470, %v528
        %v531 = vmul.f32 %v474, %v528
        %v532 = vmul.f32 %v478, %v528
        %v533 = vmul.f32 %v482, %v528
        %v534 = vmul.f32 %v486, %v528
        %v535 = vmul.f32 %v490, %v528
        %v536 = vmul.f32 %v494, %v528
        %v537 = vmul.f32 %v498, %v528
        %v538 = vmul.f32 %v502, %v528
        %v539 = vmul.f32 %v506, %v528
        %v540 = vmul.f32 %v510, %v528
        %v541 = vmul.f32 %v514, %v528
        %v542 = vmul.f32 %v518, %v528
        %v543 = vmul.f32 %v522, %v528
        %v544 = vmul.f32 %v526, %v528
        %v545 = vadd.f32 %v448, %v529
        %v546 = vadd.f32 %v449, %v530
        %v547 = vadd.f32 %v450, %v531
        %v548 = vadd.f32 %v451, %v532
        %v549 = vadd.f32 %v452, %v533
        %v550 = vadd.f32 %v453, %v534
        %v551 = vadd.f32 %v454, %v535
        %v552 = vadd.f32 %v455, %v536
        %v553 = vadd.f32 %v456, %v537
        %v554 = vadd.f32 %v457, %v538
        %v555 = vadd.f32 %v458, %v539
        %v556 = vadd.f32 %v459, %v540
        %v557 = vadd.f32 %v460, %v541
        %v558 = vadd.f32 %v461, %v542
        %v559 = vadd.f32 %v462, %v543
        %v560 = vadd.f32 %v463, %v544
        %561 = vset.pattern.permute.xlu0 2
        %562 = vperm.xlu0 %561, %v334
        %v563 = vpop.permute.xlu0 %562
        %565 = vset.pattern.permute.xlu0 2
        %566 = vperm.xlu0 %565, %v335
        %v567 = vpop.permute.xlu0 %566
        %569 = vset.pattern.permute.xlu0 2
        %570 = vperm.xlu0 %569, %v336
        %v571 = vpop.permute.xlu0 %570
        %573 = vset.pattern.permute.xlu0 2
        %574 = vperm.xlu0 %573, %v337
        %v575 = vpop.permute.xlu0 %574
        %577 = vset.pattern.permute.xlu0 2
        %578 = vperm.xlu0 %577, %v338
        %v579 = vpop.permute.xlu0 %578
        %581 = vset.pattern.permute.xlu0 2
        %582 = vperm.xlu0 %581, %v339
        %v583 = vpop.permute.xlu0 %582
        %585 = vset.pattern.permute.xlu0 2
        %586 = vperm.xlu0 %585, %v340
        %v587 = vpop.permute.xlu0 %586
        %589 = vset.pattern.permute.xlu0 2
        %590 = vperm.xlu0 %589, %v341
        %v591 = vpop.permute.xlu0 %590
        %593 = vset.pattern.permute.xlu0 2
        %594 = vperm.xlu0 %593, %v342
        %v595 = vpop.permute.xlu0 %594
        %597 = vset.pattern.permute.xlu0 2
        %598 = vperm.xlu0 %597, %v343
        %v599 = vpop.permute.xlu0 %598
        %601 = vset.pattern.permute.xlu0 2
        %602 = vperm.xlu0 %601, %v344
        %v603 = vpop.permute.xlu0 %602
        %605 = vset.pattern.permute.xlu0 2
        %606 = vperm.xlu0 %605, %v345
        %v607 = vpop.permute.xlu0 %606
        %609 = vset.pattern.permute.xlu0 2
        %610 = vperm.xlu0 %609, %v346
        %v611 = vpop.permute.xlu0 %610
        %613 = vset.pattern.permute.xlu0 2
        %614 = vperm.xlu0 %613, %v347
        %v615 = vpop.permute.xlu0 %614
        %617 = vset.pattern.permute.xlu0 2
        %618 = vperm.xlu0 %617, %v348
        %v619 = vpop.permute.xlu0 %618
        %621 = vset.pattern.permute.xlu0 2
        %622 = vperm.xlu0 %621, %v349
        %v623 = vpop.permute.xlu0 %622
        %v625 = vperm.slane %v366, 2
        %v626 = vmul.f32 %v563, %v625
        %v627 = vmul.f32 %v567, %v625
        %v628 = vmul.f32 %v571, %v625
        %v629 = vmul.f32 %v575, %v625
        %v630 = vmul.f32 %v579, %v625
        %v631 = vmul.f32 %v583, %v625
        %v632 = vmul.f32 %v587, %v625
        %v633 = vmul.f32 %v591, %v625
        %v634 = vmul.f32 %v595, %v625
        %v635 = vmul.f32 %v599, %v625
        %v636 = vmul.f32 %v603, %v625
        %v637 = vmul.f32 %v607, %v625
        %v638 = vmul.f32 %v611, %v625
        %v639 = vmul.f32 %v615, %v625
        %v640 = vmul.f32 %v619, %v625
        %v641 = vmul.f32 %v623, %v625
        %v642 = vadd.f32 %v545, %v626
        %v643 = vadd.f32 %v546, %v627
        %v644 = vadd.f32 %v547, %v628
        %v645 = vadd.f32 %v548, %v629
        %v646 = vadd.f32 %v549, %v630
        %v647 = vadd.f32 %v550, %v631
        %v648 = vadd.f32 %v551, %v632
        %v649 = vadd.f32 %v552, %v633
        %v650 = vadd.f32 %v553, %v634
        %v651 = vadd.f32 %v554, %v635
        %v652 = vadd.f32 %v555, %v636
        %v653 = vadd.f32 %v556, %v637
        %v654 = vadd.f32 %v557, %v638
        %v655 = vadd.f32 %v558, %v639
        %v656 = vadd.f32 %v559, %v640
        %v657 = vadd.f32 %v560, %v641
        %659 = vset.pattern.permute.xlu0 0
        %660 = vperm.xlu0 %659, %v350
        %v661 = vpop.permute.xlu0 %660
        %664 = vset.pattern.permute.xlu0 0
        %665 = vperm.xlu0 %664, %v351
        %v666 = vpop.permute.xlu0 %665
        %669 = vset.pattern.permute.xlu0 0
        %670 = vperm.xlu0 %669, %v352
        %v671 = vpop.permute.xlu0 %670
        %674 = vset.pattern.permute.xlu0 0
        %675 = vperm.xlu0 %674, %v353
        %v676 = vpop.permute.xlu0 %675
        %679 = vset.pattern.permute.xlu0 0
        %680 = vperm.xlu0 %679, %v354
        %v681 = vpop.permute.xlu0 %680
        %684 = vset.pattern.permute.xlu0 0
        %685 = vperm.xlu0 %684, %v355
        %v686 = vpop.permute.xlu0 %685
        %689 = vset.pattern.permute.xlu0 0
        %690 = vperm.xlu0 %689, %v356
        %v691 = vpop.permute.xlu0 %690
        %694 = vset.pattern.permute.xlu0 0
        %695 = vperm.xlu0 %694, %v357
        %v696 = vpop.permute.xlu0 %695
        %699 = vset.pattern.permute.xlu0 0
        %700 = vperm.xlu0 %699, %v358
        %v701 = vpop.permute.xlu0 %700
        %704 = vset.pattern.permute.xlu0 0
        %705 = vperm.xlu0 %704, %v359
        %v706 = vpop.permute.xlu0 %705
        %709 = vset.pattern.permute.xlu0 0
        %710 = vperm.xlu0 %709, %v360
        %v711 = vpop.permute.xlu0 %710
        %714 = vset.pattern.permute.xlu0 0
        %715 = vperm.xlu0 %714, %v361
        %v716 = vpop.permute.xlu0 %715
        %719 = vset.pattern.permute.xlu0 0
        %720 = vperm.xlu0 %719, %v362
        %v721 = vpop.permute.xlu0 %720
        %724 = vset.pattern.permute.xlu0 0
        %725 = vperm.xlu0 %724, %v363
        %v726 = vpop.permute.xlu0 %725
        %729 = vset.pattern.permute.xlu0 0
        %730 = vperm.xlu0 %729, %v364
        %v731 = vpop.permute.xlu0 %730
        %734 = vset.pattern.permute.xlu0 0
        %735 = vperm.xlu0 %734, %v365
        %v736 = vpop.permute.xlu0 %735
        %v738 = vadd.f32 %v642, %v661
        %v739 = vadd.f32 %v643, %v666
        %v740 = vadd.f32 %v644, %v671
        %v741 = vadd.f32 %v645, %v676
        %v742 = vadd.f32 %v646, %v681
        %v743 = vadd.f32 %v647, %v686
        %v744 = vadd.f32 %v648, %v691
        %v745 = vadd.f32 %v649, %v696
        %v746 = vadd.f32 %v650, %v701
        %v747 = vadd.f32 %v651, %v706
        %v748 = vadd.f32 %v652, %v711
        %v749 = vadd.f32 %v653, %v716
        %v750 = vadd.f32 %v654, %v721
        %v751 = vadd.f32 %v655, %v726
        %v752 = vadd.f32 %v656, %v731
        %v753 = vadd.f32 %v657, %v736
        %v754 = vand.u32 2147483647, %v738
        %vm755 = vcmp.le.f32.partialorder %v754, 0.7853982
        %vm756 = vcmp.lt.s32.totalorder %v738, 0
        %v757 = vand.u32 %v738, 2139095040
        %v758 = vshrl.u32 %v757, 23
        %v759 = vsub.s32 %v758, 127
        %v760 = vand.u32 2147483647, %v738
        %v761 = vand.u32 %v760, 8388607
        %v762 = vor.u32 %v761, 8388608
        %v763 = vsub.s32 0, %v762
        %v764 = vadd.s32 %v759, 1
        %vm765 = vcmp.gt.s32.totalorder %v764, 0
        %v766 = vsel %vm765, %v764, 0
        %v767 = vshrl.u32 %v766, 5
        %v768 = vand.u32 %v766, 31
        %v769 = vsub.s32 32, %v768
        %v770 = vshrl.u32 683565275, %v769
        %v771 = vshll.u32 683565275, %v768
        %v772 = vshrl.u32 2475754826, %v769
        %v773 = vor.u32 %v771, %v772
        %v774 = vshll.u32 2475754826, %v768
        %v775 = vshrl.u32 2131351028, %v769
        %v776 = vor.u32 %v774, %v775
        %v777 = vshll.u32 2131351028, %v768
        %v778 = vshrl.u32 2102212464, %v769
        %v779 = vor.u32 %v777, %v778
        %v780 = vshll.u32 2102212464, %v768
        %v781 = vshrl.u32 920167782, %v769
        %v782 = vor.u32 %v780, %v781
        %v783 = vshll.u32 920167782, %v768
        %v784 = vshrl.u32 1326507024, %v769
        %v785 = vor.u32 %v783, %v784
        %vm786 = vcmp.lt.s32.totalorder %v767, 1
        %vm787 = vcmp.lt.s32.totalorder %v767, 2
        %vm788 = vcmp.lt.s32.totalorder %v767, 3
        %vm789 = vcmp.lt.s32.totalorder %v767, 4
        %v790 = vsel %vm786, %v770, %v773
        %v791 = vsel %vm789, %v779, 2102212464
        %v792 = vsel %vm788, %v776, %v791
        %v793 = vsel %vm787, %v790, %v792
        %v794 = vsel %vm786, %v773, %v776
        %v795 = vsel %vm789, %v782, 920167782
        %v796 = vsel %vm788, %v779, %v795
        %v797 = vsel %vm787, %v794, %v796
        %v798 = vsel %vm786, %v776, %v779
        %v799 = vsel %vm789, %v785, 1326507024
        %v800 = vsel %vm788, %v782, %v799
        %v801 = vsel %vm787, %v798, %v800
        %v802 = vshll.u32 %v762, 8
        %v803 = vand.u32 %v802, 65535
        %v804 = vshrl.u32 %v802, 16
        %v805 = vand.u32 %v801, 65535
        %v806 = vshrl.u32 %v801, 16
        %v807 = vmul.u32 %v803, %v805
        %v808 = vmul.u32 %v803, %v806
        %v809 = vmul.u32 %v804, %v805
        %v810 = vmul.u32 %v804, %v806
        %v811 = vshll.u32 %v808, 16
        %v812 = vshrl.u32 %v808, 16
        %v813 = vshll.u32 %v809, 16
        %v814 = vshrl.u32 %v809, 16
        %vm815 = vc.u32 %v807, %v811
        %v816 = vsel %vm815, 1, 0
        %v817 = vadd.s32 %v807, %v811
        %v818 = vadd.s32 %v810, %v816
        %vm819 = vc.u32 %v817, %v813
        %v820 = vsel %vm819, 1, 0
        %v821 = vadd.s32 %v817, %v813
        %v822 = vadd.s32 %v818, %v820
        %v823 = vadd.s32 %v822, %v812
        %v824 = vadd.s32 %v823, %v814
        %v825 = vand.u32 %v802, 65535
        %v826 = vshrl.u32 %v802, 16
        %v827 = vand.u32 %v797, 65535
        %v828 = vshrl.u32 %v797, 16
        %v829 = vmul.u32 %v825, %v827
        %v830 = vmul.u32 %v825, %v828
        %v831 = vmul.u32 %v826, %v827
        %v832 = vmul.u32 %v826, %v828
        %v833 = vshll.u32 %v830, 16
        %v834 = vshrl.u32 %v830, 16
        %v835 = vshll.u32 %v831, 16
        %v836 = vshrl.u32 %v831, 16
        %vm837 = vc.u32 %v829, %v833
        %v838 = vsel %vm837, 1, 0
        %v839 = vadd.s32 %v829, %v833
        %v840 = vadd.s32 %v832, %v838
        %vm841 = vc.u32 %v839, %v835
        %v842 = vsel %vm841, 1, 0
        %v843 = vadd.s32 %v839, %v835
        %v844 = vadd.s32 %v840, %v842
        %v845 = vadd.s32 %v844, %v834
        %v846 = vadd.s32 %v845, %v836
        %v847 = vmul.u32 %v802, %v793
        %v848 = vadd.s32 %v824, %v843
        %vm849 = vc.u32 %v824, %v843
        %v850 = vadd.s32 %v846, 1
        %v851 = vsel %vm849, %v850, %v846
        %v852 = vadd.s32 %v847, %v851
        %v853 = vadd.s32 %v852, 536870912
        %v854 = vshrl.u32 %v853, 30
        %v855 = vshll.u32 %v854, 30
        %v856 = vsub.s32 %v852, %v855
        %vm857 = vcmp.lt.s32.totalorder %v856, 0
        %v858 = vsub.s32 0, %v856
        %v859 = vsel %vm857, %v858, %v856
        %v860 = vclz %v859
        %v861 = vsub.s32 %v860, 2
        %vm862 = vcmp.gt.s32.totalorder 0, %v861
        %v863 = vsel %vm862, 0, %v861
        %v864 = vsub.s32 32, %v863
        %v865 = vshll.u32 %v856, %v863
        %v866 = vshrl.u32 %v848, %v864
        %v867 = vor.u32 %v865, %v866
        %v868 = vsub.s32 4294967266, %v863
        %v869 = vadd.s32 %v868, 127
        %v870 = vshll.u32 %v869, 23
        %v871 = vor.u32 4788187, %v870
        %v872 = vand.u32 2147483647, %v871
        %v874 = vcvt.s32.f32 %v867
        %v875 = vmul.f32 %v874, %v872
        %v876 = vxor.u32 %v875, 2147483648
        %v877 = vsel %vm756, %v876, %v875
        %v878 = vsub.s32 4, %v854
        %v879 = vsel %vm756, %v878, %v854
        %v880 = vsel %vm755, %v738, %v877
        %v881 = vsel %vm755, 0, %v879
        %v882 = vmul.f32 %v880, %v880
        %v883 = vmul.f32 %v882, -0.001358992
        %v884 = vadd.f32 %v883, 0.041655596
        %v885 = vmul.f32 %v882, %v884
        %v886 = vadd.f32 %v885, -0.4999988
        %v887 = vmul.f32 %v882, %v886
        %v888 = vadd.f32 1.0, %v887
        %v889 = vmul.f32 %v880, %v880
        %v890 = vmul.f32 %v889, -0.00019511016
        %v891 = vadd.f32 %v890, 0.008332121
        %v892 = vmul.f32 %v889, %v891
        %v893 = vadd.f32 %v892, -0.16666654
        %v894 = vmul.f32 %v889, %v893
        %v895 = vadd.f32 %v894, 1.0
        %v896 = vmul.f32 %v895, %v880
        %vm897 = vweird.f32 %v738
        %v898 = vadd.s32 %v881, 3
        %v899 = vand.u32 %v898, 3
        %vm900 = vcmp.lt.s32.totalorder %v899, 2
        %vm901 = vcmp.eq.s32.totalorder %v899, 0
        %v902 = vxor.u32 %v896, 2147483648
        %v903 = vsel %vm901, %v888, %v902
        %vm904 = vcmp.eq.s32.totalorder %v899, 2
        %v905 = vxor.u32 %v888, 2147483648
        %v906 = vsel %vm904, %v905, %v896
        %v907 = vsel %vm900, %v903, %v906
        %v908 = vsel %vm897, nan, %v907
        %v909 = vand.u32 2147483647, %v739
        %vm910 = vcmp.le.f32.partialorder %v909, 0.7853982
        %vm911 = vcmp.lt.s32.totalorder %v739, 0
        %v912 = vand.u32 %v739, 2139095040
        %v913 = vshrl.u32 %v912, 23
        %v914 = vsub.s32 %v913, 127
        %v915 = vand.u32 2147483647, %v739
        %v916 = vand.u32 %v915, 8388607
        %v917 = vor.u32 %v916, 8388608
        %v918 = vsub.s32 0, %v917
        %v919 = vadd.s32 %v914, 1
        %vm920 = vcmp.gt.s32.totalorder %v919, 0
        %v921 = vsel %vm920, %v919, 0
        %v922 = vshrl.u32 %v921, 5
        %v923 = vand.u32 %v921, 31
        %v924 = vsub.s32 32, %v923
        %v925 = vshrl.u32 683565275, %v924
        %v926 = vshll.u32 683565275, %v923
        %v927 = vshrl.u32 2475754826, %v924
        %v928 = vor.u32 %v926, %v927
        %v929 = vshll.u32 2475754826, %v923
        %v930 = vshrl.u32 2131351028, %v924
        %v931 = vor.u32 %v929, %v930
        %v932 = vshll.u32 2131351028, %v923
        %v933 = vshrl.u32 2102212464, %v924
        %v934 = vor.u32 %v932, %v933
        %v935 = vshll.u32 2102212464, %v923
        %v936 = vshrl.u32 920167782, %v924
        %v937 = vor.u32 %v935, %v936
        %v938 = vshll.u32 920167782, %v923
        %v939 = vshrl.u32 1326507024, %v924
        %v940 = vor.u32 %v938, %v939
        %vm941 = vcmp.lt.s32.totalorder %v922, 1
        %vm942 = vcmp.lt.s32.totalorder %v922, 2
        %vm943 = vcmp.lt.s32.totalorder %v922, 3
        %vm944 = vcmp.lt.s32.totalorder %v922, 4
        %v945 = vsel %vm941, %v925, %v928
        %v946 = vsel %vm944, %v934, 2102212464
        %v947 = vsel %vm943, %v931, %v946
        %v948 = vsel %vm942, %v945, %v947
        %v949 = vsel %vm941, %v928, %v931
        %v950 = vsel %vm944, %v937, 920167782
        %v951 = vsel %vm943, %v934, %v950
        %v952 = vsel %vm942, %v949, %v951
        %v953 = vsel %vm941, %v931, %v934
        %v954 = vsel %vm944, %v940, 1326507024
        %v955 = vsel %vm943, %v937, %v954
        %v956 = vsel %vm942, %v953, %v955
        %v957 = vshll.u32 %v917, 8
        %v958 = vand.u32 %v957, 65535
        %v959 = vshrl.u32 %v957, 16
        %v960 = vand.u32 %v956, 65535
        %v961 = vshrl.u32 %v956, 16
        %v962 = vmul.u32 %v958, %v960
        %v963 = vmul.u32 %v958, %v961
        %v964 = vmul.u32 %v959, %v960
        %v965 = vmul.u32 %v959, %v961
        %v966 = vshll.u32 %v963, 16
        %v967 = vshrl.u32 %v963, 16
        %v968 = vshll.u32 %v964, 16
        %v969 = vshrl.u32 %v964, 16
        %vm970 = vc.u32 %v962, %v966
        %v971 = vsel %vm970, 1, 0
        %v972 = vadd.s32 %v962, %v966
        %v973 = vadd.s32 %v965, %v971
        %vm974 = vc.u32 %v972, %v968
        %v975 = vsel %vm974, 1, 0
        %v976 = vadd.s32 %v972, %v968
        %v977 = vadd.s32 %v973, %v975
        %v978 = vadd.s32 %v977, %v967
        %v979 = vadd.s32 %v978, %v969
        %v980 = vand.u32 %v957, 65535
        %v981 = vshrl.u32 %v957, 16
        %v982 = vand.u32 %v952, 65535
        %v983 = vshrl.u32 %v952, 16
        %v984 = vmul.u32 %v980, %v982
        %v985 = vmul.u32 %v980, %v983
        %v986 = vmul.u32 %v981, %v982
        %v987 = vmul.u32 %v981, %v983
        %v988 = vshll.u32 %v985, 16
        %v989 = vshrl.u32 %v985, 16
        %v990 = vshll.u32 %v986, 16
        %v991 = vshrl.u32 %v986, 16
        %vm992 = vc.u32 %v984, %v988
        %v993 = vsel %vm992, 1, 0
        %v994 = vadd.s32 %v984, %v988
        %v995 = vadd.s32 %v987, %v993
        %vm996 = vc.u32 %v994, %v990
        %v997 = vsel %vm996, 1, 0
        %v998 = vadd.s32 %v994, %v990
        %v999 = vadd.s32 %v995, %v997
        %v1000 = vadd.s32 %v999, %v989
        %v1001 = vadd.s32 %v1000, %v991
        %v1002 = vmul.u32 %v957, %v948
        %v1003 = vadd.s32 %v979, %v998
        %vm1004 = vc.u32 %v979, %v998
        %v1005 = vadd.s32 %v1001, 1
        %v1006 = vsel %vm1004, %v1005, %v1001
        %v1007 = vadd.s32 %v1002, %v1006
        %v1008 = vadd.s32 %v1007, 536870912
        %v1009 = vshrl.u32 %v1008, 30
        %v1010 = vshll.u32 %v1009, 30
        %v1011 = vsub.s32 %v1007, %v1010
        %vm1012 = vcmp.lt.s32.totalorder %v1011, 0
        %v1013 = vsub.s32 0, %v1011
        %v1014 = vsel %vm1012, %v1013, %v1011
        %v1015 = vclz %v1014
        %v1016 = vsub.s32 %v1015, 2
        %vm1017 = vcmp.gt.s32.totalorder 0, %v1016
        %v1018 = vsel %vm1017, 0, %v1016
        %v1019 = vsub.s32 32, %v1018
        %v1020 = vshll.u32 %v1011, %v1018
        %v1021 = vshrl.u32 %v1003, %v1019
        %v1022 = vor.u32 %v1020, %v1021
        %v1023 = vsub.s32 4294967266, %v1018
        %v1024 = vadd.s32 %v1023, 127
        %v1025 = vshll.u32 %v1024, 23
        %v1026 = vor.u32 4788187, %v1025
        %v1027 = vand.u32 2147483647, %v1026
        %v1029 = vcvt.s32.f32 %v1022
        %v1030 = vmul.f32 %v1029, %v1027
        %v1031 = vxor.u32 %v1030, 2147483648
        %v1032 = vsel %vm911, %v1031, %v1030
        %v1033 = vsub.s32 4, %v1009
        %v1034 = vsel %vm911, %v1033, %v1009
        %v1035 = vsel %vm910, %v739, %v1032
        %v1036 = vsel %vm910, 0, %v1034
        %v1037 = vmul.f32 %v1035, %v1035
        %v1038 = vmul.f32 %v1037, -0.001358992
        %v1039 = vadd.f32 %v1038, 0.041655596
        %v1040 = vmul.f32 %v1037, %v1039
        %v1041 = vadd.f32 %v1040, -0.4999988
        %v1042 = vmul.f32 %v1037, %v1041
        %v1043 = vadd.f32 1.0, %v1042
        %v1044 = vmul.f32 %v1035, %v1035
        %v1045 = vmul.f32 %v1044, -0.00019511016
        %v1046 = vadd.f32 %v1045, 0.008332121
        %v1047 = vmul.f32 %v1044, %v1046
        %v1048 = vadd.f32 %v1047, -0.16666654
        %v1049 = vmul.f32 %v1044, %v1048
        %v1050 = vadd.f32 %v1049, 1.0
        %v1051 = vmul.f32 %v1050, %v1035
        %vm1052 = vweird.f32 %v739
        %v1053 = vadd.s32 %v1036, 3
        %v1054 = vand.u32 %v1053, 3
        %vm1055 = vcmp.lt.s32.totalorder %v1054, 2
        %vm1056 = vcmp.eq.s32.totalorder %v1054, 0
        %v1057 = vxor.u32 %v1051, 2147483648
        %v1058 = vsel %vm1056, %v1043, %v1057
        %vm1059 = vcmp.eq.s32.totalorder %v1054, 2
        %v1060 = vxor.u32 %v1043, 2147483648
        %v1061 = vsel %vm1059, %v1060, %v1051
        %v1062 = vsel %vm1055, %v1058, %v1061
        %v1063 = vsel %vm1052, nan, %v1062
        %v1064 = vand.u32 2147483647, %v740
        %vm1065 = vcmp.le.f32.partialorder %v1064, 0.7853982
        %vm1066 = vcmp.lt.s32.totalorder %v740, 0
        %v1067 = vand.u32 %v740, 2139095040
        %v1068 = vshrl.u32 %v1067, 23
        %v1069 = vsub.s32 %v1068, 127
        %v1070 = vand.u32 2147483647, %v740
        %v1071 = vand.u32 %v1070, 8388607
        %v1072 = vor.u32 %v1071, 8388608
        %v1073 = vsub.s32 0, %v1072
        %v1074 = vadd.s32 %v1069, 1
        %vm1075 = vcmp.gt.s32.totalorder %v1074, 0
        %v1076 = vsel %vm1075, %v1074, 0
        %v1077 = vshrl.u32 %v1076, 5
        %v1078 = vand.u32 %v1076, 31
        %v1079 = vsub.s32 32, %v1078
        %v1080 = vshrl.u32 683565275, %v1079
        %v1081 = vshll.u32 683565275, %v1078
        %v1082 = vshrl.u32 2475754826, %v1079
        %v1083 = vor.u32 %v1081, %v1082
        %v1084 = vshll.u32 2475754826, %v1078
        %v1085 = vshrl.u32 2131351028, %v1079
        %v1086 = vor.u32 %v1084, %v1085
        %v1087 = vshll.u32 2131351028, %v1078
        %v1088 = vshrl.u32 2102212464, %v1079
        %v1089 = vor.u32 %v1087, %v1088
        %v1090 = vshll.u32 2102212464, %v1078
        %v1091 = vshrl.u32 920167782, %v1079
        %v1092 = vor.u32 %v1090, %v1091
        %v1093 = vshll.u32 920167782, %v1078
        %v1094 = vshrl.u32 1326507024, %v1079
        %v1095 = vor.u32 %v1093, %v1094
        %vm1096 = vcmp.lt.s32.totalorder %v1077, 1
        %vm1097 = vcmp.lt.s32.totalorder %v1077, 2
        %vm1098 = vcmp.lt.s32.totalorder %v1077, 3
        %vm1099 = vcmp.lt.s32.totalorder %v1077, 4
        %v1100 = vsel %vm1096, %v1080, %v1083
        %v1101 = vsel %vm1099, %v1089, 2102212464
        %v1102 = vsel %vm1098, %v1086, %v1101
        %v1103 = vsel %vm1097, %v1100, %v1102
        %v1104 = vsel %vm1096, %v1083, %v1086
        %v1105 = vsel %vm1099, %v1092, 920167782
        %v1106 = vsel %vm1098, %v1089, %v1105
        %v1107 = vsel %vm1097, %v1104, %v1106
        %v1108 = vsel %vm1096, %v1086, %v1089
        %v1109 = vsel %vm1099, %v1095, 1326507024
        %v1110 = vsel %vm1098, %v1092, %v1109
        %v1111 = vsel %vm1097, %v1108, %v1110
        %v1112 = vshll.u32 %v1072, 8
        %v1113 = vand.u32 %v1112, 65535
        %v1114 = vshrl.u32 %v1112, 16
        %v1115 = vand.u32 %v1111, 65535
        %v1116 = vshrl.u32 %v1111, 16
        %v1117 = vmul.u32 %v1113, %v1115
        %v1118 = vmul.u32 %v1113, %v1116
        %v1119 = vmul.u32 %v1114, %v1115
        %v1120 = vmul.u32 %v1114, %v1116
        %v1121 = vshll.u32 %v1118, 16
        %v1122 = vshrl.u32 %v1118, 16
        %v1123 = vshll.u32 %v1119, 16
        %v1124 = vshrl.u32 %v1119, 16
        %vm1125 = vc.u32 %v1117, %v1121
        %v1126 = vsel %vm1125, 1, 0
        %v1127 = vadd.s32 %v1117, %v1121
        %v1128 = vadd.s32 %v1120, %v1126
        %vm1129 = vc.u32 %v1127, %v1123
        %v1130 = vsel %vm1129, 1, 0
        %v1131 = vadd.s32 %v1127, %v1123
        %v1132 = vadd.s32 %v1128, %v1130
        %v1133 = vadd.s32 %v1132, %v1122
        %v1134 = vadd.s32 %v1133, %v1124
        %v1135 = vand.u32 %v1112, 65535
        %v1136 = vshrl.u32 %v1112, 16
        %v1137 = vand.u32 %v1107, 65535
        %v1138 = vshrl.u32 %v1107, 16
        %v1139 = vmul.u32 %v1135, %v1137
        %v1140 = vmul.u32 %v1135, %v1138
        %v1141 = vmul.u32 %v1136, %v1137
        %v1142 = vmul.u32 %v1136, %v1138
        %v1143 = vshll.u32 %v1140, 16
        %v1144 = vshrl.u32 %v1140, 16
        %v1145 = vshll.u32 %v1141, 16
        %v1146 = vshrl.u32 %v1141, 16
        %vm1147 = vc.u32 %v1139, %v1143
        %v1148 = vsel %vm1147, 1, 0
        %v1149 = vadd.s32 %v1139, %v1143
        %v1150 = vadd.s32 %v1142, %v1148
        %vm1151 = vc.u32 %v1149, %v1145
        %v1152 = vsel %vm1151, 1, 0
        %v1153 = vadd.s32 %v1149, %v1145
        %v1154 = vadd.s32 %v1150, %v1152
        %v1155 = vadd.s32 %v1154, %v1144
        %v1156 = vadd.s32 %v1155, %v1146
        %v1157 = vmul.u32 %v1112, %v1103
        %v1158 = vadd.s32 %v1134, %v1153
        %vm1159 = vc.u32 %v1134, %v1153
        %v1160 = vadd.s32 %v1156, 1
        %v1161 = vsel %vm1159, %v1160, %v1156
        %v1162 = vadd.s32 %v1157, %v1161
        %v1163 = vadd.s32 %v1162, 536870912
        %v1164 = vshrl.u32 %v1163, 30
        %v1165 = vshll.u32 %v1164, 30
        %v1166 = vsub.s32 %v1162, %v1165
        %vm1167 = vcmp.lt.s32.totalorder %v1166, 0
        %v1168 = vsub.s32 0, %v1166
        %v1169 = vsel %vm1167, %v1168, %v1166
        %v1170 = vclz %v1169
        %v1171 = vsub.s32 %v1170, 2
        %vm1172 = vcmp.gt.s32.totalorder 0, %v1171
        %v1173 = vsel %vm1172, 0, %v1171
        %v1174 = vsub.s32 32, %v1173
        %v1175 = vshll.u32 %v1166, %v1173
        %v1176 = vshrl.u32 %v1158, %v1174
        %v1177 = vor.u32 %v1175, %v1176
        %v1178 = vsub.s32 4294967266, %v1173
        %v1179 = vadd.s32 %v1178, 127
        %v1180 = vshll.u32 %v1179, 23
        %v1181 = vor.u32 4788187, %v1180
        %v1182 = vand.u32 2147483647, %v1181
        %v1184 = vcvt.s32.f32 %v1177
        %v1185 = vmul.f32 %v1184, %v1182
        %v1186 = vxor.u32 %v1185, 2147483648
        %v1187 = vsel %vm1066, %v1186, %v1185
        %v1188 = vsub.s32 4, %v1164
        %v1189 = vsel %vm1066, %v1188, %v1164
        %v1190 = vsel %vm1065, %v740, %v1187
        %v1191 = vsel %vm1065, 0, %v1189
        %v1192 = vmul.f32 %v1190, %v1190
        %v1193 = vmul.f32 %v1192, -0.001358992
        %v1194 = vadd.f32 %v1193, 0.041655596
        %v1195 = vmul.f32 %v1192, %v1194
        %v1196 = vadd.f32 %v1195, -0.4999988
        %v1197 = vmul.f32 %v1192, %v1196
        %v1198 = vadd.f32 1.0, %v1197
        %v1199 = vmul.f32 %v1190, %v1190
        %v1200 = vmul.f32 %v1199, -0.00019511016
        %v1201 = vadd.f32 %v1200, 0.008332121
        %v1202 = vmul.f32 %v1199, %v1201
        %v1203 = vadd.f32 %v1202, -0.16666654
        %v1204 = vmul.f32 %v1199, %v1203
        %v1205 = vadd.f32 %v1204, 1.0
        %v1206 = vmul.f32 %v1205, %v1190
        %vm1207 = vweird.f32 %v740
        %v1208 = vadd.s32 %v1191, 3
        %v1209 = vand.u32 %v1208, 3
        %vm1210 = vcmp.lt.s32.totalorder %v1209, 2
        %vm1211 = vcmp.eq.s32.totalorder %v1209, 0
        %v1212 = vxor.u32 %v1206, 2147483648
        %v1213 = vsel %vm1211, %v1198, %v1212
        %vm1214 = vcmp.eq.s32.totalorder %v1209, 2
        %v1215 = vxor.u32 %v1198, 2147483648
        %v1216 = vsel %vm1214, %v1215, %v1206
        %v1217 = vsel %vm1210, %v1213, %v1216
        %v1218 = vsel %vm1207, nan, %v1217
        %v1219 = vand.u32 2147483647, %v741
        %vm1220 = vcmp.le.f32.partialorder %v1219, 0.7853982
        %vm1221 = vcmp.lt.s32.totalorder %v741, 0
        %v1222 = vand.u32 %v741, 2139095040
        %v1223 = vshrl.u32 %v1222, 23
        %v1224 = vsub.s32 %v1223, 127
        %v1225 = vand.u32 2147483647, %v741
        %v1226 = vand.u32 %v1225, 8388607
        %v1227 = vor.u32 %v1226, 8388608
        %v1228 = vsub.s32 0, %v1227
        %v1229 = vadd.s32 %v1224, 1
        %vm1230 = vcmp.gt.s32.totalorder %v1229, 0
        %v1231 = vsel %vm1230, %v1229, 0
        %v1232 = vshrl.u32 %v1231, 5
        %v1233 = vand.u32 %v1231, 31
        %v1234 = vsub.s32 32, %v1233
        %v1235 = vshrl.u32 683565275, %v1234
        %v1236 = vshll.u32 683565275, %v1233
        %v1237 = vshrl.u32 2475754826, %v1234
        %v1238 = vor.u32 %v1236, %v1237
        %v1239 = vshll.u32 2475754826, %v1233
        %v1240 = vshrl.u32 2131351028, %v1234
        %v1241 = vor.u32 %v1239, %v1240
        %v1242 = vshll.u32 2131351028, %v1233
        %v1243 = vshrl.u32 2102212464, %v1234
        %v1244 = vor.u32 %v1242, %v1243
        %v1245 = vshll.u32 2102212464, %v1233
        %v1246 = vshrl.u32 920167782, %v1234
        %v1247 = vor.u32 %v1245, %v1246
        %v1248 = vshll.u32 920167782, %v1233
        %v1249 = vshrl.u32 1326507024, %v1234
        %v1250 = vor.u32 %v1248, %v1249
        %vm1251 = vcmp.lt.s32.totalorder %v1232, 1
        %vm1252 = vcmp.lt.s32.totalorder %v1232, 2
        %vm1253 = vcmp.lt.s32.totalorder %v1232, 3
        %vm1254 = vcmp.lt.s32.totalorder %v1232, 4
        %v1255 = vsel %vm1251, %v1235, %v1238
        %v1256 = vsel %vm1254, %v1244, 2102212464
        %v1257 = vsel %vm1253, %v1241, %v1256
        %v1258 = vsel %vm1252, %v1255, %v1257
        %v1259 = vsel %vm1251, %v1238, %v1241
        %v1260 = vsel %vm1254, %v1247, 920167782
        %v1261 = vsel %vm1253, %v1244, %v1260
        %v1262 = vsel %vm1252, %v1259, %v1261
        %v1263 = vsel %vm1251, %v1241, %v1244
        %v1264 = vsel %vm1254, %v1250, 1326507024
        %v1265 = vsel %vm1253, %v1247, %v1264
        %v1266 = vsel %vm1252, %v1263, %v1265
        %v1267 = vshll.u32 %v1227, 8
        %v1268 = vand.u32 %v1267, 65535
        %v1269 = vshrl.u32 %v1267, 16
        %v1270 = vand.u32 %v1266, 65535
        %v1271 = vshrl.u32 %v1266, 16
        %v1272 = vmul.u32 %v1268, %v1270
        %v1273 = vmul.u32 %v1268, %v1271
        %v1274 = vmul.u32 %v1269, %v1270
        %v1275 = vmul.u32 %v1269, %v1271
        %v1276 = vshll.u32 %v1273, 16
        %v1277 = vshrl.u32 %v1273, 16
        %v1278 = vshll.u32 %v1274, 16
        %v1279 = vshrl.u32 %v1274, 16
        %vm1280 = vc.u32 %v1272, %v1276
        %v1281 = vsel %vm1280, 1, 0
        %v1282 = vadd.s32 %v1272, %v1276
        %v1283 = vadd.s32 %v1275, %v1281
        %vm1284 = vc.u32 %v1282, %v1278
        %v1285 = vsel %vm1284, 1, 0
        %v1286 = vadd.s32 %v1282, %v1278
        %v1287 = vadd.s32 %v1283, %v1285
        %v1288 = vadd.s32 %v1287, %v1277
        %v1289 = vadd.s32 %v1288, %v1279
        %v1290 = vand.u32 %v1267, 65535
        %v1291 = vshrl.u32 %v1267, 16
        %v1292 = vand.u32 %v1262, 65535
        %v1293 = vshrl.u32 %v1262, 16
        %v1294 = vmul.u32 %v1290, %v1292
        %v1295 = vmul.u32 %v1290, %v1293
        %v1296 = vmul.u32 %v1291, %v1292
        %v1297 = vmul.u32 %v1291, %v1293
        %v1298 = vshll.u32 %v1295, 16
        %v1299 = vshrl.u32 %v1295, 16
        %v1300 = vshll.u32 %v1296, 16
        %v1301 = vshrl.u32 %v1296, 16
        %vm1302 = vc.u32 %v1294, %v1298
        %v1303 = vsel %vm1302, 1, 0
        %v1304 = vadd.s32 %v1294, %v1298
        %v1305 = vadd.s32 %v1297, %v1303
        %vm1306 = vc.u32 %v1304, %v1300
        %v1307 = vsel %vm1306, 1, 0
        %v1308 = vadd.s32 %v1304, %v1300
        %v1309 = vadd.s32 %v1305, %v1307
        %v1310 = vadd.s32 %v1309, %v1299
        %v1311 = vadd.s32 %v1310, %v1301
        %v1312 = vmul.u32 %v1267, %v1258
        %v1313 = vadd.s32 %v1289, %v1308
        %vm1314 = vc.u32 %v1289, %v1308
        %v1315 = vadd.s32 %v1311, 1
        %v1316 = vsel %vm1314, %v1315, %v1311
        %v1317 = vadd.s32 %v1312, %v1316
        %v1318 = vadd.s32 %v1317, 536870912
        %v1319 = vshrl.u32 %v1318, 30
        %v1320 = vshll.u32 %v1319, 30
        %v1321 = vsub.s32 %v1317, %v1320
        %vm1322 = vcmp.lt.s32.totalorder %v1321, 0
        %v1323 = vsub.s32 0, %v1321
        %v1324 = vsel %vm1322, %v1323, %v1321
        %v1325 = vclz %v1324
        %v1326 = vsub.s32 %v1325, 2
        %vm1327 = vcmp.gt.s32.totalorder 0, %v1326
        %v1328 = vsel %vm1327, 0, %v1326
        %v1329 = vsub.s32 32, %v1328
        %v1330 = vshll.u32 %v1321, %v1328
        %v1331 = vshrl.u32 %v1313, %v1329
        %v1332 = vor.u32 %v1330, %v1331
        %v1333 = vsub.s32 4294967266, %v1328
        %v1334 = vadd.s32 %v1333, 127
        %v1335 = vshll.u32 %v1334, 23
        %v1336 = vor.u32 4788187, %v1335
        %v1337 = vand.u32 2147483647, %v1336
        %v1339 = vcvt.s32.f32 %v1332
        %v1340 = vmul.f32 %v1339, %v1337
        %v1341 = vxor.u32 %v1340, 2147483648
        %v1342 = vsel %vm1221, %v1341, %v1340
        %v1343 = vsub.s32 4, %v1319
        %v1344 = vsel %vm1221, %v1343, %v1319
        %v1345 = vsel %vm1220, %v741, %v1342
        %v1346 = vsel %vm1220, 0, %v1344
        %v1347 = vmul.f32 %v1345, %v1345
        %v1348 = vmul.f32 %v1347, -0.001358992
        %v1349 = vadd.f32 %v1348, 0.041655596
        %v1350 = vmul.f32 %v1347, %v1349
        %v1351 = vadd.f32 %v1350, -0.4999988
        %v1352 = vmul.f32 %v1347, %v1351
        %v1353 = vadd.f32 1.0, %v1352
        %v1354 = vmul.f32 %v1345, %v1345
        %v1355 = vmul.f32 %v1354, -0.00019511016
        %v1356 = vadd.f32 %v1355, 0.008332121
        %v1357 = vmul.f32 %v1354, %v1356
        %v1358 = vadd.f32 %v1357, -0.16666654
        %v1359 = vmul.f32 %v1354, %v1358
        %v1360 = vadd.f32 %v1359, 1.0
        %v1361 = vmul.f32 %v1360, %v1345
        %vm1362 = vweird.f32 %v741
        %v1363 = vadd.s32 %v1346, 3
        %v1364 = vand.u32 %v1363, 3
        %vm1365 = vcmp.lt.s32.totalorder %v1364, 2
        %vm1366 = vcmp.eq.s32.totalorder %v1364, 0
        %v1367 = vxor.u32 %v1361, 2147483648
        %v1368 = vsel %vm1366, %v1353, %v1367
        %vm1369 = vcmp.eq.s32.totalorder %v1364, 2
        %v1370 = vxor.u32 %v1353, 2147483648
        %v1371 = vsel %vm1369, %v1370, %v1361
        %v1372 = vsel %vm1365, %v1368, %v1371
        %v1373 = vsel %vm1362, nan, %v1372
        %v1374 = vand.u32 2147483647, %v742
        %vm1375 = vcmp.le.f32.partialorder %v1374, 0.7853982
        %vm1376 = vcmp.lt.s32.totalorder %v742, 0
        %v1377 = vand.u32 %v742, 2139095040
        %v1378 = vshrl.u32 %v1377, 23
        %v1379 = vsub.s32 %v1378, 127
        %v1380 = vand.u32 2147483647, %v742
        %v1381 = vand.u32 %v1380, 8388607
        %v1382 = vor.u32 %v1381, 8388608
        %v1383 = vsub.s32 0, %v1382
        %v1384 = vadd.s32 %v1379, 1
        %vm1385 = vcmp.gt.s32.totalorder %v1384, 0
        %v1386 = vsel %vm1385, %v1384, 0
        %v1387 = vshrl.u32 %v1386, 5
        %v1388 = vand.u32 %v1386, 31
        %v1389 = vsub.s32 32, %v1388
        %v1390 = vshrl.u32 683565275, %v1389
        %v1391 = vshll.u32 683565275, %v1388
        %v1392 = vshrl.u32 2475754826, %v1389
        %v1393 = vor.u32 %v1391, %v1392
        %v1394 = vshll.u32 2475754826, %v1388
        %v1395 = vshrl.u32 2131351028, %v1389
        %v1396 = vor.u32 %v1394, %v1395
        %v1397 = vshll.u32 2131351028, %v1388
        %v1398 = vshrl.u32 2102212464, %v1389
        %v1399 = vor.u32 %v1397, %v1398
        %v1400 = vshll.u32 2102212464, %v1388
        %v1401 = vshrl.u32 920167782, %v1389
        %v1402 = vor.u32 %v1400, %v1401
        %v1403 = vshll.u32 920167782, %v1388
        %v1404 = vshrl.u32 1326507024, %v1389
        %v1405 = vor.u32 %v1403, %v1404
        %vm1406 = vcmp.lt.s32.totalorder %v1387, 1
        %vm1407 = vcmp.lt.s32.totalorder %v1387, 2
        %vm1408 = vcmp.lt.s32.totalorder %v1387, 3
        %vm1409 = vcmp.lt.s32.totalorder %v1387, 4
        %v1410 = vsel %vm1406, %v1390, %v1393
        %v1411 = vsel %vm1409, %v1399, 2102212464
        %v1412 = vsel %vm1408, %v1396, %v1411
        %v1413 = vsel %vm1407, %v1410, %v1412
        %v1414 = vsel %vm1406, %v1393, %v1396
        %v1415 = vsel %vm1409, %v1402, 920167782
        %v1416 = vsel %vm1408, %v1399, %v1415
        %v1417 = vsel %vm1407, %v1414, %v1416
        %v1418 = vsel %vm1406, %v1396, %v1399
        %v1419 = vsel %vm1409, %v1405, 1326507024
        %v1420 = vsel %vm1408, %v1402, %v1419
        %v1421 = vsel %vm1407, %v1418, %v1420
        %v1422 = vshll.u32 %v1382, 8
        %v1423 = vand.u32 %v1422, 65535
        %v1424 = vshrl.u32 %v1422, 16
        %v1425 = vand.u32 %v1421, 65535
        %v1426 = vshrl.u32 %v1421, 16
        %v1427 = vmul.u32 %v1423, %v1425
        %v1428 = vmul.u32 %v1423, %v1426
        %v1429 = vmul.u32 %v1424, %v1425
        %v1430 = vmul.u32 %v1424, %v1426
        %v1431 = vshll.u32 %v1428, 16
        %v1432 = vshrl.u32 %v1428, 16
        %v1433 = vshll.u32 %v1429, 16
        %v1434 = vshrl.u32 %v1429, 16
        %vm1435 = vc.u32 %v1427, %v1431
        %v1436 = vsel %vm1435, 1, 0
        %v1437 = vadd.s32 %v1427, %v1431
        %v1438 = vadd.s32 %v1430, %v1436
        %vm1439 = vc.u32 %v1437, %v1433
        %v1440 = vsel %vm1439, 1, 0
        %v1441 = vadd.s32 %v1437, %v1433
        %v1442 = vadd.s32 %v1438, %v1440
        %v1443 = vadd.s32 %v1442, %v1432
        %v1444 = vadd.s32 %v1443, %v1434
        %v1445 = vand.u32 %v1422, 65535
        %v1446 = vshrl.u32 %v1422, 16
        %v1447 = vand.u32 %v1417, 65535
        %v1448 = vshrl.u32 %v1417, 16
        %v1449 = vmul.u32 %v1445, %v1447
        %v1450 = vmul.u32 %v1445, %v1448
        %v1451 = vmul.u32 %v1446, %v1447
        %v1452 = vmul.u32 %v1446, %v1448
        %v1453 = vshll.u32 %v1450, 16
        %v1454 = vshrl.u32 %v1450, 16
        %v1455 = vshll.u32 %v1451, 16
        %v1456 = vshrl.u32 %v1451, 16
        %vm1457 = vc.u32 %v1449, %v1453
        %v1458 = vsel %vm1457, 1, 0
        %v1459 = vadd.s32 %v1449, %v1453
        %v1460 = vadd.s32 %v1452, %v1458
        %vm1461 = vc.u32 %v1459, %v1455
        %v1462 = vsel %vm1461, 1, 0
        %v1463 = vadd.s32 %v1459, %v1455
        %v1464 = vadd.s32 %v1460, %v1462
        %v1465 = vadd.s32 %v1464, %v1454
        %v1466 = vadd.s32 %v1465, %v1456
        %v1467 = vmul.u32 %v1422, %v1413
        %v1468 = vadd.s32 %v1444, %v1463
        %vm1469 = vc.u32 %v1444, %v1463
        %v1470 = vadd.s32 %v1466, 1
        %v1471 = vsel %vm1469, %v1470, %v1466
        %v1472 = vadd.s32 %v1467, %v1471
        %v1473 = vadd.s32 %v1472, 536870912
        %v1474 = vshrl.u32 %v1473, 30
        %v1475 = vshll.u32 %v1474, 30
        %v1476 = vsub.s32 %v1472, %v1475
        %vm1477 = vcmp.lt.s32.totalorder %v1476, 0
        %v1478 = vsub.s32 0, %v1476
        %v1479 = vsel %vm1477, %v1478, %v1476
        %v1480 = vclz %v1479
        %v1481 = vsub.s32 %v1480, 2
        %vm1482 = vcmp.gt.s32.totalorder 0, %v1481
        %v1483 = vsel %vm1482, 0, %v1481
        %v1484 = vsub.s32 32, %v1483
        %v1485 = vshll.u32 %v1476, %v1483
        %v1486 = vshrl.u32 %v1468, %v1484
        %v1487 = vor.u32 %v1485, %v1486
        %v1488 = vsub.s32 4294967266, %v1483
        %v1489 = vadd.s32 %v1488, 127
        %v1490 = vshll.u32 %v1489, 23
        %v1491 = vor.u32 4788187, %v1490
        %v1492 = vand.u32 2147483647, %v1491
        %v1494 = vcvt.s32.f32 %v1487
        %v1495 = vmul.f32 %v1494, %v1492
        %v1496 = vxor.u32 %v1495, 2147483648
        %v1497 = vsel %vm1376, %v1496, %v1495
        %v1498 = vsub.s32 4, %v1474
        %v1499 = vsel %vm1376, %v1498, %v1474
        %v1500 = vsel %vm1375, %v742, %v1497
        %v1501 = vsel %vm1375, 0, %v1499
        %v1502 = vmul.f32 %v1500, %v1500
        %v1503 = vmul.f32 %v1502, -0.001358992
        %v1504 = vadd.f32 %v1503, 0.041655596
        %v1505 = vmul.f32 %v1502, %v1504
        %v1506 = vadd.f32 %v1505, -0.4999988
        %v1507 = vmul.f32 %v1502, %v1506
        %v1508 = vadd.f32 1.0, %v1507
        %v1509 = vmul.f32 %v1500, %v1500
        %v1510 = vmul.f32 %v1509, -0.00019511016
        %v1511 = vadd.f32 %v1510, 0.008332121
        %v1512 = vmul.f32 %v1509, %v1511
        %v1513 = vadd.f32 %v1512, -0.16666654
        %v1514 = vmul.f32 %v1509, %v1513
        %v1515 = vadd.f32 %v1514, 1.0
        %v1516 = vmul.f32 %v1515, %v1500
        %vm1517 = vweird.f32 %v742
        %v1518 = vadd.s32 %v1501, 3
        %v1519 = vand.u32 %v1518, 3
        %vm1520 = vcmp.lt.s32.totalorder %v1519, 2
        %vm1521 = vcmp.eq.s32.totalorder %v1519, 0
        %v1522 = vxor.u32 %v1516, 2147483648
        %v1523 = vsel %vm1521, %v1508, %v1522
        %vm1524 = vcmp.eq.s32.totalorder %v1519, 2
        %v1525 = vxor.u32 %v1508, 2147483648
        %v1526 = vsel %vm1524, %v1525, %v1516
        %v1527 = vsel %vm1520, %v1523, %v1526
        %v1528 = vsel %vm1517, nan, %v1527
        %v1529 = vand.u32 2147483647, %v743
        %vm1530 = vcmp.le.f32.partialorder %v1529, 0.7853982
        %vm1531 = vcmp.lt.s32.totalorder %v743, 0
        %v1532 = vand.u32 %v743, 2139095040
        %v1533 = vshrl.u32 %v1532, 23
        %v1534 = vsub.s32 %v1533, 127
        %v1535 = vand.u32 2147483647, %v743
        %v1536 = vand.u32 %v1535, 8388607
        %v1537 = vor.u32 %v1536, 8388608
        %v1538 = vsub.s32 0, %v1537
        %v1539 = vadd.s32 %v1534, 1
        %vm1540 = vcmp.gt.s32.totalorder %v1539, 0
        %v1541 = vsel %vm1540, %v1539, 0
        %v1542 = vshrl.u32 %v1541, 5
        %v1543 = vand.u32 %v1541, 31
        %v1544 = vsub.s32 32, %v1543
        %v1545 = vshrl.u32 683565275, %v1544
        %v1546 = vshll.u32 683565275, %v1543
        %v1547 = vshrl.u32 2475754826, %v1544
        %v1548 = vor.u32 %v1546, %v1547
        %v1549 = vshll.u32 2475754826, %v1543
        %v1550 = vshrl.u32 2131351028, %v1544
        %v1551 = vor.u32 %v1549, %v1550
        %v1552 = vshll.u32 2131351028, %v1543
        %v1553 = vshrl.u32 2102212464, %v1544
        %v1554 = vor.u32 %v1552, %v1553
        %v1555 = vshll.u32 2102212464, %v1543
        %v1556 = vshrl.u32 920167782, %v1544
        %v1557 = vor.u32 %v1555, %v1556
        %v1558 = vshll.u32 920167782, %v1543
        %v1559 = vshrl.u32 1326507024, %v1544
        %v1560 = vor.u32 %v1558, %v1559
        %vm1561 = vcmp.lt.s32.totalorder %v1542, 1
        %vm1562 = vcmp.lt.s32.totalorder %v1542, 2
        %vm1563 = vcmp.lt.s32.totalorder %v1542, 3
        %vm1564 = vcmp.lt.s32.totalorder %v1542, 4
        %v1565 = vsel %vm1561, %v1545, %v1548
        %v1566 = vsel %vm1564, %v1554, 2102212464
        %v1567 = vsel %vm1563, %v1551, %v1566
        %v1568 = vsel %vm1562, %v1565, %v1567
        %v1569 = vsel %vm1561, %v1548, %v1551
        %v1570 = vsel %vm1564, %v1557, 920167782
        %v1571 = vsel %vm1563, %v1554, %v1570
        %v1572 = vsel %vm1562, %v1569, %v1571
        %v1573 = vsel %vm1561, %v1551, %v1554
        %v1574 = vsel %vm1564, %v1560, 1326507024
        %v1575 = vsel %vm1563, %v1557, %v1574
        %v1576 = vsel %vm1562, %v1573, %v1575
        %v1577 = vshll.u32 %v1537, 8
        %v1578 = vand.u32 %v1577, 65535
        %v1579 = vshrl.u32 %v1577, 16
        %v1580 = vand.u32 %v1576, 65535
        %v1581 = vshrl.u32 %v1576, 16
        %v1582 = vmul.u32 %v1578, %v1580
        %v1583 = vmul.u32 %v1578, %v1581
        %v1584 = vmul.u32 %v1579, %v1580
        %v1585 = vmul.u32 %v1579, %v1581
        %v1586 = vshll.u32 %v1583, 16
        %v1587 = vshrl.u32 %v1583, 16
        %v1588 = vshll.u32 %v1584, 16
        %v1589 = vshrl.u32 %v1584, 16
        %vm1590 = vc.u32 %v1582, %v1586
        %v1591 = vsel %vm1590, 1, 0
        %v1592 = vadd.s32 %v1582, %v1586
        %v1593 = vadd.s32 %v1585, %v1591
        %vm1594 = vc.u32 %v1592, %v1588
        %v1595 = vsel %vm1594, 1, 0
        %v1596 = vadd.s32 %v1592, %v1588
        %v1597 = vadd.s32 %v1593, %v1595
        %v1598 = vadd.s32 %v1597, %v1587
        %v1599 = vadd.s32 %v1598, %v1589
        %v1600 = vand.u32 %v1577, 65535
        %v1601 = vshrl.u32 %v1577, 16
        %v1602 = vand.u32 %v1572, 65535
        %v1603 = vshrl.u32 %v1572, 16
        %v1604 = vmul.u32 %v1600, %v1602
        %v1605 = vmul.u32 %v1600, %v1603
        %v1606 = vmul.u32 %v1601, %v1602
        %v1607 = vmul.u32 %v1601, %v1603
        %v1608 = vshll.u32 %v1605, 16
        %v1609 = vshrl.u32 %v1605, 16
        %v1610 = vshll.u32 %v1606, 16
        %v1611 = vshrl.u32 %v1606, 16
        %vm1612 = vc.u32 %v1604, %v1608
        %v1613 = vsel %vm1612, 1, 0
        %v1614 = vadd.s32 %v1604, %v1608
        %v1615 = vadd.s32 %v1607, %v1613
        %vm1616 = vc.u32 %v1614, %v1610
        %v1617 = vsel %vm1616, 1, 0
        %v1618 = vadd.s32 %v1614, %v1610
        %v1619 = vadd.s32 %v1615, %v1617
        %v1620 = vadd.s32 %v1619, %v1609
        %v1621 = vadd.s32 %v1620, %v1611
        %v1622 = vmul.u32 %v1577, %v1568
        %v1623 = vadd.s32 %v1599, %v1618
        %vm1624 = vc.u32 %v1599, %v1618
        %v1625 = vadd.s32 %v1621, 1
        %v1626 = vsel %vm1624, %v1625, %v1621
        %v1627 = vadd.s32 %v1622, %v1626
        %v1628 = vadd.s32 %v1627, 536870912
        %v1629 = vshrl.u32 %v1628, 30
        %v1630 = vshll.u32 %v1629, 30
        %v1631 = vsub.s32 %v1627, %v1630
        %vm1632 = vcmp.lt.s32.totalorder %v1631, 0
        %v1633 = vsub.s32 0, %v1631
        %v1634 = vsel %vm1632, %v1633, %v1631
        %v1635 = vclz %v1634
        %v1636 = vsub.s32 %v1635, 2
        %vm1637 = vcmp.gt.s32.totalorder 0, %v1636
        %v1638 = vsel %vm1637, 0, %v1636
        %v1639 = vsub.s32 32, %v1638
        %v1640 = vshll.u32 %v1631, %v1638
        %v1641 = vshrl.u32 %v1623, %v1639
        %v1642 = vor.u32 %v1640, %v1641
        %v1643 = vsub.s32 4294967266, %v1638
        %v1644 = vadd.s32 %v1643, 127
        %v1645 = vshll.u32 %v1644, 23
        %v1646 = vor.u32 4788187, %v1645
        %v1647 = vand.u32 2147483647, %v1646
        %v1649 = vcvt.s32.f32 %v1642
        %v1650 = vmul.f32 %v1649, %v1647
        %v1651 = vxor.u32 %v1650, 2147483648
        %v1652 = vsel %vm1531, %v1651, %v1650
        %v1653 = vsub.s32 4, %v1629
        %v1654 = vsel %vm1531, %v1653, %v1629
        %v1655 = vsel %vm1530, %v743, %v1652
        %v1656 = vsel %vm1530, 0, %v1654
        %v1657 = vmul.f32 %v1655, %v1655
        %v1658 = vmul.f32 %v1657, -0.001358992
        %v1659 = vadd.f32 %v1658, 0.041655596
        %v1660 = vmul.f32 %v1657, %v1659
        %v1661 = vadd.f32 %v1660, -0.4999988
        %v1662 = vmul.f32 %v1657, %v1661
        %v1663 = vadd.f32 1.0, %v1662
        %v1664 = vmul.f32 %v1655, %v1655
        %v1665 = vmul.f32 %v1664, -0.00019511016
        %v1666 = vadd.f32 %v1665, 0.008332121
        %v1667 = vmul.f32 %v1664, %v1666
        %v1668 = vadd.f32 %v1667, -0.16666654
        %v1669 = vmul.f32 %v1664, %v1668
        %v1670 = vadd.f32 %v1669, 1.0
        %v1671 = vmul.f32 %v1670, %v1655
        %vm1672 = vweird.f32 %v743
        %v1673 = vadd.s32 %v1656, 3
        %v1674 = vand.u32 %v1673, 3
        %vm1675 = vcmp.lt.s32.totalorder %v1674, 2
        %vm1676 = vcmp.eq.s32.totalorder %v1674, 0
        %v1677 = vxor.u32 %v1671, 2147483648
        %v1678 = vsel %vm1676, %v1663, %v1677
        %vm1679 = vcmp.eq.s32.totalorder %v1674, 2
        %v1680 = vxor.u32 %v1663, 2147483648
        %v1681 = vsel %vm1679, %v1680, %v1671
        %v1682 = vsel %vm1675, %v1678, %v1681
        %v1683 = vsel %vm1672, nan, %v1682
        %v1684 = vand.u32 2147483647, %v744
        %vm1685 = vcmp.le.f32.partialorder %v1684, 0.7853982
        %vm1686 = vcmp.lt.s32.totalorder %v744, 0
        %v1687 = vand.u32 %v744, 2139095040
        %v1688 = vshrl.u32 %v1687, 23
        %v1689 = vsub.s32 %v1688, 127
        %v1690 = vand.u32 2147483647, %v744
        %v1691 = vand.u32 %v1690, 8388607
        %v1692 = vor.u32 %v1691, 8388608
        %v1693 = vsub.s32 0, %v1692
        %v1694 = vadd.s32 %v1689, 1
        %vm1695 = vcmp.gt.s32.totalorder %v1694, 0
        %v1696 = vsel %vm1695, %v1694, 0
        %v1697 = vshrl.u32 %v1696, 5
        %v1698 = vand.u32 %v1696, 31
        %v1699 = vsub.s32 32, %v1698
        %v1700 = vshrl.u32 683565275, %v1699
        %v1701 = vshll.u32 683565275, %v1698
        %v1702 = vshrl.u32 2475754826, %v1699
        %v1703 = vor.u32 %v1701, %v1702
        %v1704 = vshll.u32 2475754826, %v1698
        %v1705 = vshrl.u32 2131351028, %v1699
        %v1706 = vor.u32 %v1704, %v1705
        %v1707 = vshll.u32 2131351028, %v1698
        %v1708 = vshrl.u32 2102212464, %v1699
        %v1709 = vor.u32 %v1707, %v1708
        %v1710 = vshll.u32 2102212464, %v1698
        %v1711 = vshrl.u32 920167782, %v1699
        %v1712 = vor.u32 %v1710, %v1711
        %v1713 = vshll.u32 920167782, %v1698
        %v1714 = vshrl.u32 1326507024, %v1699
        %v1715 = vor.u32 %v1713, %v1714
        %vm1716 = vcmp.lt.s32.totalorder %v1697, 1
        %vm1717 = vcmp.lt.s32.totalorder %v1697, 2
        %vm1718 = vcmp.lt.s32.totalorder %v1697, 3
        %vm1719 = vcmp.lt.s32.totalorder %v1697, 4
        %v1720 = vsel %vm1716, %v1700, %v1703
        %v1721 = vsel %vm1719, %v1709, 2102212464
        %v1722 = vsel %vm1718, %v1706, %v1721
        %v1723 = vsel %vm1717, %v1720, %v1722
        %v1724 = vsel %vm1716, %v1703, %v1706
        %v1725 = vsel %vm1719, %v1712, 920167782
        %v1726 = vsel %vm1718, %v1709, %v1725
        %v1727 = vsel %vm1717, %v1724, %v1726
        %v1728 = vsel %vm1716, %v1706, %v1709
        %v1729 = vsel %vm1719, %v1715, 1326507024
        %v1730 = vsel %vm1718, %v1712, %v1729
        %v1731 = vsel %vm1717, %v1728, %v1730
        %v1732 = vshll.u32 %v1692, 8
        %v1733 = vand.u32 %v1732, 65535
        %v1734 = vshrl.u32 %v1732, 16
        %v1735 = vand.u32 %v1731, 65535
        %v1736 = vshrl.u32 %v1731, 16
        %v1737 = vmul.u32 %v1733, %v1735
        %v1738 = vmul.u32 %v1733, %v1736
        %v1739 = vmul.u32 %v1734, %v1735
        %v1740 = vmul.u32 %v1734, %v1736
        %v1741 = vshll.u32 %v1738, 16
        %v1742 = vshrl.u32 %v1738, 16
        %v1743 = vshll.u32 %v1739, 16
        %v1744 = vshrl.u32 %v1739, 16
        %vm1745 = vc.u32 %v1737, %v1741
        %v1746 = vsel %vm1745, 1, 0
        %v1747 = vadd.s32 %v1737, %v1741
        %v1748 = vadd.s32 %v1740, %v1746
        %vm1749 = vc.u32 %v1747, %v1743
        %v1750 = vsel %vm1749, 1, 0
        %v1751 = vadd.s32 %v1747, %v1743
        %v1752 = vadd.s32 %v1748, %v1750
        %v1753 = vadd.s32 %v1752, %v1742
        %v1754 = vadd.s32 %v1753, %v1744
        %v1755 = vand.u32 %v1732, 65535
        %v1756 = vshrl.u32 %v1732, 16
        %v1757 = vand.u32 %v1727, 65535
        %v1758 = vshrl.u32 %v1727, 16
        %v1759 = vmul.u32 %v1755, %v1757
        %v1760 = vmul.u32 %v1755, %v1758
        %v1761 = vmul.u32 %v1756, %v1757
        %v1762 = vmul.u32 %v1756, %v1758
        %v1763 = vshll.u32 %v1760, 16
        %v1764 = vshrl.u32 %v1760, 16
        %v1765 = vshll.u32 %v1761, 16
        %v1766 = vshrl.u32 %v1761, 16
        %vm1767 = vc.u32 %v1759, %v1763
        %v1768 = vsel %vm1767, 1, 0
        %v1769 = vadd.s32 %v1759, %v1763
        %v1770 = vadd.s32 %v1762, %v1768
        %vm1771 = vc.u32 %v1769, %v1765
        %v1772 = vsel %vm1771, 1, 0
        %v1773 = vadd.s32 %v1769, %v1765
        %v1774 = vadd.s32 %v1770, %v1772
        %v1775 = vadd.s32 %v1774, %v1764
        %v1776 = vadd.s32 %v1775, %v1766
        %v1777 = vmul.u32 %v1732, %v1723
        %v1778 = vadd.s32 %v1754, %v1773
        %vm1779 = vc.u32 %v1754, %v1773
        %v1780 = vadd.s32 %v1776, 1
        %v1781 = vsel %vm1779, %v1780, %v1776
        %v1782 = vadd.s32 %v1777, %v1781
        %v1783 = vadd.s32 %v1782, 536870912
        %v1784 = vshrl.u32 %v1783, 30
        %v1785 = vshll.u32 %v1784, 30
        %v1786 = vsub.s32 %v1782, %v1785
        %vm1787 = vcmp.lt.s32.totalorder %v1786, 0
        %v1788 = vsub.s32 0, %v1786
        %v1789 = vsel %vm1787, %v1788, %v1786
        %v1790 = vclz %v1789
        %v1791 = vsub.s32 %v1790, 2
        %vm1792 = vcmp.gt.s32.totalorder 0, %v1791
        %v1793 = vsel %vm1792, 0, %v1791
        %v1794 = vsub.s32 32, %v1793
        %v1795 = vshll.u32 %v1786, %v1793
        %v1796 = vshrl.u32 %v1778, %v1794
        %v1797 = vor.u32 %v1795, %v1796
        %v1798 = vsub.s32 4294967266, %v1793
        %v1799 = vadd.s32 %v1798, 127
        %v1800 = vshll.u32 %v1799, 23
        %v1801 = vor.u32 4788187, %v1800
        %v1802 = vand.u32 2147483647, %v1801
        %v1804 = vcvt.s32.f32 %v1797
        %v1805 = vmul.f32 %v1804, %v1802
        %v1806 = vxor.u32 %v1805, 2147483648
        %v1807 = vsel %vm1686, %v1806, %v1805
        %v1808 = vsub.s32 4, %v1784
        %v1809 = vsel %vm1686, %v1808, %v1784
        %v1810 = vsel %vm1685, %v744, %v1807
        %v1811 = vsel %vm1685, 0, %v1809
        %v1812 = vmul.f32 %v1810, %v1810
        %v1813 = vmul.f32 %v1812, -0.001358992
        %v1814 = vadd.f32 %v1813, 0.041655596
        %v1815 = vmul.f32 %v1812, %v1814
        %v1816 = vadd.f32 %v1815, -0.4999988
        %v1817 = vmul.f32 %v1812, %v1816
        %v1818 = vadd.f32 1.0, %v1817
        %v1819 = vmul.f32 %v1810, %v1810
        %v1820 = vmul.f32 %v1819, -0.00019511016
        %v1821 = vadd.f32 %v1820, 0.008332121
        %v1822 = vmul.f32 %v1819, %v1821
        %v1823 = vadd.f32 %v1822, -0.16666654
        %v1824 = vmul.f32 %v1819, %v1823
        %v1825 = vadd.f32 %v1824, 1.0
        %v1826 = vmul.f32 %v1825, %v1810
        %vm1827 = vweird.f32 %v744
        %v1828 = vadd.s32 %v1811, 3
        %v1829 = vand.u32 %v1828, 3
        %vm1830 = vcmp.lt.s32.totalorder %v1829, 2
        %vm1831 = vcmp.eq.s32.totalorder %v1829, 0
        %v1832 = vxor.u32 %v1826, 2147483648
        %v1833 = vsel %vm1831, %v1818, %v1832
        %vm1834 = vcmp.eq.s32.totalorder %v1829, 2
        %v1835 = vxor.u32 %v1818, 2147483648
        %v1836 = vsel %vm1834, %v1835, %v1826
        %v1837 = vsel %vm1830, %v1833, %v1836
        %v1838 = vsel %vm1827, nan, %v1837
        %v1839 = vand.u32 2147483647, %v745
        %vm1840 = vcmp.le.f32.partialorder %v1839, 0.7853982
        %vm1841 = vcmp.lt.s32.totalorder %v745, 0
        %v1842 = vand.u32 %v745, 2139095040
        %v1843 = vshrl.u32 %v1842, 23
        %v1844 = vsub.s32 %v1843, 127
        %v1845 = vand.u32 2147483647, %v745
        %v1846 = vand.u32 %v1845, 8388607
        %v1847 = vor.u32 %v1846, 8388608
        %v1848 = vsub.s32 0, %v1847
        %v1849 = vadd.s32 %v1844, 1
        %vm1850 = vcmp.gt.s32.totalorder %v1849, 0
        %v1851 = vsel %vm1850, %v1849, 0
        %v1852 = vshrl.u32 %v1851, 5
        %v1853 = vand.u32 %v1851, 31
        %v1854 = vsub.s32 32, %v1853
        %v1855 = vshrl.u32 683565275, %v1854
        %v1856 = vshll.u32 683565275, %v1853
        %v1857 = vshrl.u32 2475754826, %v1854
        %v1858 = vor.u32 %v1856, %v1857
        %v1859 = vshll.u32 2475754826, %v1853
        %v1860 = vshrl.u32 2131351028, %v1854
        %v1861 = vor.u32 %v1859, %v1860
        %v1862 = vshll.u32 2131351028, %v1853
        %v1863 = vshrl.u32 2102212464, %v1854
        %v1864 = vor.u32 %v1862, %v1863
        %v1865 = vshll.u32 2102212464, %v1853
        %v1866 = vshrl.u32 920167782, %v1854
        %v1867 = vor.u32 %v1865, %v1866
        %v1868 = vshll.u32 920167782, %v1853
        %v1869 = vshrl.u32 1326507024, %v1854
        %v1870 = vor.u32 %v1868, %v1869
        %vm1871 = vcmp.lt.s32.totalorder %v1852, 1
        %vm1872 = vcmp.lt.s32.totalorder %v1852, 2
        %vm1873 = vcmp.lt.s32.totalorder %v1852, 3
        %vm1874 = vcmp.lt.s32.totalorder %v1852, 4
        %v1875 = vsel %vm1871, %v1855, %v1858
        %v1876 = vsel %vm1874, %v1864, 2102212464
        %v1877 = vsel %vm1873, %v1861, %v1876
        %v1878 = vsel %vm1872, %v1875, %v1877
        %v1879 = vsel %vm1871, %v1858, %v1861
        %v1880 = vsel %vm1874, %v1867, 920167782
        %v1881 = vsel %vm1873, %v1864, %v1880
        %v1882 = vsel %vm1872, %v1879, %v1881
        %v1883 = vsel %vm1871, %v1861, %v1864
        %v1884 = vsel %vm1874, %v1870, 1326507024
        %v1885 = vsel %vm1873, %v1867, %v1884
        %v1886 = vsel %vm1872, %v1883, %v1885
        %v1887 = vshll.u32 %v1847, 8
        %v1888 = vand.u32 %v1887, 65535
        %v1889 = vshrl.u32 %v1887, 16
        %v1890 = vand.u32 %v1886, 65535
        %v1891 = vshrl.u32 %v1886, 16
        %v1892 = vmul.u32 %v1888, %v1890
        %v1893 = vmul.u32 %v1888, %v1891
        %v1894 = vmul.u32 %v1889, %v1890
        %v1895 = vmul.u32 %v1889, %v1891
        %v1896 = vshll.u32 %v1893, 16
        %v1897 = vshrl.u32 %v1893, 16
        %v1898 = vshll.u32 %v1894, 16
        %v1899 = vshrl.u32 %v1894, 16
        %vm1900 = vc.u32 %v1892, %v1896
        %v1901 = vsel %vm1900, 1, 0
        %v1902 = vadd.s32 %v1892, %v1896
        %v1903 = vadd.s32 %v1895, %v1901
        %vm1904 = vc.u32 %v1902, %v1898
        %v1905 = vsel %vm1904, 1, 0
        %v1906 = vadd.s32 %v1902, %v1898
        %v1907 = vadd.s32 %v1903, %v1905
        %v1908 = vadd.s32 %v1907, %v1897
        %v1909 = vadd.s32 %v1908, %v1899
        %v1910 = vand.u32 %v1887, 65535
        %v1911 = vshrl.u32 %v1887, 16
        %v1912 = vand.u32 %v1882, 65535
        %v1913 = vshrl.u32 %v1882, 16
        %v1914 = vmul.u32 %v1910, %v1912
        %v1915 = vmul.u32 %v1910, %v1913
        %v1916 = vmul.u32 %v1911, %v1912
        %v1917 = vmul.u32 %v1911, %v1913
        %v1918 = vshll.u32 %v1915, 16
        %v1919 = vshrl.u32 %v1915, 16
        %v1920 = vshll.u32 %v1916, 16
        %v1921 = vshrl.u32 %v1916, 16
        %vm1922 = vc.u32 %v1914, %v1918
        %v1923 = vsel %vm1922, 1, 0
        %v1924 = vadd.s32 %v1914, %v1918
        %v1925 = vadd.s32 %v1917, %v1923
        %vm1926 = vc.u32 %v1924, %v1920
        %v1927 = vsel %vm1926, 1, 0
        %v1928 = vadd.s32 %v1924, %v1920
        %v1929 = vadd.s32 %v1925, %v1927
        %v1930 = vadd.s32 %v1929, %v1919
        %v1931 = vadd.s32 %v1930, %v1921
        %v1932 = vmul.u32 %v1887, %v1878
        %v1933 = vadd.s32 %v1909, %v1928
        %vm1934 = vc.u32 %v1909, %v1928
        %v1935 = vadd.s32 %v1931, 1
        %v1936 = vsel %vm1934, %v1935, %v1931
        %v1937 = vadd.s32 %v1932, %v1936
        %v1938 = vadd.s32 %v1937, 536870912
        %v1939 = vshrl.u32 %v1938, 30
        %v1940 = vshll.u32 %v1939, 30
        %v1941 = vsub.s32 %v1937, %v1940
        %vm1942 = vcmp.lt.s32.totalorder %v1941, 0
        %v1943 = vsub.s32 0, %v1941
        %v1944 = vsel %vm1942, %v1943, %v1941
        %v1945 = vclz %v1944
        %v1946 = vsub.s32 %v1945, 2
        %vm1947 = vcmp.gt.s32.totalorder 0, %v1946
        %v1948 = vsel %vm1947, 0, %v1946
        %v1949 = vsub.s32 32, %v1948
        %v1950 = vshll.u32 %v1941, %v1948
        %v1951 = vshrl.u32 %v1933, %v1949
        %v1952 = vor.u32 %v1950, %v1951
        %v1953 = vsub.s32 4294967266, %v1948
        %v1954 = vadd.s32 %v1953, 127
        %v1955 = vshll.u32 %v1954, 23
        %v1956 = vor.u32 4788187, %v1955
        %v1957 = vand.u32 2147483647, %v1956
        %v1959 = vcvt.s32.f32 %v1952
        %v1960 = vmul.f32 %v1959, %v1957
        %v1961 = vxor.u32 %v1960, 2147483648
        %v1962 = vsel %vm1841, %v1961, %v1960
        %v1963 = vsub.s32 4, %v1939
        %v1964 = vsel %vm1841, %v1963, %v1939
        %v1965 = vsel %vm1840, %v745, %v1962
        %v1966 = vsel %vm1840, 0, %v1964
        %v1967 = vmul.f32 %v1965, %v1965
        %v1968 = vmul.f32 %v1967, -0.001358992
        %v1969 = vadd.f32 %v1968, 0.041655596
        %v1970 = vmul.f32 %v1967, %v1969
        %v1971 = vadd.f32 %v1970, -0.4999988
        %v1972 = vmul.f32 %v1967, %v1971
        %v1973 = vadd.f32 1.0, %v1972
        %v1974 = vmul.f32 %v1965, %v1965
        %v1975 = vmul.f32 %v1974, -0.00019511016
        %v1976 = vadd.f32 %v1975, 0.008332121
        %v1977 = vmul.f32 %v1974, %v1976
        %v1978 = vadd.f32 %v1977, -0.16666654
        %v1979 = vmul.f32 %v1974, %v1978
        %v1980 = vadd.f32 %v1979, 1.0
        %v1981 = vmul.f32 %v1980, %v1965
        %vm1982 = vweird.f32 %v745
        %v1983 = vadd.s32 %v1966, 3
        %v1984 = vand.u32 %v1983, 3
        %vm1985 = vcmp.lt.s32.totalorder %v1984, 2
        %vm1986 = vcmp.eq.s32.totalorder %v1984, 0
        %v1987 = vxor.u32 %v1981, 2147483648
        %v1988 = vsel %vm1986, %v1973, %v1987
        %vm1989 = vcmp.eq.s32.totalorder %v1984, 2
        %v1990 = vxor.u32 %v1973, 2147483648
        %v1991 = vsel %vm1989, %v1990, %v1981
        %v1992 = vsel %vm1985, %v1988, %v1991
        %v1993 = vsel %vm1982, nan, %v1992
        %v1994 = vand.u32 2147483647, %v746
        %vm1995 = vcmp.le.f32.partialorder %v1994, 0.7853982
        %vm1996 = vcmp.lt.s32.totalorder %v746, 0
        %v1997 = vand.u32 %v746, 2139095040
        %v1998 = vshrl.u32 %v1997, 23
        %v1999 = vsub.s32 %v1998, 127
        %v2000 = vand.u32 2147483647, %v746
        %v2001 = vand.u32 %v2000, 8388607
        %v2002 = vor.u32 %v2001, 8388608
        %v2003 = vsub.s32 0, %v2002
        %v2004 = vadd.s32 %v1999, 1
        %vm2005 = vcmp.gt.s32.totalorder %v2004, 0
        %v2006 = vsel %vm2005, %v2004, 0
        %v2007 = vshrl.u32 %v2006, 5
        %v2008 = vand.u32 %v2006, 31
        %v2009 = vsub.s32 32, %v2008
        %v2010 = vshrl.u32 683565275, %v2009
        %v2011 = vshll.u32 683565275, %v2008
        %v2012 = vshrl.u32 2475754826, %v2009
        %v2013 = vor.u32 %v2011, %v2012
        %v2014 = vshll.u32 2475754826, %v2008
        %v2015 = vshrl.u32 2131351028, %v2009
        %v2016 = vor.u32 %v2014, %v2015
        %v2017 = vshll.u32 2131351028, %v2008
        %v2018 = vshrl.u32 2102212464, %v2009
        %v2019 = vor.u32 %v2017, %v2018
        %v2020 = vshll.u32 2102212464, %v2008
        %v2021 = vshrl.u32 920167782, %v2009
        %v2022 = vor.u32 %v2020, %v2021
        %v2023 = vshll.u32 920167782, %v2008
        %v2024 = vshrl.u32 1326507024, %v2009
        %v2025 = vor.u32 %v2023, %v2024
        %vm2026 = vcmp.lt.s32.totalorder %v2007, 1
        %vm2027 = vcmp.lt.s32.totalorder %v2007, 2
        %vm2028 = vcmp.lt.s32.totalorder %v2007, 3
        %vm2029 = vcmp.lt.s32.totalorder %v2007, 4
        %v2030 = vsel %vm2026, %v2010, %v2013
        %v2031 = vsel %vm2029, %v2019, 2102212464
        %v2032 = vsel %vm2028, %v2016, %v2031
        %v2033 = vsel %vm2027, %v2030, %v2032
        %v2034 = vsel %vm2026, %v2013, %v2016
        %v2035 = vsel %vm2029, %v2022, 920167782
        %v2036 = vsel %vm2028, %v2019, %v2035
        %v2037 = vsel %vm2027, %v2034, %v2036
        %v2038 = vsel %vm2026, %v2016, %v2019
        %v2039 = vsel %vm2029, %v2025, 1326507024
        %v2040 = vsel %vm2028, %v2022, %v2039
        %v2041 = vsel %vm2027, %v2038, %v2040
        %v2042 = vshll.u32 %v2002, 8
        %v2043 = vand.u32 %v2042, 65535
        %v2044 = vshrl.u32 %v2042, 16
        %v2045 = vand.u32 %v2041, 65535
        %v2046 = vshrl.u32 %v2041, 16
        %v2047 = vmul.u32 %v2043, %v2045
        %v2048 = vmul.u32 %v2043, %v2046
        %v2049 = vmul.u32 %v2044, %v2045
        %v2050 = vmul.u32 %v2044, %v2046
        %v2051 = vshll.u32 %v2048, 16
        %v2052 = vshrl.u32 %v2048, 16
        %v2053 = vshll.u32 %v2049, 16
        %v2054 = vshrl.u32 %v2049, 16
        %vm2055 = vc.u32 %v2047, %v2051
        %v2056 = vsel %vm2055, 1, 0
        %v2057 = vadd.s32 %v2047, %v2051
        %v2058 = vadd.s32 %v2050, %v2056
        %vm2059 = vc.u32 %v2057, %v2053
        %v2060 = vsel %vm2059, 1, 0
        %v2061 = vadd.s32 %v2057, %v2053
        %v2062 = vadd.s32 %v2058, %v2060
        %v2063 = vadd.s32 %v2062, %v2052
        %v2064 = vadd.s32 %v2063, %v2054
        %v2065 = vand.u32 %v2042, 65535
        %v2066 = vshrl.u32 %v2042, 16
        %v2067 = vand.u32 %v2037, 65535
        %v2068 = vshrl.u32 %v2037, 16
        %v2069 = vmul.u32 %v2065, %v2067
        %v2070 = vmul.u32 %v2065, %v2068
        %v2071 = vmul.u32 %v2066, %v2067
        %v2072 = vmul.u32 %v2066, %v2068
        %v2073 = vshll.u32 %v2070, 16
        %v2074 = vshrl.u32 %v2070, 16
        %v2075 = vshll.u32 %v2071, 16
        %v2076 = vshrl.u32 %v2071, 16
        %vm2077 = vc.u32 %v2069, %v2073
        %v2078 = vsel %vm2077, 1, 0
        %v2079 = vadd.s32 %v2069, %v2073
        %v2080 = vadd.s32 %v2072, %v2078
        %vm2081 = vc.u32 %v2079, %v2075
        %v2082 = vsel %vm2081, 1, 0
        %v2083 = vadd.s32 %v2079, %v2075
        %v2084 = vadd.s32 %v2080, %v2082
        %v2085 = vadd.s32 %v2084, %v2074
        %v2086 = vadd.s32 %v2085, %v2076
        %v2087 = vmul.u32 %v2042, %v2033
        %v2088 = vadd.s32 %v2064, %v2083
        %vm2089 = vc.u32 %v2064, %v2083
        %v2090 = vadd.s32 %v2086, 1
        %v2091 = vsel %vm2089, %v2090, %v2086
        %v2092 = vadd.s32 %v2087, %v2091
        %v2093 = vadd.s32 %v2092, 536870912
        %v2094 = vshrl.u32 %v2093, 30
        %v2095 = vshll.u32 %v2094, 30
        %v2096 = vsub.s32 %v2092, %v2095
        %vm2097 = vcmp.lt.s32.totalorder %v2096, 0
        %v2098 = vsub.s32 0, %v2096
        %v2099 = vsel %vm2097, %v2098, %v2096
        %v2100 = vclz %v2099
        %v2101 = vsub.s32 %v2100, 2
        %vm2102 = vcmp.gt.s32.totalorder 0, %v2101
        %v2103 = vsel %vm2102, 0, %v2101
        %v2104 = vsub.s32 32, %v2103
        %v2105 = vshll.u32 %v2096, %v2103
        %v2106 = vshrl.u32 %v2088, %v2104
        %v2107 = vor.u32 %v2105, %v2106
        %v2108 = vsub.s32 4294967266, %v2103
        %v2109 = vadd.s32 %v2108, 127
        %v2110 = vshll.u32 %v2109, 23
        %v2111 = vor.u32 4788187, %v2110
        %v2112 = vand.u32 2147483647, %v2111
        %v2114 = vcvt.s32.f32 %v2107
        %v2115 = vmul.f32 %v2114, %v2112
        %v2116 = vxor.u32 %v2115, 2147483648
        %v2117 = vsel %vm1996, %v2116, %v2115
        %v2118 = vsub.s32 4, %v2094
        %v2119 = vsel %vm1996, %v2118, %v2094
        %v2120 = vsel %vm1995, %v746, %v2117
        %v2121 = vsel %vm1995, 0, %v2119
        %v2122 = vmul.f32 %v2120, %v2120
        %v2123 = vmul.f32 %v2122, -0.001358992
        %v2124 = vadd.f32 %v2123, 0.041655596
        %v2125 = vmul.f32 %v2122, %v2124
        %v2126 = vadd.f32 %v2125, -0.4999988
        %v2127 = vmul.f32 %v2122, %v2126
        %v2128 = vadd.f32 1.0, %v2127
        %v2129 = vmul.f32 %v2120, %v2120
        %v2130 = vmul.f32 %v2129, -0.00019511016
        %v2131 = vadd.f32 %v2130, 0.008332121
        %v2132 = vmul.f32 %v2129, %v2131
        %v2133 = vadd.f32 %v2132, -0.16666654
        %v2134 = vmul.f32 %v2129, %v2133
        %v2135 = vadd.f32 %v2134, 1.0
        %v2136 = vmul.f32 %v2135, %v2120
        %vm2137 = vweird.f32 %v746
        %v2138 = vadd.s32 %v2121, 3
        %v2139 = vand.u32 %v2138, 3
        %vm2140 = vcmp.lt.s32.totalorder %v2139, 2
        %vm2141 = vcmp.eq.s32.totalorder %v2139, 0
        %v2142 = vxor.u32 %v2136, 2147483648
        %v2143 = vsel %vm2141, %v2128, %v2142
        %vm2144 = vcmp.eq.s32.totalorder %v2139, 2
        %v2145 = vxor.u32 %v2128, 2147483648
        %v2146 = vsel %vm2144, %v2145, %v2136
        %v2147 = vsel %vm2140, %v2143, %v2146
        %v2148 = vsel %vm2137, nan, %v2147
        %v2149 = vand.u32 2147483647, %v747
        %vm2150 = vcmp.le.f32.partialorder %v2149, 0.7853982
        %vm2151 = vcmp.lt.s32.totalorder %v747, 0
        %v2152 = vand.u32 %v747, 2139095040
        %v2153 = vshrl.u32 %v2152, 23
        %v2154 = vsub.s32 %v2153, 127
        %v2155 = vand.u32 2147483647, %v747
        %v2156 = vand.u32 %v2155, 8388607
        %v2157 = vor.u32 %v2156, 8388608
        %v2158 = vsub.s32 0, %v2157
        %v2159 = vadd.s32 %v2154, 1
        %vm2160 = vcmp.gt.s32.totalorder %v2159, 0
        %v2161 = vsel %vm2160, %v2159, 0
        %v2162 = vshrl.u32 %v2161, 5
        %v2163 = vand.u32 %v2161, 31
        %v2164 = vsub.s32 32, %v2163
        %v2165 = vshrl.u32 683565275, %v2164
        %v2166 = vshll.u32 683565275, %v2163
        %v2167 = vshrl.u32 2475754826, %v2164
        %v2168 = vor.u32 %v2166, %v2167
        %v2169 = vshll.u32 2475754826, %v2163
        %v2170 = vshrl.u32 2131351028, %v2164
        %v2171 = vor.u32 %v2169, %v2170
        %v2172 = vshll.u32 2131351028, %v2163
        %v2173 = vshrl.u32 2102212464, %v2164
        %v2174 = vor.u32 %v2172, %v2173
        %v2175 = vshll.u32 2102212464, %v2163
        %v2176 = vshrl.u32 920167782, %v2164
        %v2177 = vor.u32 %v2175, %v2176
        %v2178 = vshll.u32 920167782, %v2163
        %v2179 = vshrl.u32 1326507024, %v2164
        %v2180 = vor.u32 %v2178, %v2179
        %vm2181 = vcmp.lt.s32.totalorder %v2162, 1
        %vm2182 = vcmp.lt.s32.totalorder %v2162, 2
        %vm2183 = vcmp.lt.s32.totalorder %v2162, 3
        %vm2184 = vcmp.lt.s32.totalorder %v2162, 4
        %v2185 = vsel %vm2181, %v2165, %v2168
        %v2186 = vsel %vm2184, %v2174, 2102212464
        %v2187 = vsel %vm2183, %v2171, %v2186
        %v2188 = vsel %vm2182, %v2185, %v2187
        %v2189 = vsel %vm2181, %v2168, %v2171
        %v2190 = vsel %vm2184, %v2177, 920167782
        %v2191 = vsel %vm2183, %v2174, %v2190
        %v2192 = vsel %vm2182, %v2189, %v2191
        %v2193 = vsel %vm2181, %v2171, %v2174
        %v2194 = vsel %vm2184, %v2180, 1326507024
        %v2195 = vsel %vm2183, %v2177, %v2194
        %v2196 = vsel %vm2182, %v2193, %v2195
        %v2197 = vshll.u32 %v2157, 8
        %v2198 = vand.u32 %v2197, 65535
        %v2199 = vshrl.u32 %v2197, 16
        %v2200 = vand.u32 %v2196, 65535
        %v2201 = vshrl.u32 %v2196, 16
        %v2202 = vmul.u32 %v2198, %v2200
        %v2203 = vmul.u32 %v2198, %v2201
        %v2204 = vmul.u32 %v2199, %v2200
        %v2205 = vmul.u32 %v2199, %v2201
        %v2206 = vshll.u32 %v2203, 16
        %v2207 = vshrl.u32 %v2203, 16
        %v2208 = vshll.u32 %v2204, 16
        %v2209 = vshrl.u32 %v2204, 16
        %vm2210 = vc.u32 %v2202, %v2206
        %v2211 = vsel %vm2210, 1, 0
        %v2212 = vadd.s32 %v2202, %v2206
        %v2213 = vadd.s32 %v2205, %v2211
        %vm2214 = vc.u32 %v2212, %v2208
        %v2215 = vsel %vm2214, 1, 0
        %v2216 = vadd.s32 %v2212, %v2208
        %v2217 = vadd.s32 %v2213, %v2215
        %v2218 = vadd.s32 %v2217, %v2207
        %v2219 = vadd.s32 %v2218, %v2209
        %v2220 = vand.u32 %v2197, 65535
        %v2221 = vshrl.u32 %v2197, 16
        %v2222 = vand.u32 %v2192, 65535
        %v2223 = vshrl.u32 %v2192, 16
        %v2224 = vmul.u32 %v2220, %v2222
        %v2225 = vmul.u32 %v2220, %v2223
        %v2226 = vmul.u32 %v2221, %v2222
        %v2227 = vmul.u32 %v2221, %v2223
        %v2228 = vshll.u32 %v2225, 16
        %v2229 = vshrl.u32 %v2225, 16
        %v2230 = vshll.u32 %v2226, 16
        %v2231 = vshrl.u32 %v2226, 16
        %vm2232 = vc.u32 %v2224, %v2228
        %v2233 = vsel %vm2232, 1, 0
        %v2234 = vadd.s32 %v2224, %v2228
        %v2235 = vadd.s32 %v2227, %v2233
        %vm2236 = vc.u32 %v2234, %v2230
        %v2237 = vsel %vm2236, 1, 0
        %v2238 = vadd.s32 %v2234, %v2230
        %v2239 = vadd.s32 %v2235, %v2237
        %v2240 = vadd.s32 %v2239, %v2229
        %v2241 = vadd.s32 %v2240, %v2231
        %v2242 = vmul.u32 %v2197, %v2188
        %v2243 = vadd.s32 %v2219, %v2238
        %vm2244 = vc.u32 %v2219, %v2238
        %v2245 = vadd.s32 %v2241, 1
        %v2246 = vsel %vm2244, %v2245, %v2241
        %v2247 = vadd.s32 %v2242, %v2246
        %v2248 = vadd.s32 %v2247, 536870912
        %v2249 = vshrl.u32 %v2248, 30
        %v2250 = vshll.u32 %v2249, 30
        %v2251 = vsub.s32 %v2247, %v2250
        %vm2252 = vcmp.lt.s32.totalorder %v2251, 0
        %v2253 = vsub.s32 0, %v2251
        %v2254 = vsel %vm2252, %v2253, %v2251
        %v2255 = vclz %v2254
        %v2256 = vsub.s32 %v2255, 2
        %vm2257 = vcmp.gt.s32.totalorder 0, %v2256
        %v2258 = vsel %vm2257, 0, %v2256
        %v2259 = vsub.s32 32, %v2258
        %v2260 = vshll.u32 %v2251, %v2258
        %v2261 = vshrl.u32 %v2243, %v2259
        %v2262 = vor.u32 %v2260, %v2261
        %v2263 = vsub.s32 4294967266, %v2258
        %v2264 = vadd.s32 %v2263, 127
        %v2265 = vshll.u32 %v2264, 23
        %v2266 = vor.u32 4788187, %v2265
        %v2267 = vand.u32 2147483647, %v2266
        %v2269 = vcvt.s32.f32 %v2262
        %v2270 = vmul.f32 %v2269, %v2267
        %v2271 = vxor.u32 %v2270, 2147483648
        %v2272 = vsel %vm2151, %v2271, %v2270
        %v2273 = vsub.s32 4, %v2249
        %v2274 = vsel %vm2151, %v2273, %v2249
        %v2275 = vsel %vm2150, %v747, %v2272
        %v2276 = vsel %vm2150, 0, %v2274
        %v2277 = vmul.f32 %v2275, %v2275
        %v2278 = vmul.f32 %v2277, -0.001358992
        %v2279 = vadd.f32 %v2278, 0.041655596
        %v2280 = vmul.f32 %v2277, %v2279
        %v2281 = vadd.f32 %v2280, -0.4999988
        %v2282 = vmul.f32 %v2277, %v2281
        %v2283 = vadd.f32 1.0, %v2282
        %v2284 = vmul.f32 %v2275, %v2275
        %v2285 = vmul.f32 %v2284, -0.00019511016
        %v2286 = vadd.f32 %v2285, 0.008332121
        %v2287 = vmul.f32 %v2284, %v2286
        %v2288 = vadd.f32 %v2287, -0.16666654
        %v2289 = vmul.f32 %v2284, %v2288
        %v2290 = vadd.f32 %v2289, 1.0
        %v2291 = vmul.f32 %v2290, %v2275
        %vm2292 = vweird.f32 %v747
        %v2293 = vadd.s32 %v2276, 3
        %v2294 = vand.u32 %v2293, 3
        %vm2295 = vcmp.lt.s32.totalorder %v2294, 2
        %vm2296 = vcmp.eq.s32.totalorder %v2294, 0
        %v2297 = vxor.u32 %v2291, 2147483648
        %v2298 = vsel %vm2296, %v2283, %v2297
        %vm2299 = vcmp.eq.s32.totalorder %v2294, 2
        %v2300 = vxor.u32 %v2283, 2147483648
        %v2301 = vsel %vm2299, %v2300, %v2291
        %v2302 = vsel %vm2295, %v2298, %v2301
        %v2303 = vsel %vm2292, nan, %v2302
        %v2304 = vand.u32 2147483647, %v748
        %vm2305 = vcmp.le.f32.partialorder %v2304, 0.7853982
        %vm2306 = vcmp.lt.s32.totalorder %v748, 0
        %v2307 = vand.u32 %v748, 2139095040
        %v2308 = vshrl.u32 %v2307, 23
        %v2309 = vsub.s32 %v2308, 127
        %v2310 = vand.u32 2147483647, %v748
        %v2311 = vand.u32 %v2310, 8388607
        %v2312 = vor.u32 %v2311, 8388608
        %v2313 = vsub.s32 0, %v2312
        %v2314 = vadd.s32 %v2309, 1
        %vm2315 = vcmp.gt.s32.totalorder %v2314, 0
        %v2316 = vsel %vm2315, %v2314, 0
        %v2317 = vshrl.u32 %v2316, 5
        %v2318 = vand.u32 %v2316, 31
        %v2319 = vsub.s32 32, %v2318
        %v2320 = vshrl.u32 683565275, %v2319
        %v2321 = vshll.u32 683565275, %v2318
        %v2322 = vshrl.u32 2475754826, %v2319
        %v2323 = vor.u32 %v2321, %v2322
        %v2324 = vshll.u32 2475754826, %v2318
        %v2325 = vshrl.u32 2131351028, %v2319
        %v2326 = vor.u32 %v2324, %v2325
        %v2327 = vshll.u32 2131351028, %v2318
        %v2328 = vshrl.u32 2102212464, %v2319
        %v2329 = vor.u32 %v2327, %v2328
        %v2330 = vshll.u32 2102212464, %v2318
        %v2331 = vshrl.u32 920167782, %v2319
        %v2332 = vor.u32 %v2330, %v2331
        %v2333 = vshll.u32 920167782, %v2318
        %v2334 = vshrl.u32 1326507024, %v2319
        %v2335 = vor.u32 %v2333, %v2334
        %vm2336 = vcmp.lt.s32.totalorder %v2317, 1
        %vm2337 = vcmp.lt.s32.totalorder %v2317, 2
        %vm2338 = vcmp.lt.s32.totalorder %v2317, 3
        %vm2339 = vcmp.lt.s32.totalorder %v2317, 4
        %v2340 = vsel %vm2336, %v2320, %v2323
        %v2341 = vsel %vm2339, %v2329, 2102212464
        %v2342 = vsel %vm2338, %v2326, %v2341
        %v2343 = vsel %vm2337, %v2340, %v2342
        %v2344 = vsel %vm2336, %v2323, %v2326
        %v2345 = vsel %vm2339, %v2332, 920167782
        %v2346 = vsel %vm2338, %v2329, %v2345
        %v2347 = vsel %vm2337, %v2344, %v2346
        %v2348 = vsel %vm2336, %v2326, %v2329
        %v2349 = vsel %vm2339, %v2335, 1326507024
        %v2350 = vsel %vm2338, %v2332, %v2349
        %v2351 = vsel %vm2337, %v2348, %v2350
        %v2352 = vshll.u32 %v2312, 8
        %v2353 = vand.u32 %v2352, 65535
        %v2354 = vshrl.u32 %v2352, 16
        %v2355 = vand.u32 %v2351, 65535
        %v2356 = vshrl.u32 %v2351, 16
        %v2357 = vmul.u32 %v2353, %v2355
        %v2358 = vmul.u32 %v2353, %v2356
        %v2359 = vmul.u32 %v2354, %v2355
        %v2360 = vmul.u32 %v2354, %v2356
        %v2361 = vshll.u32 %v2358, 16
        %v2362 = vshrl.u32 %v2358, 16
        %v2363 = vshll.u32 %v2359, 16
        %v2364 = vshrl.u32 %v2359, 16
        %vm2365 = vc.u32 %v2357, %v2361
        %v2366 = vsel %vm2365, 1, 0
        %v2367 = vadd.s32 %v2357, %v2361
        %v2368 = vadd.s32 %v2360, %v2366
        %vm2369 = vc.u32 %v2367, %v2363
        %v2370 = vsel %vm2369, 1, 0
        %v2371 = vadd.s32 %v2367, %v2363
        %v2372 = vadd.s32 %v2368, %v2370
        %v2373 = vadd.s32 %v2372, %v2362
        %v2374 = vadd.s32 %v2373, %v2364
        %v2375 = vand.u32 %v2352, 65535
        %v2376 = vshrl.u32 %v2352, 16
        %v2377 = vand.u32 %v2347, 65535
        %v2378 = vshrl.u32 %v2347, 16
        %v2379 = vmul.u32 %v2375, %v2377
        %v2380 = vmul.u32 %v2375, %v2378
        %v2381 = vmul.u32 %v2376, %v2377
        %v2382 = vmul.u32 %v2376, %v2378
        %v2383 = vshll.u32 %v2380, 16
        %v2384 = vshrl.u32 %v2380, 16
        %v2385 = vshll.u32 %v2381, 16
        %v2386 = vshrl.u32 %v2381, 16
        %vm2387 = vc.u32 %v2379, %v2383
        %v2388 = vsel %vm2387, 1, 0
        %v2389 = vadd.s32 %v2379, %v2383
        %v2390 = vadd.s32 %v2382, %v2388
        %vm2391 = vc.u32 %v2389, %v2385
        %v2392 = vsel %vm2391, 1, 0
        %v2393 = vadd.s32 %v2389, %v2385
        %v2394 = vadd.s32 %v2390, %v2392
        %v2395 = vadd.s32 %v2394, %v2384
        %v2396 = vadd.s32 %v2395, %v2386
        %v2397 = vmul.u32 %v2352, %v2343
        %v2398 = vadd.s32 %v2374, %v2393
        %vm2399 = vc.u32 %v2374, %v2393
        %v2400 = vadd.s32 %v2396, 1
        %v2401 = vsel %vm2399, %v2400, %v2396
        %v2402 = vadd.s32 %v2397, %v2401
        %v2403 = vadd.s32 %v2402, 536870912
        %v2404 = vshrl.u32 %v2403, 30
        %v2405 = vshll.u32 %v2404, 30
        %v2406 = vsub.s32 %v2402, %v2405
        %vm2407 = vcmp.lt.s32.totalorder %v2406, 0
        %v2408 = vsub.s32 0, %v2406
        %v2409 = vsel %vm2407, %v2408, %v2406
        %v2410 = vclz %v2409
        %v2411 = vsub.s32 %v2410, 2
        %vm2412 = vcmp.gt.s32.totalorder 0, %v2411
        %v2413 = vsel %vm2412, 0, %v2411
        %v2414 = vsub.s32 32, %v2413
        %v2415 = vshll.u32 %v2406, %v2413
        %v2416 = vshrl.u32 %v2398, %v2414
        %v2417 = vor.u32 %v2415, %v2416
        %v2418 = vsub.s32 4294967266, %v2413
        %v2419 = vadd.s32 %v2418, 127
        %v2420 = vshll.u32 %v2419, 23
        %v2421 = vor.u32 4788187, %v2420
        %v2422 = vand.u32 2147483647, %v2421
        %v2424 = vcvt.s32.f32 %v2417
        %v2425 = vmul.f32 %v2424, %v2422
        %v2426 = vxor.u32 %v2425, 2147483648
        %v2427 = vsel %vm2306, %v2426, %v2425
        %v2428 = vsub.s32 4, %v2404
        %v2429 = vsel %vm2306, %v2428, %v2404
        %v2430 = vsel %vm2305, %v748, %v2427
        %v2431 = vsel %vm2305, 0, %v2429
        %v2432 = vmul.f32 %v2430, %v2430
        %v2433 = vmul.f32 %v2432, -0.001358992
        %v2434 = vadd.f32 %v2433, 0.041655596
        %v2435 = vmul.f32 %v2432, %v2434
        %v2436 = vadd.f32 %v2435, -0.4999988
        %v2437 = vmul.f32 %v2432, %v2436
        %v2438 = vadd.f32 1.0, %v2437
        %v2439 = vmul.f32 %v2430, %v2430
        %v2440 = vmul.f32 %v2439, -0.00019511016
        %v2441 = vadd.f32 %v2440, 0.008332121
        %v2442 = vmul.f32 %v2439, %v2441
        %v2443 = vadd.f32 %v2442, -0.16666654
        %v2444 = vmul.f32 %v2439, %v2443
        %v2445 = vadd.f32 %v2444, 1.0
        %v2446 = vmul.f32 %v2445, %v2430
        %vm2447 = vweird.f32 %v748
        %v2448 = vadd.s32 %v2431, 3
        %v2449 = vand.u32 %v2448, 3
        %vm2450 = vcmp.lt.s32.totalorder %v2449, 2
        %vm2451 = vcmp.eq.s32.totalorder %v2449, 0
        %v2452 = vxor.u32 %v2446, 2147483648
        %v2453 = vsel %vm2451, %v2438, %v2452
        %vm2454 = vcmp.eq.s32.totalorder %v2449, 2
        %v2455 = vxor.u32 %v2438, 2147483648
        %v2456 = vsel %vm2454, %v2455, %v2446
        %v2457 = vsel %vm2450, %v2453, %v2456
        %v2458 = vsel %vm2447, nan, %v2457
        %v2459 = vand.u32 2147483647, %v749
        %vm2460 = vcmp.le.f32.partialorder %v2459, 0.7853982
        %vm2461 = vcmp.lt.s32.totalorder %v749, 0
        %v2462 = vand.u32 %v749, 2139095040
        %v2463 = vshrl.u32 %v2462, 23
        %v2464 = vsub.s32 %v2463, 127
        %v2465 = vand.u32 2147483647, %v749
        %v2466 = vand.u32 %v2465, 8388607
        %v2467 = vor.u32 %v2466, 8388608
        %v2468 = vsub.s32 0, %v2467
        %v2469 = vadd.s32 %v2464, 1
        %vm2470 = vcmp.gt.s32.totalorder %v2469, 0
        %v2471 = vsel %vm2470, %v2469, 0
        %v2472 = vshrl.u32 %v2471, 5
        %v2473 = vand.u32 %v2471, 31
        %v2474 = vsub.s32 32, %v2473
        %v2475 = vshrl.u32 683565275, %v2474
        %v2476 = vshll.u32 683565275, %v2473
        %v2477 = vshrl.u32 2475754826, %v2474
        %v2478 = vor.u32 %v2476, %v2477
        %v2479 = vshll.u32 2475754826, %v2473
        %v2480 = vshrl.u32 2131351028, %v2474
        %v2481 = vor.u32 %v2479, %v2480
        %v2482 = vshll.u32 2131351028, %v2473
        %v2483 = vshrl.u32 2102212464, %v2474
        %v2484 = vor.u32 %v2482, %v2483
        %v2485 = vshll.u32 2102212464, %v2473
        %v2486 = vshrl.u32 920167782, %v2474
        %v2487 = vor.u32 %v2485, %v2486
        %v2488 = vshll.u32 920167782, %v2473
        %v2489 = vshrl.u32 1326507024, %v2474
        %v2490 = vor.u32 %v2488, %v2489
        %vm2491 = vcmp.lt.s32.totalorder %v2472, 1
        %vm2492 = vcmp.lt.s32.totalorder %v2472, 2
        %vm2493 = vcmp.lt.s32.totalorder %v2472, 3
        %vm2494 = vcmp.lt.s32.totalorder %v2472, 4
        %v2495 = vsel %vm2491, %v2475, %v2478
        %v2496 = vsel %vm2494, %v2484, 2102212464
        %v2497 = vsel %vm2493, %v2481, %v2496
        %v2498 = vsel %vm2492, %v2495, %v2497
        %v2499 = vsel %vm2491, %v2478, %v2481
        %v2500 = vsel %vm2494, %v2487, 920167782
        %v2501 = vsel %vm2493, %v2484, %v2500
        %v2502 = vsel %vm2492, %v2499, %v2501
        %v2503 = vsel %vm2491, %v2481, %v2484
        %v2504 = vsel %vm2494, %v2490, 1326507024
        %v2505 = vsel %vm2493, %v2487, %v2504
        %v2506 = vsel %vm2492, %v2503, %v2505
        %v2507 = vshll.u32 %v2467, 8
        %v2508 = vand.u32 %v2507, 65535
        %v2509 = vshrl.u32 %v2507, 16
        %v2510 = vand.u32 %v2506, 65535
        %v2511 = vshrl.u32 %v2506, 16
        %v2512 = vmul.u32 %v2508, %v2510
        %v2513 = vmul.u32 %v2508, %v2511
        %v2514 = vmul.u32 %v2509, %v2510
        %v2515 = vmul.u32 %v2509, %v2511
        %v2516 = vshll.u32 %v2513, 16
        %v2517 = vshrl.u32 %v2513, 16
        %v2518 = vshll.u32 %v2514, 16
        %v2519 = vshrl.u32 %v2514, 16
        %vm2520 = vc.u32 %v2512, %v2516
        %v2521 = vsel %vm2520, 1, 0
        %v2522 = vadd.s32 %v2512, %v2516
        %v2523 = vadd.s32 %v2515, %v2521
        %vm2524 = vc.u32 %v2522, %v2518
        %v2525 = vsel %vm2524, 1, 0
        %v2526 = vadd.s32 %v2522, %v2518
        %v2527 = vadd.s32 %v2523, %v2525
        %v2528 = vadd.s32 %v2527, %v2517
        %v2529 = vadd.s32 %v2528, %v2519
        %v2530 = vand.u32 %v2507, 65535
        %v2531 = vshrl.u32 %v2507, 16
        %v2532 = vand.u32 %v2502, 65535
        %v2533 = vshrl.u32 %v2502, 16
        %v2534 = vmul.u32 %v2530, %v2532
        %v2535 = vmul.u32 %v2530, %v2533
        %v2536 = vmul.u32 %v2531, %v2532
        %v2537 = vmul.u32 %v2531, %v2533
        %v2538 = vshll.u32 %v2535, 16
        %v2539 = vshrl.u32 %v2535, 16
        %v2540 = vshll.u32 %v2536, 16
        %v2541 = vshrl.u32 %v2536, 16
        %vm2542 = vc.u32 %v2534, %v2538
        %v2543 = vsel %vm2542, 1, 0
        %v2544 = vadd.s32 %v2534, %v2538
        %v2545 = vadd.s32 %v2537, %v2543
        %vm2546 = vc.u32 %v2544, %v2540
        %v2547 = vsel %vm2546, 1, 0
        %v2548 = vadd.s32 %v2544, %v2540
        %v2549 = vadd.s32 %v2545, %v2547
        %v2550 = vadd.s32 %v2549, %v2539
        %v2551 = vadd.s32 %v2550, %v2541
        %v2552 = vmul.u32 %v2507, %v2498
        %v2553 = vadd.s32 %v2529, %v2548
        %vm2554 = vc.u32 %v2529, %v2548
        %v2555 = vadd.s32 %v2551, 1
        %v2556 = vsel %vm2554, %v2555, %v2551
        %v2557 = vadd.s32 %v2552, %v2556
        %v2558 = vadd.s32 %v2557, 536870912
        %v2559 = vshrl.u32 %v2558, 30
        %v2560 = vshll.u32 %v2559, 30
        %v2561 = vsub.s32 %v2557, %v2560
        %vm2562 = vcmp.lt.s32.totalorder %v2561, 0
        %v2563 = vsub.s32 0, %v2561
        %v2564 = vsel %vm2562, %v2563, %v2561
        %v2565 = vclz %v2564
        %v2566 = vsub.s32 %v2565, 2
        %vm2567 = vcmp.gt.s32.totalorder 0, %v2566
        %v2568 = vsel %vm2567, 0, %v2566
        %v2569 = vsub.s32 32, %v2568
        %v2570 = vshll.u32 %v2561, %v2568
        %v2571 = vshrl.u32 %v2553, %v2569
        %v2572 = vor.u32 %v2570, %v2571
        %v2573 = vsub.s32 4294967266, %v2568
        %v2574 = vadd.s32 %v2573, 127
        %v2575 = vshll.u32 %v2574, 23
        %v2576 = vor.u32 4788187, %v2575
        %v2577 = vand.u32 2147483647, %v2576
        %v2579 = vcvt.s32.f32 %v2572
        %v2580 = vmul.f32 %v2579, %v2577
        %v2581 = vxor.u32 %v2580, 2147483648
        %v2582 = vsel %vm2461, %v2581, %v2580
        %v2583 = vsub.s32 4, %v2559
        %v2584 = vsel %vm2461, %v2583, %v2559
        %v2585 = vsel %vm2460, %v749, %v2582
        %v2586 = vsel %vm2460, 0, %v2584
        %v2587 = vmul.f32 %v2585, %v2585
        %v2588 = vmul.f32 %v2587, -0.001358992
        %v2589 = vadd.f32 %v2588, 0.041655596
        %v2590 = vmul.f32 %v2587, %v2589
        %v2591 = vadd.f32 %v2590, -0.4999988
        %v2592 = vmul.f32 %v2587, %v2591
        %v2593 = vadd.f32 1.0, %v2592
        %v2594 = vmul.f32 %v2585, %v2585
        %v2595 = vmul.f32 %v2594, -0.00019511016
        %v2596 = vadd.f32 %v2595, 0.008332121
        %v2597 = vmul.f32 %v2594, %v2596
        %v2598 = vadd.f32 %v2597, -0.16666654
        %v2599 = vmul.f32 %v2594, %v2598
        %v2600 = vadd.f32 %v2599, 1.0
        %v2601 = vmul.f32 %v2600, %v2585
        %vm2602 = vweird.f32 %v749
        %v2603 = vadd.s32 %v2586, 3
        %v2604 = vand.u32 %v2603, 3
        %vm2605 = vcmp.lt.s32.totalorder %v2604, 2
        %vm2606 = vcmp.eq.s32.totalorder %v2604, 0
        %v2607 = vxor.u32 %v2601, 2147483648
        %v2608 = vsel %vm2606, %v2593, %v2607
        %vm2609 = vcmp.eq.s32.totalorder %v2604, 2
        %v2610 = vxor.u32 %v2593, 2147483648
        %v2611 = vsel %vm2609, %v2610, %v2601
        %v2612 = vsel %vm2605, %v2608, %v2611
        %v2613 = vsel %vm2602, nan, %v2612
        %v2614 = vand.u32 2147483647, %v750
        %vm2615 = vcmp.le.f32.partialorder %v2614, 0.7853982
        %vm2616 = vcmp.lt.s32.totalorder %v750, 0
        %v2617 = vand.u32 %v750, 2139095040
        %v2618 = vshrl.u32 %v2617, 23
        %v2619 = vsub.s32 %v2618, 127
        %v2620 = vand.u32 2147483647, %v750
        %v2621 = vand.u32 %v2620, 8388607
        %v2622 = vor.u32 %v2621, 8388608
        %v2623 = vsub.s32 0, %v2622
        %v2624 = vadd.s32 %v2619, 1
        %vm2625 = vcmp.gt.s32.totalorder %v2624, 0
        %v2626 = vsel %vm2625, %v2624, 0
        %v2627 = vshrl.u32 %v2626, 5
        %v2628 = vand.u32 %v2626, 31
        %v2629 = vsub.s32 32, %v2628
        %v2630 = vshrl.u32 683565275, %v2629
        %v2631 = vshll.u32 683565275, %v2628
        %v2632 = vshrl.u32 2475754826, %v2629
        %v2633 = vor.u32 %v2631, %v2632
        %v2634 = vshll.u32 2475754826, %v2628
        %v2635 = vshrl.u32 2131351028, %v2629
        %v2636 = vor.u32 %v2634, %v2635
        %v2637 = vshll.u32 2131351028, %v2628
        %v2638 = vshrl.u32 2102212464, %v2629
        %v2639 = vor.u32 %v2637, %v2638
        %v2640 = vshll.u32 2102212464, %v2628
        %v2641 = vshrl.u32 920167782, %v2629
        %v2642 = vor.u32 %v2640, %v2641
        %v2643 = vshll.u32 920167782, %v2628
        %v2644 = vshrl.u32 1326507024, %v2629
        %v2645 = vor.u32 %v2643, %v2644
        %vm2646 = vcmp.lt.s32.totalorder %v2627, 1
        %vm2647 = vcmp.lt.s32.totalorder %v2627, 2
        %vm2648 = vcmp.lt.s32.totalorder %v2627, 3
        %vm2649 = vcmp.lt.s32.totalorder %v2627, 4
        %v2650 = vsel %vm2646, %v2630, %v2633
        %v2651 = vsel %vm2649, %v2639, 2102212464
        %v2652 = vsel %vm2648, %v2636, %v2651
        %v2653 = vsel %vm2647, %v2650, %v2652
        %v2654 = vsel %vm2646, %v2633, %v2636
        %v2655 = vsel %vm2649, %v2642, 920167782
        %v2656 = vsel %vm2648, %v2639, %v2655
        %v2657 = vsel %vm2647, %v2654, %v2656
        %v2658 = vsel %vm2646, %v2636, %v2639
        %v2659 = vsel %vm2649, %v2645, 1326507024
        %v2660 = vsel %vm2648, %v2642, %v2659
        %v2661 = vsel %vm2647, %v2658, %v2660
        %v2662 = vshll.u32 %v2622, 8
        %v2663 = vand.u32 %v2662, 65535
        %v2664 = vshrl.u32 %v2662, 16
        %v2665 = vand.u32 %v2661, 65535
        %v2666 = vshrl.u32 %v2661, 16
        %v2667 = vmul.u32 %v2663, %v2665
        %v2668 = vmul.u32 %v2663, %v2666
        %v2669 = vmul.u32 %v2664, %v2665
        %v2670 = vmul.u32 %v2664, %v2666
        %v2671 = vshll.u32 %v2668, 16
        %v2672 = vshrl.u32 %v2668, 16
        %v2673 = vshll.u32 %v2669, 16
        %v2674 = vshrl.u32 %v2669, 16
        %vm2675 = vc.u32 %v2667, %v2671
        %v2676 = vsel %vm2675, 1, 0
        %v2677 = vadd.s32 %v2667, %v2671
        %v2678 = vadd.s32 %v2670, %v2676
        %vm2679 = vc.u32 %v2677, %v2673
        %v2680 = vsel %vm2679, 1, 0
        %v2681 = vadd.s32 %v2677, %v2673
        %v2682 = vadd.s32 %v2678, %v2680
        %v2683 = vadd.s32 %v2682, %v2672
        %v2684 = vadd.s32 %v2683, %v2674
        %v2685 = vand.u32 %v2662, 65535
        %v2686 = vshrl.u32 %v2662, 16
        %v2687 = vand.u32 %v2657, 65535
        %v2688 = vshrl.u32 %v2657, 16
        %v2689 = vmul.u32 %v2685, %v2687
        %v2690 = vmul.u32 %v2685, %v2688
        %v2691 = vmul.u32 %v2686, %v2687
        %v2692 = vmul.u32 %v2686, %v2688
        %v2693 = vshll.u32 %v2690, 16
        %v2694 = vshrl.u32 %v2690, 16
        %v2695 = vshll.u32 %v2691, 16
        %v2696 = vshrl.u32 %v2691, 16
        %vm2697 = vc.u32 %v2689, %v2693
        %v2698 = vsel %vm2697, 1, 0
        %v2699 = vadd.s32 %v2689, %v2693
        %v2700 = vadd.s32 %v2692, %v2698
        %vm2701 = vc.u32 %v2699, %v2695
        %v2702 = vsel %vm2701, 1, 0
        %v2703 = vadd.s32 %v2699, %v2695
        %v2704 = vadd.s32 %v2700, %v2702
        %v2705 = vadd.s32 %v2704, %v2694
        %v2706 = vadd.s32 %v2705, %v2696
        %v2707 = vmul.u32 %v2662, %v2653
        %v2708 = vadd.s32 %v2684, %v2703
        %vm2709 = vc.u32 %v2684, %v2703
        %v2710 = vadd.s32 %v2706, 1
        %v2711 = vsel %vm2709, %v2710, %v2706
        %v2712 = vadd.s32 %v2707, %v2711
        %v2713 = vadd.s32 %v2712, 536870912
        %v2714 = vshrl.u32 %v2713, 30
        %v2715 = vshll.u32 %v2714, 30
        %v2716 = vsub.s32 %v2712, %v2715
        %vm2717 = vcmp.lt.s32.totalorder %v2716, 0
        %v2718 = vsub.s32 0, %v2716
        %v2719 = vsel %vm2717, %v2718, %v2716
        %v2720 = vclz %v2719
        %v2721 = vsub.s32 %v2720, 2
        %vm2722 = vcmp.gt.s32.totalorder 0, %v2721
        %v2723 = vsel %vm2722, 0, %v2721
        %v2724 = vsub.s32 32, %v2723
        %v2725 = vshll.u32 %v2716, %v2723
        %v2726 = vshrl.u32 %v2708, %v2724
        %v2727 = vor.u32 %v2725, %v2726
        %v2728 = vsub.s32 4294967266, %v2723
        %v2729 = vadd.s32 %v2728, 127
        %v2730 = vshll.u32 %v2729, 23
        %v2731 = vor.u32 4788187, %v2730
        %v2732 = vand.u32 2147483647, %v2731
        %v2734 = vcvt.s32.f32 %v2727
        %v2735 = vmul.f32 %v2734, %v2732
        %v2736 = vxor.u32 %v2735, 2147483648
        %v2737 = vsel %vm2616, %v2736, %v2735
        %v2738 = vsub.s32 4, %v2714
        %v2739 = vsel %vm2616, %v2738, %v2714
        %v2740 = vsel %vm2615, %v750, %v2737
        %v2741 = vsel %vm2615, 0, %v2739
        %v2742 = vmul.f32 %v2740, %v2740
        %v2743 = vmul.f32 %v2742, -0.001358992
        %v2744 = vadd.f32 %v2743, 0.041655596
        %v2745 = vmul.f32 %v2742, %v2744
        %v2746 = vadd.f32 %v2745, -0.4999988
        %v2747 = vmul.f32 %v2742, %v2746
        %v2748 = vadd.f32 1.0, %v2747
        %v2749 = vmul.f32 %v2740, %v2740
        %v2750 = vmul.f32 %v2749, -0.00019511016
        %v2751 = vadd.f32 %v2750, 0.008332121
        %v2752 = vmul.f32 %v2749, %v2751
        %v2753 = vadd.f32 %v2752, -0.16666654
        %v2754 = vmul.f32 %v2749, %v2753
        %v2755 = vadd.f32 %v2754, 1.0
        %v2756 = vmul.f32 %v2755, %v2740
        %vm2757 = vweird.f32 %v750
        %v2758 = vadd.s32 %v2741, 3
        %v2759 = vand.u32 %v2758, 3
        %vm2760 = vcmp.lt.s32.totalorder %v2759, 2
        %vm2761 = vcmp.eq.s32.totalorder %v2759, 0
        %v2762 = vxor.u32 %v2756, 2147483648
        %v2763 = vsel %vm2761, %v2748, %v2762
        %vm2764 = vcmp.eq.s32.totalorder %v2759, 2
        %v2765 = vxor.u32 %v2748, 2147483648
        %v2766 = vsel %vm2764, %v2765, %v2756
        %v2767 = vsel %vm2760, %v2763, %v2766
        %v2768 = vsel %vm2757, nan, %v2767
        %v2769 = vand.u32 2147483647, %v751
        %vm2770 = vcmp.le.f32.partialorder %v2769, 0.7853982
        %vm2771 = vcmp.lt.s32.totalorder %v751, 0
        %v2772 = vand.u32 %v751, 2139095040
        %v2773 = vshrl.u32 %v2772, 23
        %v2774 = vsub.s32 %v2773, 127
        %v2775 = vand.u32 2147483647, %v751
        %v2776 = vand.u32 %v2775, 8388607
        %v2777 = vor.u32 %v2776, 8388608
        %v2778 = vsub.s32 0, %v2777
        %v2779 = vadd.s32 %v2774, 1
        %vm2780 = vcmp.gt.s32.totalorder %v2779, 0
        %v2781 = vsel %vm2780, %v2779, 0
        %v2782 = vshrl.u32 %v2781, 5
        %v2783 = vand.u32 %v2781, 31
        %v2784 = vsub.s32 32, %v2783
        %v2785 = vshrl.u32 683565275, %v2784
        %v2786 = vshll.u32 683565275, %v2783
        %v2787 = vshrl.u32 2475754826, %v2784
        %v2788 = vor.u32 %v2786, %v2787
        %v2789 = vshll.u32 2475754826, %v2783
        %v2790 = vshrl.u32 2131351028, %v2784
        %v2791 = vor.u32 %v2789, %v2790
        %v2792 = vshll.u32 2131351028, %v2783
        %v2793 = vshrl.u32 2102212464, %v2784
        %v2794 = vor.u32 %v2792, %v2793
        %v2795 = vshll.u32 2102212464, %v2783
        %v2796 = vshrl.u32 920167782, %v2784
        %v2797 = vor.u32 %v2795, %v2796
        %v2798 = vshll.u32 920167782, %v2783
        %v2799 = vshrl.u32 1326507024, %v2784
        %v2800 = vor.u32 %v2798, %v2799
        %vm2801 = vcmp.lt.s32.totalorder %v2782, 1
        %vm2802 = vcmp.lt.s32.totalorder %v2782, 2
        %vm2803 = vcmp.lt.s32.totalorder %v2782, 3
        %vm2804 = vcmp.lt.s32.totalorder %v2782, 4
        %v2805 = vsel %vm2801, %v2785, %v2788
        %v2806 = vsel %vm2804, %v2794, 2102212464
        %v2807 = vsel %vm2803, %v2791, %v2806
        %v2808 = vsel %vm2802, %v2805, %v2807
        %v2809 = vsel %vm2801, %v2788, %v2791
        %v2810 = vsel %vm2804, %v2797, 920167782
        %v2811 = vsel %vm2803, %v2794, %v2810
        %v2812 = vsel %vm2802, %v2809, %v2811
        %v2813 = vsel %vm2801, %v2791, %v2794
        %v2814 = vsel %vm2804, %v2800, 1326507024
        %v2815 = vsel %vm2803, %v2797, %v2814
        %v2816 = vsel %vm2802, %v2813, %v2815
        %v2817 = vshll.u32 %v2777, 8
        %v2818 = vand.u32 %v2817, 65535
        %v2819 = vshrl.u32 %v2817, 16
        %v2820 = vand.u32 %v2816, 65535
        %v2821 = vshrl.u32 %v2816, 16
        %v2822 = vmul.u32 %v2818, %v2820
        %v2823 = vmul.u32 %v2818, %v2821
        %v2824 = vmul.u32 %v2819, %v2820
        %v2825 = vmul.u32 %v2819, %v2821
        %v2826 = vshll.u32 %v2823, 16
        %v2827 = vshrl.u32 %v2823, 16
        %v2828 = vshll.u32 %v2824, 16
        %v2829 = vshrl.u32 %v2824, 16
        %vm2830 = vc.u32 %v2822, %v2826
        %v2831 = vsel %vm2830, 1, 0
        %v2832 = vadd.s32 %v2822, %v2826
        %v2833 = vadd.s32 %v2825, %v2831
        %vm2834 = vc.u32 %v2832, %v2828
        %v2835 = vsel %vm2834, 1, 0
        %v2836 = vadd.s32 %v2832, %v2828
        %v2837 = vadd.s32 %v2833, %v2835
        %v2838 = vadd.s32 %v2837, %v2827
        %v2839 = vadd.s32 %v2838, %v2829
        %v2840 = vand.u32 %v2817, 65535
        %v2841 = vshrl.u32 %v2817, 16
        %v2842 = vand.u32 %v2812, 65535
        %v2843 = vshrl.u32 %v2812, 16
        %v2844 = vmul.u32 %v2840, %v2842
        %v2845 = vmul.u32 %v2840, %v2843
        %v2846 = vmul.u32 %v2841, %v2842
        %v2847 = vmul.u32 %v2841, %v2843
        %v2848 = vshll.u32 %v2845, 16
        %v2849 = vshrl.u32 %v2845, 16
        %v2850 = vshll.u32 %v2846, 16
        %v2851 = vshrl.u32 %v2846, 16
        %vm2852 = vc.u32 %v2844, %v2848
        %v2853 = vsel %vm2852, 1, 0
        %v2854 = vadd.s32 %v2844, %v2848
        %v2855 = vadd.s32 %v2847, %v2853
        %vm2856 = vc.u32 %v2854, %v2850
        %v2857 = vsel %vm2856, 1, 0
        %v2858 = vadd.s32 %v2854, %v2850
        %v2859 = vadd.s32 %v2855, %v2857
        %v2860 = vadd.s32 %v2859, %v2849
        %v2861 = vadd.s32 %v2860, %v2851
        %v2862 = vmul.u32 %v2817, %v2808
        %v2863 = vadd.s32 %v2839, %v2858
        %vm2864 = vc.u32 %v2839, %v2858
        %v2865 = vadd.s32 %v2861, 1
        %v2866 = vsel %vm2864, %v2865, %v2861
        %v2867 = vadd.s32 %v2862, %v2866
        %v2868 = vadd.s32 %v2867, 536870912
        %v2869 = vshrl.u32 %v2868, 30
        %v2870 = vshll.u32 %v2869, 30
        %v2871 = vsub.s32 %v2867, %v2870
        %vm2872 = vcmp.lt.s32.totalorder %v2871, 0
        %v2873 = vsub.s32 0, %v2871
        %v2874 = vsel %vm2872, %v2873, %v2871
        %v2875 = vclz %v2874
        %v2876 = vsub.s32 %v2875, 2
        %vm2877 = vcmp.gt.s32.totalorder 0, %v2876
        %v2878 = vsel %vm2877, 0, %v2876
        %v2879 = vsub.s32 32, %v2878
        %v2880 = vshll.u32 %v2871, %v2878
        %v2881 = vshrl.u32 %v2863, %v2879
        %v2882 = vor.u32 %v2880, %v2881
        %v2883 = vsub.s32 4294967266, %v2878
        %v2884 = vadd.s32 %v2883, 127
        %v2885 = vshll.u32 %v2884, 23
        %v2886 = vor.u32 4788187, %v2885
        %v2887 = vand.u32 2147483647, %v2886
        %v2889 = vcvt.s32.f32 %v2882
        %v2890 = vmul.f32 %v2889, %v2887
        %v2891 = vxor.u32 %v2890, 2147483648
        %v2892 = vsel %vm2771, %v2891, %v2890
        %v2893 = vsub.s32 4, %v2869
        %v2894 = vsel %vm2771, %v2893, %v2869
        %v2895 = vsel %vm2770, %v751, %v2892
        %v2896 = vsel %vm2770, 0, %v2894
        %v2897 = vmul.f32 %v2895, %v2895
        %v2898 = vmul.f32 %v2897, -0.001358992
        %v2899 = vadd.f32 %v2898, 0.041655596
        %v2900 = vmul.f32 %v2897, %v2899
        %v2901 = vadd.f32 %v2900, -0.4999988
        %v2902 = vmul.f32 %v2897, %v2901
        %v2903 = vadd.f32 1.0, %v2902
        %v2904 = vmul.f32 %v2895, %v2895
        %v2905 = vmul.f32 %v2904, -0.00019511016
        %v2906 = vadd.f32 %v2905, 0.008332121
        %v2907 = vmul.f32 %v2904, %v2906
        %v2908 = vadd.f32 %v2907, -0.16666654
        %v2909 = vmul.f32 %v2904, %v2908
        %v2910 = vadd.f32 %v2909, 1.0
        %v2911 = vmul.f32 %v2910, %v2895
        %vm2912 = vweird.f32 %v751
        %v2913 = vadd.s32 %v2896, 3
        %v2914 = vand.u32 %v2913, 3
        %vm2915 = vcmp.lt.s32.totalorder %v2914, 2
        %vm2916 = vcmp.eq.s32.totalorder %v2914, 0
        %v2917 = vxor.u32 %v2911, 2147483648
        %v2918 = vsel %vm2916, %v2903, %v2917
        %vm2919 = vcmp.eq.s32.totalorder %v2914, 2
        %v2920 = vxor.u32 %v2903, 2147483648
        %v2921 = vsel %vm2919, %v2920, %v2911
        %v2922 = vsel %vm2915, %v2918, %v2921
        %v2923 = vsel %vm2912, nan, %v2922
        %v2924 = vand.u32 2147483647, %v752
        %vm2925 = vcmp.le.f32.partialorder %v2924, 0.7853982
        %vm2926 = vcmp.lt.s32.totalorder %v752, 0
        %v2927 = vand.u32 %v752, 2139095040
        %v2928 = vshrl.u32 %v2927, 23
        %v2929 = vsub.s32 %v2928, 127
        %v2930 = vand.u32 2147483647, %v752
        %v2931 = vand.u32 %v2930, 8388607
        %v2932 = vor.u32 %v2931, 8388608
        %v2933 = vsub.s32 0, %v2932
        %v2934 = vadd.s32 %v2929, 1
        %vm2935 = vcmp.gt.s32.totalorder %v2934, 0
        %v2936 = vsel %vm2935, %v2934, 0
        %v2937 = vshrl.u32 %v2936, 5
        %v2938 = vand.u32 %v2936, 31
        %v2939 = vsub.s32 32, %v2938
        %v2940 = vshrl.u32 683565275, %v2939
        %v2941 = vshll.u32 683565275, %v2938
        %v2942 = vshrl.u32 2475754826, %v2939
        %v2943 = vor.u32 %v2941, %v2942
        %v2944 = vshll.u32 2475754826, %v2938
        %v2945 = vshrl.u32 2131351028, %v2939
        %v2946 = vor.u32 %v2944, %v2945
        %v2947 = vshll.u32 2131351028, %v2938
        %v2948 = vshrl.u32 2102212464, %v2939
        %v2949 = vor.u32 %v2947, %v2948
        %v2950 = vshll.u32 2102212464, %v2938
        %v2951 = vshrl.u32 920167782, %v2939
        %v2952 = vor.u32 %v2950, %v2951
        %v2953 = vshll.u32 920167782, %v2938
        %v2954 = vshrl.u32 1326507024, %v2939
        %v2955 = vor.u32 %v2953, %v2954
        %vm2956 = vcmp.lt.s32.totalorder %v2937, 1
        %vm2957 = vcmp.lt.s32.totalorder %v2937, 2
        %vm2958 = vcmp.lt.s32.totalorder %v2937, 3
        %vm2959 = vcmp.lt.s32.totalorder %v2937, 4
        %v2960 = vsel %vm2956, %v2940, %v2943
        %v2961 = vsel %vm2959, %v2949, 2102212464
        %v2962 = vsel %vm2958, %v2946, %v2961
        %v2963 = vsel %vm2957, %v2960, %v2962
        %v2964 = vsel %vm2956, %v2943, %v2946
        %v2965 = vsel %vm2959, %v2952, 920167782
        %v2966 = vsel %vm2958, %v2949, %v2965
        %v2967 = vsel %vm2957, %v2964, %v2966
        %v2968 = vsel %vm2956, %v2946, %v2949
        %v2969 = vsel %vm2959, %v2955, 1326507024
        %v2970 = vsel %vm2958, %v2952, %v2969
        %v2971 = vsel %vm2957, %v2968, %v2970
        %v2972 = vshll.u32 %v2932, 8
        %v2973 = vand.u32 %v2972, 65535
        %v2974 = vshrl.u32 %v2972, 16
        %v2975 = vand.u32 %v2971, 65535
        %v2976 = vshrl.u32 %v2971, 16
        %v2977 = vmul.u32 %v2973, %v2975
        %v2978 = vmul.u32 %v2973, %v2976
        %v2979 = vmul.u32 %v2974, %v2975
        %v2980 = vmul.u32 %v2974, %v2976
        %v2981 = vshll.u32 %v2978, 16
        %v2982 = vshrl.u32 %v2978, 16
        %v2983 = vshll.u32 %v2979, 16
        %v2984 = vshrl.u32 %v2979, 16
        %vm2985 = vc.u32 %v2977, %v2981
        %v2986 = vsel %vm2985, 1, 0
        %v2987 = vadd.s32 %v2977, %v2981
        %v2988 = vadd.s32 %v2980, %v2986
        %vm2989 = vc.u32 %v2987, %v2983
        %v2990 = vsel %vm2989, 1, 0
        %v2991 = vadd.s32 %v2987, %v2983
        %v2992 = vadd.s32 %v2988, %v2990
        %v2993 = vadd.s32 %v2992, %v2982
        %v2994 = vadd.s32 %v2993, %v2984
        %v2995 = vand.u32 %v2972, 65535
        %v2996 = vshrl.u32 %v2972, 16
        %v2997 = vand.u32 %v2967, 65535
        %v2998 = vshrl.u32 %v2967, 16
        %v2999 = vmul.u32 %v2995, %v2997
        %v3000 = vmul.u32 %v2995, %v2998
        %v3001 = vmul.u32 %v2996, %v2997
        %v3002 = vmul.u32 %v2996, %v2998
        %v3003 = vshll.u32 %v3000, 16
        %v3004 = vshrl.u32 %v3000, 16
        %v3005 = vshll.u32 %v3001, 16
        %v3006 = vshrl.u32 %v3001, 16
        %vm3007 = vc.u32 %v2999, %v3003
        %v3008 = vsel %vm3007, 1, 0
        %v3009 = vadd.s32 %v2999, %v3003
        %v3010 = vadd.s32 %v3002, %v3008
        %vm3011 = vc.u32 %v3009, %v3005
        %v3012 = vsel %vm3011, 1, 0
        %v3013 = vadd.s32 %v3009, %v3005
        %v3014 = vadd.s32 %v3010, %v3012
        %v3015 = vadd.s32 %v3014, %v3004
        %v3016 = vadd.s32 %v3015, %v3006
        %v3017 = vmul.u32 %v2972, %v2963
        %v3018 = vadd.s32 %v2994, %v3013
        %vm3019 = vc.u32 %v2994, %v3013
        %v3020 = vadd.s32 %v3016, 1
        %v3021 = vsel %vm3019, %v3020, %v3016
        %v3022 = vadd.s32 %v3017, %v3021
        %v3023 = vadd.s32 %v3022, 536870912
        %v3024 = vshrl.u32 %v3023, 30
        %v3025 = vshll.u32 %v3024, 30
        %v3026 = vsub.s32 %v3022, %v3025
        %vm3027 = vcmp.lt.s32.totalorder %v3026, 0
        %v3028 = vsub.s32 0, %v3026
        %v3029 = vsel %vm3027, %v3028, %v3026
        %v3030 = vclz %v3029
        %v3031 = vsub.s32 %v3030, 2
        %vm3032 = vcmp.gt.s32.totalorder 0, %v3031
        %v3033 = vsel %vm3032, 0, %v3031
        %v3034 = vsub.s32 32, %v3033
        %v3035 = vshll.u32 %v3026, %v3033
        %v3036 = vshrl.u32 %v3018, %v3034
        %v3037 = vor.u32 %v3035, %v3036
        %v3038 = vsub.s32 4294967266, %v3033
        %v3039 = vadd.s32 %v3038, 127
        %v3040 = vshll.u32 %v3039, 23
        %v3041 = vor.u32 4788187, %v3040
        %v3042 = vand.u32 2147483647, %v3041
        %v3044 = vcvt.s32.f32 %v3037
        %v3045 = vmul.f32 %v3044, %v3042
        %v3046 = vxor.u32 %v3045, 2147483648
        %v3047 = vsel %vm2926, %v3046, %v3045
        %v3048 = vsub.s32 4, %v3024
        %v3049 = vsel %vm2926, %v3048, %v3024
        %v3050 = vsel %vm2925, %v752, %v3047
        %v3051 = vsel %vm2925, 0, %v3049
        %v3052 = vmul.f32 %v3050, %v3050
        %v3053 = vmul.f32 %v3052, -0.001358992
        %v3054 = vadd.f32 %v3053, 0.041655596
        %v3055 = vmul.f32 %v3052, %v3054
        %v3056 = vadd.f32 %v3055, -0.4999988
        %v3057 = vmul.f32 %v3052, %v3056
        %v3058 = vadd.f32 1.0, %v3057
        %v3059 = vmul.f32 %v3050, %v3050
        %v3060 = vmul.f32 %v3059, -0.00019511016
        %v3061 = vadd.f32 %v3060, 0.008332121
        %v3062 = vmul.f32 %v3059, %v3061
        %v3063 = vadd.f32 %v3062, -0.16666654
        %v3064 = vmul.f32 %v3059, %v3063
        %v3065 = vadd.f32 %v3064, 1.0
        %v3066 = vmul.f32 %v3065, %v3050
        %vm3067 = vweird.f32 %v752
        %v3068 = vadd.s32 %v3051, 3
        %v3069 = vand.u32 %v3068, 3
        %vm3070 = vcmp.lt.s32.totalorder %v3069, 2
        %vm3071 = vcmp.eq.s32.totalorder %v3069, 0
        %v3072 = vxor.u32 %v3066, 2147483648
        %v3073 = vsel %vm3071, %v3058, %v3072
        %vm3074 = vcmp.eq.s32.totalorder %v3069, 2
        %v3075 = vxor.u32 %v3058, 2147483648
        %v3076 = vsel %vm3074, %v3075, %v3066
        %v3077 = vsel %vm3070, %v3073, %v3076
        %v3078 = vsel %vm3067, nan, %v3077
        %v3079 = vand.u32 2147483647, %v753
        %vm3080 = vcmp.le.f32.partialorder %v3079, 0.7853982
        %vm3081 = vcmp.lt.s32.totalorder %v753, 0
        %v3082 = vand.u32 %v753, 2139095040
        %v3083 = vshrl.u32 %v3082, 23
        %v3084 = vsub.s32 %v3083, 127
        %v3085 = vand.u32 2147483647, %v753
        %v3086 = vand.u32 %v3085, 8388607
        %v3087 = vor.u32 %v3086, 8388608
        %v3088 = vsub.s32 0, %v3087
        %v3089 = vadd.s32 %v3084, 1
        %vm3090 = vcmp.gt.s32.totalorder %v3089, 0
        %v3091 = vsel %vm3090, %v3089, 0
        %v3092 = vshrl.u32 %v3091, 5
        %v3093 = vand.u32 %v3091, 31
        %v3094 = vsub.s32 32, %v3093
        %v3095 = vshrl.u32 683565275, %v3094
        %v3096 = vshll.u32 683565275, %v3093
        %v3097 = vshrl.u32 2475754826, %v3094
        %v3098 = vor.u32 %v3096, %v3097
        %v3099 = vshll.u32 2475754826, %v3093
        %v3100 = vshrl.u32 2131351028, %v3094
        %v3101 = vor.u32 %v3099, %v3100
        %v3102 = vshll.u32 2131351028, %v3093
        %v3103 = vshrl.u32 2102212464, %v3094
        %v3104 = vor.u32 %v3102, %v3103
        %v3105 = vshll.u32 2102212464, %v3093
        %v3106 = vshrl.u32 920167782, %v3094
        %v3107 = vor.u32 %v3105, %v3106
        %v3108 = vshll.u32 920167782, %v3093
        %v3109 = vshrl.u32 1326507024, %v3094
        %v3110 = vor.u32 %v3108, %v3109
        %vm3111 = vcmp.lt.s32.totalorder %v3092, 1
        %vm3112 = vcmp.lt.s32.totalorder %v3092, 2
        %vm3113 = vcmp.lt.s32.totalorder %v3092, 3
        %vm3114 = vcmp.lt.s32.totalorder %v3092, 4
        %v3115 = vsel %vm3111, %v3095, %v3098
        %v3116 = vsel %vm3114, %v3104, 2102212464
        %v3117 = vsel %vm3113, %v3101, %v3116
        %v3118 = vsel %vm3112, %v3115, %v3117
        %v3119 = vsel %vm3111, %v3098, %v3101
        %v3120 = vsel %vm3114, %v3107, 920167782
        %v3121 = vsel %vm3113, %v3104, %v3120
        %v3122 = vsel %vm3112, %v3119, %v3121
        %v3123 = vsel %vm3111, %v3101, %v3104
        %v3124 = vsel %vm3114, %v3110, 1326507024
        %v3125 = vsel %vm3113, %v3107, %v3124
        %v3126 = vsel %vm3112, %v3123, %v3125
        %v3127 = vshll.u32 %v3087, 8
        %v3128 = vand.u32 %v3127, 65535
        %v3129 = vshrl.u32 %v3127, 16
        %v3130 = vand.u32 %v3126, 65535
        %v3131 = vshrl.u32 %v3126, 16
        %v3132 = vmul.u32 %v3128, %v3130
        %v3133 = vmul.u32 %v3128, %v3131
        %v3134 = vmul.u32 %v3129, %v3130
        %v3135 = vmul.u32 %v3129, %v3131
        %v3136 = vshll.u32 %v3133, 16
        %v3137 = vshrl.u32 %v3133, 16
        %v3138 = vshll.u32 %v3134, 16
        %v3139 = vshrl.u32 %v3134, 16
        %vm3140 = vc.u32 %v3132, %v3136
        %v3141 = vsel %vm3140, 1, 0
        %v3142 = vadd.s32 %v3132, %v3136
        %v3143 = vadd.s32 %v3135, %v3141
        %vm3144 = vc.u32 %v3142, %v3138
        %v3145 = vsel %vm3144, 1, 0
        %v3146 = vadd.s32 %v3142, %v3138
        %v3147 = vadd.s32 %v3143, %v3145
        %v3148 = vadd.s32 %v3147, %v3137
        %v3149 = vadd.s32 %v3148, %v3139
        %v3150 = vand.u32 %v3127, 65535
        %v3151 = vshrl.u32 %v3127, 16
        %v3152 = vand.u32 %v3122, 65535
        %v3153 = vshrl.u32 %v3122, 16
        %v3154 = vmul.u32 %v3150, %v3152
        %v3155 = vmul.u32 %v3150, %v3153
        %v3156 = vmul.u32 %v3151, %v3152
        %v3157 = vmul.u32 %v3151, %v3153
        %v3158 = vshll.u32 %v3155, 16
        %v3159 = vshrl.u32 %v3155, 16
        %v3160 = vshll.u32 %v3156, 16
        %v3161 = vshrl.u32 %v3156, 16
        %vm3162 = vc.u32 %v3154, %v3158
        %v3163 = vsel %vm3162, 1, 0
        %v3164 = vadd.s32 %v3154, %v3158
        %v3165 = vadd.s32 %v3157, %v3163
        %vm3166 = vc.u32 %v3164, %v3160
        %v3167 = vsel %vm3166, 1, 0
        %v3168 = vadd.s32 %v3164, %v3160
        %v3169 = vadd.s32 %v3165, %v3167
        %v3170 = vadd.s32 %v3169, %v3159
        %v3171 = vadd.s32 %v3170, %v3161
        %v3172 = vmul.u32 %v3127, %v3118
        %v3173 = vadd.s32 %v3149, %v3168
        %vm3174 = vc.u32 %v3149, %v3168
        %v3175 = vadd.s32 %v3171, 1
        %v3176 = vsel %vm3174, %v3175, %v3171
        %v3177 = vadd.s32 %v3172, %v3176
        %v3178 = vadd.s32 %v3177, 536870912
        %v3179 = vshrl.u32 %v3178, 30
        %v3180 = vshll.u32 %v3179, 30
        %v3181 = vsub.s32 %v3177, %v3180
        %vm3182 = vcmp.lt.s32.totalorder %v3181, 0
        %v3183 = vsub.s32 0, %v3181
        %v3184 = vsel %vm3182, %v3183, %v3181
        %v3185 = vclz %v3184
        %v3186 = vsub.s32 %v3185, 2
        %vm3187 = vcmp.gt.s32.totalorder 0, %v3186
        %v3188 = vsel %vm3187, 0, %v3186
        %v3189 = vsub.s32 32, %v3188
        %v3190 = vshll.u32 %v3181, %v3188
        %v3191 = vshrl.u32 %v3173, %v3189
        %v3192 = vor.u32 %v3190, %v3191
        %v3193 = vsub.s32 4294967266, %v3188
        %v3194 = vadd.s32 %v3193, 127
        %v3195 = vshll.u32 %v3194, 23
        %v3196 = vor.u32 4788187, %v3195
        %v3197 = vand.u32 2147483647, %v3196
        %v3199 = vcvt.s32.f32 %v3192
        %v3200 = vmul.f32 %v3199, %v3197
        %v3201 = vxor.u32 %v3200, 2147483648
        %v3202 = vsel %vm3081, %v3201, %v3200
        %v3203 = vsub.s32 4, %v3179
        %v3204 = vsel %vm3081, %v3203, %v3179
        %v3205 = vsel %vm3080, %v753, %v3202
        %v3206 = vsel %vm3080, 0, %v3204
        %v3207 = vmul.f32 %v3205, %v3205
        %v3208 = vmul.f32 %v3207, -0.001358992
        %v3209 = vadd.f32 %v3208, 0.041655596
        %v3210 = vmul.f32 %v3207, %v3209
        %v3211 = vadd.f32 %v3210, -0.4999988
        %v3212 = vmul.f32 %v3207, %v3211
        %v3213 = vadd.f32 1.0, %v3212
        %v3214 = vmul.f32 %v3205, %v3205
        %v3215 = vmul.f32 %v3214, -0.00019511016
        %v3216 = vadd.f32 %v3215, 0.008332121
        %v3217 = vmul.f32 %v3214, %v3216
        %v3218 = vadd.f32 %v3217, -0.16666654
        %v3219 = vmul.f32 %v3214, %v3218
        %v3220 = vadd.f32 %v3219, 1.0
        %v3221 = vmul.f32 %v3220, %v3205
        %vm3222 = vweird.f32 %v753
        %v3223 = vadd.s32 %v3206, 3
        %v3224 = vand.u32 %v3223, 3
        %vm3225 = vcmp.lt.s32.totalorder %v3224, 2
        %vm3226 = vcmp.eq.s32.totalorder %v3224, 0
        %v3227 = vxor.u32 %v3221, 2147483648
        %v3228 = vsel %vm3226, %v3213, %v3227
        %vm3229 = vcmp.eq.s32.totalorder %v3224, 2
        %v3230 = vxor.u32 %v3213, 2147483648
        %v3231 = vsel %vm3229, %v3230, %v3221
        %v3232 = vsel %vm3225, %v3228, %v3231
        %v3233 = vsel %vm3222, nan, %v3232
        %v3234 = vld [vmem:[%s3] sm:$0xf]
        %v3235 = vld [vmem:[%s3 + $0x4] sm:$0xf]
        %v3236 = vld [vmem:[%s3 + $0x8] sm:$0xf]
        %v3237 = vld [vmem:[%s3 + $0xc] sm:$0xf]
        %v3238 = vld [vmem:[%s3 + $0x10] sm:$0xf]
        %v3239 = vld [vmem:[%s3 + $0x14] sm:$0xf]
        %v3240 = vld [vmem:[%s3 + $0x18] sm:$0xf]
        %v3241 = vld [vmem:[%s3 + $0x1c] sm:$0xf]
        %v3242 = vld [vmem:[%s3 + $0x20] sm:$0xf]
        %v3243 = vld [vmem:[%s3 + $0x24] sm:$0xf]
        %v3244 = vld [vmem:[%s3 + $0x28] sm:$0xf]
        %v3245 = vld [vmem:[%s3 + $0x2c] sm:$0xf]
        %v3246 = vld [vmem:[%s3 + $0x30] sm:$0xf]
        %v3247 = vld [vmem:[%s3 + $0x34] sm:$0xf]
        %v3248 = vld [vmem:[%s3 + $0x38] sm:$0xf]
        %v3249 = vld [vmem:[%s3 + $0x3c] sm:$0xf]
        %v3250 = vld [vmem:[%s4] sm:$0xff]
        %v3251 = vld [vmem:[%s4 + $0x8] sm:$0xff]
        %v3252 = vld [vmem:[%s4 + $0x10] sm:$0xff]
        %v3253 = vld [vmem:[%s4 + $0x18] sm:$0xff]
        %v3254 = vld [vmem:[%s4 + $0x20] sm:$0xff]
        %v3255 = vld [vmem:[%s4 + $0x28] sm:$0xff]
        %v3256 = vld [vmem:[%s4 + $0x30] sm:$0xff]
        %v3257 = vld [vmem:[%s4 + $0x38] sm:$0xff]
        %v3258 = vld [vmem:[%s4 + $0x40] sm:$0xff]
        %v3259 = vld [vmem:[%s4 + $0x48] sm:$0xff]
        %v3260 = vld [vmem:[%s4 + $0x50] sm:$0xff]
        %v3261 = vld [vmem:[%s4 + $0x58] sm:$0xff]
        %v3262 = vld [vmem:[%s4 + $0x60] sm:$0xff]
        %v3263 = vld [vmem:[%s4 + $0x68] sm:$0xff]
        %v3264 = vld [vmem:[%s4 + $0x70] sm:$0xff]
        %v3265 = vld [vmem:[%s4 + $0x78] sm:$0xff]
        %v3266 = vpack.c.bf16 %v1063, %v908
        %v3267 = vpack.c.bf16 %v1373, %v1218
        %v3268 = vpack.c.bf16 %v1683, %v1528
        %v3269 = vpack.c.bf16 %v1993, %v1838
        %v3270 = vpack.c.bf16 %v2303, %v2148
        %v3271 = vpack.c.bf16 %v2613, %v2458
        %v3272 = vpack.c.bf16 %v2923, %v2768
        %v3273 = vpack.c.bf16 %v3233, %v3078
        %3275 = vset.pattern.permute.xlu0 0
        %3276 = vperm.xlu0 %3275, %v3250
        %v3277 = vpop.permute.xlu0 %3276
        %3280 = vset.pattern.permute.xlu0 0
        %3281 = vperm.xlu0 %3280, %v3251
        %v3282 = vpop.permute.xlu0 %3281
        %3285 = vset.pattern.permute.xlu0 0
        %3286 = vperm.xlu0 %3285, %v3252
        %v3287 = vpop.permute.xlu0 %3286
        %3290 = vset.pattern.permute.xlu0 0
        %3291 = vperm.xlu0 %3290, %v3253
        %v3292 = vpop.permute.xlu0 %3291
        %3295 = vset.pattern.permute.xlu0 0
        %3296 = vperm.xlu0 %3295, %v3254
        %v3297 = vpop.permute.xlu0 %3296
        %3300 = vset.pattern.permute.xlu0 0
        %3301 = vperm.xlu0 %3300, %v3255
        %v3302 = vpop.permute.xlu0 %3301
        %3305 = vset.pattern.permute.xlu0 0
        %3306 = vperm.xlu0 %3305, %v3256
        %v3307 = vpop.permute.xlu0 %3306
        %3310 = vset.pattern.permute.xlu0 0
        %3311 = vperm.xlu0 %3310, %v3257
        %v3312 = vpop.permute.xlu0 %3311
        %3315 = vset.pattern.permute.xlu0 0
        %3316 = vperm.xlu0 %3315, %v3258
        %v3317 = vpop.permute.xlu0 %3316
        %3320 = vset.pattern.permute.xlu0 0
        %3321 = vperm.xlu0 %3320, %v3259
        %v3322 = vpop.permute.xlu0 %3321
        %3325 = vset.pattern.permute.xlu0 0
        %3326 = vperm.xlu0 %3325, %v3260
        %v3327 = vpop.permute.xlu0 %3326
        %3330 = vset.pattern.permute.xlu0 0
        %3331 = vperm.xlu0 %3330, %v3261
        %v3332 = vpop.permute.xlu0 %3331
        %3335 = vset.pattern.permute.xlu0 0
        %3336 = vperm.xlu0 %3335, %v3262
        %v3337 = vpop.permute.xlu0 %3336
        %3340 = vset.pattern.permute.xlu0 0
        %3341 = vperm.xlu0 %3340, %v3263
        %v3342 = vpop.permute.xlu0 %3341
        %3345 = vset.pattern.permute.xlu0 0
        %3346 = vperm.xlu0 %3345, %v3264
        %v3347 = vpop.permute.xlu0 %3346
        %3350 = vset.pattern.permute.xlu0 0
        %3351 = vperm.xlu0 %3350, %v3265
        %v3352 = vpop.permute.xlu0 %3351
        %v3370 = vunpack.c.l.b16 %v3234
        %v3371 = vunpack.c.l.b16 %v3235
        %v3372 = vunpack.c.l.b16 %v3236
        %v3373 = vunpack.c.l.b16 %v3237
        %v3374 = vunpack.c.l.b16 %v3238
        %v3375 = vunpack.c.l.b16 %v3239
        %v3376 = vunpack.c.l.b16 %v3240
        %v3377 = vunpack.c.l.b16 %v3241
        %v3378 = vunpack.c.l.b16 %v3242
        %v3379 = vunpack.c.l.b16 %v3243
        %v3380 = vunpack.c.l.b16 %v3244
        %v3381 = vunpack.c.l.b16 %v3245
        %v3382 = vunpack.c.l.b16 %v3246
        %v3383 = vunpack.c.l.b16 %v3247
        %v3384 = vunpack.c.l.b16 %v3248
        %v3385 = vunpack.c.l.b16 %v3249
        %v3386 = vpack.c.b16 %v3371, %v3370
        %v3387 = vpack.c.b16 %v3373, %v3372
        %v3388 = vpack.c.b16 %v3375, %v3374
        %v3389 = vpack.c.b16 %v3377, %v3376
        %v3390 = vpack.c.b16 %v3379, %v3378
        %v3391 = vpack.c.b16 %v3381, %v3380
        %v3392 = vpack.c.b16 %v3383, %v3382
        %v3393 = vpack.c.b16 %v3385, %v3384
        %3402 = vmatpush.bf16.msra.mxu0 %v3273
        %3403 = vmatpush.bf16.msra.mxu0 %v3272
        %3404 = vmatpush.bf16.msra.mxu0 %v3271
        %3405 = vmatpush.bf16.msra.mxu0 %v3270
        %3406 = vmatpush.bf16.msra.mxu0 %v3269
        %3407 = vmatpush.bf16.msra.mxu0 %v3268
        %3408 = vmatpush.bf16.msra.mxu0 %v3267
        %3409 = vmatpush.bf16.msra.mxu0 %v3266
        %3410 = vmatmul.bf16.gmra.mxu0 %v3386
        %v3411 = vpop.f32.mrf.mxu0
        %v3412 = vadd.f32 %v3277, %v3411
        %v3413 = vpop.f32.mrf.mxu0
        %v3414 = vadd.f32 %v3282, %v3413
        %3415 = vmatmul.bf16.gmra.mxu0 %v3387
        %v3416 = vpop.f32.mrf.mxu0
        %v3417 = vadd.f32 %v3287, %v3416
        %v3418 = vpop.f32.mrf.mxu0
        %v3419 = vadd.f32 %v3292, %v3418
        %3420 = vmatmul.bf16.gmra.mxu0 %v3388
        %v3421 = vpop.f32.mrf.mxu0
        %v3422 = vadd.f32 %v3297, %v3421
        %v3423 = vpop.f32.mrf.mxu0
        %v3424 = vadd.f32 %v3302, %v3423
        %3425 = vmatmul.bf16.gmra.mxu0 %v3389
        %v3426 = vpop.f32.mrf.mxu0
        %v3427 = vadd.f32 %v3307, %v3426
        %v3428 = vpop.f32.mrf.mxu0
        %v3429 = vadd.f32 %v3312, %v3428
        %3430 = vmatmul.bf16.gmra.mxu0 %v3390
        %v3431 = vpop.f32.mrf.mxu0
        %v3432 = vadd.f32 %v3317, %v3431
        %v3433 = vpop.f32.mrf.mxu0
        %v3434 = vadd.f32 %v3322, %v3433
        %3435 = vmatmul.bf16.gmra.mxu0 %v3391
        %v3436 = vpop.f32.mrf.mxu0
        %v3437 = vadd.f32 %v3327, %v3436
        %v3438 = vpop.f32.mrf.mxu0
        %v3439 = vadd.f32 %v3332, %v3438
        %3440 = vmatmul.bf16.gmra.mxu0 %v3392
        %v3441 = vpop.f32.mrf.mxu0
        %v3442 = vadd.f32 %v3337, %v3441
        %v3443 = vpop.f32.mrf.mxu0
        %v3444 = vadd.f32 %v3342, %v3443
        %3445 = vmatmul.bf16.gmra.mxu0 %v3393
        %v3446 = vpop.f32.mrf.mxu0
        %v3447 = vadd.f32 %v3347, %v3446
        %v3448 = vpop.f32.mrf.mxu0
        %v3449 = vadd.f32 %v3352, %v3448
        %3450 = vdwg.mxu0
        %v3451 = vmax.f32 %v3412, 0.0
        %v3452 = vmax.f32 %v3414, 0.0
        %v3453 = vmax.f32 %v3417, 0.0
        %v3454 = vmax.f32 %v3419, 0.0
        %v3455 = vmax.f32 %v3422, 0.0
        %v3456 = vmax.f32 %v3424, 0.0
        %v3457 = vmax.f32 %v3427, 0.0
        %v3458 = vmax.f32 %v3429, 0.0
        %v3459 = vmax.f32 %v3432, 0.0
        %v3460 = vmax.f32 %v3434, 0.0
        %v3461 = vmax.f32 %v3437, 0.0
        %v3462 = vmax.f32 %v3439, 0.0
        %v3463 = vmax.f32 %v3442, 0.0
        %v3464 = vmax.f32 %v3444, 0.0
        %v3465 = vmax.f32 %v3447, 0.0
        %v3466 = vmax.f32 %v3449, 0.0
        %v3467 = vld [vmem:[%s5] sm:$0xf]
        %v3468 = vld [vmem:[%s5 + $0x4] sm:$0xf]
        %v3469 = vld [vmem:[%s5 + $0x8] sm:$0xf]
        %v3470 = vld [vmem:[%s5 + $0xc] sm:$0xf]
        %v3471 = vld [vmem:[%s5 + $0x10] sm:$0xf]
        %v3472 = vld [vmem:[%s5 + $0x14] sm:$0xf]
        %v3473 = vld [vmem:[%s5 + $0x18] sm:$0xf]
        %v3474 = vld [vmem:[%s5 + $0x1c] sm:$0xf]
        %v3475 = vld [vmem:[%s5 + $0x20] sm:$0xf]
        %v3476 = vld [vmem:[%s5 + $0x24] sm:$0xf]
        %v3477 = vld [vmem:[%s5 + $0x28] sm:$0xf]
        %v3478 = vld [vmem:[%s5 + $0x2c] sm:$0xf]
        %v3479 = vld [vmem:[%s5 + $0x30] sm:$0xf]
        %v3480 = vld [vmem:[%s5 + $0x34] sm:$0xf]
        %v3481 = vld [vmem:[%s5 + $0x38] sm:$0xf]
        %v3482 = vld [vmem:[%s5 + $0x3c] sm:$0xf]
        %v3483 = vld [vmem:[%s6] sm:$0xff]
        %v3484 = vld [vmem:[%s6 + $0x8] sm:$0xff]
        %v3485 = vld [vmem:[%s6 + $0x10] sm:$0xff]
        %v3486 = vld [vmem:[%s6 + $0x18] sm:$0xff]
        %v3487 = vld [vmem:[%s6 + $0x20] sm:$0xff]
        %v3488 = vld [vmem:[%s6 + $0x28] sm:$0xff]
        %v3489 = vld [vmem:[%s6 + $0x30] sm:$0xff]
        %v3490 = vld [vmem:[%s6 + $0x38] sm:$0xff]
        %v3491 = vld [vmem:[%s6 + $0x40] sm:$0xff]
        %v3492 = vld [vmem:[%s6 + $0x48] sm:$0xff]
        %v3493 = vld [vmem:[%s6 + $0x50] sm:$0xff]
        %v3494 = vld [vmem:[%s6 + $0x58] sm:$0xff]
        %v3495 = vld [vmem:[%s6 + $0x60] sm:$0xff]
        %v3496 = vld [vmem:[%s6 + $0x68] sm:$0xff]
        %v3497 = vld [vmem:[%s6 + $0x70] sm:$0xff]
        %v3498 = vld [vmem:[%s6 + $0x78] sm:$0xff]
        %v3499 = vpack.c.bf16 %v3452, %v3451
        %v3500 = vpack.c.bf16 %v3454, %v3453
        %v3501 = vpack.c.bf16 %v3456, %v3455
        %v3502 = vpack.c.bf16 %v3458, %v3457
        %v3503 = vpack.c.bf16 %v3460, %v3459
        %v3504 = vpack.c.bf16 %v3462, %v3461
        %v3505 = vpack.c.bf16 %v3464, %v3463
        %v3506 = vpack.c.bf16 %v3466, %v3465
        %3508 = vset.pattern.permute.xlu0 0
        %3509 = vperm.xlu0 %3508, %v3483
        %v3510 = vpop.permute.xlu0 %3509
        %3513 = vset.pattern.permute.xlu0 0
        %3514 = vperm.xlu0 %3513, %v3484
        %v3515 = vpop.permute.xlu0 %3514
        %3518 = vset.pattern.permute.xlu0 0
        %3519 = vperm.xlu0 %3518, %v3485
        %v3520 = vpop.permute.xlu0 %3519
        %3523 = vset.pattern.permute.xlu0 0
        %3524 = vperm.xlu0 %3523, %v3486
        %v3525 = vpop.permute.xlu0 %3524
        %3528 = vset.pattern.permute.xlu0 0
        %3529 = vperm.xlu0 %3528, %v3487
        %v3530 = vpop.permute.xlu0 %3529
        %3533 = vset.pattern.permute.xlu0 0
        %3534 = vperm.xlu0 %3533, %v3488
        %v3535 = vpop.permute.xlu0 %3534
        %3538 = vset.pattern.permute.xlu0 0
        %3539 = vperm.xlu0 %3538, %v3489
        %v3540 = vpop.permute.xlu0 %3539
        %3543 = vset.pattern.permute.xlu0 0
        %3544 = vperm.xlu0 %3543, %v3490
        %v3545 = vpop.permute.xlu0 %3544
        %3548 = vset.pattern.permute.xlu0 0
        %3549 = vperm.xlu0 %3548, %v3491
        %v3550 = vpop.permute.xlu0 %3549
        %3553 = vset.pattern.permute.xlu0 0
        %3554 = vperm.xlu0 %3553, %v3492
        %v3555 = vpop.permute.xlu0 %3554
        %3558 = vset.pattern.permute.xlu0 0
        %3559 = vperm.xlu0 %3558, %v3493
        %v3560 = vpop.permute.xlu0 %3559
        %3563 = vset.pattern.permute.xlu0 0
        %3564 = vperm.xlu0 %3563, %v3494
        %v3565 = vpop.permute.xlu0 %3564
        %3568 = vset.pattern.permute.xlu0 0
        %3569 = vperm.xlu0 %3568, %v3495
        %v3570 = vpop.permute.xlu0 %3569
        %3573 = vset.pattern.permute.xlu0 0
        %3574 = vperm.xlu0 %3573, %v3496
        %v3575 = vpop.permute.xlu0 %3574
        %3578 = vset.pattern.permute.xlu0 0
        %3579 = vperm.xlu0 %3578, %v3497
        %v3580 = vpop.permute.xlu0 %3579
        %3583 = vset.pattern.permute.xlu0 0
        %3584 = vperm.xlu0 %3583, %v3498
        %v3585 = vpop.permute.xlu0 %3584
        %v3603 = vunpack.c.l.b16 %v3467
        %v3604 = vunpack.c.l.b16 %v3468
        %v3605 = vunpack.c.l.b16 %v3469
        %v3606 = vunpack.c.l.b16 %v3470
        %v3607 = vunpack.c.l.b16 %v3471
        %v3608 = vunpack.c.l.b16 %v3472
        %v3609 = vunpack.c.l.b16 %v3473
        %v3610 = vunpack.c.l.b16 %v3474
        %v3611 = vunpack.c.l.b16 %v3475
        %v3612 = vunpack.c.l.b16 %v3476
        %v3613 = vunpack.c.l.b16 %v3477
        %v3614 = vunpack.c.l.b16 %v3478
        %v3615 = vunpack.c.l.b16 %v3479
        %v3616 = vunpack.c.l.b16 %v3480
        %v3617 = vunpack.c.l.b16 %v3481
        %v3618 = vunpack.c.l.b16 %v3482
        %v3619 = vpack.c.b16 %v3604, %v3603
        %v3620 = vpack.c.b16 %v3606, %v3605
        %v3621 = vpack.c.b16 %v3608, %v3607
        %v3622 = vpack.c.b16 %v3610, %v3609
        %v3623 = vpack.c.b16 %v3612, %v3611
        %v3624 = vpack.c.b16 %v3614, %v3613
        %v3625 = vpack.c.b16 %v3616, %v3615
        %v3626 = vpack.c.b16 %v3618, %v3617
        %3635 = vmatpush.bf16.msra.mxu0 %v3506
        %3636 = vmatpush.bf16.msra.mxu0 %v3505
        %3637 = vmatpush.bf16.msra.mxu0 %v3504
        %3638 = vmatpush.bf16.msra.mxu0 %v3503
        %3639 = vmatpush.bf16.msra.mxu0 %v3502
        %3640 = vmatpush.bf16.msra.mxu0 %v3501
        %3641 = vmatpush.bf16.msra.mxu0 %v3500
        %3642 = vmatpush.bf16.msra.mxu0 %v3499
        %3643 = vmatmul.bf16.gmra.mxu0 %v3619
        %v3644 = vpop.f32.mrf.mxu0
        %v3645 = vadd.f32 %v3510, %v3644
        %v3646 = vpop.f32.mrf.mxu0
        %v3647 = vadd.f32 %v3515, %v3646
        %3648 = vmatmul.bf16.gmra.mxu0 %v3620
        %v3649 = vpop.f32.mrf.mxu0
        %v3650 = vadd.f32 %v3520, %v3649
        %v3651 = vpop.f32.mrf.mxu0
        %v3652 = vadd.f32 %v3525, %v3651
        %3653 = vmatmul.bf16.gmra.mxu0 %v3621
        %v3654 = vpop.f32.mrf.mxu0
        %v3655 = vadd.f32 %v3530, %v3654
        %v3656 = vpop.f32.mrf.mxu0
        %v3657 = vadd.f32 %v3535, %v3656
        %3658 = vmatmul.bf16.gmra.mxu0 %v3622
        %v3659 = vpop.f32.mrf.mxu0
        %v3660 = vadd.f32 %v3540, %v3659
        %v3661 = vpop.f32.mrf.mxu0
        %v3662 = vadd.f32 %v3545, %v3661
        %3663 = vmatmul.bf16.gmra.mxu0 %v3623
        %v3664 = vpop.f32.mrf.mxu0
        %v3665 = vadd.f32 %v3550, %v3664
        %v3666 = vpop.f32.mrf.mxu0
        %v3667 = vadd.f32 %v3555, %v3666
        %3668 = vmatmul.bf16.gmra.mxu0 %v3624
        %v3669 = vpop.f32.mrf.mxu0
        %v3670 = vadd.f32 %v3560, %v3669
        %v3671 = vpop.f32.mrf.mxu0
        %v3672 = vadd.f32 %v3565, %v3671
        %3673 = vmatmul.bf16.gmra.mxu0 %v3625
        %v3674 = vpop.f32.mrf.mxu0
        %v3675 = vadd.f32 %v3570, %v3674
        %v3676 = vpop.f32.mrf.mxu0
        %v3677 = vadd.f32 %v3575, %v3676
        %3678 = vmatmul.bf16.gmra.mxu0 %v3626
        %v3679 = vpop.f32.mrf.mxu0
        %v3680 = vadd.f32 %v3580, %v3679
        %v3681 = vpop.f32.mrf.mxu0
        %v3682 = vadd.f32 %v3585, %v3681
        %3683 = vdwg.mxu0
        %v3684 = vmax.f32 %v3645, 0.0
        %v3685 = vmax.f32 %v3647, 0.0
        %v3686 = vmax.f32 %v3650, 0.0
        %v3687 = vmax.f32 %v3652, 0.0
        %v3688 = vmax.f32 %v3655, 0.0
        %v3689 = vmax.f32 %v3657, 0.0
        %v3690 = vmax.f32 %v3660, 0.0
        %v3691 = vmax.f32 %v3662, 0.0
        %v3692 = vmax.f32 %v3665, 0.0
        %v3693 = vmax.f32 %v3667, 0.0
        %v3694 = vmax.f32 %v3670, 0.0
        %v3695 = vmax.f32 %v3672, 0.0
        %v3696 = vmax.f32 %v3675, 0.0
        %v3697 = vmax.f32 %v3677, 0.0
        %v3698 = vmax.f32 %v3680, 0.0
        %v3699 = vmax.f32 %v3682, 0.0
        %s3700 = scalar_lea.vmem %s5, 64
        %v3701 = vld [vmem:[%s3700] sm:$0xf]
        %v3702 = vld [vmem:[%s3700 + $0x4] sm:$0xf]
        %v3703 = vld [vmem:[%s3700 + $0x8] sm:$0xf]
        %v3704 = vld [vmem:[%s3700 + $0xc] sm:$0xf]
        %v3705 = vld [vmem:[%s3700 + $0x10] sm:$0xf]
        %v3706 = vld [vmem:[%s3700 + $0x14] sm:$0xf]
        %v3707 = vld [vmem:[%s3700 + $0x18] sm:$0xf]
        %v3708 = vld [vmem:[%s3700 + $0x1c] sm:$0xf]
        %v3709 = vld [vmem:[%s3700 + $0x20] sm:$0xf]
        %v3710 = vld [vmem:[%s3700 + $0x24] sm:$0xf]
        %v3711 = vld [vmem:[%s3700 + $0x28] sm:$0xf]
        %v3712 = vld [vmem:[%s3700 + $0x2c] sm:$0xf]
        %v3713 = vld [vmem:[%s3700 + $0x30] sm:$0xf]
        %v3714 = vld [vmem:[%s3700 + $0x34] sm:$0xf]
        %v3715 = vld [vmem:[%s3700 + $0x38] sm:$0xf]
        %v3716 = vld [vmem:[%s3700 + $0x3c] sm:$0xf]
        %s3717 = scalar_lea.vmem %s6, 128
        %v3718 = vld [vmem:[%s3717] sm:$0xff]
        %v3719 = vld [vmem:[%s3717 + $0x8] sm:$0xff]
        %v3720 = vld [vmem:[%s3717 + $0x10] sm:$0xff]
        %v3721 = vld [vmem:[%s3717 + $0x18] sm:$0xff]
        %v3722 = vld [vmem:[%s3717 + $0x20] sm:$0xff]
        %v3723 = vld [vmem:[%s3717 + $0x28] sm:$0xff]
        %v3724 = vld [vmem:[%s3717 + $0x30] sm:$0xff]
        %v3725 = vld [vmem:[%s3717 + $0x38] sm:$0xff]
        %v3726 = vld [vmem:[%s3717 + $0x40] sm:$0xff]
        %v3727 = vld [vmem:[%s3717 + $0x48] sm:$0xff]
        %v3728 = vld [vmem:[%s3717 + $0x50] sm:$0xff]
        %v3729 = vld [vmem:[%s3717 + $0x58] sm:$0xff]
        %v3730 = vld [vmem:[%s3717 + $0x60] sm:$0xff]
        %v3731 = vld [vmem:[%s3717 + $0x68] sm:$0xff]
        %v3732 = vld [vmem:[%s3717 + $0x70] sm:$0xff]
        %v3733 = vld [vmem:[%s3717 + $0x78] sm:$0xff]
        %v3734 = vpack.c.bf16 %v3685, %v3684
        %v3735 = vpack.c.bf16 %v3687, %v3686
        %v3736 = vpack.c.bf16 %v3689, %v3688
        %v3737 = vpack.c.bf16 %v3691, %v3690
        %v3738 = vpack.c.bf16 %v3693, %v3692
        %v3739 = vpack.c.bf16 %v3695, %v3694
        %v3740 = vpack.c.bf16 %v3697, %v3696
        %v3741 = vpack.c.bf16 %v3699, %v3698
        %3743 = vset.pattern.permute.xlu0 0
        %3744 = vperm.xlu0 %3743, %v3718
        %v3745 = vpop.permute.xlu0 %3744
        %3748 = vset.pattern.permute.xlu0 0
        %3749 = vperm.xlu0 %3748, %v3719
        %v3750 = vpop.permute.xlu0 %3749
        %3753 = vset.pattern.permute.xlu0 0
        %3754 = vperm.xlu0 %3753, %v3720
        %v3755 = vpop.permute.xlu0 %3754
        %3758 = vset.pattern.permute.xlu0 0
        %3759 = vperm.xlu0 %3758, %v3721
        %v3760 = vpop.permute.xlu0 %3759
        %3763 = vset.pattern.permute.xlu0 0
        %3764 = vperm.xlu0 %3763, %v3722
        %v3765 = vpop.permute.xlu0 %3764
        %3768 = vset.pattern.permute.xlu0 0
        %3769 = vperm.xlu0 %3768, %v3723
        %v3770 = vpop.permute.xlu0 %3769
        %3773 = vset.pattern.permute.xlu0 0
        %3774 = vperm.xlu0 %3773, %v3724
        %v3775 = vpop.permute.xlu0 %3774
        %3778 = vset.pattern.permute.xlu0 0
        %3779 = vperm.xlu0 %3778, %v3725
        %v3780 = vpop.permute.xlu0 %3779
        %3783 = vset.pattern.permute.xlu0 0
        %3784 = vperm.xlu0 %3783, %v3726
        %v3785 = vpop.permute.xlu0 %3784
        %3788 = vset.pattern.permute.xlu0 0
        %3789 = vperm.xlu0 %3788, %v3727
        %v3790 = vpop.permute.xlu0 %3789
        %3793 = vset.pattern.permute.xlu0 0
        %3794 = vperm.xlu0 %3793, %v3728
        %v3795 = vpop.permute.xlu0 %3794
        %3798 = vset.pattern.permute.xlu0 0
        %3799 = vperm.xlu0 %3798, %v3729
        %v3800 = vpop.permute.xlu0 %3799
        %3803 = vset.pattern.permute.xlu0 0
        %3804 = vperm.xlu0 %3803, %v3730
        %v3805 = vpop.permute.xlu0 %3804
        %3808 = vset.pattern.permute.xlu0 0
        %3809 = vperm.xlu0 %3808, %v3731
        %v3810 = vpop.permute.xlu0 %3809
        %3813 = vset.pattern.permute.xlu0 0
        %3814 = vperm.xlu0 %3813, %v3732
        %v3815 = vpop.permute.xlu0 %3814
        %3818 = vset.pattern.permute.xlu0 0
        %3819 = vperm.xlu0 %3818, %v3733
        %v3820 = vpop.permute.xlu0 %3819
        %v3838 = vunpack.c.l.b16 %v3701
        %v3839 = vunpack.c.l.b16 %v3702
        %v3840 = vunpack.c.l.b16 %v3703
        %v3841 = vunpack.c.l.b16 %v3704
        %v3842 = vunpack.c.l.b16 %v3705
        %v3843 = vunpack.c.l.b16 %v3706
        %v3844 = vunpack.c.l.b16 %v3707
        %v3845 = vunpack.c.l.b16 %v3708
        %v3846 = vunpack.c.l.b16 %v3709
        %v3847 = vunpack.c.l.b16 %v3710
        %v3848 = vunpack.c.l.b16 %v3711
        %v3849 = vunpack.c.l.b16 %v3712
        %v3850 = vunpack.c.l.b16 %v3713
        %v3851 = vunpack.c.l.b16 %v3714
        %v3852 = vunpack.c.l.b16 %v3715
        %v3853 = vunpack.c.l.b16 %v3716
        %v3854 = vpack.c.b16 %v3839, %v3838
        %v3855 = vpack.c.b16 %v3841, %v3840
        %v3856 = vpack.c.b16 %v3843, %v3842
        %v3857 = vpack.c.b16 %v3845, %v3844
        %v3858 = vpack.c.b16 %v3847, %v3846
        %v3859 = vpack.c.b16 %v3849, %v3848
        %v3860 = vpack.c.b16 %v3851, %v3850
        %v3861 = vpack.c.b16 %v3853, %v3852
        %3870 = vmatpush.bf16.msra.mxu0 %v3741
        %3871 = vmatpush.bf16.msra.mxu0 %v3740
        %3872 = vmatpush.bf16.msra.mxu0 %v3739
        %3873 = vmatpush.bf16.msra.mxu0 %v3738
        %3874 = vmatpush.bf16.msra.mxu0 %v3737
        %3875 = vmatpush.bf16.msra.mxu0 %v3736
        %3876 = vmatpush.bf16.msra.mxu0 %v3735
        %3877 = vmatpush.bf16.msra.mxu0 %v3734
        %3878 = vmatmul.bf16.gmra.mxu0 %v3854
        %v3879 = vpop.f32.mrf.mxu0
        %v3880 = vadd.f32 %v3745, %v3879
        %v3881 = vpop.f32.mrf.mxu0
        %v3882 = vadd.f32 %v3750, %v3881
        %3883 = vmatmul.bf16.gmra.mxu0 %v3855
        %v3884 = vpop.f32.mrf.mxu0
        %v3885 = vadd.f32 %v3755, %v3884
        %v3886 = vpop.f32.mrf.mxu0
        %v3887 = vadd.f32 %v3760, %v3886
        %3888 = vmatmul.bf16.gmra.mxu0 %v3856
        %v3889 = vpop.f32.mrf.mxu0
        %v3890 = vadd.f32 %v3765, %v3889
        %v3891 = vpop.f32.mrf.mxu0
        %v3892 = vadd.f32 %v3770, %v3891
        %3893 = vmatmul.bf16.gmra.mxu0 %v3857
        %v3894 = vpop.f32.mrf.mxu0
        %v3895 = vadd.f32 %v3775, %v3894
        %v3896 = vpop.f32.mrf.mxu0
        %v3897 = vadd.f32 %v3780, %v3896
        %3898 = vmatmul.bf16.gmra.mxu0 %v3858
        %v3899 = vpop.f32.mrf.mxu0
        %v3900 = vadd.f32 %v3785, %v3899
        %v3901 = vpop.f32.mrf.mxu0
        %v3902 = vadd.f32 %v3790, %v3901
        %3903 = vmatmul.bf16.gmra.mxu0 %v3859
        %v3904 = vpop.f32.mrf.mxu0
        %v3905 = vadd.f32 %v3795, %v3904
        %v3906 = vpop.f32.mrf.mxu0
        %v3907 = vadd.f32 %v3800, %v3906
        %3908 = vmatmul.bf16.gmra.mxu0 %v3860
        %v3909 = vpop.f32.mrf.mxu0
        %v3910 = vadd.f32 %v3805, %v3909
        %v3911 = vpop.f32.mrf.mxu0
        %v3912 = vadd.f32 %v3810, %v3911
        %3913 = vmatmul.bf16.gmra.mxu0 %v3861
        %v3914 = vpop.f32.mrf.mxu0
        %v3915 = vadd.f32 %v3815, %v3914
        %v3916 = vpop.f32.mrf.mxu0
        %v3917 = vadd.f32 %v3820, %v3916
        %3918 = vdwg.mxu0
        %v3919 = vmax.f32 %v3880, 0.0
        %v3920 = vmax.f32 %v3882, 0.0
        %v3921 = vmax.f32 %v3885, 0.0
        %v3922 = vmax.f32 %v3887, 0.0
        %v3923 = vmax.f32 %v3890, 0.0
        %v3924 = vmax.f32 %v3892, 0.0
        %v3925 = vmax.f32 %v3895, 0.0
        %v3926 = vmax.f32 %v3897, 0.0
        %v3927 = vmax.f32 %v3900, 0.0
        %v3928 = vmax.f32 %v3902, 0.0
        %v3929 = vmax.f32 %v3905, 0.0
        %v3930 = vmax.f32 %v3907, 0.0
        %v3931 = vmax.f32 %v3910, 0.0
        %v3932 = vmax.f32 %v3912, 0.0
        %v3933 = vmax.f32 %v3915, 0.0
        %v3934 = vmax.f32 %v3917, 0.0
        %s3935 = scalar_lea.vmem %s5, 128
        %v3936 = vld [vmem:[%s3935] sm:$0xf]
        %v3937 = vld [vmem:[%s3935 + $0x4] sm:$0xf]
        %v3938 = vld [vmem:[%s3935 + $0x8] sm:$0xf]
        %v3939 = vld [vmem:[%s3935 + $0xc] sm:$0xf]
        %v3940 = vld [vmem:[%s3935 + $0x10] sm:$0xf]
        %v3941 = vld [vmem:[%s3935 + $0x14] sm:$0xf]
        %v3942 = vld [vmem:[%s3935 + $0x18] sm:$0xf]
        %v3943 = vld [vmem:[%s3935 + $0x1c] sm:$0xf]
        %v3944 = vld [vmem:[%s3935 + $0x20] sm:$0xf]
        %v3945 = vld [vmem:[%s3935 + $0x24] sm:$0xf]
        %v3946 = vld [vmem:[%s3935 + $0x28] sm:$0xf]
        %v3947 = vld [vmem:[%s3935 + $0x2c] sm:$0xf]
        %v3948 = vld [vmem:[%s3935 + $0x30] sm:$0xf]
        %v3949 = vld [vmem:[%s3935 + $0x34] sm:$0xf]
        %v3950 = vld [vmem:[%s3935 + $0x38] sm:$0xf]
        %v3951 = vld [vmem:[%s3935 + $0x3c] sm:$0xf]
        %s3952 = scalar_lea.vmem %s6, 256
        %v3953 = vld [vmem:[%s3952] sm:$0xff]
        %v3954 = vld [vmem:[%s3952 + $0x8] sm:$0xff]
        %v3955 = vld [vmem:[%s3952 + $0x10] sm:$0xff]
        %v3956 = vld [vmem:[%s3952 + $0x18] sm:$0xff]
        %v3957 = vld [vmem:[%s3952 + $0x20] sm:$0xff]
        %v3958 = vld [vmem:[%s3952 + $0x28] sm:$0xff]
        %v3959 = vld [vmem:[%s3952 + $0x30] sm:$0xff]
        %v3960 = vld [vmem:[%s3952 + $0x38] sm:$0xff]
        %v3961 = vld [vmem:[%s3952 + $0x40] sm:$0xff]
        %v3962 = vld [vmem:[%s3952 + $0x48] sm:$0xff]
        %v3963 = vld [vmem:[%s3952 + $0x50] sm:$0xff]
        %v3964 = vld [vmem:[%s3952 + $0x58] sm:$0xff]
        %v3965 = vld [vmem:[%s3952 + $0x60] sm:$0xff]
        %v3966 = vld [vmem:[%s3952 + $0x68] sm:$0xff]
        %v3967 = vld [vmem:[%s3952 + $0x70] sm:$0xff]
        %v3968 = vld [vmem:[%s3952 + $0x78] sm:$0xff]
        %v3969 = vpack.c.bf16 %v3920, %v3919
        %v3970 = vpack.c.bf16 %v3922, %v3921
        %v3971 = vpack.c.bf16 %v3924, %v3923
        %v3972 = vpack.c.bf16 %v3926, %v3925
        %v3973 = vpack.c.bf16 %v3928, %v3927
        %v3974 = vpack.c.bf16 %v3930, %v3929
        %v3975 = vpack.c.bf16 %v3932, %v3931
        %v3976 = vpack.c.bf16 %v3934, %v3933
        %3978 = vset.pattern.permute.xlu0 0
        %3979 = vperm.xlu0 %3978, %v3953
        %v3980 = vpop.permute.xlu0 %3979
        %3983 = vset.pattern.permute.xlu0 0
        %3984 = vperm.xlu0 %3983, %v3954
        %v3985 = vpop.permute.xlu0 %3984
        %3988 = vset.pattern.permute.xlu0 0
        %3989 = vperm.xlu0 %3988, %v3955
        %v3990 = vpop.permute.xlu0 %3989
        %3993 = vset.pattern.permute.xlu0 0
        %3994 = vperm.xlu0 %3993, %v3956
        %v3995 = vpop.permute.xlu0 %3994
        %3998 = vset.pattern.permute.xlu0 0
        %3999 = vperm.xlu0 %3998, %v3957
        %v4000 = vpop.permute.xlu0 %3999
        %4003 = vset.pattern.permute.xlu0 0
        %4004 = vperm.xlu0 %4003, %v3958
        %v4005 = vpop.permute.xlu0 %4004
        %4008 = vset.pattern.permute.xlu0 0
        %4009 = vperm.xlu0 %4008, %v3959
        %v4010 = vpop.permute.xlu0 %4009
        %4013 = vset.pattern.permute.xlu0 0
        %4014 = vperm.xlu0 %4013, %v3960
        %v4015 = vpop.permute.xlu0 %4014
        %4018 = vset.pattern.permute.xlu0 0
        %4019 = vperm.xlu0 %4018, %v3961
        %v4020 = vpop.permute.xlu0 %4019
        %4023 = vset.pattern.permute.xlu0 0
        %4024 = vperm.xlu0 %4023, %v3962
        %v4025 = vpop.permute.xlu0 %4024
        %4028 = vset.pattern.permute.xlu0 0
        %4029 = vperm.xlu0 %4028, %v3963
        %v4030 = vpop.permute.xlu0 %4029
        %4033 = vset.pattern.permute.xlu0 0
        %4034 = vperm.xlu0 %4033, %v3964
        %v4035 = vpop.permute.xlu0 %4034
        %4038 = vset.pattern.permute.xlu0 0
        %4039 = vperm.xlu0 %4038, %v3965
        %v4040 = vpop.permute.xlu0 %4039
        %4043 = vset.pattern.permute.xlu0 0
        %4044 = vperm.xlu0 %4043, %v3966
        %v4045 = vpop.permute.xlu0 %4044
        %4048 = vset.pattern.permute.xlu0 0
        %4049 = vperm.xlu0 %4048, %v3967
        %v4050 = vpop.permute.xlu0 %4049
        %4053 = vset.pattern.permute.xlu0 0
        %4054 = vperm.xlu0 %4053, %v3968
        %v4055 = vpop.permute.xlu0 %4054
        %v4073 = vunpack.c.l.b16 %v3936
        %v4074 = vunpack.c.l.b16 %v3937
        %v4075 = vunpack.c.l.b16 %v3938
        %v4076 = vunpack.c.l.b16 %v3939
        %v4077 = vunpack.c.l.b16 %v3940
        %v4078 = vunpack.c.l.b16 %v3941
        %v4079 = vunpack.c.l.b16 %v3942
        %v4080 = vunpack.c.l.b16 %v3943
        %v4081 = vunpack.c.l.b16 %v3944
        %v4082 = vunpack.c.l.b16 %v3945
        %v4083 = vunpack.c.l.b16 %v3946
        %v4084 = vunpack.c.l.b16 %v3947
        %v4085 = vunpack.c.l.b16 %v3948
        %v4086 = vunpack.c.l.b16 %v3949
        %v4087 = vunpack.c.l.b16 %v3950
        %v4088 = vunpack.c.l.b16 %v3951
        %v4089 = vpack.c.b16 %v4074, %v4073
        %v4090 = vpack.c.b16 %v4076, %v4075
        %v4091 = vpack.c.b16 %v4078, %v4077
        %v4092 = vpack.c.b16 %v4080, %v4079
        %v4093 = vpack.c.b16 %v4082, %v4081
        %v4094 = vpack.c.b16 %v4084, %v4083
        %v4095 = vpack.c.b16 %v4086, %v4085
        %v4096 = vpack.c.b16 %v4088, %v4087
        %4105 = vmatpush.bf16.msra.mxu0 %v3976
        %4106 = vmatpush.bf16.msra.mxu0 %v3975
        %4107 = vmatpush.bf16.msra.mxu0 %v3974
        %4108 = vmatpush.bf16.msra.mxu0 %v3973
        %4109 = vmatpush.bf16.msra.mxu0 %v3972
        %4110 = vmatpush.bf16.msra.mxu0 %v3971
        %4111 = vmatpush.bf16.msra.mxu0 %v3970
        %4112 = vmatpush.bf16.msra.mxu0 %v3969
        %4113 = vmatmul.bf16.gmra.mxu0 %v4089
        %v4114 = vpop.f32.mrf.mxu0
        %v4115 = vadd.f32 %v3980, %v4114
        %v4116 = vpop.f32.mrf.mxu0
        %v4117 = vadd.f32 %v3985, %v4116
        %4118 = vmatmul.bf16.gmra.mxu0 %v4090
        %v4119 = vpop.f32.mrf.mxu0
        %v4120 = vadd.f32 %v3990, %v4119
        %v4121 = vpop.f32.mrf.mxu0
        %v4122 = vadd.f32 %v3995, %v4121
        %4123 = vmatmul.bf16.gmra.mxu0 %v4091
        %v4124 = vpop.f32.mrf.mxu0
        %v4125 = vadd.f32 %v4000, %v4124
        %v4126 = vpop.f32.mrf.mxu0
        %v4127 = vadd.f32 %v4005, %v4126
        %4128 = vmatmul.bf16.gmra.mxu0 %v4092
        %v4129 = vpop.f32.mrf.mxu0
        %v4130 = vadd.f32 %v4010, %v4129
        %v4131 = vpop.f32.mrf.mxu0
        %v4132 = vadd.f32 %v4015, %v4131
        %4133 = vmatmul.bf16.gmra.mxu0 %v4093
        %v4134 = vpop.f32.mrf.mxu0
        %v4135 = vadd.f32 %v4020, %v4134
        %v4136 = vpop.f32.mrf.mxu0
        %v4137 = vadd.f32 %v4025, %v4136
        %4138 = vmatmul.bf16.gmra.mxu0 %v4094
        %v4139 = vpop.f32.mrf.mxu0
        %v4140 = vadd.f32 %v4030, %v4139
        %v4141 = vpop.f32.mrf.mxu0
        %v4142 = vadd.f32 %v4035, %v4141
        %4143 = vmatmul.bf16.gmra.mxu0 %v4095
        %v4144 = vpop.f32.mrf.mxu0
        %v4145 = vadd.f32 %v4040, %v4144
        %v4146 = vpop.f32.mrf.mxu0
        %v4147 = vadd.f32 %v4045, %v4146
        %4148 = vmatmul.bf16.gmra.mxu0 %v4096
        %v4149 = vpop.f32.mrf.mxu0
        %v4150 = vadd.f32 %v4050, %v4149
        %v4151 = vpop.f32.mrf.mxu0
        %v4152 = vadd.f32 %v4055, %v4151
        %4153 = vdwg.mxu0
        %v4154 = vmax.f32 %v4115, 0.0
        %v4155 = vmax.f32 %v4117, 0.0
        %v4156 = vmax.f32 %v4120, 0.0
        %v4157 = vmax.f32 %v4122, 0.0
        %v4158 = vmax.f32 %v4125, 0.0
        %v4159 = vmax.f32 %v4127, 0.0
        %v4160 = vmax.f32 %v4130, 0.0
        %v4161 = vmax.f32 %v4132, 0.0
        %v4162 = vmax.f32 %v4135, 0.0
        %v4163 = vmax.f32 %v4137, 0.0
        %v4164 = vmax.f32 %v4140, 0.0
        %v4165 = vmax.f32 %v4142, 0.0
        %v4166 = vmax.f32 %v4145, 0.0
        %v4167 = vmax.f32 %v4147, 0.0
        %v4168 = vmax.f32 %v4150, 0.0
        %v4169 = vmax.f32 %v4152, 0.0
        %s4170 = scalar_lea.vmem %s5, 192
        %v4171 = vld [vmem:[%s4170] sm:$0xf]
        %v4172 = vld [vmem:[%s4170 + $0x4] sm:$0xf]
        %v4173 = vld [vmem:[%s4170 + $0x8] sm:$0xf]
        %v4174 = vld [vmem:[%s4170 + $0xc] sm:$0xf]
        %v4175 = vld [vmem:[%s4170 + $0x10] sm:$0xf]
        %v4176 = vld [vmem:[%s4170 + $0x14] sm:$0xf]
        %v4177 = vld [vmem:[%s4170 + $0x18] sm:$0xf]
        %v4178 = vld [vmem:[%s4170 + $0x1c] sm:$0xf]
        %v4179 = vld [vmem:[%s4170 + $0x20] sm:$0xf]
        %v4180 = vld [vmem:[%s4170 + $0x24] sm:$0xf]
        %v4181 = vld [vmem:[%s4170 + $0x28] sm:$0xf]
        %v4182 = vld [vmem:[%s4170 + $0x2c] sm:$0xf]
        %v4183 = vld [vmem:[%s4170 + $0x30] sm:$0xf]
        %v4184 = vld [vmem:[%s4170 + $0x34] sm:$0xf]
        %v4185 = vld [vmem:[%s4170 + $0x38] sm:$0xf]
        %v4186 = vld [vmem:[%s4170 + $0x3c] sm:$0xf]
        %s4187 = scalar_lea.vmem %s6, 384
        %v4188 = vld [vmem:[%s4187] sm:$0xff]
        %v4189 = vld [vmem:[%s4187 + $0x8] sm:$0xff]
        %v4190 = vld [vmem:[%s4187 + $0x10] sm:$0xff]
        %v4191 = vld [vmem:[%s4187 + $0x18] sm:$0xff]
        %v4192 = vld [vmem:[%s4187 + $0x20] sm:$0xff]
        %v4193 = vld [vmem:[%s4187 + $0x28] sm:$0xff]
        %v4194 = vld [vmem:[%s4187 + $0x30] sm:$0xff]
        %v4195 = vld [vmem:[%s4187 + $0x38] sm:$0xff]
        %v4196 = vld [vmem:[%s4187 + $0x40] sm:$0xff]
        %v4197 = vld [vmem:[%s4187 + $0x48] sm:$0xff]
        %v4198 = vld [vmem:[%s4187 + $0x50] sm:$0xff]
        %v4199 = vld [vmem:[%s4187 + $0x58] sm:$0xff]
        %v4200 = vld [vmem:[%s4187 + $0x60] sm:$0xff]
        %v4201 = vld [vmem:[%s4187 + $0x68] sm:$0xff]
        %v4202 = vld [vmem:[%s4187 + $0x70] sm:$0xff]
        %v4203 = vld [vmem:[%s4187 + $0x78] sm:$0xff]
        %v4204 = vpack.c.bf16 %v4155, %v4154
        %v4205 = vpack.c.bf16 %v4157, %v4156
        %v4206 = vpack.c.bf16 %v4159, %v4158
        %v4207 = vpack.c.bf16 %v4161, %v4160
        %v4208 = vpack.c.bf16 %v4163, %v4162
        %v4209 = vpack.c.bf16 %v4165, %v4164
        %v4210 = vpack.c.bf16 %v4167, %v4166
        %v4211 = vpack.c.bf16 %v4169, %v4168
        %4213 = vset.pattern.permute.xlu0 0
        %4214 = vperm.xlu0 %4213, %v4188
        %v4215 = vpop.permute.xlu0 %4214
        %4218 = vset.pattern.permute.xlu0 0
        %4219 = vperm.xlu0 %4218, %v4189
        %v4220 = vpop.permute.xlu0 %4219
        %4223 = vset.pattern.permute.xlu0 0
        %4224 = vperm.xlu0 %4223, %v4190
        %v4225 = vpop.permute.xlu0 %4224
        %4228 = vset.pattern.permute.xlu0 0
        %4229 = vperm.xlu0 %4228, %v4191
        %v4230 = vpop.permute.xlu0 %4229
        %4233 = vset.pattern.permute.xlu0 0
        %4234 = vperm.xlu0 %4233, %v4192
        %v4235 = vpop.permute.xlu0 %4234
        %4238 = vset.pattern.permute.xlu0 0
        %4239 = vperm.xlu0 %4238, %v4193
        %v4240 = vpop.permute.xlu0 %4239
        %4243 = vset.pattern.permute.xlu0 0
        %4244 = vperm.xlu0 %4243, %v4194
        %v4245 = vpop.permute.xlu0 %4244
        %4248 = vset.pattern.permute.xlu0 0
        %4249 = vperm.xlu0 %4248, %v4195
        %v4250 = vpop.permute.xlu0 %4249
        %4253 = vset.pattern.permute.xlu0 0
        %4254 = vperm.xlu0 %4253, %v4196
        %v4255 = vpop.permute.xlu0 %4254
        %4258 = vset.pattern.permute.xlu0 0
        %4259 = vperm.xlu0 %4258, %v4197
        %v4260 = vpop.permute.xlu0 %4259
        %4263 = vset.pattern.permute.xlu0 0
        %4264 = vperm.xlu0 %4263, %v4198
        %v4265 = vpop.permute.xlu0 %4264
        %4268 = vset.pattern.permute.xlu0 0
        %4269 = vperm.xlu0 %4268, %v4199
        %v4270 = vpop.permute.xlu0 %4269
        %4273 = vset.pattern.permute.xlu0 0
        %4274 = vperm.xlu0 %4273, %v4200
        %v4275 = vpop.permute.xlu0 %4274
        %4278 = vset.pattern.permute.xlu0 0
        %4279 = vperm.xlu0 %4278, %v4201
        %v4280 = vpop.permute.xlu0 %4279
        %4283 = vset.pattern.permute.xlu0 0
        %4284 = vperm.xlu0 %4283, %v4202
        %v4285 = vpop.permute.xlu0 %4284
        %4288 = vset.pattern.permute.xlu0 0
        %4289 = vperm.xlu0 %4288, %v4203
        %v4290 = vpop.permute.xlu0 %4289
        %v4308 = vunpack.c.l.b16 %v4171
        %v4309 = vunpack.c.l.b16 %v4172
        %v4310 = vunpack.c.l.b16 %v4173
        %v4311 = vunpack.c.l.b16 %v4174
        %v4312 = vunpack.c.l.b16 %v4175
        %v4313 = vunpack.c.l.b16 %v4176
        %v4314 = vunpack.c.l.b16 %v4177
        %v4315 = vunpack.c.l.b16 %v4178
        %v4316 = vunpack.c.l.b16 %v4179
        %v4317 = vunpack.c.l.b16 %v4180
        %v4318 = vunpack.c.l.b16 %v4181
        %v4319 = vunpack.c.l.b16 %v4182
        %v4320 = vunpack.c.l.b16 %v4183
        %v4321 = vunpack.c.l.b16 %v4184
        %v4322 = vunpack.c.l.b16 %v4185
        %v4323 = vunpack.c.l.b16 %v4186
        %v4324 = vpack.c.b16 %v4309, %v4308
        %v4325 = vpack.c.b16 %v4311, %v4310
        %v4326 = vpack.c.b16 %v4313, %v4312
        %v4327 = vpack.c.b16 %v4315, %v4314
        %v4328 = vpack.c.b16 %v4317, %v4316
        %v4329 = vpack.c.b16 %v4319, %v4318
        %v4330 = vpack.c.b16 %v4321, %v4320
        %v4331 = vpack.c.b16 %v4323, %v4322
        %4340 = vmatpush.bf16.msra.mxu0 %v4211
        %4341 = vmatpush.bf16.msra.mxu0 %v4210
        %4342 = vmatpush.bf16.msra.mxu0 %v4209
        %4343 = vmatpush.bf16.msra.mxu0 %v4208
        %4344 = vmatpush.bf16.msra.mxu0 %v4207
        %4345 = vmatpush.bf16.msra.mxu0 %v4206
        %4346 = vmatpush.bf16.msra.mxu0 %v4205
        %4347 = vmatpush.bf16.msra.mxu0 %v4204
        %4348 = vmatmul.bf16.gmra.mxu0 %v4324
        %v4349 = vpop.f32.mrf.mxu0
        %v4350 = vadd.f32 %v4215, %v4349
        %v4351 = vpop.f32.mrf.mxu0
        %v4352 = vadd.f32 %v4220, %v4351
        %4353 = vmatmul.bf16.gmra.mxu0 %v4325
        %v4354 = vpop.f32.mrf.mxu0
        %v4355 = vadd.f32 %v4225, %v4354
        %v4356 = vpop.f32.mrf.mxu0
        %v4357 = vadd.f32 %v4230, %v4356
        %4358 = vmatmul.bf16.gmra.mxu0 %v4326
        %v4359 = vpop.f32.mrf.mxu0
        %v4360 = vadd.f32 %v4235, %v4359
        %v4361 = vpop.f32.mrf.mxu0
        %v4362 = vadd.f32 %v4240, %v4361
        %4363 = vmatmul.bf16.gmra.mxu0 %v4327
        %v4364 = vpop.f32.mrf.mxu0
        %v4365 = vadd.f32 %v4245, %v4364
        %v4366 = vpop.f32.mrf.mxu0
        %v4367 = vadd.f32 %v4250, %v4366
        %4368 = vmatmul.bf16.gmra.mxu0 %v4328
        %v4369 = vpop.f32.mrf.mxu0
        %v4370 = vadd.f32 %v4255, %v4369
        %v4371 = vpop.f32.mrf.mxu0
        %v4372 = vadd.f32 %v4260, %v4371
        %4373 = vmatmul.bf16.gmra.mxu0 %v4329
        %v4374 = vpop.f32.mrf.mxu0
        %v4375 = vadd.f32 %v4265, %v4374
        %v4376 = vpop.f32.mrf.mxu0
        %v4377 = vadd.f32 %v4270, %v4376
        %4378 = vmatmul.bf16.gmra.mxu0 %v4330
        %v4379 = vpop.f32.mrf.mxu0
        %v4380 = vadd.f32 %v4275, %v4379
        %v4381 = vpop.f32.mrf.mxu0
        %v4382 = vadd.f32 %v4280, %v4381
        %4383 = vmatmul.bf16.gmra.mxu0 %v4331
        %v4384 = vpop.f32.mrf.mxu0
        %v4385 = vadd.f32 %v4285, %v4384
        %v4386 = vpop.f32.mrf.mxu0
        %v4387 = vadd.f32 %v4290, %v4386
        %4388 = vdwg.mxu0
        %v4389 = vmax.f32 %v4350, 0.0
        %v4390 = vmax.f32 %v4352, 0.0
        %v4391 = vmax.f32 %v4355, 0.0
        %v4392 = vmax.f32 %v4357, 0.0
        %v4393 = vmax.f32 %v4360, 0.0
        %v4394 = vmax.f32 %v4362, 0.0
        %v4395 = vmax.f32 %v4365, 0.0
        %v4396 = vmax.f32 %v4367, 0.0
        %v4397 = vmax.f32 %v4370, 0.0
        %v4398 = vmax.f32 %v4372, 0.0
        %v4399 = vmax.f32 %v4375, 0.0
        %v4400 = vmax.f32 %v4377, 0.0
        %v4401 = vmax.f32 %v4380, 0.0
        %v4402 = vmax.f32 %v4382, 0.0
        %v4403 = vmax.f32 %v4385, 0.0
        %v4404 = vmax.f32 %v4387, 0.0
        %v4405 = vld [vmem:[%s7] sm:$0xf]
        %v4406 = vpack.c.bf16 %v4390, %v4389
        %v4407 = vpack.c.bf16 %v4392, %v4391
        %v4408 = vpack.c.bf16 %v4394, %v4393
        %v4409 = vpack.c.bf16 %v4396, %v4395
        %v4410 = vpack.c.bf16 %v4398, %v4397
        %v4411 = vpack.c.bf16 %v4400, %v4399
        %v4412 = vpack.c.bf16 %v4402, %v4401
        %v4413 = vpack.c.bf16 %v4404, %v4403
        %v4414 = vld [vmem:[%s8] sm:$0xff]
        %4416 = vset.pattern.permute.xlu0 0
        %4417 = vperm.xlu0 %4416, %v4414
        %v4418 = vpop.permute.xlu0 %4417
        %4420 = vmatpush.bf16.msra.mxu0 %v4413
        %4421 = vmatpush.bf16.msra.mxu0 %v4412
        %4422 = vmatpush.bf16.msra.mxu0 %v4411
        %4423 = vmatpush.bf16.msra.mxu0 %v4410
        %4424 = vmatpush.bf16.msra.mxu0 %v4409
        %4425 = vmatpush.bf16.msra.mxu0 %v4408
        %4426 = vmatpush.bf16.msra.mxu0 %v4407
        %4427 = vmatpush.bf16.msra.mxu0 %v4406
        %4428 = vmatmul.bf16.gmra.mxu0 %v4405
        %v4429 = vpop.f32.mrf.mxu0
        %v4430 = vadd.f32 %v4418, %v4429
        %v4431 = vpop.f32.mrf.mxu0
        %4432 = vdwg.mxu0
        %v4433 = vlaneseq
        %v4434 = vshrl.u32 %v4433, 7
        %vm4435 = vcmp.lt.s32.totalorder %v4434, 3
        %v4436 = vxor.u32 %v4430, 2147483648
        %v4437 = vmul.f32 %v4436, 1.442695
        %v4438 = vpow.pop %v4437
        %v4439 = vadd.f32 %v4438, 1.0
        %v4440 = vrcp.pop %v4439
        %v4441 = vmul.f32 %v4439, %v4440
        %v4442 = vsub.f32 1.0, %v4441
        %v4443 = vmul.f32 %v4440, %v4442
        %v4444 = vadd.f32 %v4440, %v4443
        %vm4445 = vweird.f32 %v4439
        %vm4446 = vweird.f32 %v4440
        %vm4447 = vmor %vm4445, %vm4446
        %v4448 = vsel %vm4447, %v4440, %v4444
        %v4449 = vand.u32 2147483647, %v4439
        %vm4450 = vcmp.eq.f32.partialorder %v4449, 8.507059e+37
        %v4451 = vand.u32 %v4439, 2147483648
        %v4452 = vor.u32 1.1754944e-38, %v4451
        %v4453 = vsel %vm4450, %v4452, %v4448
        %v4454 = vmul.f32 1.0, %v4453
        %v4455 = vmax.f32 %v4430, 0.0
        %v4456 = vsel %vm4435, %v4454, %v4455
        %4457 = vst [vmem:[%s326] sm:$0xff] %v4456
        %v4458 = vld [vmem:[%s331 + $0x4] sm:$0x7]
        %v4459 = vperm.slane %v4458, 0
        %v4460 = vmul.f32 %v370, %v4459
        %v4461 = vmul.f32 %v375, %v4459
        %v4462 = vmul.f32 %v380, %v4459
        %v4463 = vmul.f32 %v385, %v4459
        %v4464 = vmul.f32 %v390, %v4459
        %v4465 = vmul.f32 %v395, %v4459
        %v4466 = vmul.f32 %v400, %v4459
        %v4467 = vmul.f32 %v405, %v4459
        %v4468 = vmul.f32 %v410, %v4459
        %v4469 = vmul.f32 %v415, %v4459
        %v4470 = vmul.f32 %v420, %v4459
        %v4471 = vmul.f32 %v425, %v4459
        %v4472 = vmul.f32 %v430, %v4459
        %v4473 = vmul.f32 %v435, %v4459
        %v4474 = vmul.f32 %v440, %v4459
        %v4475 = vmul.f32 %v445, %v4459
        %v4476 = vperm.slane %v4458, 1
        %v4477 = vmul.f32 %v466, %v4476
        %v4478 = vmul.f32 %v470, %v4476
        %v4479 = vmul.f32 %v474, %v4476
        %v4480 = vmul.f32 %v478, %v4476
        %v4481 = vmul.f32 %v482, %v4476
        %v4482 = vmul.f32 %v486, %v4476
        %v4483 = vmul.f32 %v490, %v4476
        %v4484 = vmul.f32 %v494, %v4476
        %v4485 = vmul.f32 %v498, %v4476
        %v4486 = vmul.f32 %v502, %v4476
        %v4487 = vmul.f32 %v506, %v4476
        %v4488 = vmul.f32 %v510, %v4476
        %v4489 = vmul.f32 %v514, %v4476
        %v4490 = vmul.f32 %v518, %v4476
        %v4491 = vmul.f32 %v522, %v4476
        %v4492 = vmul.f32 %v526, %v4476
        %v4493 = vadd.f32 %v4460, %v4477
        %v4494 = vadd.f32 %v4461, %v4478
        %v4495 = vadd.f32 %v4462, %v4479
        %v4496 = vadd.f32 %v4463, %v4480
        %v4497 = vadd.f32 %v4464, %v4481
        %v4498 = vadd.f32 %v4465, %v4482
        %v4499 = vadd.f32 %v4466, %v4483
        %v4500 = vadd.f32 %v4467, %v4484
        %v4501 = vadd.f32 %v4468, %v4485
        %v4502 = vadd.f32 %v4469, %v4486
        %v4503 = vadd.f32 %v4470, %v4487
        %v4504 = vadd.f32 %v4471, %v4488
        %v4505 = vadd.f32 %v4472, %v4489
        %v4506 = vadd.f32 %v4473, %v4490
        %v4507 = vadd.f32 %v4474, %v4491
        %v4508 = vadd.f32 %v4475, %v4492
        %v4509 = vperm.slane %v4458, 2
        %v4510 = vmul.f32 %v563, %v4509
        %v4511 = vmul.f32 %v567, %v4509
        %v4512 = vmul.f32 %v571, %v4509
        %v4513 = vmul.f32 %v575, %v4509
        %v4514 = vmul.f32 %v579, %v4509
        %v4515 = vmul.f32 %v583, %v4509
        %v4516 = vmul.f32 %v587, %v4509
        %v4517 = vmul.f32 %v591, %v4509
        %v4518 = vmul.f32 %v595, %v4509
        %v4519 = vmul.f32 %v599, %v4509
        %v4520 = vmul.f32 %v603, %v4509
        %v4521 = vmul.f32 %v607, %v4509
        %v4522 = vmul.f32 %v611, %v4509
        %v4523 = vmul.f32 %v615, %v4509
        %v4524 = vmul.f32 %v619, %v4509
        %v4525 = vmul.f32 %v623, %v4509
        %v4526 = vadd.f32 %v4493, %v4510
        %v4527 = vadd.f32 %v4494, %v4511
        %v4528 = vadd.f32 %v4495, %v4512
        %v4529 = vadd.f32 %v4496, %v4513
        %v4530 = vadd.f32 %v4497, %v4514
        %v4531 = vadd.f32 %v4498, %v4515
        %v4532 = vadd.f32 %v4499, %v4516
        %v4533 = vadd.f32 %v4500, %v4517
        %v4534 = vadd.f32 %v4501, %v4518
        %v4535 = vadd.f32 %v4502, %v4519
        %v4536 = vadd.f32 %v4503, %v4520
        %v4537 = vadd.f32 %v4504, %v4521
        %v4538 = vadd.f32 %v4505, %v4522
        %v4539 = vadd.f32 %v4506, %v4523
        %v4540 = vadd.f32 %v4507, %v4524
        %v4541 = vadd.f32 %v4508, %v4525
        %v4542 = vadd.f32 %v4526, %v661
        %v4543 = vadd.f32 %v4527, %v666
        %v4544 = vadd.f32 %v4528, %v671
        %v4545 = vadd.f32 %v4529, %v676
        %v4546 = vadd.f32 %v4530, %v681
        %v4547 = vadd.f32 %v4531, %v686
        %v4548 = vadd.f32 %v4532, %v691
        %v4549 = vadd.f32 %v4533, %v696
        %v4550 = vadd.f32 %v4534, %v701
        %v4551 = vadd.f32 %v4535, %v706
        %v4552 = vadd.f32 %v4536, %v711
        %v4553 = vadd.f32 %v4537, %v716
        %v4554 = vadd.f32 %v4538, %v721
        %v4555 = vadd.f32 %v4539, %v726
        %v4556 = vadd.f32 %v4540, %v731
        %v4557 = vadd.f32 %v4541, %v736
        %v4558 = vand.u32 2147483647, %v4542
        %vm4559 = vcmp.le.f32.partialorder %v4558, 0.7853982
        %vm4560 = vcmp.lt.s32.totalorder %v4542, 0
        %v4561 = vand.u32 %v4542, 2139095040
        %v4562 = vshrl.u32 %v4561, 23
        %v4563 = vsub.s32 %v4562, 127
        %v4564 = vand.u32 2147483647, %v4542
        %v4565 = vand.u32 %v4564, 8388607
        %v4566 = vor.u32 %v4565, 8388608
        %v4567 = vsub.s32 0, %v4566
        %v4568 = vadd.s32 %v4563, 1
        %vm4569 = vcmp.gt.s32.totalorder %v4568, 0
        %v4570 = vsel %vm4569, %v4568, 0
        %v4571 = vshrl.u32 %v4570, 5
        %v4572 = vand.u32 %v4570, 31
        %v4573 = vsub.s32 32, %v4572
        %v4574 = vshrl.u32 683565275, %v4573
        %v4575 = vshll.u32 683565275, %v4572
        %v4576 = vshrl.u32 2475754826, %v4573
        %v4577 = vor.u32 %v4575, %v4576
        %v4578 = vshll.u32 2475754826, %v4572
        %v4579 = vshrl.u32 2131351028, %v4573
        %v4580 = vor.u32 %v4578, %v4579
        %v4581 = vshll.u32 2131351028, %v4572
        %v4582 = vshrl.u32 2102212464, %v4573
        %v4583 = vor.u32 %v4581, %v4582
        %v4584 = vshll.u32 2102212464, %v4572
        %v4585 = vshrl.u32 920167782, %v4573
        %v4586 = vor.u32 %v4584, %v4585
        %v4587 = vshll.u32 920167782, %v4572
        %v4588 = vshrl.u32 1326507024, %v4573
        %v4589 = vor.u32 %v4587, %v4588
        %vm4590 = vcmp.lt.s32.totalorder %v4571, 1
        %vm4591 = vcmp.lt.s32.totalorder %v4571, 2
        %vm4592 = vcmp.lt.s32.totalorder %v4571, 3
        %vm4593 = vcmp.lt.s32.totalorder %v4571, 4
        %v4594 = vsel %vm4590, %v4574, %v4577
        %v4595 = vsel %vm4593, %v4583, 2102212464
        %v4596 = vsel %vm4592, %v4580, %v4595
        %v4597 = vsel %vm4591, %v4594, %v4596
        %v4598 = vsel %vm4590, %v4577, %v4580
        %v4599 = vsel %vm4593, %v4586, 920167782
        %v4600 = vsel %vm4592, %v4583, %v4599
        %v4601 = vsel %vm4591, %v4598, %v4600
        %v4602 = vsel %vm4590, %v4580, %v4583
        %v4603 = vsel %vm4593, %v4589, 1326507024
        %v4604 = vsel %vm4592, %v4586, %v4603
        %v4605 = vsel %vm4591, %v4602, %v4604
        %v4606 = vshll.u32 %v4566, 8
        %v4607 = vand.u32 %v4606, 65535
        %v4608 = vshrl.u32 %v4606, 16
        %v4609 = vand.u32 %v4605, 65535
        %v4610 = vshrl.u32 %v4605, 16
        %v4611 = vmul.u32 %v4607, %v4609
        %v4612 = vmul.u32 %v4607, %v4610
        %v4613 = vmul.u32 %v4608, %v4609
        %v4614 = vmul.u32 %v4608, %v4610
        %v4615 = vshll.u32 %v4612, 16
        %v4616 = vshrl.u32 %v4612, 16
        %v4617 = vshll.u32 %v4613, 16
        %v4618 = vshrl.u32 %v4613, 16
        %vm4619 = vc.u32 %v4611, %v4615
        %v4620 = vsel %vm4619, 1, 0
        %v4621 = vadd.s32 %v4611, %v4615
        %v4622 = vadd.s32 %v4614, %v4620
        %vm4623 = vc.u32 %v4621, %v4617
        %v4624 = vsel %vm4623, 1, 0
        %v4625 = vadd.s32 %v4621, %v4617
        %v4626 = vadd.s32 %v4622, %v4624
        %v4627 = vadd.s32 %v4626, %v4616
        %v4628 = vadd.s32 %v4627, %v4618
        %v4629 = vand.u32 %v4606, 65535
        %v4630 = vshrl.u32 %v4606, 16
        %v4631 = vand.u32 %v4601, 65535
        %v4632 = vshrl.u32 %v4601, 16
        %v4633 = vmul.u32 %v4629, %v4631
        %v4634 = vmul.u32 %v4629, %v4632
        %v4635 = vmul.u32 %v4630, %v4631
        %v4636 = vmul.u32 %v4630, %v4632
        %v4637 = vshll.u32 %v4634, 16
        %v4638 = vshrl.u32 %v4634, 16
        %v4639 = vshll.u32 %v4635, 16
        %v4640 = vshrl.u32 %v4635, 16
        %vm4641 = vc.u32 %v4633, %v4637
        %v4642 = vsel %vm4641, 1, 0
        %v4643 = vadd.s32 %v4633, %v4637
        %v4644 = vadd.s32 %v4636, %v4642
        %vm4645 = vc.u32 %v4643, %v4639
        %v4646 = vsel %vm4645, 1, 0
        %v4647 = vadd.s32 %v4643, %v4639
        %v4648 = vadd.s32 %v4644, %v4646
        %v4649 = vadd.s32 %v4648, %v4638
        %v4650 = vadd.s32 %v4649, %v4640
        %v4651 = vmul.u32 %v4606, %v4597
        %v4652 = vadd.s32 %v4628, %v4647
        %vm4653 = vc.u32 %v4628, %v4647
        %v4654 = vadd.s32 %v4650, 1
        %v4655 = vsel %vm4653, %v4654, %v4650
        %v4656 = vadd.s32 %v4651, %v4655
        %v4657 = vadd.s32 %v4656, 536870912
        %v4658 = vshrl.u32 %v4657, 30
        %v4659 = vshll.u32 %v4658, 30
        %v4660 = vsub.s32 %v4656, %v4659
        %vm4661 = vcmp.lt.s32.totalorder %v4660, 0
        %v4662 = vsub.s32 0, %v4660
        %v4663 = vsel %vm4661, %v4662, %v4660
        %v4664 = vclz %v4663
        %v4665 = vsub.s32 %v4664, 2
        %vm4666 = vcmp.gt.s32.totalorder 0, %v4665
        %v4667 = vsel %vm4666, 0, %v4665
        %v4668 = vsub.s32 32, %v4667
        %v4669 = vshll.u32 %v4660, %v4667
        %v4670 = vshrl.u32 %v4652, %v4668
        %v4671 = vor.u32 %v4669, %v4670
        %v4672 = vsub.s32 4294967266, %v4667
        %v4673 = vadd.s32 %v4672, 127
        %v4674 = vshll.u32 %v4673, 23
        %v4675 = vor.u32 4788187, %v4674
        %v4676 = vand.u32 2147483647, %v4675
        %v4678 = vcvt.s32.f32 %v4671
        %v4679 = vmul.f32 %v4678, %v4676
        %v4680 = vxor.u32 %v4679, 2147483648
        %v4681 = vsel %vm4560, %v4680, %v4679
        %v4682 = vsub.s32 4, %v4658
        %v4683 = vsel %vm4560, %v4682, %v4658
        %v4684 = vsel %vm4559, %v4542, %v4681
        %v4685 = vsel %vm4559, 0, %v4683
        %v4686 = vmul.f32 %v4684, %v4684
        %v4687 = vmul.f32 %v4686, -0.001358992
        %v4688 = vadd.f32 %v4687, 0.041655596
        %v4689 = vmul.f32 %v4686, %v4688
        %v4690 = vadd.f32 %v4689, -0.4999988
        %v4691 = vmul.f32 %v4686, %v4690
        %v4692 = vadd.f32 1.0, %v4691
        %v4693 = vmul.f32 %v4684, %v4684
        %v4694 = vmul.f32 %v4693, -0.00019511016
        %v4695 = vadd.f32 %v4694, 0.008332121
        %v4696 = vmul.f32 %v4693, %v4695
        %v4697 = vadd.f32 %v4696, -0.16666654
        %v4698 = vmul.f32 %v4693, %v4697
        %v4699 = vadd.f32 %v4698, 1.0
        %v4700 = vmul.f32 %v4699, %v4684
        %vm4701 = vweird.f32 %v4542
        %v4702 = vadd.s32 %v4685, 3
        %v4703 = vand.u32 %v4702, 3
        %vm4704 = vcmp.lt.s32.totalorder %v4703, 2
        %vm4705 = vcmp.eq.s32.totalorder %v4703, 0
        %v4706 = vxor.u32 %v4700, 2147483648
        %v4707 = vsel %vm4705, %v4692, %v4706
        %vm4708 = vcmp.eq.s32.totalorder %v4703, 2
        %v4709 = vxor.u32 %v4692, 2147483648
        %v4710 = vsel %vm4708, %v4709, %v4700
        %v4711 = vsel %vm4704, %v4707, %v4710
        %v4712 = vsel %vm4701, nan, %v4711
        %v4713 = vand.u32 2147483647, %v4543
        %vm4714 = vcmp.le.f32.partialorder %v4713, 0.7853982
        %vm4715 = vcmp.lt.s32.totalorder %v4543, 0
        %v4716 = vand.u32 %v4543, 2139095040
        %v4717 = vshrl.u32 %v4716, 23
        %v4718 = vsub.s32 %v4717, 127
        %v4719 = vand.u32 2147483647, %v4543
        %v4720 = vand.u32 %v4719, 8388607
        %v4721 = vor.u32 %v4720, 8388608
        %v4722 = vsub.s32 0, %v4721
        %v4723 = vadd.s32 %v4718, 1
        %vm4724 = vcmp.gt.s32.totalorder %v4723, 0
        %v4725 = vsel %vm4724, %v4723, 0
        %v4726 = vshrl.u32 %v4725, 5
        %v4727 = vand.u32 %v4725, 31
        %v4728 = vsub.s32 32, %v4727
        %v4729 = vshrl.u32 683565275, %v4728
        %v4730 = vshll.u32 683565275, %v4727
        %v4731 = vshrl.u32 2475754826, %v4728
        %v4732 = vor.u32 %v4730, %v4731
        %v4733 = vshll.u32 2475754826, %v4727
        %v4734 = vshrl.u32 2131351028, %v4728
        %v4735 = vor.u32 %v4733, %v4734
        %v4736 = vshll.u32 2131351028, %v4727
        %v4737 = vshrl.u32 2102212464, %v4728
        %v4738 = vor.u32 %v4736, %v4737
        %v4739 = vshll.u32 2102212464, %v4727
        %v4740 = vshrl.u32 920167782, %v4728
        %v4741 = vor.u32 %v4739, %v4740
        %v4742 = vshll.u32 920167782, %v4727
        %v4743 = vshrl.u32 1326507024, %v4728
        %v4744 = vor.u32 %v4742, %v4743
        %vm4745 = vcmp.lt.s32.totalorder %v4726, 1
        %vm4746 = vcmp.lt.s32.totalorder %v4726, 2
        %vm4747 = vcmp.lt.s32.totalorder %v4726, 3
        %vm4748 = vcmp.lt.s32.totalorder %v4726, 4
        %v4749 = vsel %vm4745, %v4729, %v4732
        %v4750 = vsel %vm4748, %v4738, 2102212464
        %v4751 = vsel %vm4747, %v4735, %v4750
        %v4752 = vsel %vm4746, %v4749, %v4751
        %v4753 = vsel %vm4745, %v4732, %v4735
        %v4754 = vsel %vm4748, %v4741, 920167782
        %v4755 = vsel %vm4747, %v4738, %v4754
        %v4756 = vsel %vm4746, %v4753, %v4755
        %v4757 = vsel %vm4745, %v4735, %v4738
        %v4758 = vsel %vm4748, %v4744, 1326507024
        %v4759 = vsel %vm4747, %v4741, %v4758
        %v4760 = vsel %vm4746, %v4757, %v4759
        %v4761 = vshll.u32 %v4721, 8
        %v4762 = vand.u32 %v4761, 65535
        %v4763 = vshrl.u32 %v4761, 16
        %v4764 = vand.u32 %v4760, 65535
        %v4765 = vshrl.u32 %v4760, 16
        %v4766 = vmul.u32 %v4762, %v4764
        %v4767 = vmul.u32 %v4762, %v4765
        %v4768 = vmul.u32 %v4763, %v4764
        %v4769 = vmul.u32 %v4763, %v4765
        %v4770 = vshll.u32 %v4767, 16
        %v4771 = vshrl.u32 %v4767, 16
        %v4772 = vshll.u32 %v4768, 16
        %v4773 = vshrl.u32 %v4768, 16
        %vm4774 = vc.u32 %v4766, %v4770
        %v4775 = vsel %vm4774, 1, 0
        %v4776 = vadd.s32 %v4766, %v4770
        %v4777 = vadd.s32 %v4769, %v4775
        %vm4778 = vc.u32 %v4776, %v4772
        %v4779 = vsel %vm4778, 1, 0
        %v4780 = vadd.s32 %v4776, %v4772
        %v4781 = vadd.s32 %v4777, %v4779
        %v4782 = vadd.s32 %v4781, %v4771
        %v4783 = vadd.s32 %v4782, %v4773
        %v4784 = vand.u32 %v4761, 65535
        %v4785 = vshrl.u32 %v4761, 16
        %v4786 = vand.u32 %v4756, 65535
        %v4787 = vshrl.u32 %v4756, 16
        %v4788 = vmul.u32 %v4784, %v4786
        %v4789 = vmul.u32 %v4784, %v4787
        %v4790 = vmul.u32 %v4785, %v4786
        %v4791 = vmul.u32 %v4785, %v4787
        %v4792 = vshll.u32 %v4789, 16
        %v4793 = vshrl.u32 %v4789, 16
        %v4794 = vshll.u32 %v4790, 16
        %v4795 = vshrl.u32 %v4790, 16
        %vm4796 = vc.u32 %v4788, %v4792
        %v4797 = vsel %vm4796, 1, 0
        %v4798 = vadd.s32 %v4788, %v4792
        %v4799 = vadd.s32 %v4791, %v4797
        %vm4800 = vc.u32 %v4798, %v4794
        %v4801 = vsel %vm4800, 1, 0
        %v4802 = vadd.s32 %v4798, %v4794
        %v4803 = vadd.s32 %v4799, %v4801
        %v4804 = vadd.s32 %v4803, %v4793
        %v4805 = vadd.s32 %v4804, %v4795
        %v4806 = vmul.u32 %v4761, %v4752
        %v4807 = vadd.s32 %v4783, %v4802
        %vm4808 = vc.u32 %v4783, %v4802
        %v4809 = vadd.s32 %v4805, 1
        %v4810 = vsel %vm4808, %v4809, %v4805
        %v4811 = vadd.s32 %v4806, %v4810
        %v4812 = vadd.s32 %v4811, 536870912
        %v4813 = vshrl.u32 %v4812, 30
        %v4814 = vshll.u32 %v4813, 30
        %v4815 = vsub.s32 %v4811, %v4814
        %vm4816 = vcmp.lt.s32.totalorder %v4815, 0
        %v4817 = vsub.s32 0, %v4815
        %v4818 = vsel %vm4816, %v4817, %v4815
        %v4819 = vclz %v4818
        %v4820 = vsub.s32 %v4819, 2
        %vm4821 = vcmp.gt.s32.totalorder 0, %v4820
        %v4822 = vsel %vm4821, 0, %v4820
        %v4823 = vsub.s32 32, %v4822
        %v4824 = vshll.u32 %v4815, %v4822
        %v4825 = vshrl.u32 %v4807, %v4823
        %v4826 = vor.u32 %v4824, %v4825
        %v4827 = vsub.s32 4294967266, %v4822
        %v4828 = vadd.s32 %v4827, 127
        %v4829 = vshll.u32 %v4828, 23
        %v4830 = vor.u32 4788187, %v4829
        %v4831 = vand.u32 2147483647, %v4830
        %v4833 = vcvt.s32.f32 %v4826
        %v4834 = vmul.f32 %v4833, %v4831
        %v4835 = vxor.u32 %v4834, 2147483648
        %v4836 = vsel %vm4715, %v4835, %v4834
        %v4837 = vsub.s32 4, %v4813
        %v4838 = vsel %vm4715, %v4837, %v4813
        %v4839 = vsel %vm4714, %v4543, %v4836
        %v4840 = vsel %vm4714, 0, %v4838
        %v4841 = vmul.f32 %v4839, %v4839
        %v4842 = vmul.f32 %v4841, -0.001358992
        %v4843 = vadd.f32 %v4842, 0.041655596
        %v4844 = vmul.f32 %v4841, %v4843
        %v4845 = vadd.f32 %v4844, -0.4999988
        %v4846 = vmul.f32 %v4841, %v4845
        %v4847 = vadd.f32 1.0, %v4846
        %v4848 = vmul.f32 %v4839, %v4839
        %v4849 = vmul.f32 %v4848, -0.00019511016
        %v4850 = vadd.f32 %v4849, 0.008332121
        %v4851 = vmul.f32 %v4848, %v4850
        %v4852 = vadd.f32 %v4851, -0.16666654
        %v4853 = vmul.f32 %v4848, %v4852
        %v4854 = vadd.f32 %v4853, 1.0
        %v4855 = vmul.f32 %v4854, %v4839
        %vm4856 = vweird.f32 %v4543
        %v4857 = vadd.s32 %v4840, 3
        %v4858 = vand.u32 %v4857, 3
        %vm4859 = vcmp.lt.s32.totalorder %v4858, 2
        %vm4860 = vcmp.eq.s32.totalorder %v4858, 0
        %v4861 = vxor.u32 %v4855, 2147483648
        %v4862 = vsel %vm4860, %v4847, %v4861
        %vm4863 = vcmp.eq.s32.totalorder %v4858, 2
        %v4864 = vxor.u32 %v4847, 2147483648
        %v4865 = vsel %vm4863, %v4864, %v4855
        %v4866 = vsel %vm4859, %v4862, %v4865
        %v4867 = vsel %vm4856, nan, %v4866
        %v4868 = vand.u32 2147483647, %v4544
        %vm4869 = vcmp.le.f32.partialorder %v4868, 0.7853982
        %vm4870 = vcmp.lt.s32.totalorder %v4544, 0
        %v4871 = vand.u32 %v4544, 2139095040
        %v4872 = vshrl.u32 %v4871, 23
        %v4873 = vsub.s32 %v4872, 127
        %v4874 = vand.u32 2147483647, %v4544
        %v4875 = vand.u32 %v4874, 8388607
        %v4876 = vor.u32 %v4875, 8388608
        %v4877 = vsub.s32 0, %v4876
        %v4878 = vadd.s32 %v4873, 1
        %vm4879 = vcmp.gt.s32.totalorder %v4878, 0
        %v4880 = vsel %vm4879, %v4878, 0
        %v4881 = vshrl.u32 %v4880, 5
        %v4882 = vand.u32 %v4880, 31
        %v4883 = vsub.s32 32, %v4882
        %v4884 = vshrl.u32 683565275, %v4883
        %v4885 = vshll.u32 683565275, %v4882
        %v4886 = vshrl.u32 2475754826, %v4883
        %v4887 = vor.u32 %v4885, %v4886
        %v4888 = vshll.u32 2475754826, %v4882
        %v4889 = vshrl.u32 2131351028, %v4883
        %v4890 = vor.u32 %v4888, %v4889
        %v4891 = vshll.u32 2131351028, %v4882
        %v4892 = vshrl.u32 2102212464, %v4883
        %v4893 = vor.u32 %v4891, %v4892
        %v4894 = vshll.u32 2102212464, %v4882
        %v4895 = vshrl.u32 920167782, %v4883
        %v4896 = vor.u32 %v4894, %v4895
        %v4897 = vshll.u32 920167782, %v4882
        %v4898 = vshrl.u32 1326507024, %v4883
        %v4899 = vor.u32 %v4897, %v4898
        %vm4900 = vcmp.lt.s32.totalorder %v4881, 1
        %vm4901 = vcmp.lt.s32.totalorder %v4881, 2
        %vm4902 = vcmp.lt.s32.totalorder %v4881, 3
        %vm4903 = vcmp.lt.s32.totalorder %v4881, 4
        %v4904 = vsel %vm4900, %v4884, %v4887
        %v4905 = vsel %vm4903, %v4893, 2102212464
        %v4906 = vsel %vm4902, %v4890, %v4905
        %v4907 = vsel %vm4901, %v4904, %v4906
        %v4908 = vsel %vm4900, %v4887, %v4890
        %v4909 = vsel %vm4903, %v4896, 920167782
        %v4910 = vsel %vm4902, %v4893, %v4909
        %v4911 = vsel %vm4901, %v4908, %v4910
        %v4912 = vsel %vm4900, %v4890, %v4893
        %v4913 = vsel %vm4903, %v4899, 1326507024
        %v4914 = vsel %vm4902, %v4896, %v4913
        %v4915 = vsel %vm4901, %v4912, %v4914
        %v4916 = vshll.u32 %v4876, 8
        %v4917 = vand.u32 %v4916, 65535
        %v4918 = vshrl.u32 %v4916, 16
        %v4919 = vand.u32 %v4915, 65535
        %v4920 = vshrl.u32 %v4915, 16
        %v4921 = vmul.u32 %v4917, %v4919
        %v4922 = vmul.u32 %v4917, %v4920
        %v4923 = vmul.u32 %v4918, %v4919
        %v4924 = vmul.u32 %v4918, %v4920
        %v4925 = vshll.u32 %v4922, 16
        %v4926 = vshrl.u32 %v4922, 16
        %v4927 = vshll.u32 %v4923, 16
        %v4928 = vshrl.u32 %v4923, 16
        %vm4929 = vc.u32 %v4921, %v4925
        %v4930 = vsel %vm4929, 1, 0
        %v4931 = vadd.s32 %v4921, %v4925
        %v4932 = vadd.s32 %v4924, %v4930
        %vm4933 = vc.u32 %v4931, %v4927
        %v4934 = vsel %vm4933, 1, 0
        %v4935 = vadd.s32 %v4931, %v4927
        %v4936 = vadd.s32 %v4932, %v4934
        %v4937 = vadd.s32 %v4936, %v4926
        %v4938 = vadd.s32 %v4937, %v4928
        %v4939 = vand.u32 %v4916, 65535
        %v4940 = vshrl.u32 %v4916, 16
        %v4941 = vand.u32 %v4911, 65535
        %v4942 = vshrl.u32 %v4911, 16
        %v4943 = vmul.u32 %v4939, %v4941
        %v4944 = vmul.u32 %v4939, %v4942
        %v4945 = vmul.u32 %v4940, %v4941
        %v4946 = vmul.u32 %v4940, %v4942
        %v4947 = vshll.u32 %v4944, 16
        %v4948 = vshrl.u32 %v4944, 16
        %v4949 = vshll.u32 %v4945, 16
        %v4950 = vshrl.u32 %v4945, 16
        %vm4951 = vc.u32 %v4943, %v4947
        %v4952 = vsel %vm4951, 1, 0
        %v4953 = vadd.s32 %v4943, %v4947
        %v4954 = vadd.s32 %v4946, %v4952
        %vm4955 = vc.u32 %v4953, %v4949
        %v4956 = vsel %vm4955, 1, 0
        %v4957 = vadd.s32 %v4953, %v4949
        %v4958 = vadd.s32 %v4954, %v4956
        %v4959 = vadd.s32 %v4958, %v4948
        %v4960 = vadd.s32 %v4959, %v4950
        %v4961 = vmul.u32 %v4916, %v4907
        %v4962 = vadd.s32 %v4938, %v4957
        %vm4963 = vc.u32 %v4938, %v4957
        %v4964 = vadd.s32 %v4960, 1
        %v4965 = vsel %vm4963, %v4964, %v4960
        %v4966 = vadd.s32 %v4961, %v4965
        %v4967 = vadd.s32 %v4966, 536870912
        %v4968 = vshrl.u32 %v4967, 30
        %v4969 = vshll.u32 %v4968, 30
        %v4970 = vsub.s32 %v4966, %v4969
        %vm4971 = vcmp.lt.s32.totalorder %v4970, 0
        %v4972 = vsub.s32 0, %v4970
        %v4973 = vsel %vm4971, %v4972, %v4970
        %v4974 = vclz %v4973
        %v4975 = vsub.s32 %v4974, 2
        %vm4976 = vcmp.gt.s32.totalorder 0, %v4975
        %v4977 = vsel %vm4976, 0, %v4975
        %v4978 = vsub.s32 32, %v4977
        %v4979 = vshll.u32 %v4970, %v4977
        %v4980 = vshrl.u32 %v4962, %v4978
        %v4981 = vor.u32 %v4979, %v4980
        %v4982 = vsub.s32 4294967266, %v4977
        %v4983 = vadd.s32 %v4982, 127
        %v4984 = vshll.u32 %v4983, 23
        %v4985 = vor.u32 4788187, %v4984
        %v4986 = vand.u32 2147483647, %v4985
        %v4988 = vcvt.s32.f32 %v4981
        %v4989 = vmul.f32 %v4988, %v4986
        %v4990 = vxor.u32 %v4989, 2147483648
        %v4991 = vsel %vm4870, %v4990, %v4989
        %v4992 = vsub.s32 4, %v4968
        %v4993 = vsel %vm4870, %v4992, %v4968
        %v4994 = vsel %vm4869, %v4544, %v4991
        %v4995 = vsel %vm4869, 0, %v4993
        %v4996 = vmul.f32 %v4994, %v4994
        %v4997 = vmul.f32 %v4996, -0.001358992
        %v4998 = vadd.f32 %v4997, 0.041655596
        %v4999 = vmul.f32 %v4996, %v4998
        %v5000 = vadd.f32 %v4999, -0.4999988
        %v5001 = vmul.f32 %v4996, %v5000
        %v5002 = vadd.f32 1.0, %v5001
        %v5003 = vmul.f32 %v4994, %v4994
        %v5004 = vmul.f32 %v5003, -0.00019511016
        %v5005 = vadd.f32 %v5004, 0.008332121
        %v5006 = vmul.f32 %v5003, %v5005
        %v5007 = vadd.f32 %v5006, -0.16666654
        %v5008 = vmul.f32 %v5003, %v5007
        %v5009 = vadd.f32 %v5008, 1.0
        %v5010 = vmul.f32 %v5009, %v4994
        %vm5011 = vweird.f32 %v4544
        %v5012 = vadd.s32 %v4995, 3
        %v5013 = vand.u32 %v5012, 3
        %vm5014 = vcmp.lt.s32.totalorder %v5013, 2
        %vm5015 = vcmp.eq.s32.totalorder %v5013, 0
        %v5016 = vxor.u32 %v5010, 2147483648
        %v5017 = vsel %vm5015, %v5002, %v5016
        %vm5018 = vcmp.eq.s32.totalorder %v5013, 2
        %v5019 = vxor.u32 %v5002, 2147483648
        %v5020 = vsel %vm5018, %v5019, %v5010
        %v5021 = vsel %vm5014, %v5017, %v5020
        %v5022 = vsel %vm5011, nan, %v5021
        %v5023 = vand.u32 2147483647, %v4545
        %vm5024 = vcmp.le.f32.partialorder %v5023, 0.7853982
        %vm5025 = vcmp.lt.s32.totalorder %v4545, 0
        %v5026 = vand.u32 %v4545, 2139095040
        %v5027 = vshrl.u32 %v5026, 23
        %v5028 = vsub.s32 %v5027, 127
        %v5029 = vand.u32 2147483647, %v4545
        %v5030 = vand.u32 %v5029, 8388607
        %v5031 = vor.u32 %v5030, 8388608
        %v5032 = vsub.s32 0, %v5031
        %v5033 = vadd.s32 %v5028, 1
        %vm5034 = vcmp.gt.s32.totalorder %v5033, 0
        %v5035 = vsel %vm5034, %v5033, 0
        %v5036 = vshrl.u32 %v5035, 5
        %v5037 = vand.u32 %v5035, 31
        %v5038 = vsub.s32 32, %v5037
        %v5039 = vshrl.u32 683565275, %v5038
        %v5040 = vshll.u32 683565275, %v5037
        %v5041 = vshrl.u32 2475754826, %v5038
        %v5042 = vor.u32 %v5040, %v5041
        %v5043 = vshll.u32 2475754826, %v5037
        %v5044 = vshrl.u32 2131351028, %v5038
        %v5045 = vor.u32 %v5043, %v5044
        %v5046 = vshll.u32 2131351028, %v5037
        %v5047 = vshrl.u32 2102212464, %v5038
        %v5048 = vor.u32 %v5046, %v5047
        %v5049 = vshll.u32 2102212464, %v5037
        %v5050 = vshrl.u32 920167782, %v5038
        %v5051 = vor.u32 %v5049, %v5050
        %v5052 = vshll.u32 920167782, %v5037
        %v5053 = vshrl.u32 1326507024, %v5038
        %v5054 = vor.u32 %v5052, %v5053
        %vm5055 = vcmp.lt.s32.totalorder %v5036, 1
        %vm5056 = vcmp.lt.s32.totalorder %v5036, 2
        %vm5057 = vcmp.lt.s32.totalorder %v5036, 3
        %vm5058 = vcmp.lt.s32.totalorder %v5036, 4
        %v5059 = vsel %vm5055, %v5039, %v5042
        %v5060 = vsel %vm5058, %v5048, 2102212464
        %v5061 = vsel %vm5057, %v5045, %v5060
        %v5062 = vsel %vm5056, %v5059, %v5061
        %v5063 = vsel %vm5055, %v5042, %v5045
        %v5064 = vsel %vm5058, %v5051, 920167782
        %v5065 = vsel %vm5057, %v5048, %v5064
        %v5066 = vsel %vm5056, %v5063, %v5065
        %v5067 = vsel %vm5055, %v5045, %v5048
        %v5068 = vsel %vm5058, %v5054, 1326507024
        %v5069 = vsel %vm5057, %v5051, %v5068
        %v5070 = vsel %vm5056, %v5067, %v5069
        %v5071 = vshll.u32 %v5031, 8
        %v5072 = vand.u32 %v5071, 65535
        %v5073 = vshrl.u32 %v5071, 16
        %v5074 = vand.u32 %v5070, 65535
        %v5075 = vshrl.u32 %v5070, 16
        %v5076 = vmul.u32 %v5072, %v5074
        %v5077 = vmul.u32 %v5072, %v5075
        %v5078 = vmul.u32 %v5073, %v5074
        %v5079 = vmul.u32 %v5073, %v5075
        %v5080 = vshll.u32 %v5077, 16
        %v5081 = vshrl.u32 %v5077, 16
        %v5082 = vshll.u32 %v5078, 16
        %v5083 = vshrl.u32 %v5078, 16
        %vm5084 = vc.u32 %v5076, %v5080
        %v5085 = vsel %vm5084, 1, 0
        %v5086 = vadd.s32 %v5076, %v5080
        %v5087 = vadd.s32 %v5079, %v5085
        %vm5088 = vc.u32 %v5086, %v5082
        %v5089 = vsel %vm5088, 1, 0
        %v5090 = vadd.s32 %v5086, %v5082
        %v5091 = vadd.s32 %v5087, %v5089
        %v5092 = vadd.s32 %v5091, %v5081
        %v5093 = vadd.s32 %v5092, %v5083
        %v5094 = vand.u32 %v5071, 65535
        %v5095 = vshrl.u32 %v5071, 16
        %v5096 = vand.u32 %v5066, 65535
        %v5097 = vshrl.u32 %v5066, 16
        %v5098 = vmul.u32 %v5094, %v5096
        %v5099 = vmul.u32 %v5094, %v5097
        %v5100 = vmul.u32 %v5095, %v5096
        %v5101 = vmul.u32 %v5095, %v5097
        %v5102 = vshll.u32 %v5099, 16
        %v5103 = vshrl.u32 %v5099, 16
        %v5104 = vshll.u32 %v5100, 16
        %v5105 = vshrl.u32 %v5100, 16
        %vm5106 = vc.u32 %v5098, %v5102
        %v5107 = vsel %vm5106, 1, 0
        %v5108 = vadd.s32 %v5098, %v5102
        %v5109 = vadd.s32 %v5101, %v5107
        %vm5110 = vc.u32 %v5108, %v5104
        %v5111 = vsel %vm5110, 1, 0
        %v5112 = vadd.s32 %v5108, %v5104
        %v5113 = vadd.s32 %v5109, %v5111
        %v5114 = vadd.s32 %v5113, %v5103
        %v5115 = vadd.s32 %v5114, %v5105
        %v5116 = vmul.u32 %v5071, %v5062
        %v5117 = vadd.s32 %v5093, %v5112
        %vm5118 = vc.u32 %v5093, %v5112
        %v5119 = vadd.s32 %v5115, 1
        %v5120 = vsel %vm5118, %v5119, %v5115
        %v5121 = vadd.s32 %v5116, %v5120
        %v5122 = vadd.s32 %v5121, 536870912
        %v5123 = vshrl.u32 %v5122, 30
        %v5124 = vshll.u32 %v5123, 30
        %v5125 = vsub.s32 %v5121, %v5124
        %vm5126 = vcmp.lt.s32.totalorder %v5125, 0
        %v5127 = vsub.s32 0, %v5125
        %v5128 = vsel %vm5126, %v5127, %v5125
        %v5129 = vclz %v5128
        %v5130 = vsub.s32 %v5129, 2
        %vm5131 = vcmp.gt.s32.totalorder 0, %v5130
        %v5132 = vsel %vm5131, 0, %v5130
        %v5133 = vsub.s32 32, %v5132
        %v5134 = vshll.u32 %v5125, %v5132
        %v5135 = vshrl.u32 %v5117, %v5133
        %v5136 = vor.u32 %v5134, %v5135
        %v5137 = vsub.s32 4294967266, %v5132
        %v5138 = vadd.s32 %v5137, 127
        %v5139 = vshll.u32 %v5138, 23
        %v5140 = vor.u32 4788187, %v5139
        %v5141 = vand.u32 2147483647, %v5140
        %v5143 = vcvt.s32.f32 %v5136
        %v5144 = vmul.f32 %v5143, %v5141
        %v5145 = vxor.u32 %v5144, 2147483648
        %v5146 = vsel %vm5025, %v5145, %v5144
        %v5147 = vsub.s32 4, %v5123
        %v5148 = vsel %vm5025, %v5147, %v5123
        %v5149 = vsel %vm5024, %v4545, %v5146
        %v5150 = vsel %vm5024, 0, %v5148
        %v5151 = vmul.f32 %v5149, %v5149
        %v5152 = vmul.f32 %v5151, -0.001358992
        %v5153 = vadd.f32 %v5152, 0.041655596
        %v5154 = vmul.f32 %v5151, %v5153
        %v5155 = vadd.f32 %v5154, -0.4999988
        %v5156 = vmul.f32 %v5151, %v5155
        %v5157 = vadd.f32 1.0, %v5156
        %v5158 = vmul.f32 %v5149, %v5149
        %v5159 = vmul.f32 %v5158, -0.00019511016
        %v5160 = vadd.f32 %v5159, 0.008332121
        %v5161 = vmul.f32 %v5158, %v5160
        %v5162 = vadd.f32 %v5161, -0.16666654
        %v5163 = vmul.f32 %v5158, %v5162
        %v5164 = vadd.f32 %v5163, 1.0
        %v5165 = vmul.f32 %v5164, %v5149
        %vm5166 = vweird.f32 %v4545
        %v5167 = vadd.s32 %v5150, 3
        %v5168 = vand.u32 %v5167, 3
        %vm5169 = vcmp.lt.s32.totalorder %v5168, 2
        %vm5170 = vcmp.eq.s32.totalorder %v5168, 0
        %v5171 = vxor.u32 %v5165, 2147483648
        %v5172 = vsel %vm5170, %v5157, %v5171
        %vm5173 = vcmp.eq.s32.totalorder %v5168, 2
        %v5174 = vxor.u32 %v5157, 2147483648
        %v5175 = vsel %vm5173, %v5174, %v5165
        %v5176 = vsel %vm5169, %v5172, %v5175
        %v5177 = vsel %vm5166, nan, %v5176
        %v5178 = vand.u32 2147483647, %v4546
        %vm5179 = vcmp.le.f32.partialorder %v5178, 0.7853982
        %vm5180 = vcmp.lt.s32.totalorder %v4546, 0
        %v5181 = vand.u32 %v4546, 2139095040
        %v5182 = vshrl.u32 %v5181, 23
        %v5183 = vsub.s32 %v5182, 127
        %v5184 = vand.u32 2147483647, %v4546
        %v5185 = vand.u32 %v5184, 8388607
        %v5186 = vor.u32 %v5185, 8388608
        %v5187 = vsub.s32 0, %v5186
        %v5188 = vadd.s32 %v5183, 1
        %vm5189 = vcmp.gt.s32.totalorder %v5188, 0
        %v5190 = vsel %vm5189, %v5188, 0
        %v5191 = vshrl.u32 %v5190, 5
        %v5192 = vand.u32 %v5190, 31
        %v5193 = vsub.s32 32, %v5192
        %v5194 = vshrl.u32 683565275, %v5193
        %v5195 = vshll.u32 683565275, %v5192
        %v5196 = vshrl.u32 2475754826, %v5193
        %v5197 = vor.u32 %v5195, %v5196
        %v5198 = vshll.u32 2475754826, %v5192
        %v5199 = vshrl.u32 2131351028, %v5193
        %v5200 = vor.u32 %v5198, %v5199
        %v5201 = vshll.u32 2131351028, %v5192
        %v5202 = vshrl.u32 2102212464, %v5193
        %v5203 = vor.u32 %v5201, %v5202
        %v5204 = vshll.u32 2102212464, %v5192
        %v5205 = vshrl.u32 920167782, %v5193
        %v5206 = vor.u32 %v5204, %v5205
        %v5207 = vshll.u32 920167782, %v5192
        %v5208 = vshrl.u32 1326507024, %v5193
        %v5209 = vor.u32 %v5207, %v5208
        %vm5210 = vcmp.lt.s32.totalorder %v5191, 1
        %vm5211 = vcmp.lt.s32.totalorder %v5191, 2
        %vm5212 = vcmp.lt.s32.totalorder %v5191, 3
        %vm5213 = vcmp.lt.s32.totalorder %v5191, 4
        %v5214 = vsel %vm5210, %v5194, %v5197
        %v5215 = vsel %vm5213, %v5203, 2102212464
        %v5216 = vsel %vm5212, %v5200, %v5215
        %v5217 = vsel %vm5211, %v5214, %v5216
        %v5218 = vsel %vm5210, %v5197, %v5200
        %v5219 = vsel %vm5213, %v5206, 920167782
        %v5220 = vsel %vm5212, %v5203, %v5219
        %v5221 = vsel %vm5211, %v5218, %v5220
        %v5222 = vsel %vm5210, %v5200, %v5203
        %v5223 = vsel %vm5213, %v5209, 1326507024
        %v5224 = vsel %vm5212, %v5206, %v5223
        %v5225 = vsel %vm5211, %v5222, %v5224
        %v5226 = vshll.u32 %v5186, 8
        %v5227 = vand.u32 %v5226, 65535
        %v5228 = vshrl.u32 %v5226, 16
        %v5229 = vand.u32 %v5225, 65535
        %v5230 = vshrl.u32 %v5225, 16
        %v5231 = vmul.u32 %v5227, %v5229
        %v5232 = vmul.u32 %v5227, %v5230
        %v5233 = vmul.u32 %v5228, %v5229
        %v5234 = vmul.u32 %v5228, %v5230
        %v5235 = vshll.u32 %v5232, 16
        %v5236 = vshrl.u32 %v5232, 16
        %v5237 = vshll.u32 %v5233, 16
        %v5238 = vshrl.u32 %v5233, 16
        %vm5239 = vc.u32 %v5231, %v5235
        %v5240 = vsel %vm5239, 1, 0
        %v5241 = vadd.s32 %v5231, %v5235
        %v5242 = vadd.s32 %v5234, %v5240
        %vm5243 = vc.u32 %v5241, %v5237
        %v5244 = vsel %vm5243, 1, 0
        %v5245 = vadd.s32 %v5241, %v5237
        %v5246 = vadd.s32 %v5242, %v5244
        %v5247 = vadd.s32 %v5246, %v5236
        %v5248 = vadd.s32 %v5247, %v5238
        %v5249 = vand.u32 %v5226, 65535
        %v5250 = vshrl.u32 %v5226, 16
        %v5251 = vand.u32 %v5221, 65535
        %v5252 = vshrl.u32 %v5221, 16
        %v5253 = vmul.u32 %v5249, %v5251
        %v5254 = vmul.u32 %v5249, %v5252
        %v5255 = vmul.u32 %v5250, %v5251
        %v5256 = vmul.u32 %v5250, %v5252
        %v5257 = vshll.u32 %v5254, 16
        %v5258 = vshrl.u32 %v5254, 16
        %v5259 = vshll.u32 %v5255, 16
        %v5260 = vshrl.u32 %v5255, 16
        %vm5261 = vc.u32 %v5253, %v5257
        %v5262 = vsel %vm5261, 1, 0
        %v5263 = vadd.s32 %v5253, %v5257
        %v5264 = vadd.s32 %v5256, %v5262
        %vm5265 = vc.u32 %v5263, %v5259
        %v5266 = vsel %vm5265, 1, 0
        %v5267 = vadd.s32 %v5263, %v5259
        %v5268 = vadd.s32 %v5264, %v5266
        %v5269 = vadd.s32 %v5268, %v5258
        %v5270 = vadd.s32 %v5269, %v5260
        %v5271 = vmul.u32 %v5226, %v5217
        %v5272 = vadd.s32 %v5248, %v5267
        %vm5273 = vc.u32 %v5248, %v5267
        %v5274 = vadd.s32 %v5270, 1
        %v5275 = vsel %vm5273, %v5274, %v5270
        %v5276 = vadd.s32 %v5271, %v5275
        %v5277 = vadd.s32 %v5276, 536870912
        %v5278 = vshrl.u32 %v5277, 30
        %v5279 = vshll.u32 %v5278, 30
        %v5280 = vsub.s32 %v5276, %v5279
        %vm5281 = vcmp.lt.s32.totalorder %v5280, 0
        %v5282 = vsub.s32 0, %v5280
        %v5283 = vsel %vm5281, %v5282, %v5280
        %v5284 = vclz %v5283
        %v5285 = vsub.s32 %v5284, 2
        %vm5286 = vcmp.gt.s32.totalorder 0, %v5285
        %v5287 = vsel %vm5286, 0, %v5285
        %v5288 = vsub.s32 32, %v5287
        %v5289 = vshll.u32 %v5280, %v5287
        %v5290 = vshrl.u32 %v5272, %v5288
        %v5291 = vor.u32 %v5289, %v5290
        %v5292 = vsub.s32 4294967266, %v5287
        %v5293 = vadd.s32 %v5292, 127
        %v5294 = vshll.u32 %v5293, 23
        %v5295 = vor.u32 4788187, %v5294
        %v5296 = vand.u32 2147483647, %v5295
        %v5298 = vcvt.s32.f32 %v5291
        %v5299 = vmul.f32 %v5298, %v5296
        %v5300 = vxor.u32 %v5299, 2147483648
        %v5301 = vsel %vm5180, %v5300, %v5299
        %v5302 = vsub.s32 4, %v5278
        %v5303 = vsel %vm5180, %v5302, %v5278
        %v5304 = vsel %vm5179, %v4546, %v5301
        %v5305 = vsel %vm5179, 0, %v5303
        %v5306 = vmul.f32 %v5304, %v5304
        %v5307 = vmul.f32 %v5306, -0.001358992
        %v5308 = vadd.f32 %v5307, 0.041655596
        %v5309 = vmul.f32 %v5306, %v5308
        %v5310 = vadd.f32 %v5309, -0.4999988
        %v5311 = vmul.f32 %v5306, %v5310
        %v5312 = vadd.f32 1.0, %v5311
        %v5313 = vmul.f32 %v5304, %v5304
        %v5314 = vmul.f32 %v5313, -0.00019511016
        %v5315 = vadd.f32 %v5314, 0.008332121
        %v5316 = vmul.f32 %v5313, %v5315
        %v5317 = vadd.f32 %v5316, -0.16666654
        %v5318 = vmul.f32 %v5313, %v5317
        %v5319 = vadd.f32 %v5318, 1.0
        %v5320 = vmul.f32 %v5319, %v5304
        %vm5321 = vweird.f32 %v4546
        %v5322 = vadd.s32 %v5305, 3
        %v5323 = vand.u32 %v5322, 3
        %vm5324 = vcmp.lt.s32.totalorder %v5323, 2
        %vm5325 = vcmp.eq.s32.totalorder %v5323, 0
        %v5326 = vxor.u32 %v5320, 2147483648
        %v5327 = vsel %vm5325, %v5312, %v5326
        %vm5328 = vcmp.eq.s32.totalorder %v5323, 2
        %v5329 = vxor.u32 %v5312, 2147483648
        %v5330 = vsel %vm5328, %v5329, %v5320
        %v5331 = vsel %vm5324, %v5327, %v5330
        %v5332 = vsel %vm5321, nan, %v5331
        %v5333 = vand.u32 2147483647, %v4547
        %vm5334 = vcmp.le.f32.partialorder %v5333, 0.7853982
        %vm5335 = vcmp.lt.s32.totalorder %v4547, 0
        %v5336 = vand.u32 %v4547, 2139095040
        %v5337 = vshrl.u32 %v5336, 23
        %v5338 = vsub.s32 %v5337, 127
        %v5339 = vand.u32 2147483647, %v4547
        %v5340 = vand.u32 %v5339, 8388607
        %v5341 = vor.u32 %v5340, 8388608
        %v5342 = vsub.s32 0, %v5341
        %v5343 = vadd.s32 %v5338, 1
        %vm5344 = vcmp.gt.s32.totalorder %v5343, 0
        %v5345 = vsel %vm5344, %v5343, 0
        %v5346 = vshrl.u32 %v5345, 5
        %v5347 = vand.u32 %v5345, 31
        %v5348 = vsub.s32 32, %v5347
        %v5349 = vshrl.u32 683565275, %v5348
        %v5350 = vshll.u32 683565275, %v5347
        %v5351 = vshrl.u32 2475754826, %v5348
        %v5352 = vor.u32 %v5350, %v5351
        %v5353 = vshll.u32 2475754826, %v5347
        %v5354 = vshrl.u32 2131351028, %v5348
        %v5355 = vor.u32 %v5353, %v5354
        %v5356 = vshll.u32 2131351028, %v5347
        %v5357 = vshrl.u32 2102212464, %v5348
        %v5358 = vor.u32 %v5356, %v5357
        %v5359 = vshll.u32 2102212464, %v5347
        %v5360 = vshrl.u32 920167782, %v5348
        %v5361 = vor.u32 %v5359, %v5360
        %v5362 = vshll.u32 920167782, %v5347
        %v5363 = vshrl.u32 1326507024, %v5348
        %v5364 = vor.u32 %v5362, %v5363
        %vm5365 = vcmp.lt.s32.totalorder %v5346, 1
        %vm5366 = vcmp.lt.s32.totalorder %v5346, 2
        %vm5367 = vcmp.lt.s32.totalorder %v5346, 3
        %vm5368 = vcmp.lt.s32.totalorder %v5346, 4
        %v5369 = vsel %vm5365, %v5349, %v5352
        %v5370 = vsel %vm5368, %v5358, 2102212464
        %v5371 = vsel %vm5367, %v5355, %v5370
        %v5372 = vsel %vm5366, %v5369, %v5371
        %v5373 = vsel %vm5365, %v5352, %v5355
        %v5374 = vsel %vm5368, %v5361, 920167782
        %v5375 = vsel %vm5367, %v5358, %v5374
        %v5376 = vsel %vm5366, %v5373, %v5375
        %v5377 = vsel %vm5365, %v5355, %v5358
        %v5378 = vsel %vm5368, %v5364, 1326507024
        %v5379 = vsel %vm5367, %v5361, %v5378
        %v5380 = vsel %vm5366, %v5377, %v5379
        %v5381 = vshll.u32 %v5341, 8
        %v5382 = vand.u32 %v5381, 65535
        %v5383 = vshrl.u32 %v5381, 16
        %v5384 = vand.u32 %v5380, 65535
        %v5385 = vshrl.u32 %v5380, 16
        %v5386 = vmul.u32 %v5382, %v5384
        %v5387 = vmul.u32 %v5382, %v5385
        %v5388 = vmul.u32 %v5383, %v5384
        %v5389 = vmul.u32 %v5383, %v5385
        %v5390 = vshll.u32 %v5387, 16
        %v5391 = vshrl.u32 %v5387, 16
        %v5392 = vshll.u32 %v5388, 16
        %v5393 = vshrl.u32 %v5388, 16
        %vm5394 = vc.u32 %v5386, %v5390
        %v5395 = vsel %vm5394, 1, 0
        %v5396 = vadd.s32 %v5386, %v5390
        %v5397 = vadd.s32 %v5389, %v5395
        %vm5398 = vc.u32 %v5396, %v5392
        %v5399 = vsel %vm5398, 1, 0
        %v5400 = vadd.s32 %v5396, %v5392
        %v5401 = vadd.s32 %v5397, %v5399
        %v5402 = vadd.s32 %v5401, %v5391
        %v5403 = vadd.s32 %v5402, %v5393
        %v5404 = vand.u32 %v5381, 65535
        %v5405 = vshrl.u32 %v5381, 16
        %v5406 = vand.u32 %v5376, 65535
        %v5407 = vshrl.u32 %v5376, 16
        %v5408 = vmul.u32 %v5404, %v5406
        %v5409 = vmul.u32 %v5404, %v5407
        %v5410 = vmul.u32 %v5405, %v5406
        %v5411 = vmul.u32 %v5405, %v5407
        %v5412 = vshll.u32 %v5409, 16
        %v5413 = vshrl.u32 %v5409, 16
        %v5414 = vshll.u32 %v5410, 16
        %v5415 = vshrl.u32 %v5410, 16
        %vm5416 = vc.u32 %v5408, %v5412
        %v5417 = vsel %vm5416, 1, 0
        %v5418 = vadd.s32 %v5408, %v5412
        %v5419 = vadd.s32 %v5411, %v5417
        %vm5420 = vc.u32 %v5418, %v5414
        %v5421 = vsel %vm5420, 1, 0
        %v5422 = vadd.s32 %v5418, %v5414
        %v5423 = vadd.s32 %v5419, %v5421
        %v5424 = vadd.s32 %v5423, %v5413
        %v5425 = vadd.s32 %v5424, %v5415
        %v5426 = vmul.u32 %v5381, %v5372
        %v5427 = vadd.s32 %v5403, %v5422
        %vm5428 = vc.u32 %v5403, %v5422
        %v5429 = vadd.s32 %v5425, 1
        %v5430 = vsel %vm5428, %v5429, %v5425
        %v5431 = vadd.s32 %v5426, %v5430
        %v5432 = vadd.s32 %v5431, 536870912
        %v5433 = vshrl.u32 %v5432, 30
        %v5434 = vshll.u32 %v5433, 30
        %v5435 = vsub.s32 %v5431, %v5434
        %vm5436 = vcmp.lt.s32.totalorder %v5435, 0
        %v5437 = vsub.s32 0, %v5435
        %v5438 = vsel %vm5436, %v5437, %v5435
        %v5439 = vclz %v5438
        %v5440 = vsub.s32 %v5439, 2
        %vm5441 = vcmp.gt.s32.totalorder 0, %v5440
        %v5442 = vsel %vm5441, 0, %v5440
        %v5443 = vsub.s32 32, %v5442
        %v5444 = vshll.u32 %v5435, %v5442
        %v5445 = vshrl.u32 %v5427, %v5443
        %v5446 = vor.u32 %v5444, %v5445
        %v5447 = vsub.s32 4294967266, %v5442
        %v5448 = vadd.s32 %v5447, 127
        %v5449 = vshll.u32 %v5448, 23
        %v5450 = vor.u32 4788187, %v5449
        %v5451 = vand.u32 2147483647, %v5450
        %v5453 = vcvt.s32.f32 %v5446
        %v5454 = vmul.f32 %v5453, %v5451
        %v5455 = vxor.u32 %v5454, 2147483648
        %v5456 = vsel %vm5335, %v5455, %v5454
        %v5457 = vsub.s32 4, %v5433
        %v5458 = vsel %vm5335, %v5457, %v5433
        %v5459 = vsel %vm5334, %v4547, %v5456
        %v5460 = vsel %vm5334, 0, %v5458
        %v5461 = vmul.f32 %v5459, %v5459
        %v5462 = vmul.f32 %v5461, -0.001358992
        %v5463 = vadd.f32 %v5462, 0.041655596
        %v5464 = vmul.f32 %v5461, %v5463
        %v5465 = vadd.f32 %v5464, -0.4999988
        %v5466 = vmul.f32 %v5461, %v5465
        %v5467 = vadd.f32 1.0, %v5466
        %v5468 = vmul.f32 %v5459, %v5459
        %v5469 = vmul.f32 %v5468, -0.00019511016
        %v5470 = vadd.f32 %v5469, 0.008332121
        %v5471 = vmul.f32 %v5468, %v5470
        %v5472 = vadd.f32 %v5471, -0.16666654
        %v5473 = vmul.f32 %v5468, %v5472
        %v5474 = vadd.f32 %v5473, 1.0
        %v5475 = vmul.f32 %v5474, %v5459
        %vm5476 = vweird.f32 %v4547
        %v5477 = vadd.s32 %v5460, 3
        %v5478 = vand.u32 %v5477, 3
        %vm5479 = vcmp.lt.s32.totalorder %v5478, 2
        %vm5480 = vcmp.eq.s32.totalorder %v5478, 0
        %v5481 = vxor.u32 %v5475, 2147483648
        %v5482 = vsel %vm5480, %v5467, %v5481
        %vm5483 = vcmp.eq.s32.totalorder %v5478, 2
        %v5484 = vxor.u32 %v5467, 2147483648
        %v5485 = vsel %vm5483, %v5484, %v5475
        %v5486 = vsel %vm5479, %v5482, %v5485
        %v5487 = vsel %vm5476, nan, %v5486
        %v5488 = vand.u32 2147483647, %v4548
        %vm5489 = vcmp.le.f32.partialorder %v5488, 0.7853982
        %vm5490 = vcmp.lt.s32.totalorder %v4548, 0
        %v5491 = vand.u32 %v4548, 2139095040
        %v5492 = vshrl.u32 %v5491, 23
        %v5493 = vsub.s32 %v5492, 127
        %v5494 = vand.u32 2147483647, %v4548
        %v5495 = vand.u32 %v5494, 8388607
        %v5496 = vor.u32 %v5495, 8388608
        %v5497 = vsub.s32 0, %v5496
        %v5498 = vadd.s32 %v5493, 1
        %vm5499 = vcmp.gt.s32.totalorder %v5498, 0
        %v5500 = vsel %vm5499, %v5498, 0
        %v5501 = vshrl.u32 %v5500, 5
        %v5502 = vand.u32 %v5500, 31
        %v5503 = vsub.s32 32, %v5502
        %v5504 = vshrl.u32 683565275, %v5503
        %v5505 = vshll.u32 683565275, %v5502
        %v5506 = vshrl.u32 2475754826, %v5503
        %v5507 = vor.u32 %v5505, %v5506
        %v5508 = vshll.u32 2475754826, %v5502
        %v5509 = vshrl.u32 2131351028, %v5503
        %v5510 = vor.u32 %v5508, %v5509
        %v5511 = vshll.u32 2131351028, %v5502
        %v5512 = vshrl.u32 2102212464, %v5503
        %v5513 = vor.u32 %v5511, %v5512
        %v5514 = vshll.u32 2102212464, %v5502
        %v5515 = vshrl.u32 920167782, %v5503
        %v5516 = vor.u32 %v5514, %v5515
        %v5517 = vshll.u32 920167782, %v5502
        %v5518 = vshrl.u32 1326507024, %v5503
        %v5519 = vor.u32 %v5517, %v5518
        %vm5520 = vcmp.lt.s32.totalorder %v5501, 1
        %vm5521 = vcmp.lt.s32.totalorder %v5501, 2
        %vm5522 = vcmp.lt.s32.totalorder %v5501, 3
        %vm5523 = vcmp.lt.s32.totalorder %v5501, 4
        %v5524 = vsel %vm5520, %v5504, %v5507
        %v5525 = vsel %vm5523, %v5513, 2102212464
        %v5526 = vsel %vm5522, %v5510, %v5525
        %v5527 = vsel %vm5521, %v5524, %v5526
        %v5528 = vsel %vm5520, %v5507, %v5510
        %v5529 = vsel %vm5523, %v5516, 920167782
        %v5530 = vsel %vm5522, %v5513, %v5529
        %v5531 = vsel %vm5521, %v5528, %v5530
        %v5532 = vsel %vm5520, %v5510, %v5513
        %v5533 = vsel %vm5523, %v5519, 1326507024
        %v5534 = vsel %vm5522, %v5516, %v5533
        %v5535 = vsel %vm5521, %v5532, %v5534
        %v5536 = vshll.u32 %v5496, 8
        %v5537 = vand.u32 %v5536, 65535
        %v5538 = vshrl.u32 %v5536, 16
        %v5539 = vand.u32 %v5535, 65535
        %v5540 = vshrl.u32 %v5535, 16
        %v5541 = vmul.u32 %v5537, %v5539
        %v5542 = vmul.u32 %v5537, %v5540
        %v5543 = vmul.u32 %v5538, %v5539
        %v5544 = vmul.u32 %v5538, %v5540
        %v5545 = vshll.u32 %v5542, 16
        %v5546 = vshrl.u32 %v5542, 16
        %v5547 = vshll.u32 %v5543, 16
        %v5548 = vshrl.u32 %v5543, 16
        %vm5549 = vc.u32 %v5541, %v5545
        %v5550 = vsel %vm5549, 1, 0
        %v5551 = vadd.s32 %v5541, %v5545
        %v5552 = vadd.s32 %v5544, %v5550
        %vm5553 = vc.u32 %v5551, %v5547
        %v5554 = vsel %vm5553, 1, 0
        %v5555 = vadd.s32 %v5551, %v5547
        %v5556 = vadd.s32 %v5552, %v5554
        %v5557 = vadd.s32 %v5556, %v5546
        %v5558 = vadd.s32 %v5557, %v5548
        %v5559 = vand.u32 %v5536, 65535
        %v5560 = vshrl.u32 %v5536, 16
        %v5561 = vand.u32 %v5531, 65535
        %v5562 = vshrl.u32 %v5531, 16
        %v5563 = vmul.u32 %v5559, %v5561
        %v5564 = vmul.u32 %v5559, %v5562
        %v5565 = vmul.u32 %v5560, %v5561
        %v5566 = vmul.u32 %v5560, %v5562
        %v5567 = vshll.u32 %v5564, 16
        %v5568 = vshrl.u32 %v5564, 16
        %v5569 = vshll.u32 %v5565, 16
        %v5570 = vshrl.u32 %v5565, 16
        %vm5571 = vc.u32 %v5563, %v5567
        %v5572 = vsel %vm5571, 1, 0
        %v5573 = vadd.s32 %v5563, %v5567
        %v5574 = vadd.s32 %v5566, %v5572
        %vm5575 = vc.u32 %v5573, %v5569
        %v5576 = vsel %vm5575, 1, 0
        %v5577 = vadd.s32 %v5573, %v5569
        %v5578 = vadd.s32 %v5574, %v5576
        %v5579 = vadd.s32 %v5578, %v5568
        %v5580 = vadd.s32 %v5579, %v5570
        %v5581 = vmul.u32 %v5536, %v5527
        %v5582 = vadd.s32 %v5558, %v5577
        %vm5583 = vc.u32 %v5558, %v5577
        %v5584 = vadd.s32 %v5580, 1
        %v5585 = vsel %vm5583, %v5584, %v5580
        %v5586 = vadd.s32 %v5581, %v5585
        %v5587 = vadd.s32 %v5586, 536870912
        %v5588 = vshrl.u32 %v5587, 30
        %v5589 = vshll.u32 %v5588, 30
        %v5590 = vsub.s32 %v5586, %v5589
        %vm5591 = vcmp.lt.s32.totalorder %v5590, 0
        %v5592 = vsub.s32 0, %v5590
        %v5593 = vsel %vm5591, %v5592, %v5590
        %v5594 = vclz %v5593
        %v5595 = vsub.s32 %v5594, 2
        %vm5596 = vcmp.gt.s32.totalorder 0, %v5595
        %v5597 = vsel %vm5596, 0, %v5595
        %v5598 = vsub.s32 32, %v5597
        %v5599 = vshll.u32 %v5590, %v5597
        %v5600 = vshrl.u32 %v5582, %v5598
        %v5601 = vor.u32 %v5599, %v5600
        %v5602 = vsub.s32 4294967266, %v5597
        %v5603 = vadd.s32 %v5602, 127
        %v5604 = vshll.u32 %v5603, 23
        %v5605 = vor.u32 4788187, %v5604
        %v5606 = vand.u32 2147483647, %v5605
        %v5608 = vcvt.s32.f32 %v5601
        %v5609 = vmul.f32 %v5608, %v5606
        %v5610 = vxor.u32 %v5609, 2147483648
        %v5611 = vsel %vm5490, %v5610, %v5609
        %v5612 = vsub.s32 4, %v5588
        %v5613 = vsel %vm5490, %v5612, %v5588
        %v5614 = vsel %vm5489, %v4548, %v5611
        %v5615 = vsel %vm5489, 0, %v5613
        %v5616 = vmul.f32 %v5614, %v5614
        %v5617 = vmul.f32 %v5616, -0.001358992
        %v5618 = vadd.f32 %v5617, 0.041655596
        %v5619 = vmul.f32 %v5616, %v5618
        %v5620 = vadd.f32 %v5619, -0.4999988
        %v5621 = vmul.f32 %v5616, %v5620
        %v5622 = vadd.f32 1.0, %v5621
        %v5623 = vmul.f32 %v5614, %v5614
        %v5624 = vmul.f32 %v5623, -0.00019511016
        %v5625 = vadd.f32 %v5624, 0.008332121
        %v5626 = vmul.f32 %v5623, %v5625
        %v5627 = vadd.f32 %v5626, -0.16666654
        %v5628 = vmul.f32 %v5623, %v5627
        %v5629 = vadd.f32 %v5628, 1.0
        %v5630 = vmul.f32 %v5629, %v5614
        %vm5631 = vweird.f32 %v4548
        %v5632 = vadd.s32 %v5615, 3
        %v5633 = vand.u32 %v5632, 3
        %vm5634 = vcmp.lt.s32.totalorder %v5633, 2
        %vm5635 = vcmp.eq.s32.totalorder %v5633, 0
        %v5636 = vxor.u32 %v5630, 2147483648
        %v5637 = vsel %vm5635, %v5622, %v5636
        %vm5638 = vcmp.eq.s32.totalorder %v5633, 2
        %v5639 = vxor.u32 %v5622, 2147483648
        %v5640 = vsel %vm5638, %v5639, %v5630
        %v5641 = vsel %vm5634, %v5637, %v5640
        %v5642 = vsel %vm5631, nan, %v5641
        %v5643 = vand.u32 2147483647, %v4549
        %vm5644 = vcmp.le.f32.partialorder %v5643, 0.7853982
        %vm5645 = vcmp.lt.s32.totalorder %v4549, 0
        %v5646 = vand.u32 %v4549, 2139095040
        %v5647 = vshrl.u32 %v5646, 23
        %v5648 = vsub.s32 %v5647, 127
        %v5649 = vand.u32 2147483647, %v4549
        %v5650 = vand.u32 %v5649, 8388607
        %v5651 = vor.u32 %v5650, 8388608
        %v5652 = vsub.s32 0, %v5651
        %v5653 = vadd.s32 %v5648, 1
        %vm5654 = vcmp.gt.s32.totalorder %v5653, 0
        %v5655 = vsel %vm5654, %v5653, 0
        %v5656 = vshrl.u32 %v5655, 5
        %v5657 = vand.u32 %v5655, 31
        %v5658 = vsub.s32 32, %v5657
        %v5659 = vshrl.u32 683565275, %v5658
        %v5660 = vshll.u32 683565275, %v5657
        %v5661 = vshrl.u32 2475754826, %v5658
        %v5662 = vor.u32 %v5660, %v5661
        %v5663 = vshll.u32 2475754826, %v5657
        %v5664 = vshrl.u32 2131351028, %v5658
        %v5665 = vor.u32 %v5663, %v5664
        %v5666 = vshll.u32 2131351028, %v5657
        %v5667 = vshrl.u32 2102212464, %v5658
        %v5668 = vor.u32 %v5666, %v5667
        %v5669 = vshll.u32 2102212464, %v5657
        %v5670 = vshrl.u32 920167782, %v5658
        %v5671 = vor.u32 %v5669, %v5670
        %v5672 = vshll.u32 920167782, %v5657
        %v5673 = vshrl.u32 1326507024, %v5658
        %v5674 = vor.u32 %v5672, %v5673
        %vm5675 = vcmp.lt.s32.totalorder %v5656, 1
        %vm5676 = vcmp.lt.s32.totalorder %v5656, 2
        %vm5677 = vcmp.lt.s32.totalorder %v5656, 3
        %vm5678 = vcmp.lt.s32.totalorder %v5656, 4
        %v5679 = vsel %vm5675, %v5659, %v5662
        %v5680 = vsel %vm5678, %v5668, 2102212464
        %v5681 = vsel %vm5677, %v5665, %v5680
        %v5682 = vsel %vm5676, %v5679, %v5681
        %v5683 = vsel %vm5675, %v5662, %v5665
        %v5684 = vsel %vm5678, %v5671, 920167782
        %v5685 = vsel %vm5677, %v5668, %v5684
        %v5686 = vsel %vm5676, %v5683, %v5685
        %v5687 = vsel %vm5675, %v5665, %v5668
        %v5688 = vsel %vm5678, %v5674, 1326507024
        %v5689 = vsel %vm5677, %v5671, %v5688
        %v5690 = vsel %vm5676, %v5687, %v5689
        %v5691 = vshll.u32 %v5651, 8
        %v5692 = vand.u32 %v5691, 65535
        %v5693 = vshrl.u32 %v5691, 16
        %v5694 = vand.u32 %v5690, 65535
        %v5695 = vshrl.u32 %v5690, 16
        %v5696 = vmul.u32 %v5692, %v5694
        %v5697 = vmul.u32 %v5692, %v5695
        %v5698 = vmul.u32 %v5693, %v5694
        %v5699 = vmul.u32 %v5693, %v5695
        %v5700 = vshll.u32 %v5697, 16
        %v5701 = vshrl.u32 %v5697, 16
        %v5702 = vshll.u32 %v5698, 16
        %v5703 = vshrl.u32 %v5698, 16
        %vm5704 = vc.u32 %v5696, %v5700
        %v5705 = vsel %vm5704, 1, 0
        %v5706 = vadd.s32 %v5696, %v5700
        %v5707 = vadd.s32 %v5699, %v5705
        %vm5708 = vc.u32 %v5706, %v5702
        %v5709 = vsel %vm5708, 1, 0
        %v5710 = vadd.s32 %v5706, %v5702
        %v5711 = vadd.s32 %v5707, %v5709
        %v5712 = vadd.s32 %v5711, %v5701
        %v5713 = vadd.s32 %v5712, %v5703
        %v5714 = vand.u32 %v5691, 65535
        %v5715 = vshrl.u32 %v5691, 16
        %v5716 = vand.u32 %v5686, 65535
        %v5717 = vshrl.u32 %v5686, 16
        %v5718 = vmul.u32 %v5714, %v5716
        %v5719 = vmul.u32 %v5714, %v5717
        %v5720 = vmul.u32 %v5715, %v5716
        %v5721 = vmul.u32 %v5715, %v5717
        %v5722 = vshll.u32 %v5719, 16
        %v5723 = vshrl.u32 %v5719, 16
        %v5724 = vshll.u32 %v5720, 16
        %v5725 = vshrl.u32 %v5720, 16
        %vm5726 = vc.u32 %v5718, %v5722
        %v5727 = vsel %vm5726, 1, 0
        %v5728 = vadd.s32 %v5718, %v5722
        %v5729 = vadd.s32 %v5721, %v5727
        %vm5730 = vc.u32 %v5728, %v5724
        %v5731 = vsel %vm5730, 1, 0
        %v5732 = vadd.s32 %v5728, %v5724
        %v5733 = vadd.s32 %v5729, %v5731
        %v5734 = vadd.s32 %v5733, %v5723
        %v5735 = vadd.s32 %v5734, %v5725
        %v5736 = vmul.u32 %v5691, %v5682
        %v5737 = vadd.s32 %v5713, %v5732
        %vm5738 = vc.u32 %v5713, %v5732
        %v5739 = vadd.s32 %v5735, 1
        %v5740 = vsel %vm5738, %v5739, %v5735
        %v5741 = vadd.s32 %v5736, %v5740
        %v5742 = vadd.s32 %v5741, 536870912
        %v5743 = vshrl.u32 %v5742, 30
        %v5744 = vshll.u32 %v5743, 30
        %v5745 = vsub.s32 %v5741, %v5744
        %vm5746 = vcmp.lt.s32.totalorder %v5745, 0
        %v5747 = vsub.s32 0, %v5745
        %v5748 = vsel %vm5746, %v5747, %v5745
        %v5749 = vclz %v5748
        %v5750 = vsub.s32 %v5749, 2
        %vm5751 = vcmp.gt.s32.totalorder 0, %v5750
        %v5752 = vsel %vm5751, 0, %v5750
        %v5753 = vsub.s32 32, %v5752
        %v5754 = vshll.u32 %v5745, %v5752
        %v5755 = vshrl.u32 %v5737, %v5753
        %v5756 = vor.u32 %v5754, %v5755
        %v5757 = vsub.s32 4294967266, %v5752
        %v5758 = vadd.s32 %v5757, 127
        %v5759 = vshll.u32 %v5758, 23
        %v5760 = vor.u32 4788187, %v5759
        %v5761 = vand.u32 2147483647, %v5760
        %v5763 = vcvt.s32.f32 %v5756
        %v5764 = vmul.f32 %v5763, %v5761
        %v5765 = vxor.u32 %v5764, 2147483648
        %v5766 = vsel %vm5645, %v5765, %v5764
        %v5767 = vsub.s32 4, %v5743
        %v5768 = vsel %vm5645, %v5767, %v5743
        %v5769 = vsel %vm5644, %v4549, %v5766
        %v5770 = vsel %vm5644, 0, %v5768
        %v5771 = vmul.f32 %v5769, %v5769
        %v5772 = vmul.f32 %v5771, -0.001358992
        %v5773 = vadd.f32 %v5772, 0.041655596
        %v5774 = vmul.f32 %v5771, %v5773
        %v5775 = vadd.f32 %v5774, -0.4999988
        %v5776 = vmul.f32 %v5771, %v5775
        %v5777 = vadd.f32 1.0, %v5776
        %v5778 = vmul.f32 %v5769, %v5769
        %v5779 = vmul.f32 %v5778, -0.00019511016
        %v5780 = vadd.f32 %v5779, 0.008332121
        %v5781 = vmul.f32 %v5778, %v5780
        %v5782 = vadd.f32 %v5781, -0.16666654
        %v5783 = vmul.f32 %v5778, %v5782
        %v5784 = vadd.f32 %v5783, 1.0
        %v5785 = vmul.f32 %v5784, %v5769
        %vm5786 = vweird.f32 %v4549
        %v5787 = vadd.s32 %v5770, 3
        %v5788 = vand.u32 %v5787, 3
        %vm5789 = vcmp.lt.s32.totalorder %v5788, 2
        %vm5790 = vcmp.eq.s32.totalorder %v5788, 0
        %v5791 = vxor.u32 %v5785, 2147483648
        %v5792 = vsel %vm5790, %v5777, %v5791
        %vm5793 = vcmp.eq.s32.totalorder %v5788, 2
        %v5794 = vxor.u32 %v5777, 2147483648
        %v5795 = vsel %vm5793, %v5794, %v5785
        %v5796 = vsel %vm5789, %v5792, %v5795
        %v5797 = vsel %vm5786, nan, %v5796
        %v5798 = vand.u32 2147483647, %v4550
        %vm5799 = vcmp.le.f32.partialorder %v5798, 0.7853982
        %vm5800 = vcmp.lt.s32.totalorder %v4550, 0
        %v5801 = vand.u32 %v4550, 2139095040
        %v5802 = vshrl.u32 %v5801, 23
        %v5803 = vsub.s32 %v5802, 127
        %v5804 = vand.u32 2147483647, %v4550
        %v5805 = vand.u32 %v5804, 8388607
        %v5806 = vor.u32 %v5805, 8388608
        %v5807 = vsub.s32 0, %v5806
        %v5808 = vadd.s32 %v5803, 1
        %vm5809 = vcmp.gt.s32.totalorder %v5808, 0
        %v5810 = vsel %vm5809, %v5808, 0
        %v5811 = vshrl.u32 %v5810, 5
        %v5812 = vand.u32 %v5810, 31
        %v5813 = vsub.s32 32, %v5812
        %v5814 = vshrl.u32 683565275, %v5813
        %v5815 = vshll.u32 683565275, %v5812
        %v5816 = vshrl.u32 2475754826, %v5813
        %v5817 = vor.u32 %v5815, %v5816
        %v5818 = vshll.u32 2475754826, %v5812
        %v5819 = vshrl.u32 2131351028, %v5813
        %v5820 = vor.u32 %v5818, %v5819
        %v5821 = vshll.u32 2131351028, %v5812
        %v5822 = vshrl.u32 2102212464, %v5813
        %v5823 = vor.u32 %v5821, %v5822
        %v5824 = vshll.u32 2102212464, %v5812
        %v5825 = vshrl.u32 920167782, %v5813
        %v5826 = vor.u32 %v5824, %v5825
        %v5827 = vshll.u32 920167782, %v5812
        %v5828 = vshrl.u32 1326507024, %v5813
        %v5829 = vor.u32 %v5827, %v5828
        %vm5830 = vcmp.lt.s32.totalorder %v5811, 1
        %vm5831 = vcmp.lt.s32.totalorder %v5811, 2
        %vm5832 = vcmp.lt.s32.totalorder %v5811, 3
        %vm5833 = vcmp.lt.s32.totalorder %v5811, 4
        %v5834 = vsel %vm5830, %v5814, %v5817
        %v5835 = vsel %vm5833, %v5823, 2102212464
        %v5836 = vsel %vm5832, %v5820, %v5835
        %v5837 = vsel %vm5831, %v5834, %v5836
        %v5838 = vsel %vm5830, %v5817, %v5820
        %v5839 = vsel %vm5833, %v5826, 920167782
        %v5840 = vsel %vm5832, %v5823, %v5839
        %v5841 = vsel %vm5831, %v5838, %v5840
        %v5842 = vsel %vm5830, %v5820, %v5823
        %v5843 = vsel %vm5833, %v5829, 1326507024
        %v5844 = vsel %vm5832, %v5826, %v5843
        %v5845 = vsel %vm5831, %v5842, %v5844
        %v5846 = vshll.u32 %v5806, 8
        %v5847 = vand.u32 %v5846, 65535
        %v5848 = vshrl.u32 %v5846, 16
        %v5849 = vand.u32 %v5845, 65535
        %v5850 = vshrl.u32 %v5845, 16
        %v5851 = vmul.u32 %v5847, %v5849
        %v5852 = vmul.u32 %v5847, %v5850
        %v5853 = vmul.u32 %v5848, %v5849
        %v5854 = vmul.u32 %v5848, %v5850
        %v5855 = vshll.u32 %v5852, 16
        %v5856 = vshrl.u32 %v5852, 16
        %v5857 = vshll.u32 %v5853, 16
        %v5858 = vshrl.u32 %v5853, 16
        %vm5859 = vc.u32 %v5851, %v5855
        %v5860 = vsel %vm5859, 1, 0
        %v5861 = vadd.s32 %v5851, %v5855
        %v5862 = vadd.s32 %v5854, %v5860
        %vm5863 = vc.u32 %v5861, %v5857
        %v5864 = vsel %vm5863, 1, 0
        %v5865 = vadd.s32 %v5861, %v5857
        %v5866 = vadd.s32 %v5862, %v5864
        %v5867 = vadd.s32 %v5866, %v5856
        %v5868 = vadd.s32 %v5867, %v5858
        %v5869 = vand.u32 %v5846, 65535
        %v5870 = vshrl.u32 %v5846, 16
        %v5871 = vand.u32 %v5841, 65535
        %v5872 = vshrl.u32 %v5841, 16
        %v5873 = vmul.u32 %v5869, %v5871
        %v5874 = vmul.u32 %v5869, %v5872
        %v5875 = vmul.u32 %v5870, %v5871
        %v5876 = vmul.u32 %v5870, %v5872
        %v5877 = vshll.u32 %v5874, 16
        %v5878 = vshrl.u32 %v5874, 16
        %v5879 = vshll.u32 %v5875, 16
        %v5880 = vshrl.u32 %v5875, 16
        %vm5881 = vc.u32 %v5873, %v5877
        %v5882 = vsel %vm5881, 1, 0
        %v5883 = vadd.s32 %v5873, %v5877
        %v5884 = vadd.s32 %v5876, %v5882
        %vm5885 = vc.u32 %v5883, %v5879
        %v5886 = vsel %vm5885, 1, 0
        %v5887 = vadd.s32 %v5883, %v5879
        %v5888 = vadd.s32 %v5884, %v5886
        %v5889 = vadd.s32 %v5888, %v5878
        %v5890 = vadd.s32 %v5889, %v5880
        %v5891 = vmul.u32 %v5846, %v5837
        %v5892 = vadd.s32 %v5868, %v5887
        %vm5893 = vc.u32 %v5868, %v5887
        %v5894 = vadd.s32 %v5890, 1
        %v5895 = vsel %vm5893, %v5894, %v5890
        %v5896 = vadd.s32 %v5891, %v5895
        %v5897 = vadd.s32 %v5896, 536870912
        %v5898 = vshrl.u32 %v5897, 30
        %v5899 = vshll.u32 %v5898, 30
        %v5900 = vsub.s32 %v5896, %v5899
        %vm5901 = vcmp.lt.s32.totalorder %v5900, 0
        %v5902 = vsub.s32 0, %v5900
        %v5903 = vsel %vm5901, %v5902, %v5900
        %v5904 = vclz %v5903
        %v5905 = vsub.s32 %v5904, 2
        %vm5906 = vcmp.gt.s32.totalorder 0, %v5905
        %v5907 = vsel %vm5906, 0, %v5905
        %v5908 = vsub.s32 32, %v5907
        %v5909 = vshll.u32 %v5900, %v5907
        %v5910 = vshrl.u32 %v5892, %v5908
        %v5911 = vor.u32 %v5909, %v5910
        %v5912 = vsub.s32 4294967266, %v5907
        %v5913 = vadd.s32 %v5912, 127
        %v5914 = vshll.u32 %v5913, 23
        %v5915 = vor.u32 4788187, %v5914
        %v5916 = vand.u32 2147483647, %v5915
        %v5918 = vcvt.s32.f32 %v5911
        %v5919 = vmul.f32 %v5918, %v5916
        %v5920 = vxor.u32 %v5919, 2147483648
        %v5921 = vsel %vm5800, %v5920, %v5919
        %v5922 = vsub.s32 4, %v5898
        %v5923 = vsel %vm5800, %v5922, %v5898
        %v5924 = vsel %vm5799, %v4550, %v5921
        %v5925 = vsel %vm5799, 0, %v5923
        %v5926 = vmul.f32 %v5924, %v5924
        %v5927 = vmul.f32 %v5926, -0.001358992
        %v5928 = vadd.f32 %v5927, 0.041655596
        %v5929 = vmul.f32 %v5926, %v5928
        %v5930 = vadd.f32 %v5929, -0.4999988
        %v5931 = vmul.f32 %v5926, %v5930
        %v5932 = vadd.f32 1.0, %v5931
        %v5933 = vmul.f32 %v5924, %v5924
        %v5934 = vmul.f32 %v5933, -0.00019511016
        %v5935 = vadd.f32 %v5934, 0.008332121
        %v5936 = vmul.f32 %v5933, %v5935
        %v5937 = vadd.f32 %v5936, -0.16666654
        %v5938 = vmul.f32 %v5933, %v5937
        %v5939 = vadd.f32 %v5938, 1.0
        %v5940 = vmul.f32 %v5939, %v5924
        %vm5941 = vweird.f32 %v4550
        %v5942 = vadd.s32 %v5925, 3
        %v5943 = vand.u32 %v5942, 3
        %vm5944 = vcmp.lt.s32.totalorder %v5943, 2
        %vm5945 = vcmp.eq.s32.totalorder %v5943, 0
        %v5946 = vxor.u32 %v5940, 2147483648
        %v5947 = vsel %vm5945, %v5932, %v5946
        %vm5948 = vcmp.eq.s32.totalorder %v5943, 2
        %v5949 = vxor.u32 %v5932, 2147483648
        %v5950 = vsel %vm5948, %v5949, %v5940
        %v5951 = vsel %vm5944, %v5947, %v5950
        %v5952 = vsel %vm5941, nan, %v5951
        %v5953 = vand.u32 2147483647, %v4551
        %vm5954 = vcmp.le.f32.partialorder %v5953, 0.7853982
        %vm5955 = vcmp.lt.s32.totalorder %v4551, 0
        %v5956 = vand.u32 %v4551, 2139095040
        %v5957 = vshrl.u32 %v5956, 23
        %v5958 = vsub.s32 %v5957, 127
        %v5959 = vand.u32 2147483647, %v4551
        %v5960 = vand.u32 %v5959, 8388607
        %v5961 = vor.u32 %v5960, 8388608
        %v5962 = vsub.s32 0, %v5961
        %v5963 = vadd.s32 %v5958, 1
        %vm5964 = vcmp.gt.s32.totalorder %v5963, 0
        %v5965 = vsel %vm5964, %v5963, 0
        %v5966 = vshrl.u32 %v5965, 5
        %v5967 = vand.u32 %v5965, 31
        %v5968 = vsub.s32 32, %v5967
        %v5969 = vshrl.u32 683565275, %v5968
        %v5970 = vshll.u32 683565275, %v5967
        %v5971 = vshrl.u32 2475754826, %v5968
        %v5972 = vor.u32 %v5970, %v5971
        %v5973 = vshll.u32 2475754826, %v5967
        %v5974 = vshrl.u32 2131351028, %v5968
        %v5975 = vor.u32 %v5973, %v5974
        %v5976 = vshll.u32 2131351028, %v5967
        %v5977 = vshrl.u32 2102212464, %v5968
        %v5978 = vor.u32 %v5976, %v5977
        %v5979 = vshll.u32 2102212464, %v5967
        %v5980 = vshrl.u32 920167782, %v5968
        %v5981 = vor.u32 %v5979, %v5980
        %v5982 = vshll.u32 920167782, %v5967
        %v5983 = vshrl.u32 1326507024, %v5968
        %v5984 = vor.u32 %v5982, %v5983
        %vm5985 = vcmp.lt.s32.totalorder %v5966, 1
        %vm5986 = vcmp.lt.s32.totalorder %v5966, 2
        %vm5987 = vcmp.lt.s32.totalorder %v5966, 3
        %vm5988 = vcmp.lt.s32.totalorder %v5966, 4
        %v5989 = vsel %vm5985, %v5969, %v5972
        %v5990 = vsel %vm5988, %v5978, 2102212464
        %v5991 = vsel %vm5987, %v5975, %v5990
        %v5992 = vsel %vm5986, %v5989, %v5991
        %v5993 = vsel %vm5985, %v5972, %v5975
        %v5994 = vsel %vm5988, %v5981, 920167782
        %v5995 = vsel %vm5987, %v5978, %v5994
        %v5996 = vsel %vm5986, %v5993, %v5995
        %v5997 = vsel %vm5985, %v5975, %v5978
        %v5998 = vsel %vm5988, %v5984, 1326507024
        %v5999 = vsel %vm5987, %v5981, %v5998
        %v6000 = vsel %vm5986, %v5997, %v5999
        %v6001 = vshll.u32 %v5961, 8
        %v6002 = vand.u32 %v6001, 65535
        %v6003 = vshrl.u32 %v6001, 16
        %v6004 = vand.u32 %v6000, 65535
        %v6005 = vshrl.u32 %v6000, 16
        %v6006 = vmul.u32 %v6002, %v6004
        %v6007 = vmul.u32 %v6002, %v6005
        %v6008 = vmul.u32 %v6003, %v6004
        %v6009 = vmul.u32 %v6003, %v6005
        %v6010 = vshll.u32 %v6007, 16
        %v6011 = vshrl.u32 %v6007, 16
        %v6012 = vshll.u32 %v6008, 16
        %v6013 = vshrl.u32 %v6008, 16
        %vm6014 = vc.u32 %v6006, %v6010
        %v6015 = vsel %vm6014, 1, 0
        %v6016 = vadd.s32 %v6006, %v6010
        %v6017 = vadd.s32 %v6009, %v6015
        %vm6018 = vc.u32 %v6016, %v6012
        %v6019 = vsel %vm6018, 1, 0
        %v6020 = vadd.s32 %v6016, %v6012
        %v6021 = vadd.s32 %v6017, %v6019
        %v6022 = vadd.s32 %v6021, %v6011
        %v6023 = vadd.s32 %v6022, %v6013
        %v6024 = vand.u32 %v6001, 65535
        %v6025 = vshrl.u32 %v6001, 16
        %v6026 = vand.u32 %v5996, 65535
        %v6027 = vshrl.u32 %v5996, 16
        %v6028 = vmul.u32 %v6024, %v6026
        %v6029 = vmul.u32 %v6024, %v6027
        %v6030 = vmul.u32 %v6025, %v6026
        %v6031 = vmul.u32 %v6025, %v6027
        %v6032 = vshll.u32 %v6029, 16
        %v6033 = vshrl.u32 %v6029, 16
        %v6034 = vshll.u32 %v6030, 16
        %v6035 = vshrl.u32 %v6030, 16
        %vm6036 = vc.u32 %v6028, %v6032
        %v6037 = vsel %vm6036, 1, 0
        %v6038 = vadd.s32 %v6028, %v6032
        %v6039 = vadd.s32 %v6031, %v6037
        %vm6040 = vc.u32 %v6038, %v6034
        %v6041 = vsel %vm6040, 1, 0
        %v6042 = vadd.s32 %v6038, %v6034
        %v6043 = vadd.s32 %v6039, %v6041
        %v6044 = vadd.s32 %v6043, %v6033
        %v6045 = vadd.s32 %v6044, %v6035
        %v6046 = vmul.u32 %v6001, %v5992
        %v6047 = vadd.s32 %v6023, %v6042
        %vm6048 = vc.u32 %v6023, %v6042
        %v6049 = vadd.s32 %v6045, 1
        %v6050 = vsel %vm6048, %v6049, %v6045
        %v6051 = vadd.s32 %v6046, %v6050
        %v6052 = vadd.s32 %v6051, 536870912
        %v6053 = vshrl.u32 %v6052, 30
        %v6054 = vshll.u32 %v6053, 30
        %v6055 = vsub.s32 %v6051, %v6054
        %vm6056 = vcmp.lt.s32.totalorder %v6055, 0
        %v6057 = vsub.s32 0, %v6055
        %v6058 = vsel %vm6056, %v6057, %v6055
        %v6059 = vclz %v6058
        %v6060 = vsub.s32 %v6059, 2
        %vm6061 = vcmp.gt.s32.totalorder 0, %v6060
        %v6062 = vsel %vm6061, 0, %v6060
        %v6063 = vsub.s32 32, %v6062
        %v6064 = vshll.u32 %v6055, %v6062
        %v6065 = vshrl.u32 %v6047, %v6063
        %v6066 = vor.u32 %v6064, %v6065
        %v6067 = vsub.s32 4294967266, %v6062
        %v6068 = vadd.s32 %v6067, 127
        %v6069 = vshll.u32 %v6068, 23
        %v6070 = vor.u32 4788187, %v6069
        %v6071 = vand.u32 2147483647, %v6070
        %v6073 = vcvt.s32.f32 %v6066
        %v6074 = vmul.f32 %v6073, %v6071
        %v6075 = vxor.u32 %v6074, 2147483648
        %v6076 = vsel %vm5955, %v6075, %v6074
        %v6077 = vsub.s32 4, %v6053
        %v6078 = vsel %vm5955, %v6077, %v6053
        %v6079 = vsel %vm5954, %v4551, %v6076
        %v6080 = vsel %vm5954, 0, %v6078
        %v6081 = vmul.f32 %v6079, %v6079
        %v6082 = vmul.f32 %v6081, -0.001358992
        %v6083 = vadd.f32 %v6082, 0.041655596
        %v6084 = vmul.f32 %v6081, %v6083
        %v6085 = vadd.f32 %v6084, -0.4999988
        %v6086 = vmul.f32 %v6081, %v6085
        %v6087 = vadd.f32 1.0, %v6086
        %v6088 = vmul.f32 %v6079, %v6079
        %v6089 = vmul.f32 %v6088, -0.00019511016
        %v6090 = vadd.f32 %v6089, 0.008332121
        %v6091 = vmul.f32 %v6088, %v6090
        %v6092 = vadd.f32 %v6091, -0.16666654
        %v6093 = vmul.f32 %v6088, %v6092
        %v6094 = vadd.f32 %v6093, 1.0
        %v6095 = vmul.f32 %v6094, %v6079
        %vm6096 = vweird.f32 %v4551
        %v6097 = vadd.s32 %v6080, 3
        %v6098 = vand.u32 %v6097, 3
        %vm6099 = vcmp.lt.s32.totalorder %v6098, 2
        %vm6100 = vcmp.eq.s32.totalorder %v6098, 0
        %v6101 = vxor.u32 %v6095, 2147483648
        %v6102 = vsel %vm6100, %v6087, %v6101
        %vm6103 = vcmp.eq.s32.totalorder %v6098, 2
        %v6104 = vxor.u32 %v6087, 2147483648
        %v6105 = vsel %vm6103, %v6104, %v6095
        %v6106 = vsel %vm6099, %v6102, %v6105
        %v6107 = vsel %vm6096, nan, %v6106
        %v6108 = vand.u32 2147483647, %v4552
        %vm6109 = vcmp.le.f32.partialorder %v6108, 0.7853982
        %vm6110 = vcmp.lt.s32.totalorder %v4552, 0
        %v6111 = vand.u32 %v4552, 2139095040
        %v6112 = vshrl.u32 %v6111, 23
        %v6113 = vsub.s32 %v6112, 127
        %v6114 = vand.u32 2147483647, %v4552
        %v6115 = vand.u32 %v6114, 8388607
        %v6116 = vor.u32 %v6115, 8388608
        %v6117 = vsub.s32 0, %v6116
        %v6118 = vadd.s32 %v6113, 1
        %vm6119 = vcmp.gt.s32.totalorder %v6118, 0
        %v6120 = vsel %vm6119, %v6118, 0
        %v6121 = vshrl.u32 %v6120, 5
        %v6122 = vand.u32 %v6120, 31
        %v6123 = vsub.s32 32, %v6122
        %v6124 = vshrl.u32 683565275, %v6123
        %v6125 = vshll.u32 683565275, %v6122
        %v6126 = vshrl.u32 2475754826, %v6123
        %v6127 = vor.u32 %v6125, %v6126
        %v6128 = vshll.u32 2475754826, %v6122
        %v6129 = vshrl.u32 2131351028, %v6123
        %v6130 = vor.u32 %v6128, %v6129
        %v6131 = vshll.u32 2131351028, %v6122
        %v6132 = vshrl.u32 2102212464, %v6123
        %v6133 = vor.u32 %v6131, %v6132
        %v6134 = vshll.u32 2102212464, %v6122
        %v6135 = vshrl.u32 920167782, %v6123
        %v6136 = vor.u32 %v6134, %v6135
        %v6137 = vshll.u32 920167782, %v6122
        %v6138 = vshrl.u32 1326507024, %v6123
        %v6139 = vor.u32 %v6137, %v6138
        %vm6140 = vcmp.lt.s32.totalorder %v6121, 1
        %vm6141 = vcmp.lt.s32.totalorder %v6121, 2
        %vm6142 = vcmp.lt.s32.totalorder %v6121, 3
        %vm6143 = vcmp.lt.s32.totalorder %v6121, 4
        %v6144 = vsel %vm6140, %v6124, %v6127
        %v6145 = vsel %vm6143, %v6133, 2102212464
        %v6146 = vsel %vm6142, %v6130, %v6145
        %v6147 = vsel %vm6141, %v6144, %v6146
        %v6148 = vsel %vm6140, %v6127, %v6130
        %v6149 = vsel %vm6143, %v6136, 920167782
        %v6150 = vsel %vm6142, %v6133, %v6149
        %v6151 = vsel %vm6141, %v6148, %v6150
        %v6152 = vsel %vm6140, %v6130, %v6133
        %v6153 = vsel %vm6143, %v6139, 1326507024
        %v6154 = vsel %vm6142, %v6136, %v6153
        %v6155 = vsel %vm6141, %v6152, %v6154
        %v6156 = vshll.u32 %v6116, 8
        %v6157 = vand.u32 %v6156, 65535
        %v6158 = vshrl.u32 %v6156, 16
        %v6159 = vand.u32 %v6155, 65535
        %v6160 = vshrl.u32 %v6155, 16
        %v6161 = vmul.u32 %v6157, %v6159
        %v6162 = vmul.u32 %v6157, %v6160
        %v6163 = vmul.u32 %v6158, %v6159
        %v6164 = vmul.u32 %v6158, %v6160
        %v6165 = vshll.u32 %v6162, 16
        %v6166 = vshrl.u32 %v6162, 16
        %v6167 = vshll.u32 %v6163, 16
        %v6168 = vshrl.u32 %v6163, 16
        %vm6169 = vc.u32 %v6161, %v6165
        %v6170 = vsel %vm6169, 1, 0
        %v6171 = vadd.s32 %v6161, %v6165
        %v6172 = vadd.s32 %v6164, %v6170
        %vm6173 = vc.u32 %v6171, %v6167
        %v6174 = vsel %vm6173, 1, 0
        %v6175 = vadd.s32 %v6171, %v6167
        %v6176 = vadd.s32 %v6172, %v6174
        %v6177 = vadd.s32 %v6176, %v6166
        %v6178 = vadd.s32 %v6177, %v6168
        %v6179 = vand.u32 %v6156, 65535
        %v6180 = vshrl.u32 %v6156, 16
        %v6181 = vand.u32 %v6151, 65535
        %v6182 = vshrl.u32 %v6151, 16
        %v6183 = vmul.u32 %v6179, %v6181
        %v6184 = vmul.u32 %v6179, %v6182
        %v6185 = vmul.u32 %v6180, %v6181
        %v6186 = vmul.u32 %v6180, %v6182
        %v6187 = vshll.u32 %v6184, 16
        %v6188 = vshrl.u32 %v6184, 16
        %v6189 = vshll.u32 %v6185, 16
        %v6190 = vshrl.u32 %v6185, 16
        %vm6191 = vc.u32 %v6183, %v6187
        %v6192 = vsel %vm6191, 1, 0
        %v6193 = vadd.s32 %v6183, %v6187
        %v6194 = vadd.s32 %v6186, %v6192
        %vm6195 = vc.u32 %v6193, %v6189
        %v6196 = vsel %vm6195, 1, 0
        %v6197 = vadd.s32 %v6193, %v6189
        %v6198 = vadd.s32 %v6194, %v6196
        %v6199 = vadd.s32 %v6198, %v6188
        %v6200 = vadd.s32 %v6199, %v6190
        %v6201 = vmul.u32 %v6156, %v6147
        %v6202 = vadd.s32 %v6178, %v6197
        %vm6203 = vc.u32 %v6178, %v6197
        %v6204 = vadd.s32 %v6200, 1
        %v6205 = vsel %vm6203, %v6204, %v6200
        %v6206 = vadd.s32 %v6201, %v6205
        %v6207 = vadd.s32 %v6206, 536870912
        %v6208 = vshrl.u32 %v6207, 30
        %v6209 = vshll.u32 %v6208, 30
        %v6210 = vsub.s32 %v6206, %v6209
        %vm6211 = vcmp.lt.s32.totalorder %v6210, 0
        %v6212 = vsub.s32 0, %v6210
        %v6213 = vsel %vm6211, %v6212, %v6210
        %v6214 = vclz %v6213
        %v6215 = vsub.s32 %v6214, 2
        %vm6216 = vcmp.gt.s32.totalorder 0, %v6215
        %v6217 = vsel %vm6216, 0, %v6215
        %v6218 = vsub.s32 32, %v6217
        %v6219 = vshll.u32 %v6210, %v6217
        %v6220 = vshrl.u32 %v6202, %v6218
        %v6221 = vor.u32 %v6219, %v6220
        %v6222 = vsub.s32 4294967266, %v6217
        %v6223 = vadd.s32 %v6222, 127
        %v6224 = vshll.u32 %v6223, 23
        %v6225 = vor.u32 4788187, %v6224
        %v6226 = vand.u32 2147483647, %v6225
        %v6228 = vcvt.s32.f32 %v6221
        %v6229 = vmul.f32 %v6228, %v6226
        %v6230 = vxor.u32 %v6229, 2147483648
        %v6231 = vsel %vm6110, %v6230, %v6229
        %v6232 = vsub.s32 4, %v6208
        %v6233 = vsel %vm6110, %v6232, %v6208
        %v6234 = vsel %vm6109, %v4552, %v6231
        %v6235 = vsel %vm6109, 0, %v6233
        %v6236 = vmul.f32 %v6234, %v6234
        %v6237 = vmul.f32 %v6236, -0.001358992
        %v6238 = vadd.f32 %v6237, 0.041655596
        %v6239 = vmul.f32 %v6236, %v6238
        %v6240 = vadd.f32 %v6239, -0.4999988
        %v6241 = vmul.f32 %v6236, %v6240
        %v6242 = vadd.f32 1.0, %v6241
        %v6243 = vmul.f32 %v6234, %v6234
        %v6244 = vmul.f32 %v6243, -0.00019511016
        %v6245 = vadd.f32 %v6244, 0.008332121
        %v6246 = vmul.f32 %v6243, %v6245
        %v6247 = vadd.f32 %v6246, -0.16666654
        %v6248 = vmul.f32 %v6243, %v6247
        %v6249 = vadd.f32 %v6248, 1.0
        %v6250 = vmul.f32 %v6249, %v6234
        %vm6251 = vweird.f32 %v4552
        %v6252 = vadd.s32 %v6235, 3
        %v6253 = vand.u32 %v6252, 3
        %vm6254 = vcmp.lt.s32.totalorder %v6253, 2
        %vm6255 = vcmp.eq.s32.totalorder %v6253, 0
        %v6256 = vxor.u32 %v6250, 2147483648
        %v6257 = vsel %vm6255, %v6242, %v6256
        %vm6258 = vcmp.eq.s32.totalorder %v6253, 2
        %v6259 = vxor.u32 %v6242, 2147483648
        %v6260 = vsel %vm6258, %v6259, %v6250
        %v6261 = vsel %vm6254, %v6257, %v6260
        %v6262 = vsel %vm6251, nan, %v6261
        %v6263 = vand.u32 2147483647, %v4553
        %vm6264 = vcmp.le.f32.partialorder %v6263, 0.7853982
        %vm6265 = vcmp.lt.s32.totalorder %v4553, 0
        %v6266 = vand.u32 %v4553, 2139095040
        %v6267 = vshrl.u32 %v6266, 23
        %v6268 = vsub.s32 %v6267, 127
        %v6269 = vand.u32 2147483647, %v4553
        %v6270 = vand.u32 %v6269, 8388607
        %v6271 = vor.u32 %v6270, 8388608
        %v6272 = vsub.s32 0, %v6271
        %v6273 = vadd.s32 %v6268, 1
        %vm6274 = vcmp.gt.s32.totalorder %v6273, 0
        %v6275 = vsel %vm6274, %v6273, 0
        %v6276 = vshrl.u32 %v6275, 5
        %v6277 = vand.u32 %v6275, 31
        %v6278 = vsub.s32 32, %v6277
        %v6279 = vshrl.u32 683565275, %v6278
        %v6280 = vshll.u32 683565275, %v6277
        %v6281 = vshrl.u32 2475754826, %v6278
        %v6282 = vor.u32 %v6280, %v6281
        %v6283 = vshll.u32 2475754826, %v6277
        %v6284 = vshrl.u32 2131351028, %v6278
        %v6285 = vor.u32 %v6283, %v6284
        %v6286 = vshll.u32 2131351028, %v6277
        %v6287 = vshrl.u32 2102212464, %v6278
        %v6288 = vor.u32 %v6286, %v6287
        %v6289 = vshll.u32 2102212464, %v6277
        %v6290 = vshrl.u32 920167782, %v6278
        %v6291 = vor.u32 %v6289, %v6290
        %v6292 = vshll.u32 920167782, %v6277
        %v6293 = vshrl.u32 1326507024, %v6278
        %v6294 = vor.u32 %v6292, %v6293
        %vm6295 = vcmp.lt.s32.totalorder %v6276, 1
        %vm6296 = vcmp.lt.s32.totalorder %v6276, 2
        %vm6297 = vcmp.lt.s32.totalorder %v6276, 3
        %vm6298 = vcmp.lt.s32.totalorder %v6276, 4
        %v6299 = vsel %vm6295, %v6279, %v6282
        %v6300 = vsel %vm6298, %v6288, 2102212464
        %v6301 = vsel %vm6297, %v6285, %v6300
        %v6302 = vsel %vm6296, %v6299, %v6301
        %v6303 = vsel %vm6295, %v6282, %v6285
        %v6304 = vsel %vm6298, %v6291, 920167782
        %v6305 = vsel %vm6297, %v6288, %v6304
        %v6306 = vsel %vm6296, %v6303, %v6305
        %v6307 = vsel %vm6295, %v6285, %v6288
        %v6308 = vsel %vm6298, %v6294, 1326507024
        %v6309 = vsel %vm6297, %v6291, %v6308
        %v6310 = vsel %vm6296, %v6307, %v6309
        %v6311 = vshll.u32 %v6271, 8
        %v6312 = vand.u32 %v6311, 65535
        %v6313 = vshrl.u32 %v6311, 16
        %v6314 = vand.u32 %v6310, 65535
        %v6315 = vshrl.u32 %v6310, 16
        %v6316 = vmul.u32 %v6312, %v6314
        %v6317 = vmul.u32 %v6312, %v6315
        %v6318 = vmul.u32 %v6313, %v6314
        %v6319 = vmul.u32 %v6313, %v6315
        %v6320 = vshll.u32 %v6317, 16
        %v6321 = vshrl.u32 %v6317, 16
        %v6322 = vshll.u32 %v6318, 16
        %v6323 = vshrl.u32 %v6318, 16
        %vm6324 = vc.u32 %v6316, %v6320
        %v6325 = vsel %vm6324, 1, 0
        %v6326 = vadd.s32 %v6316, %v6320
        %v6327 = vadd.s32 %v6319, %v6325
        %vm6328 = vc.u32 %v6326, %v6322
        %v6329 = vsel %vm6328, 1, 0
        %v6330 = vadd.s32 %v6326, %v6322
        %v6331 = vadd.s32 %v6327, %v6329
        %v6332 = vadd.s32 %v6331, %v6321
        %v6333 = vadd.s32 %v6332, %v6323
        %v6334 = vand.u32 %v6311, 65535
        %v6335 = vshrl.u32 %v6311, 16
        %v6336 = vand.u32 %v6306, 65535
        %v6337 = vshrl.u32 %v6306, 16
        %v6338 = vmul.u32 %v6334, %v6336
        %v6339 = vmul.u32 %v6334, %v6337
        %v6340 = vmul.u32 %v6335, %v6336
        %v6341 = vmul.u32 %v6335, %v6337
        %v6342 = vshll.u32 %v6339, 16
        %v6343 = vshrl.u32 %v6339, 16
        %v6344 = vshll.u32 %v6340, 16
        %v6345 = vshrl.u32 %v6340, 16
        %vm6346 = vc.u32 %v6338, %v6342
        %v6347 = vsel %vm6346, 1, 0
        %v6348 = vadd.s32 %v6338, %v6342
        %v6349 = vadd.s32 %v6341, %v6347
        %vm6350 = vc.u32 %v6348, %v6344
        %v6351 = vsel %vm6350, 1, 0
        %v6352 = vadd.s32 %v6348, %v6344
        %v6353 = vadd.s32 %v6349, %v6351
        %v6354 = vadd.s32 %v6353, %v6343
        %v6355 = vadd.s32 %v6354, %v6345
        %v6356 = vmul.u32 %v6311, %v6302
        %v6357 = vadd.s32 %v6333, %v6352
        %vm6358 = vc.u32 %v6333, %v6352
        %v6359 = vadd.s32 %v6355, 1
        %v6360 = vsel %vm6358, %v6359, %v6355
        %v6361 = vadd.s32 %v6356, %v6360
        %v6362 = vadd.s32 %v6361, 536870912
        %v6363 = vshrl.u32 %v6362, 30
        %v6364 = vshll.u32 %v6363, 30
        %v6365 = vsub.s32 %v6361, %v6364
        %vm6366 = vcmp.lt.s32.totalorder %v6365, 0
        %v6367 = vsub.s32 0, %v6365
        %v6368 = vsel %vm6366, %v6367, %v6365
        %v6369 = vclz %v6368
        %v6370 = vsub.s32 %v6369, 2
        %vm6371 = vcmp.gt.s32.totalorder 0, %v6370
        %v6372 = vsel %vm6371, 0, %v6370
        %v6373 = vsub.s32 32, %v6372
        %v6374 = vshll.u32 %v6365, %v6372
        %v6375 = vshrl.u32 %v6357, %v6373
        %v6376 = vor.u32 %v6374, %v6375
        %v6377 = vsub.s32 4294967266, %v6372
        %v6378 = vadd.s32 %v6377, 127
        %v6379 = vshll.u32 %v6378, 23
        %v6380 = vor.u32 4788187, %v6379
        %v6381 = vand.u32 2147483647, %v6380
        %v6383 = vcvt.s32.f32 %v6376
        %v6384 = vmul.f32 %v6383, %v6381
        %v6385 = vxor.u32 %v6384, 2147483648
        %v6386 = vsel %vm6265, %v6385, %v6384
        %v6387 = vsub.s32 4, %v6363
        %v6388 = vsel %vm6265, %v6387, %v6363
        %v6389 = vsel %vm6264, %v4553, %v6386
        %v6390 = vsel %vm6264, 0, %v6388
        %v6391 = vmul.f32 %v6389, %v6389
        %v6392 = vmul.f32 %v6391, -0.001358992
        %v6393 = vadd.f32 %v6392, 0.041655596
        %v6394 = vmul.f32 %v6391, %v6393
        %v6395 = vadd.f32 %v6394, -0.4999988
        %v6396 = vmul.f32 %v6391, %v6395
        %v6397 = vadd.f32 1.0, %v6396
        %v6398 = vmul.f32 %v6389, %v6389
        %v6399 = vmul.f32 %v6398, -0.00019511016
        %v6400 = vadd.f32 %v6399, 0.008332121
        %v6401 = vmul.f32 %v6398, %v6400
        %v6402 = vadd.f32 %v6401, -0.16666654
        %v6403 = vmul.f32 %v6398, %v6402
        %v6404 = vadd.f32 %v6403, 1.0
        %v6405 = vmul.f32 %v6404, %v6389
        %vm6406 = vweird.f32 %v4553
        %v6407 = vadd.s32 %v6390, 3
        %v6408 = vand.u32 %v6407, 3
        %vm6409 = vcmp.lt.s32.totalorder %v6408, 2
        %vm6410 = vcmp.eq.s32.totalorder %v6408, 0
        %v6411 = vxor.u32 %v6405, 2147483648
        %v6412 = vsel %vm6410, %v6397, %v6411
        %vm6413 = vcmp.eq.s32.totalorder %v6408, 2
        %v6414 = vxor.u32 %v6397, 2147483648
        %v6415 = vsel %vm6413, %v6414, %v6405
        %v6416 = vsel %vm6409, %v6412, %v6415
        %v6417 = vsel %vm6406, nan, %v6416
        %v6418 = vand.u32 2147483647, %v4554
        %vm6419 = vcmp.le.f32.partialorder %v6418, 0.7853982
        %vm6420 = vcmp.lt.s32.totalorder %v4554, 0
        %v6421 = vand.u32 %v4554, 2139095040
        %v6422 = vshrl.u32 %v6421, 23
        %v6423 = vsub.s32 %v6422, 127
        %v6424 = vand.u32 2147483647, %v4554
        %v6425 = vand.u32 %v6424, 8388607
        %v6426 = vor.u32 %v6425, 8388608
        %v6427 = vsub.s32 0, %v6426
        %v6428 = vadd.s32 %v6423, 1
        %vm6429 = vcmp.gt.s32.totalorder %v6428, 0
        %v6430 = vsel %vm6429, %v6428, 0
        %v6431 = vshrl.u32 %v6430, 5
        %v6432 = vand.u32 %v6430, 31
        %v6433 = vsub.s32 32, %v6432
        %v6434 = vshrl.u32 683565275, %v6433
        %v6435 = vshll.u32 683565275, %v6432
        %v6436 = vshrl.u32 2475754826, %v6433
        %v6437 = vor.u32 %v6435, %v6436
        %v6438 = vshll.u32 2475754826, %v6432
        %v6439 = vshrl.u32 2131351028, %v6433
        %v6440 = vor.u32 %v6438, %v6439
        %v6441 = vshll.u32 2131351028, %v6432
        %v6442 = vshrl.u32 2102212464, %v6433
        %v6443 = vor.u32 %v6441, %v6442
        %v6444 = vshll.u32 2102212464, %v6432
        %v6445 = vshrl.u32 920167782, %v6433
        %v6446 = vor.u32 %v6444, %v6445
        %v6447 = vshll.u32 920167782, %v6432
        %v6448 = vshrl.u32 1326507024, %v6433
        %v6449 = vor.u32 %v6447, %v6448
        %vm6450 = vcmp.lt.s32.totalorder %v6431, 1
        %vm6451 = vcmp.lt.s32.totalorder %v6431, 2
        %vm6452 = vcmp.lt.s32.totalorder %v6431, 3
        %vm6453 = vcmp.lt.s32.totalorder %v6431, 4
        %v6454 = vsel %vm6450, %v6434, %v6437
        %v6455 = vsel %vm6453, %v6443, 2102212464
        %v6456 = vsel %vm6452, %v6440, %v6455
        %v6457 = vsel %vm6451, %v6454, %v6456
        %v6458 = vsel %vm6450, %v6437, %v6440
        %v6459 = vsel %vm6453, %v6446, 920167782
        %v6460 = vsel %vm6452, %v6443, %v6459
        %v6461 = vsel %vm6451, %v6458, %v6460
        %v6462 = vsel %vm6450, %v6440, %v6443
        %v6463 = vsel %vm6453, %v6449, 1326507024
        %v6464 = vsel %vm6452, %v6446, %v6463
        %v6465 = vsel %vm6451, %v6462, %v6464
        %v6466 = vshll.u32 %v6426, 8
        %v6467 = vand.u32 %v6466, 65535
        %v6468 = vshrl.u32 %v6466, 16
        %v6469 = vand.u32 %v6465, 65535
        %v6470 = vshrl.u32 %v6465, 16
        %v6471 = vmul.u32 %v6467, %v6469
        %v6472 = vmul.u32 %v6467, %v6470
        %v6473 = vmul.u32 %v6468, %v6469
        %v6474 = vmul.u32 %v6468, %v6470
        %v6475 = vshll.u32 %v6472, 16
        %v6476 = vshrl.u32 %v6472, 16
        %v6477 = vshll.u32 %v6473, 16
        %v6478 = vshrl.u32 %v6473, 16
        %vm6479 = vc.u32 %v6471, %v6475
        %v6480 = vsel %vm6479, 1, 0
        %v6481 = vadd.s32 %v6471, %v6475
        %v6482 = vadd.s32 %v6474, %v6480
        %vm6483 = vc.u32 %v6481, %v6477
        %v6484 = vsel %vm6483, 1, 0
        %v6485 = vadd.s32 %v6481, %v6477
        %v6486 = vadd.s32 %v6482, %v6484
        %v6487 = vadd.s32 %v6486, %v6476
        %v6488 = vadd.s32 %v6487, %v6478
        %v6489 = vand.u32 %v6466, 65535
        %v6490 = vshrl.u32 %v6466, 16
        %v6491 = vand.u32 %v6461, 65535
        %v6492 = vshrl.u32 %v6461, 16
        %v6493 = vmul.u32 %v6489, %v6491
        %v6494 = vmul.u32 %v6489, %v6492
        %v6495 = vmul.u32 %v6490, %v6491
        %v6496 = vmul.u32 %v6490, %v6492
        %v6497 = vshll.u32 %v6494, 16
        %v6498 = vshrl.u32 %v6494, 16
        %v6499 = vshll.u32 %v6495, 16
        %v6500 = vshrl.u32 %v6495, 16
        %vm6501 = vc.u32 %v6493, %v6497
        %v6502 = vsel %vm6501, 1, 0
        %v6503 = vadd.s32 %v6493, %v6497
        %v6504 = vadd.s32 %v6496, %v6502
        %vm6505 = vc.u32 %v6503, %v6499
        %v6506 = vsel %vm6505, 1, 0
        %v6507 = vadd.s32 %v6503, %v6499
        %v6508 = vadd.s32 %v6504, %v6506
        %v6509 = vadd.s32 %v6508, %v6498
        %v6510 = vadd.s32 %v6509, %v6500
        %v6511 = vmul.u32 %v6466, %v6457
        %v6512 = vadd.s32 %v6488, %v6507
        %vm6513 = vc.u32 %v6488, %v6507
        %v6514 = vadd.s32 %v6510, 1
        %v6515 = vsel %vm6513, %v6514, %v6510
        %v6516 = vadd.s32 %v6511, %v6515
        %v6517 = vadd.s32 %v6516, 536870912
        %v6518 = vshrl.u32 %v6517, 30
        %v6519 = vshll.u32 %v6518, 30
        %v6520 = vsub.s32 %v6516, %v6519
        %vm6521 = vcmp.lt.s32.totalorder %v6520, 0
        %v6522 = vsub.s32 0, %v6520
        %v6523 = vsel %vm6521, %v6522, %v6520
        %v6524 = vclz %v6523
        %v6525 = vsub.s32 %v6524, 2
        %vm6526 = vcmp.gt.s32.totalorder 0, %v6525
        %v6527 = vsel %vm6526, 0, %v6525
        %v6528 = vsub.s32 32, %v6527
        %v6529 = vshll.u32 %v6520, %v6527
        %v6530 = vshrl.u32 %v6512, %v6528
        %v6531 = vor.u32 %v6529, %v6530
        %v6532 = vsub.s32 4294967266, %v6527
        %v6533 = vadd.s32 %v6532, 127
        %v6534 = vshll.u32 %v6533, 23
        %v6535 = vor.u32 4788187, %v6534
        %v6536 = vand.u32 2147483647, %v6535
        %v6538 = vcvt.s32.f32 %v6531
        %v6539 = vmul.f32 %v6538, %v6536
        %v6540 = vxor.u32 %v6539, 2147483648
        %v6541 = vsel %vm6420, %v6540, %v6539
        %v6542 = vsub.s32 4, %v6518
        %v6543 = vsel %vm6420, %v6542, %v6518
        %v6544 = vsel %vm6419, %v4554, %v6541
        %v6545 = vsel %vm6419, 0, %v6543
        %v6546 = vmul.f32 %v6544, %v6544
        %v6547 = vmul.f32 %v6546, -0.001358992
        %v6548 = vadd.f32 %v6547, 0.041655596
        %v6549 = vmul.f32 %v6546, %v6548
        %v6550 = vadd.f32 %v6549, -0.4999988
        %v6551 = vmul.f32 %v6546, %v6550
        %v6552 = vadd.f32 1.0, %v6551
        %v6553 = vmul.f32 %v6544, %v6544
        %v6554 = vmul.f32 %v6553, -0.00019511016
        %v6555 = vadd.f32 %v6554, 0.008332121
        %v6556 = vmul.f32 %v6553, %v6555
        %v6557 = vadd.f32 %v6556, -0.16666654
        %v6558 = vmul.f32 %v6553, %v6557
        %v6559 = vadd.f32 %v6558, 1.0
        %v6560 = vmul.f32 %v6559, %v6544
        %vm6561 = vweird.f32 %v4554
        %v6562 = vadd.s32 %v6545, 3
        %v6563 = vand.u32 %v6562, 3
        %vm6564 = vcmp.lt.s32.totalorder %v6563, 2
        %vm6565 = vcmp.eq.s32.totalorder %v6563, 0
        %v6566 = vxor.u32 %v6560, 2147483648
        %v6567 = vsel %vm6565, %v6552, %v6566
        %vm6568 = vcmp.eq.s32.totalorder %v6563, 2
        %v6569 = vxor.u32 %v6552, 2147483648
        %v6570 = vsel %vm6568, %v6569, %v6560
        %v6571 = vsel %vm6564, %v6567, %v6570
        %v6572 = vsel %vm6561, nan, %v6571
        %v6573 = vand.u32 2147483647, %v4555
        %vm6574 = vcmp.le.f32.partialorder %v6573, 0.7853982
        %vm6575 = vcmp.lt.s32.totalorder %v4555, 0
        %v6576 = vand.u32 %v4555, 2139095040
        %v6577 = vshrl.u32 %v6576, 23
        %v6578 = vsub.s32 %v6577, 127
        %v6579 = vand.u32 2147483647, %v4555
        %v6580 = vand.u32 %v6579, 8388607
        %v6581 = vor.u32 %v6580, 8388608
        %v6582 = vsub.s32 0, %v6581
        %v6583 = vadd.s32 %v6578, 1
        %vm6584 = vcmp.gt.s32.totalorder %v6583, 0
        %v6585 = vsel %vm6584, %v6583, 0
        %v6586 = vshrl.u32 %v6585, 5
        %v6587 = vand.u32 %v6585, 31
        %v6588 = vsub.s32 32, %v6587
        %v6589 = vshrl.u32 683565275, %v6588
        %v6590 = vshll.u32 683565275, %v6587
        %v6591 = vshrl.u32 2475754826, %v6588
        %v6592 = vor.u32 %v6590, %v6591
        %v6593 = vshll.u32 2475754826, %v6587
        %v6594 = vshrl.u32 2131351028, %v6588
        %v6595 = vor.u32 %v6593, %v6594
        %v6596 = vshll.u32 2131351028, %v6587
        %v6597 = vshrl.u32 2102212464, %v6588
        %v6598 = vor.u32 %v6596, %v6597
        %v6599 = vshll.u32 2102212464, %v6587
        %v6600 = vshrl.u32 920167782, %v6588
        %v6601 = vor.u32 %v6599, %v6600
        %v6602 = vshll.u32 920167782, %v6587
        %v6603 = vshrl.u32 1326507024, %v6588
        %v6604 = vor.u32 %v6602, %v6603
        %vm6605 = vcmp.lt.s32.totalorder %v6586, 1
        %vm6606 = vcmp.lt.s32.totalorder %v6586, 2
        %vm6607 = vcmp.lt.s32.totalorder %v6586, 3
        %vm6608 = vcmp.lt.s32.totalorder %v6586, 4
        %v6609 = vsel %vm6605, %v6589, %v6592
        %v6610 = vsel %vm6608, %v6598, 2102212464
        %v6611 = vsel %vm6607, %v6595, %v6610
        %v6612 = vsel %vm6606, %v6609, %v6611
        %v6613 = vsel %vm6605, %v6592, %v6595
        %v6614 = vsel %vm6608, %v6601, 920167782
        %v6615 = vsel %vm6607, %v6598, %v6614
        %v6616 = vsel %vm6606, %v6613, %v6615
        %v6617 = vsel %vm6605, %v6595, %v6598
        %v6618 = vsel %vm6608, %v6604, 1326507024
        %v6619 = vsel %vm6607, %v6601, %v6618
        %v6620 = vsel %vm6606, %v6617, %v6619
        %v6621 = vshll.u32 %v6581, 8
        %v6622 = vand.u32 %v6621, 65535
        %v6623 = vshrl.u32 %v6621, 16
        %v6624 = vand.u32 %v6620, 65535
        %v6625 = vshrl.u32 %v6620, 16
        %v6626 = vmul.u32 %v6622, %v6624
        %v6627 = vmul.u32 %v6622, %v6625
        %v6628 = vmul.u32 %v6623, %v6624
        %v6629 = vmul.u32 %v6623, %v6625
        %v6630 = vshll.u32 %v6627, 16
        %v6631 = vshrl.u32 %v6627, 16
        %v6632 = vshll.u32 %v6628, 16
        %v6633 = vshrl.u32 %v6628, 16
        %vm6634 = vc.u32 %v6626, %v6630
        %v6635 = vsel %vm6634, 1, 0
        %v6636 = vadd.s32 %v6626, %v6630
        %v6637 = vadd.s32 %v6629, %v6635
        %vm6638 = vc.u32 %v6636, %v6632
        %v6639 = vsel %vm6638, 1, 0
        %v6640 = vadd.s32 %v6636, %v6632
        %v6641 = vadd.s32 %v6637, %v6639
        %v6642 = vadd.s32 %v6641, %v6631
        %v6643 = vadd.s32 %v6642, %v6633
        %v6644 = vand.u32 %v6621, 65535
        %v6645 = vshrl.u32 %v6621, 16
        %v6646 = vand.u32 %v6616, 65535
        %v6647 = vshrl.u32 %v6616, 16
        %v6648 = vmul.u32 %v6644, %v6646
        %v6649 = vmul.u32 %v6644, %v6647
        %v6650 = vmul.u32 %v6645, %v6646
        %v6651 = vmul.u32 %v6645, %v6647
        %v6652 = vshll.u32 %v6649, 16
        %v6653 = vshrl.u32 %v6649, 16
        %v6654 = vshll.u32 %v6650, 16
        %v6655 = vshrl.u32 %v6650, 16
        %vm6656 = vc.u32 %v6648, %v6652
        %v6657 = vsel %vm6656, 1, 0
        %v6658 = vadd.s32 %v6648, %v6652
        %v6659 = vadd.s32 %v6651, %v6657
        %vm6660 = vc.u32 %v6658, %v6654
        %v6661 = vsel %vm6660, 1, 0
        %v6662 = vadd.s32 %v6658, %v6654
        %v6663 = vadd.s32 %v6659, %v6661
        %v6664 = vadd.s32 %v6663, %v6653
        %v6665 = vadd.s32 %v6664, %v6655
        %v6666 = vmul.u32 %v6621, %v6612
        %v6667 = vadd.s32 %v6643, %v6662
        %vm6668 = vc.u32 %v6643, %v6662
        %v6669 = vadd.s32 %v6665, 1
        %v6670 = vsel %vm6668, %v6669, %v6665
        %v6671 = vadd.s32 %v6666, %v6670
        %v6672 = vadd.s32 %v6671, 536870912
        %v6673 = vshrl.u32 %v6672, 30
        %v6674 = vshll.u32 %v6673, 30
        %v6675 = vsub.s32 %v6671, %v6674
        %vm6676 = vcmp.lt.s32.totalorder %v6675, 0
        %v6677 = vsub.s32 0, %v6675
        %v6678 = vsel %vm6676, %v6677, %v6675
        %v6679 = vclz %v6678
        %v6680 = vsub.s32 %v6679, 2
        %vm6681 = vcmp.gt.s32.totalorder 0, %v6680
        %v6682 = vsel %vm6681, 0, %v6680
        %v6683 = vsub.s32 32, %v6682
        %v6684 = vshll.u32 %v6675, %v6682
        %v6685 = vshrl.u32 %v6667, %v6683
        %v6686 = vor.u32 %v6684, %v6685
        %v6687 = vsub.s32 4294967266, %v6682
        %v6688 = vadd.s32 %v6687, 127
        %v6689 = vshll.u32 %v6688, 23
        %v6690 = vor.u32 4788187, %v6689
        %v6691 = vand.u32 2147483647, %v6690
        %v6693 = vcvt.s32.f32 %v6686
        %v6694 = vmul.f32 %v6693, %v6691
        %v6695 = vxor.u32 %v6694, 2147483648
        %v6696 = vsel %vm6575, %v6695, %v6694
        %v6697 = vsub.s32 4, %v6673
        %v6698 = vsel %vm6575, %v6697, %v6673
        %v6699 = vsel %vm6574, %v4555, %v6696
        %v6700 = vsel %vm6574, 0, %v6698
        %v6701 = vmul.f32 %v6699, %v6699
        %v6702 = vmul.f32 %v6701, -0.001358992
        %v6703 = vadd.f32 %v6702, 0.041655596
        %v6704 = vmul.f32 %v6701, %v6703
        %v6705 = vadd.f32 %v6704, -0.4999988
        %v6706 = vmul.f32 %v6701, %v6705
        %v6707 = vadd.f32 1.0, %v6706
        %v6708 = vmul.f32 %v6699, %v6699
        %v6709 = vmul.f32 %v6708, -0.00019511016
        %v6710 = vadd.f32 %v6709, 0.008332121
        %v6711 = vmul.f32 %v6708, %v6710
        %v6712 = vadd.f32 %v6711, -0.16666654
        %v6713 = vmul.f32 %v6708, %v6712
        %v6714 = vadd.f32 %v6713, 1.0
        %v6715 = vmul.f32 %v6714, %v6699
        %vm6716 = vweird.f32 %v4555
        %v6717 = vadd.s32 %v6700, 3
        %v6718 = vand.u32 %v6717, 3
        %vm6719 = vcmp.lt.s32.totalorder %v6718, 2
        %vm6720 = vcmp.eq.s32.totalorder %v6718, 0
        %v6721 = vxor.u32 %v6715, 2147483648
        %v6722 = vsel %vm6720, %v6707, %v6721
        %vm6723 = vcmp.eq.s32.totalorder %v6718, 2
        %v6724 = vxor.u32 %v6707, 2147483648
        %v6725 = vsel %vm6723, %v6724, %v6715
        %v6726 = vsel %vm6719, %v6722, %v6725
        %v6727 = vsel %vm6716, nan, %v6726
        %v6728 = vand.u32 2147483647, %v4556
        %vm6729 = vcmp.le.f32.partialorder %v6728, 0.7853982
        %vm6730 = vcmp.lt.s32.totalorder %v4556, 0
        %v6731 = vand.u32 %v4556, 2139095040
        %v6732 = vshrl.u32 %v6731, 23
        %v6733 = vsub.s32 %v6732, 127
        %v6734 = vand.u32 2147483647, %v4556
        %v6735 = vand.u32 %v6734, 8388607
        %v6736 = vor.u32 %v6735, 8388608
        %v6737 = vsub.s32 0, %v6736
        %v6738 = vadd.s32 %v6733, 1
        %vm6739 = vcmp.gt.s32.totalorder %v6738, 0
        %v6740 = vsel %vm6739, %v6738, 0
        %v6741 = vshrl.u32 %v6740, 5
        %v6742 = vand.u32 %v6740, 31
        %v6743 = vsub.s32 32, %v6742
        %v6744 = vshrl.u32 683565275, %v6743
        %v6745 = vshll.u32 683565275, %v6742
        %v6746 = vshrl.u32 2475754826, %v6743
        %v6747 = vor.u32 %v6745, %v6746
        %v6748 = vshll.u32 2475754826, %v6742
        %v6749 = vshrl.u32 2131351028, %v6743
        %v6750 = vor.u32 %v6748, %v6749
        %v6751 = vshll.u32 2131351028, %v6742
        %v6752 = vshrl.u32 2102212464, %v6743
        %v6753 = vor.u32 %v6751, %v6752
        %v6754 = vshll.u32 2102212464, %v6742
        %v6755 = vshrl.u32 920167782, %v6743
        %v6756 = vor.u32 %v6754, %v6755
        %v6757 = vshll.u32 920167782, %v6742
        %v6758 = vshrl.u32 1326507024, %v6743
        %v6759 = vor.u32 %v6757, %v6758
        %vm6760 = vcmp.lt.s32.totalorder %v6741, 1
        %vm6761 = vcmp.lt.s32.totalorder %v6741, 2
        %vm6762 = vcmp.lt.s32.totalorder %v6741, 3
        %vm6763 = vcmp.lt.s32.totalorder %v6741, 4
        %v6764 = vsel %vm6760, %v6744, %v6747
        %v6765 = vsel %vm6763, %v6753, 2102212464
        %v6766 = vsel %vm6762, %v6750, %v6765
        %v6767 = vsel %vm6761, %v6764, %v6766
        %v6768 = vsel %vm6760, %v6747, %v6750
        %v6769 = vsel %vm6763, %v6756, 920167782
        %v6770 = vsel %vm6762, %v6753, %v6769
        %v6771 = vsel %vm6761, %v6768, %v6770
        %v6772 = vsel %vm6760, %v6750, %v6753
        %v6773 = vsel %vm6763, %v6759, 1326507024
        %v6774 = vsel %vm6762, %v6756, %v6773
        %v6775 = vsel %vm6761, %v6772, %v6774
        %v6776 = vshll.u32 %v6736, 8
        %v6777 = vand.u32 %v6776, 65535
        %v6778 = vshrl.u32 %v6776, 16
        %v6779 = vand.u32 %v6775, 65535
        %v6780 = vshrl.u32 %v6775, 16
        %v6781 = vmul.u32 %v6777, %v6779
        %v6782 = vmul.u32 %v6777, %v6780
        %v6783 = vmul.u32 %v6778, %v6779
        %v6784 = vmul.u32 %v6778, %v6780
        %v6785 = vshll.u32 %v6782, 16
        %v6786 = vshrl.u32 %v6782, 16
        %v6787 = vshll.u32 %v6783, 16
        %v6788 = vshrl.u32 %v6783, 16
        %vm6789 = vc.u32 %v6781, %v6785
        %v6790 = vsel %vm6789, 1, 0
        %v6791 = vadd.s32 %v6781, %v6785
        %v6792 = vadd.s32 %v6784, %v6790
        %vm6793 = vc.u32 %v6791, %v6787
        %v6794 = vsel %vm6793, 1, 0
        %v6795 = vadd.s32 %v6791, %v6787
        %v6796 = vadd.s32 %v6792, %v6794
        %v6797 = vadd.s32 %v6796, %v6786
        %v6798 = vadd.s32 %v6797, %v6788
        %v6799 = vand.u32 %v6776, 65535
        %v6800 = vshrl.u32 %v6776, 16
        %v6801 = vand.u32 %v6771, 65535
        %v6802 = vshrl.u32 %v6771, 16
        %v6803 = vmul.u32 %v6799, %v6801
        %v6804 = vmul.u32 %v6799, %v6802
        %v6805 = vmul.u32 %v6800, %v6801
        %v6806 = vmul.u32 %v6800, %v6802
        %v6807 = vshll.u32 %v6804, 16
        %v6808 = vshrl.u32 %v6804, 16
        %v6809 = vshll.u32 %v6805, 16
        %v6810 = vshrl.u32 %v6805, 16
        %vm6811 = vc.u32 %v6803, %v6807
        %v6812 = vsel %vm6811, 1, 0
        %v6813 = vadd.s32 %v6803, %v6807
        %v6814 = vadd.s32 %v6806, %v6812
        %vm6815 = vc.u32 %v6813, %v6809
        %v6816 = vsel %vm6815, 1, 0
        %v6817 = vadd.s32 %v6813, %v6809
        %v6818 = vadd.s32 %v6814, %v6816
        %v6819 = vadd.s32 %v6818, %v6808
        %v6820 = vadd.s32 %v6819, %v6810
        %v6821 = vmul.u32 %v6776, %v6767
        %v6822 = vadd.s32 %v6798, %v6817
        %vm6823 = vc.u32 %v6798, %v6817
        %v6824 = vadd.s32 %v6820, 1
        %v6825 = vsel %vm6823, %v6824, %v6820
        %v6826 = vadd.s32 %v6821, %v6825
        %v6827 = vadd.s32 %v6826, 536870912
        %v6828 = vshrl.u32 %v6827, 30
        %v6829 = vshll.u32 %v6828, 30
        %v6830 = vsub.s32 %v6826, %v6829
        %vm6831 = vcmp.lt.s32.totalorder %v6830, 0
        %v6832 = vsub.s32 0, %v6830
        %v6833 = vsel %vm6831, %v6832, %v6830
        %v6834 = vclz %v6833
        %v6835 = vsub.s32 %v6834, 2
        %vm6836 = vcmp.gt.s32.totalorder 0, %v6835
        %v6837 = vsel %vm6836, 0, %v6835
        %v6838 = vsub.s32 32, %v6837
        %v6839 = vshll.u32 %v6830, %v6837
        %v6840 = vshrl.u32 %v6822, %v6838
        %v6841 = vor.u32 %v6839, %v6840
        %v6842 = vsub.s32 4294967266, %v6837
        %v6843 = vadd.s32 %v6842, 127
        %v6844 = vshll.u32 %v6843, 23
        %v6845 = vor.u32 4788187, %v6844
        %v6846 = vand.u32 2147483647, %v6845
        %v6848 = vcvt.s32.f32 %v6841
        %v6849 = vmul.f32 %v6848, %v6846
        %v6850 = vxor.u32 %v6849, 2147483648
        %v6851 = vsel %vm6730, %v6850, %v6849
        %v6852 = vsub.s32 4, %v6828
        %v6853 = vsel %vm6730, %v6852, %v6828
        %v6854 = vsel %vm6729, %v4556, %v6851
        %v6855 = vsel %vm6729, 0, %v6853
        %v6856 = vmul.f32 %v6854, %v6854
        %v6857 = vmul.f32 %v6856, -0.001358992
        %v6858 = vadd.f32 %v6857, 0.041655596
        %v6859 = vmul.f32 %v6856, %v6858
        %v6860 = vadd.f32 %v6859, -0.4999988
        %v6861 = vmul.f32 %v6856, %v6860
        %v6862 = vadd.f32 1.0, %v6861
        %v6863 = vmul.f32 %v6854, %v6854
        %v6864 = vmul.f32 %v6863, -0.00019511016
        %v6865 = vadd.f32 %v6864, 0.008332121
        %v6866 = vmul.f32 %v6863, %v6865
        %v6867 = vadd.f32 %v6866, -0.16666654
        %v6868 = vmul.f32 %v6863, %v6867
        %v6869 = vadd.f32 %v6868, 1.0
        %v6870 = vmul.f32 %v6869, %v6854
        %vm6871 = vweird.f32 %v4556
        %v6872 = vadd.s32 %v6855, 3
        %v6873 = vand.u32 %v6872, 3
        %vm6874 = vcmp.lt.s32.totalorder %v6873, 2
        %vm6875 = vcmp.eq.s32.totalorder %v6873, 0
        %v6876 = vxor.u32 %v6870, 2147483648
        %v6877 = vsel %vm6875, %v6862, %v6876
        %vm6878 = vcmp.eq.s32.totalorder %v6873, 2
        %v6879 = vxor.u32 %v6862, 2147483648
        %v6880 = vsel %vm6878, %v6879, %v6870
        %v6881 = vsel %vm6874, %v6877, %v6880
        %v6882 = vsel %vm6871, nan, %v6881
        %v6883 = vand.u32 2147483647, %v4557
        %vm6884 = vcmp.le.f32.partialorder %v6883, 0.7853982
        %vm6885 = vcmp.lt.s32.totalorder %v4557, 0
        %v6886 = vand.u32 %v4557, 2139095040
        %v6887 = vshrl.u32 %v6886, 23
        %v6888 = vsub.s32 %v6887, 127
        %v6889 = vand.u32 2147483647, %v4557
        %v6890 = vand.u32 %v6889, 8388607
        %v6891 = vor.u32 %v6890, 8388608
        %v6892 = vsub.s32 0, %v6891
        %v6893 = vadd.s32 %v6888, 1
        %vm6894 = vcmp.gt.s32.totalorder %v6893, 0
        %v6895 = vsel %vm6894, %v6893, 0
        %v6896 = vshrl.u32 %v6895, 5
        %v6897 = vand.u32 %v6895, 31
        %v6898 = vsub.s32 32, %v6897
        %v6899 = vshrl.u32 683565275, %v6898
        %v6900 = vshll.u32 683565275, %v6897
        %v6901 = vshrl.u32 2475754826, %v6898
        %v6902 = vor.u32 %v6900, %v6901
        %v6903 = vshll.u32 2475754826, %v6897
        %v6904 = vshrl.u32 2131351028, %v6898
        %v6905 = vor.u32 %v6903, %v6904
        %v6906 = vshll.u32 2131351028, %v6897
        %v6907 = vshrl.u32 2102212464, %v6898
        %v6908 = vor.u32 %v6906, %v6907
        %v6909 = vshll.u32 2102212464, %v6897
        %v6910 = vshrl.u32 920167782, %v6898
        %v6911 = vor.u32 %v6909, %v6910
        %v6912 = vshll.u32 920167782, %v6897
        %v6913 = vshrl.u32 1326507024, %v6898
        %v6914 = vor.u32 %v6912, %v6913
        %vm6915 = vcmp.lt.s32.totalorder %v6896, 1
        %vm6916 = vcmp.lt.s32.totalorder %v6896, 2
        %vm6917 = vcmp.lt.s32.totalorder %v6896, 3
        %vm6918 = vcmp.lt.s32.totalorder %v6896, 4
        %v6919 = vsel %vm6915, %v6899, %v6902
        %v6920 = vsel %vm6918, %v6908, 2102212464
        %v6921 = vsel %vm6917, %v6905, %v6920
        %v6922 = vsel %vm6916, %v6919, %v6921
        %v6923 = vsel %vm6915, %v6902, %v6905
        %v6924 = vsel %vm6918, %v6911, 920167782
        %v6925 = vsel %vm6917, %v6908, %v6924
        %v6926 = vsel %vm6916, %v6923, %v6925
        %v6927 = vsel %vm6915, %v6905, %v6908
        %v6928 = vsel %vm6918, %v6914, 1326507024
        %v6929 = vsel %vm6917, %v6911, %v6928
        %v6930 = vsel %vm6916, %v6927, %v6929
        %v6931 = vshll.u32 %v6891, 8
        %v6932 = vand.u32 %v6931, 65535
        %v6933 = vshrl.u32 %v6931, 16
        %v6934 = vand.u32 %v6930, 65535
        %v6935 = vshrl.u32 %v6930, 16
        %v6936 = vmul.u32 %v6932, %v6934
        %v6937 = vmul.u32 %v6932, %v6935
        %v6938 = vmul.u32 %v6933, %v6934
        %v6939 = vmul.u32 %v6933, %v6935
        %v6940 = vshll.u32 %v6937, 16
        %v6941 = vshrl.u32 %v6937, 16
        %v6942 = vshll.u32 %v6938, 16
        %v6943 = vshrl.u32 %v6938, 16
        %vm6944 = vc.u32 %v6936, %v6940
        %v6945 = vsel %vm6944, 1, 0
        %v6946 = vadd.s32 %v6936, %v6940
        %v6947 = vadd.s32 %v6939, %v6945
        %vm6948 = vc.u32 %v6946, %v6942
        %v6949 = vsel %vm6948, 1, 0
        %v6950 = vadd.s32 %v6946, %v6942
        %v6951 = vadd.s32 %v6947, %v6949
        %v6952 = vadd.s32 %v6951, %v6941
        %v6953 = vadd.s32 %v6952, %v6943
        %v6954 = vand.u32 %v6931, 65535
        %v6955 = vshrl.u32 %v6931, 16
        %v6956 = vand.u32 %v6926, 65535
        %v6957 = vshrl.u32 %v6926, 16
        %v6958 = vmul.u32 %v6954, %v6956
        %v6959 = vmul.u32 %v6954, %v6957
        %v6960 = vmul.u32 %v6955, %v6956
        %v6961 = vmul.u32 %v6955, %v6957
        %v6962 = vshll.u32 %v6959, 16
        %v6963 = vshrl.u32 %v6959, 16
        %v6964 = vshll.u32 %v6960, 16
        %v6965 = vshrl.u32 %v6960, 16
        %vm6966 = vc.u32 %v6958, %v6962
        %v6967 = vsel %vm6966, 1, 0
        %v6968 = vadd.s32 %v6958, %v6962
        %v6969 = vadd.s32 %v6961, %v6967
        %vm6970 = vc.u32 %v6968, %v6964
        %v6971 = vsel %vm6970, 1, 0
        %v6972 = vadd.s32 %v6968, %v6964
        %v6973 = vadd.s32 %v6969, %v6971
        %v6974 = vadd.s32 %v6973, %v6963
        %v6975 = vadd.s32 %v6974, %v6965
        %v6976 = vmul.u32 %v6931, %v6922
        %v6977 = vadd.s32 %v6953, %v6972
        %vm6978 = vc.u32 %v6953, %v6972
        %v6979 = vadd.s32 %v6975, 1
        %v6980 = vsel %vm6978, %v6979, %v6975
        %v6981 = vadd.s32 %v6976, %v6980
        %v6982 = vadd.s32 %v6981, 536870912
        %v6983 = vshrl.u32 %v6982, 30
        %v6984 = vshll.u32 %v6983, 30
        %v6985 = vsub.s32 %v6981, %v6984
        %vm6986 = vcmp.lt.s32.totalorder %v6985, 0
        %v6987 = vsub.s32 0, %v6985
        %v6988 = vsel %vm6986, %v6987, %v6985
        %v6989 = vclz %v6988
        %v6990 = vsub.s32 %v6989, 2
        %vm6991 = vcmp.gt.s32.totalorder 0, %v6990
        %v6992 = vsel %vm6991, 0, %v6990
        %v6993 = vsub.s32 32, %v6992
        %v6994 = vshll.u32 %v6985, %v6992
        %v6995 = vshrl.u32 %v6977, %v6993
        %v6996 = vor.u32 %v6994, %v6995
        %v6997 = vsub.s32 4294967266, %v6992
        %v6998 = vadd.s32 %v6997, 127
        %v6999 = vshll.u32 %v6998, 23
        %v7000 = vor.u32 4788187, %v6999
        %v7001 = vand.u32 2147483647, %v7000
        %v7003 = vcvt.s32.f32 %v6996
        %v7004 = vmul.f32 %v7003, %v7001
        %v7005 = vxor.u32 %v7004, 2147483648
        %v7006 = vsel %vm6885, %v7005, %v7004
        %v7007 = vsub.s32 4, %v6983
        %v7008 = vsel %vm6885, %v7007, %v6983
        %v7009 = vsel %vm6884, %v4557, %v7006
        %v7010 = vsel %vm6884, 0, %v7008
        %v7011 = vmul.f32 %v7009, %v7009
        %v7012 = vmul.f32 %v7011, -0.001358992
        %v7013 = vadd.f32 %v7012, 0.041655596
        %v7014 = vmul.f32 %v7011, %v7013
        %v7015 = vadd.f32 %v7014, -0.4999988
        %v7016 = vmul.f32 %v7011, %v7015
        %v7017 = vadd.f32 1.0, %v7016
        %v7018 = vmul.f32 %v7009, %v7009
        %v7019 = vmul.f32 %v7018, -0.00019511016
        %v7020 = vadd.f32 %v7019, 0.008332121
        %v7021 = vmul.f32 %v7018, %v7020
        %v7022 = vadd.f32 %v7021, -0.16666654
        %v7023 = vmul.f32 %v7018, %v7022
        %v7024 = vadd.f32 %v7023, 1.0
        %v7025 = vmul.f32 %v7024, %v7009
        %vm7026 = vweird.f32 %v4557
        %v7027 = vadd.s32 %v7010, 3
        %v7028 = vand.u32 %v7027, 3
        %vm7029 = vcmp.lt.s32.totalorder %v7028, 2
        %vm7030 = vcmp.eq.s32.totalorder %v7028, 0
        %v7031 = vxor.u32 %v7025, 2147483648
        %v7032 = vsel %vm7030, %v7017, %v7031
        %vm7033 = vcmp.eq.s32.totalorder %v7028, 2
        %v7034 = vxor.u32 %v7017, 2147483648
        %v7035 = vsel %vm7033, %v7034, %v7025
        %v7036 = vsel %vm7029, %v7032, %v7035
        %v7037 = vsel %vm7026, nan, %v7036
        %v7038 = vld [vmem:[%s3] sm:$0xf]
        %v7039 = vld [vmem:[%s3 + $0x4] sm:$0xf]
        %v7040 = vld [vmem:[%s3 + $0x8] sm:$0xf]
        %v7041 = vld [vmem:[%s3 + $0xc] sm:$0xf]
        %v7042 = vld [vmem:[%s3 + $0x10] sm:$0xf]
        %v7043 = vld [vmem:[%s3 + $0x14] sm:$0xf]
        %v7044 = vld [vmem:[%s3 + $0x18] sm:$0xf]
        %v7045 = vld [vmem:[%s3 + $0x1c] sm:$0xf]
        %v7046 = vld [vmem:[%s3 + $0x20] sm:$0xf]
        %v7047 = vld [vmem:[%s3 + $0x24] sm:$0xf]
        %v7048 = vld [vmem:[%s3 + $0x28] sm:$0xf]
        %v7049 = vld [vmem:[%s3 + $0x2c] sm:$0xf]
        %v7050 = vld [vmem:[%s3 + $0x30] sm:$0xf]
        %v7051 = vld [vmem:[%s3 + $0x34] sm:$0xf]
        %v7052 = vld [vmem:[%s3 + $0x38] sm:$0xf]
        %v7053 = vld [vmem:[%s3 + $0x3c] sm:$0xf]
        %v7054 = vld [vmem:[%s4] sm:$0xff]
        %v7055 = vld [vmem:[%s4 + $0x8] sm:$0xff]
        %v7056 = vld [vmem:[%s4 + $0x10] sm:$0xff]
        %v7057 = vld [vmem:[%s4 + $0x18] sm:$0xff]
        %v7058 = vld [vmem:[%s4 + $0x20] sm:$0xff]
        %v7059 = vld [vmem:[%s4 + $0x28] sm:$0xff]
        %v7060 = vld [vmem:[%s4 + $0x30] sm:$0xff]
        %v7061 = vld [vmem:[%s4 + $0x38] sm:$0xff]
        %v7062 = vld [vmem:[%s4 + $0x40] sm:$0xff]
        %v7063 = vld [vmem:[%s4 + $0x48] sm:$0xff]
        %v7064 = vld [vmem:[%s4 + $0x50] sm:$0xff]
        %v7065 = vld [vmem:[%s4 + $0x58] sm:$0xff]
        %v7066 = vld [vmem:[%s4 + $0x60] sm:$0xff]
        %v7067 = vld [vmem:[%s4 + $0x68] sm:$0xff]
        %v7068 = vld [vmem:[%s4 + $0x70] sm:$0xff]
        %v7069 = vld [vmem:[%s4 + $0x78] sm:$0xff]
        %v7070 = vpack.c.bf16 %v4867, %v4712
        %v7071 = vpack.c.bf16 %v5177, %v5022
        %v7072 = vpack.c.bf16 %v5487, %v5332
        %v7073 = vpack.c.bf16 %v5797, %v5642
        %v7074 = vpack.c.bf16 %v6107, %v5952
        %v7075 = vpack.c.bf16 %v6417, %v6262
        %v7076 = vpack.c.bf16 %v6727, %v6572
        %v7077 = vpack.c.bf16 %v7037, %v6882
        %7079 = vset.pattern.permute.xlu0 0
        %7080 = vperm.xlu0 %7079, %v7054
        %v7081 = vpop.permute.xlu0 %7080
        %7084 = vset.pattern.permute.xlu0 0
        %7085 = vperm.xlu0 %7084, %v7055
        %v7086 = vpop.permute.xlu0 %7085
        %7089 = vset.pattern.permute.xlu0 0
        %7090 = vperm.xlu0 %7089, %v7056
        %v7091 = vpop.permute.xlu0 %7090
        %7094 = vset.pattern.permute.xlu0 0
        %7095 = vperm.xlu0 %7094, %v7057
        %v7096 = vpop.permute.xlu0 %7095
        %7099 = vset.pattern.permute.xlu0 0
        %7100 = vperm.xlu0 %7099, %v7058
        %v7101 = vpop.permute.xlu0 %7100
        %7104 = vset.pattern.permute.xlu0 0
        %7105 = vperm.xlu0 %7104, %v7059
        %v7106 = vpop.permute.xlu0 %7105
        %7109 = vset.pattern.permute.xlu0 0
        %7110 = vperm.xlu0 %7109, %v7060
        %v7111 = vpop.permute.xlu0 %7110
        %7114 = vset.pattern.permute.xlu0 0
        %7115 = vperm.xlu0 %7114, %v7061
        %v7116 = vpop.permute.xlu0 %7115
        %7119 = vset.pattern.permute.xlu0 0
        %7120 = vperm.xlu0 %7119, %v7062
        %v7121 = vpop.permute.xlu0 %7120
        %7124 = vset.pattern.permute.xlu0 0
        %7125 = vperm.xlu0 %7124, %v7063
        %v7126 = vpop.permute.xlu0 %7125
        %7129 = vset.pattern.permute.xlu0 0
        %7130 = vperm.xlu0 %7129, %v7064
        %v7131 = vpop.permute.xlu0 %7130
        %7134 = vset.pattern.permute.xlu0 0
        %7135 = vperm.xlu0 %7134, %v7065
        %v7136 = vpop.permute.xlu0 %7135
        %7139 = vset.pattern.permute.xlu0 0
        %7140 = vperm.xlu0 %7139, %v7066
        %v7141 = vpop.permute.xlu0 %7140
        %7144 = vset.pattern.permute.xlu0 0
        %7145 = vperm.xlu0 %7144, %v7067
        %v7146 = vpop.permute.xlu0 %7145
        %7149 = vset.pattern.permute.xlu0 0
        %7150 = vperm.xlu0 %7149, %v7068
        %v7151 = vpop.permute.xlu0 %7150
        %7154 = vset.pattern.permute.xlu0 0
        %7155 = vperm.xlu0 %7154, %v7069
        %v7156 = vpop.permute.xlu0 %7155
        %v7174 = vunpack.c.l.b16 %v7038
        %v7175 = vunpack.c.l.b16 %v7039
        %v7176 = vunpack.c.l.b16 %v7040
        %v7177 = vunpack.c.l.b16 %v7041
        %v7178 = vunpack.c.l.b16 %v7042
        %v7179 = vunpack.c.l.b16 %v7043
        %v7180 = vunpack.c.l.b16 %v7044
        %v7181 = vunpack.c.l.b16 %v7045
        %v7182 = vunpack.c.l.b16 %v7046
        %v7183 = vunpack.c.l.b16 %v7047
        %v7184 = vunpack.c.l.b16 %v7048
        %v7185 = vunpack.c.l.b16 %v7049
        %v7186 = vunpack.c.l.b16 %v7050
        %v7187 = vunpack.c.l.b16 %v7051
        %v7188 = vunpack.c.l.b16 %v7052
        %v7189 = vunpack.c.l.b16 %v7053
        %v7190 = vpack.c.b16 %v7175, %v7174
        %v7191 = vpack.c.b16 %v7177, %v7176
        %v7192 = vpack.c.b16 %v7179, %v7178
        %v7193 = vpack.c.b16 %v7181, %v7180
        %v7194 = vpack.c.b16 %v7183, %v7182
        %v7195 = vpack.c.b16 %v7185, %v7184
        %v7196 = vpack.c.b16 %v7187, %v7186
        %v7197 = vpack.c.b16 %v7189, %v7188
        %7206 = vmatpush.bf16.msra.mxu0 %v7077
        %7207 = vmatpush.bf16.msra.mxu0 %v7076
        %7208 = vmatpush.bf16.msra.mxu0 %v7075
        %7209 = vmatpush.bf16.msra.mxu0 %v7074
        %7210 = vmatpush.bf16.msra.mxu0 %v7073
        %7211 = vmatpush.bf16.msra.mxu0 %v7072
        %7212 = vmatpush.bf16.msra.mxu0 %v7071
        %7213 = vmatpush.bf16.msra.mxu0 %v7070
        %7214 = vmatmul.bf16.gmra.mxu0 %v7190
        %v7215 = vpop.f32.mrf.mxu0
        %v7216 = vadd.f32 %v7081, %v7215
        %v7217 = vpop.f32.mrf.mxu0
        %v7218 = vadd.f32 %v7086, %v7217
        %7219 = vmatmul.bf16.gmra.mxu0 %v7191
        %v7220 = vpop.f32.mrf.mxu0
        %v7221 = vadd.f32 %v7091, %v7220
        %v7222 = vpop.f32.mrf.mxu0
        %v7223 = vadd.f32 %v7096, %v7222
        %7224 = vmatmul.bf16.gmra.mxu0 %v7192
        %v7225 = vpop.f32.mrf.mxu0
        %v7226 = vadd.f32 %v7101, %v7225
        %v7227 = vpop.f32.mrf.mxu0
        %v7228 = vadd.f32 %v7106, %v7227
        %7229 = vmatmul.bf16.gmra.mxu0 %v7193
        %v7230 = vpop.f32.mrf.mxu0
        %v7231 = vadd.f32 %v7111, %v7230
        %v7232 = vpop.f32.mrf.mxu0
        %v7233 = vadd.f32 %v7116, %v7232
        %7234 = vmatmul.bf16.gmra.mxu0 %v7194
        %v7235 = vpop.f32.mrf.mxu0
        %v7236 = vadd.f32 %v7121, %v7235
        %v7237 = vpop.f32.mrf.mxu0
        %v7238 = vadd.f32 %v7126, %v7237
        %7239 = vmatmul.bf16.gmra.mxu0 %v7195
        %v7240 = vpop.f32.mrf.mxu0
        %v7241 = vadd.f32 %v7131, %v7240
        %v7242 = vpop.f32.mrf.mxu0
        %v7243 = vadd.f32 %v7136, %v7242
        %7244 = vmatmul.bf16.gmra.mxu0 %v7196
        %v7245 = vpop.f32.mrf.mxu0
        %v7246 = vadd.f32 %v7141, %v7245
        %v7247 = vpop.f32.mrf.mxu0
        %v7248 = vadd.f32 %v7146, %v7247
        %7249 = vmatmul.bf16.gmra.mxu0 %v7197
        %v7250 = vpop.f32.mrf.mxu0
        %v7251 = vadd.f32 %v7151, %v7250
        %v7252 = vpop.f32.mrf.mxu0
        %v7253 = vadd.f32 %v7156, %v7252
        %7254 = vdwg.mxu0
        %v7255 = vmax.f32 %v7216, 0.0
        %v7256 = vmax.f32 %v7218, 0.0
        %v7257 = vmax.f32 %v7221, 0.0
        %v7258 = vmax.f32 %v7223, 0.0
        %v7259 = vmax.f32 %v7226, 0.0
        %v7260 = vmax.f32 %v7228, 0.0
        %v7261 = vmax.f32 %v7231, 0.0
        %v7262 = vmax.f32 %v7233, 0.0
        %v7263 = vmax.f32 %v7236, 0.0
        %v7264 = vmax.f32 %v7238, 0.0
        %v7265 = vmax.f32 %v7241, 0.0
        %v7266 = vmax.f32 %v7243, 0.0
        %v7267 = vmax.f32 %v7246, 0.0
        %v7268 = vmax.f32 %v7248, 0.0
        %v7269 = vmax.f32 %v7251, 0.0
        %v7270 = vmax.f32 %v7253, 0.0
        %v7271 = vld [vmem:[%s5] sm:$0xf]
        %v7272 = vld [vmem:[%s5 + $0x4] sm:$0xf]
        %v7273 = vld [vmem:[%s5 + $0x8] sm:$0xf]
        %v7274 = vld [vmem:[%s5 + $0xc] sm:$0xf]
        %v7275 = vld [vmem:[%s5 + $0x10] sm:$0xf]
        %v7276 = vld [vmem:[%s5 + $0x14] sm:$0xf]
        %v7277 = vld [vmem:[%s5 + $0x18] sm:$0xf]
        %v7278 = vld [vmem:[%s5 + $0x1c] sm:$0xf]
        %v7279 = vld [vmem:[%s5 + $0x20] sm:$0xf]
        %v7280 = vld [vmem:[%s5 + $0x24] sm:$0xf]
        %v7281 = vld [vmem:[%s5 + $0x28] sm:$0xf]
        %v7282 = vld [vmem:[%s5 + $0x2c] sm:$0xf]
        %v7283 = vld [vmem:[%s5 + $0x30] sm:$0xf]
        %v7284 = vld [vmem:[%s5 + $0x34] sm:$0xf]
        %v7285 = vld [vmem:[%s5 + $0x38] sm:$0xf]
        %v7286 = vld [vmem:[%s5 + $0x3c] sm:$0xf]
        %v7287 = vld [vmem:[%s6] sm:$0xff]
        %v7288 = vld [vmem:[%s6 + $0x8] sm:$0xff]
        %v7289 = vld [vmem:[%s6 + $0x10] sm:$0xff]
        %v7290 = vld [vmem:[%s6 + $0x18] sm:$0xff]
        %v7291 = vld [vmem:[%s6 + $0x20] sm:$0xff]
        %v7292 = vld [vmem:[%s6 + $0x28] sm:$0xff]
        %v7293 = vld [vmem:[%s6 + $0x30] sm:$0xff]
        %v7294 = vld [vmem:[%s6 + $0x38] sm:$0xff]
        %v7295 = vld [vmem:[%s6 + $0x40] sm:$0xff]
        %v7296 = vld [vmem:[%s6 + $0x48] sm:$0xff]
        %v7297 = vld [vmem:[%s6 + $0x50] sm:$0xff]
        %v7298 = vld [vmem:[%s6 + $0x58] sm:$0xff]
        %v7299 = vld [vmem:[%s6 + $0x60] sm:$0xff]
        %v7300 = vld [vmem:[%s6 + $0x68] sm:$0xff]
        %v7301 = vld [vmem:[%s6 + $0x70] sm:$0xff]
        %v7302 = vld [vmem:[%s6 + $0x78] sm:$0xff]
        %v7303 = vpack.c.bf16 %v7256, %v7255
        %v7304 = vpack.c.bf16 %v7258, %v7257
        %v7305 = vpack.c.bf16 %v7260, %v7259
        %v7306 = vpack.c.bf16 %v7262, %v7261
        %v7307 = vpack.c.bf16 %v7264, %v7263
        %v7308 = vpack.c.bf16 %v7266, %v7265
        %v7309 = vpack.c.bf16 %v7268, %v7267
        %v7310 = vpack.c.bf16 %v7270, %v7269
        %7312 = vset.pattern.permute.xlu0 0
        %7313 = vperm.xlu0 %7312, %v7287
        %v7314 = vpop.permute.xlu0 %7313
        %7317 = vset.pattern.permute.xlu0 0
        %7318 = vperm.xlu0 %7317, %v7288
        %v7319 = vpop.permute.xlu0 %7318
        %7322 = vset.pattern.permute.xlu0 0
        %7323 = vperm.xlu0 %7322, %v7289
        %v7324 = vpop.permute.xlu0 %7323
        %7327 = vset.pattern.permute.xlu0 0
        %7328 = vperm.xlu0 %7327, %v7290
        %v7329 = vpop.permute.xlu0 %7328
        %7332 = vset.pattern.permute.xlu0 0
        %7333 = vperm.xlu0 %7332, %v7291
        %v7334 = vpop.permute.xlu0 %7333
        %7337 = vset.pattern.permute.xlu0 0
        %7338 = vperm.xlu0 %7337, %v7292
        %v7339 = vpop.permute.xlu0 %7338
        %7342 = vset.pattern.permute.xlu0 0
        %7343 = vperm.xlu0 %7342, %v7293
        %v7344 = vpop.permute.xlu0 %7343
        %7347 = vset.pattern.permute.xlu0 0
        %7348 = vperm.xlu0 %7347, %v7294
        %v7349 = vpop.permute.xlu0 %7348
        %7352 = vset.pattern.permute.xlu0 0
        %7353 = vperm.xlu0 %7352, %v7295
        %v7354 = vpop.permute.xlu0 %7353
        %7357 = vset.pattern.permute.xlu0 0
        %7358 = vperm.xlu0 %7357, %v7296
        %v7359 = vpop.permute.xlu0 %7358
        %7362 = vset.pattern.permute.xlu0 0
        %7363 = vperm.xlu0 %7362, %v7297
        %v7364 = vpop.permute.xlu0 %7363
        %7367 = vset.pattern.permute.xlu0 0
        %7368 = vperm.xlu0 %7367, %v7298
        %v7369 = vpop.permute.xlu0 %7368
        %7372 = vset.pattern.permute.xlu0 0
        %7373 = vperm.xlu0 %7372, %v7299
        %v7374 = vpop.permute.xlu0 %7373
        %7377 = vset.pattern.permute.xlu0 0
        %7378 = vperm.xlu0 %7377, %v7300
        %v7379 = vpop.permute.xlu0 %7378
        %7382 = vset.pattern.permute.xlu0 0
        %7383 = vperm.xlu0 %7382, %v7301
        %v7384 = vpop.permute.xlu0 %7383
        %7387 = vset.pattern.permute.xlu0 0
        %7388 = vperm.xlu0 %7387, %v7302
        %v7389 = vpop.permute.xlu0 %7388
        %v7407 = vunpack.c.l.b16 %v7271
        %v7408 = vunpack.c.l.b16 %v7272
        %v7409 = vunpack.c.l.b16 %v7273
        %v7410 = vunpack.c.l.b16 %v7274
        %v7411 = vunpack.c.l.b16 %v7275
        %v7412 = vunpack.c.l.b16 %v7276
        %v7413 = vunpack.c.l.b16 %v7277
        %v7414 = vunpack.c.l.b16 %v7278
        %v7415 = vunpack.c.l.b16 %v7279
        %v7416 = vunpack.c.l.b16 %v7280
        %v7417 = vunpack.c.l.b16 %v7281
        %v7418 = vunpack.c.l.b16 %v7282
        %v7419 = vunpack.c.l.b16 %v7283
        %v7420 = vunpack.c.l.b16 %v7284
        %v7421 = vunpack.c.l.b16 %v7285
        %v7422 = vunpack.c.l.b16 %v7286
        %v7423 = vpack.c.b16 %v7408, %v7407
        %v7424 = vpack.c.b16 %v7410, %v7409
        %v7425 = vpack.c.b16 %v7412, %v7411
        %v7426 = vpack.c.b16 %v7414, %v7413
        %v7427 = vpack.c.b16 %v7416, %v7415
        %v7428 = vpack.c.b16 %v7418, %v7417
        %v7429 = vpack.c.b16 %v7420, %v7419
        %v7430 = vpack.c.b16 %v7422, %v7421
        %7439 = vmatpush.bf16.msra.mxu0 %v7310
        %7440 = vmatpush.bf16.msra.mxu0 %v7309
        %7441 = vmatpush.bf16.msra.mxu0 %v7308
        %7442 = vmatpush.bf16.msra.mxu0 %v7307
        %7443 = vmatpush.bf16.msra.mxu0 %v7306
        %7444 = vmatpush.bf16.msra.mxu0 %v7305
        %7445 = vmatpush.bf16.msra.mxu0 %v7304
        %7446 = vmatpush.bf16.msra.mxu0 %v7303
        %7447 = vmatmul.bf16.gmra.mxu0 %v7423
        %v7448 = vpop.f32.mrf.mxu0
        %v7449 = vadd.f32 %v7314, %v7448
        %v7450 = vpop.f32.mrf.mxu0
        %v7451 = vadd.f32 %v7319, %v7450
        %7452 = vmatmul.bf16.gmra.mxu0 %v7424
        %v7453 = vpop.f32.mrf.mxu0
        %v7454 = vadd.f32 %v7324, %v7453
        %v7455 = vpop.f32.mrf.mxu0
        %v7456 = vadd.f32 %v7329, %v7455
        %7457 = vmatmul.bf16.gmra.mxu0 %v7425
        %v7458 = vpop.f32.mrf.mxu0
        %v7459 = vadd.f32 %v7334, %v7458
        %v7460 = vpop.f32.mrf.mxu0
        %v7461 = vadd.f32 %v7339, %v7460
        %7462 = vmatmul.bf16.gmra.mxu0 %v7426
        %v7463 = vpop.f32.mrf.mxu0
        %v7464 = vadd.f32 %v7344, %v7463
        %v7465 = vpop.f32.mrf.mxu0
        %v7466 = vadd.f32 %v7349, %v7465
        %7467 = vmatmul.bf16.gmra.mxu0 %v7427
        %v7468 = vpop.f32.mrf.mxu0
        %v7469 = vadd.f32 %v7354, %v7468
        %v7470 = vpop.f32.mrf.mxu0
        %v7471 = vadd.f32 %v7359, %v7470
        %7472 = vmatmul.bf16.gmra.mxu0 %v7428
        %v7473 = vpop.f32.mrf.mxu0
        %v7474 = vadd.f32 %v7364, %v7473
        %v7475 = vpop.f32.mrf.mxu0
        %v7476 = vadd.f32 %v7369, %v7475
        %7477 = vmatmul.bf16.gmra.mxu0 %v7429
        %v7478 = vpop.f32.mrf.mxu0
        %v7479 = vadd.f32 %v7374, %v7478
        %v7480 = vpop.f32.mrf.mxu0
        %v7481 = vadd.f32 %v7379, %v7480
        %7482 = vmatmul.bf16.gmra.mxu0 %v7430
        %v7483 = vpop.f32.mrf.mxu0
        %v7484 = vadd.f32 %v7384, %v7483
        %v7485 = vpop.f32.mrf.mxu0
        %v7486 = vadd.f32 %v7389, %v7485
        %7487 = vdwg.mxu0
        %v7488 = vmax.f32 %v7449, 0.0
        %v7489 = vmax.f32 %v7451, 0.0
        %v7490 = vmax.f32 %v7454, 0.0
        %v7491 = vmax.f32 %v7456, 0.0
        %v7492 = vmax.f32 %v7459, 0.0
        %v7493 = vmax.f32 %v7461, 0.0
        %v7494 = vmax.f32 %v7464, 0.0
        %v7495 = vmax.f32 %v7466, 0.0
        %v7496 = vmax.f32 %v7469, 0.0
        %v7497 = vmax.f32 %v7471, 0.0
        %v7498 = vmax.f32 %v7474, 0.0
        %v7499 = vmax.f32 %v7476, 0.0
        %v7500 = vmax.f32 %v7479, 0.0
        %v7501 = vmax.f32 %v7481, 0.0
        %v7502 = vmax.f32 %v7484, 0.0
        %v7503 = vmax.f32 %v7486, 0.0
        %v7504 = vld [vmem:[%s3700] sm:$0xf]
        %v7505 = vld [vmem:[%s3700 + $0x4] sm:$0xf]
        %v7506 = vld [vmem:[%s3700 + $0x8] sm:$0xf]
        %v7507 = vld [vmem:[%s3700 + $0xc] sm:$0xf]
        %v7508 = vld [vmem:[%s3700 + $0x10] sm:$0xf]
        %v7509 = vld [vmem:[%s3700 + $0x14] sm:$0xf]
        %v7510 = vld [vmem:[%s3700 + $0x18] sm:$0xf]
        %v7511 = vld [vmem:[%s3700 + $0x1c] sm:$0xf]
        %v7512 = vld [vmem:[%s3700 + $0x20] sm:$0xf]
        %v7513 = vld [vmem:[%s3700 + $0x24] sm:$0xf]
        %v7514 = vld [vmem:[%s3700 + $0x28] sm:$0xf]
        %v7515 = vld [vmem:[%s3700 + $0x2c] sm:$0xf]
        %v7516 = vld [vmem:[%s3700 + $0x30] sm:$0xf]
        %v7517 = vld [vmem:[%s3700 + $0x34] sm:$0xf]
        %v7518 = vld [vmem:[%s3700 + $0x38] sm:$0xf]
        %v7519 = vld [vmem:[%s3700 + $0x3c] sm:$0xf]
        %v7520 = vld [vmem:[%s3717] sm:$0xff]
        %v7521 = vld [vmem:[%s3717 + $0x8] sm:$0xff]
        %v7522 = vld [vmem:[%s3717 + $0x10] sm:$0xff]
        %v7523 = vld [vmem:[%s3717 + $0x18] sm:$0xff]
        %v7524 = vld [vmem:[%s3717 + $0x20] sm:$0xff]
        %v7525 = vld [vmem:[%s3717 + $0x28] sm:$0xff]
        %v7526 = vld [vmem:[%s3717 + $0x30] sm:$0xff]
        %v7527 = vld [vmem:[%s3717 + $0x38] sm:$0xff]
        %v7528 = vld [vmem:[%s3717 + $0x40] sm:$0xff]
        %v7529 = vld [vmem:[%s3717 + $0x48] sm:$0xff]
        %v7530 = vld [vmem:[%s3717 + $0x50] sm:$0xff]
        %v7531 = vld [vmem:[%s3717 + $0x58] sm:$0xff]
        %v7532 = vld [vmem:[%s3717 + $0x60] sm:$0xff]
        %v7533 = vld [vmem:[%s3717 + $0x68] sm:$0xff]
        %v7534 = vld [vmem:[%s3717 + $0x70] sm:$0xff]
        %v7535 = vld [vmem:[%s3717 + $0x78] sm:$0xff]
        %v7536 = vpack.c.bf16 %v7489, %v7488
        %v7537 = vpack.c.bf16 %v7491, %v7490
        %v7538 = vpack.c.bf16 %v7493, %v7492
        %v7539 = vpack.c.bf16 %v7495, %v7494
        %v7540 = vpack.c.bf16 %v7497, %v7496
        %v7541 = vpack.c.bf16 %v7499, %v7498
        %v7542 = vpack.c.bf16 %v7501, %v7500
        %v7543 = vpack.c.bf16 %v7503, %v7502
        %7545 = vset.pattern.permute.xlu0 0
        %7546 = vperm.xlu0 %7545, %v7520
        %v7547 = vpop.permute.xlu0 %7546
        %7550 = vset.pattern.permute.xlu0 0
        %7551 = vperm.xlu0 %7550, %v7521
        %v7552 = vpop.permute.xlu0 %7551
        %7555 = vset.pattern.permute.xlu0 0
        %7556 = vperm.xlu0 %7555, %v7522
        %v7557 = vpop.permute.xlu0 %7556
        %7560 = vset.pattern.permute.xlu0 0
        %7561 = vperm.xlu0 %7560, %v7523
        %v7562 = vpop.permute.xlu0 %7561
        %7565 = vset.pattern.permute.xlu0 0
        %7566 = vperm.xlu0 %7565, %v7524
        %v7567 = vpop.permute.xlu0 %7566
        %7570 = vset.pattern.permute.xlu0 0
        %7571 = vperm.xlu0 %7570, %v7525
        %v7572 = vpop.permute.xlu0 %7571
        %7575 = vset.pattern.permute.xlu0 0
        %7576 = vperm.xlu0 %7575, %v7526
        %v7577 = vpop.permute.xlu0 %7576
        %7580 = vset.pattern.permute.xlu0 0
        %7581 = vperm.xlu0 %7580, %v7527
        %v7582 = vpop.permute.xlu0 %7581
        %7585 = vset.pattern.permute.xlu0 0
        %7586 = vperm.xlu0 %7585, %v7528
        %v7587 = vpop.permute.xlu0 %7586
        %7590 = vset.pattern.permute.xlu0 0
        %7591 = vperm.xlu0 %7590, %v7529
        %v7592 = vpop.permute.xlu0 %7591
        %7595 = vset.pattern.permute.xlu0 0
        %7596 = vperm.xlu0 %7595, %v7530
        %v7597 = vpop.permute.xlu0 %7596
        %7600 = vset.pattern.permute.xlu0 0
        %7601 = vperm.xlu0 %7600, %v7531
        %v7602 = vpop.permute.xlu0 %7601
        %7605 = vset.pattern.permute.xlu0 0
        %7606 = vperm.xlu0 %7605, %v7532
        %v7607 = vpop.permute.xlu0 %7606
        %7610 = vset.pattern.permute.xlu0 0
        %7611 = vperm.xlu0 %7610, %v7533
        %v7612 = vpop.permute.xlu0 %7611
        %7615 = vset.pattern.permute.xlu0 0
        %7616 = vperm.xlu0 %7615, %v7534
        %v7617 = vpop.permute.xlu0 %7616
        %7620 = vset.pattern.permute.xlu0 0
        %7621 = vperm.xlu0 %7620, %v7535
        %v7622 = vpop.permute.xlu0 %7621
        %v7640 = vunpack.c.l.b16 %v7504
        %v7641 = vunpack.c.l.b16 %v7505
        %v7642 = vunpack.c.l.b16 %v7506
        %v7643 = vunpack.c.l.b16 %v7507
        %v7644 = vunpack.c.l.b16 %v7508
        %v7645 = vunpack.c.l.b16 %v7509
        %v7646 = vunpack.c.l.b16 %v7510
        %v7647 = vunpack.c.l.b16 %v7511
        %v7648 = vunpack.c.l.b16 %v7512
        %v7649 = vunpack.c.l.b16 %v7513
        %v7650 = vunpack.c.l.b16 %v7514
        %v7651 = vunpack.c.l.b16 %v7515
        %v7652 = vunpack.c.l.b16 %v7516
        %v7653 = vunpack.c.l.b16 %v7517
        %v7654 = vunpack.c.l.b16 %v7518
        %v7655 = vunpack.c.l.b16 %v7519
        %v7656 = vpack.c.b16 %v7641, %v7640
        %v7657 = vpack.c.b16 %v7643, %v7642
        %v7658 = vpack.c.b16 %v7645, %v7644
        %v7659 = vpack.c.b16 %v7647, %v7646
        %v7660 = vpack.c.b16 %v7649, %v7648
        %v7661 = vpack.c.b16 %v7651, %v7650
        %v7662 = vpack.c.b16 %v7653, %v7652
        %v7663 = vpack.c.b16 %v7655, %v7654
        %7672 = vmatpush.bf16.msra.mxu0 %v7543
        %7673 = vmatpush.bf16.msra.mxu0 %v7542
        %7674 = vmatpush.bf16.msra.mxu0 %v7541
        %7675 = vmatpush.bf16.msra.mxu0 %v7540
        %7676 = vmatpush.bf16.msra.mxu0 %v7539
        %7677 = vmatpush.bf16.msra.mxu0 %v7538
        %7678 = vmatpush.bf16.msra.mxu0 %v7537
        %7679 = vmatpush.bf16.msra.mxu0 %v7536
        %7680 = vmatmul.bf16.gmra.mxu0 %v7656
        %v7681 = vpop.f32.mrf.mxu0
        %v7682 = vadd.f32 %v7547, %v7681
        %v7683 = vpop.f32.mrf.mxu0
        %v7684 = vadd.f32 %v7552, %v7683
        %7685 = vmatmul.bf16.gmra.mxu0 %v7657
        %v7686 = vpop.f32.mrf.mxu0
        %v7687 = vadd.f32 %v7557, %v7686
        %v7688 = vpop.f32.mrf.mxu0
        %v7689 = vadd.f32 %v7562, %v7688
        %7690 = vmatmul.bf16.gmra.mxu0 %v7658
        %v7691 = vpop.f32.mrf.mxu0
        %v7692 = vadd.f32 %v7567, %v7691
        %v7693 = vpop.f32.mrf.mxu0
        %v7694 = vadd.f32 %v7572, %v7693
        %7695 = vmatmul.bf16.gmra.mxu0 %v7659
        %v7696 = vpop.f32.mrf.mxu0
        %v7697 = vadd.f32 %v7577, %v7696
        %v7698 = vpop.f32.mrf.mxu0
        %v7699 = vadd.f32 %v7582, %v7698
        %7700 = vmatmul.bf16.gmra.mxu0 %v7660
        %v7701 = vpop.f32.mrf.mxu0
        %v7702 = vadd.f32 %v7587, %v7701
        %v7703 = vpop.f32.mrf.mxu0
        %v7704 = vadd.f32 %v7592, %v7703
        %7705 = vmatmul.bf16.gmra.mxu0 %v7661
        %v7706 = vpop.f32.mrf.mxu0
        %v7707 = vadd.f32 %v7597, %v7706
        %v7708 = vpop.f32.mrf.mxu0
        %v7709 = vadd.f32 %v7602, %v7708
        %7710 = vmatmul.bf16.gmra.mxu0 %v7662
        %v7711 = vpop.f32.mrf.mxu0
        %v7712 = vadd.f32 %v7607, %v7711
        %v7713 = vpop.f32.mrf.mxu0
        %v7714 = vadd.f32 %v7612, %v7713
        %7715 = vmatmul.bf16.gmra.mxu0 %v7663
        %v7716 = vpop.f32.mrf.mxu0
        %v7717 = vadd.f32 %v7617, %v7716
        %v7718 = vpop.f32.mrf.mxu0
        %v7719 = vadd.f32 %v7622, %v7718
        %7720 = vdwg.mxu0
        %v7721 = vmax.f32 %v7682, 0.0
        %v7722 = vmax.f32 %v7684, 0.0
        %v7723 = vmax.f32 %v7687, 0.0
        %v7724 = vmax.f32 %v7689, 0.0
        %v7725 = vmax.f32 %v7692, 0.0
        %v7726 = vmax.f32 %v7694, 0.0
        %v7727 = vmax.f32 %v7697, 0.0
        %v7728 = vmax.f32 %v7699, 0.0
        %v7729 = vmax.f32 %v7702, 0.0
        %v7730 = vmax.f32 %v7704, 0.0
        %v7731 = vmax.f32 %v7707, 0.0
        %v7732 = vmax.f32 %v7709, 0.0
        %v7733 = vmax.f32 %v7712, 0.0
        %v7734 = vmax.f32 %v7714, 0.0
        %v7735 = vmax.f32 %v7717, 0.0
        %v7736 = vmax.f32 %v7719, 0.0
        %v7737 = vld [vmem:[%s3935] sm:$0xf]
        %v7738 = vld [vmem:[%s3935 + $0x4] sm:$0xf]
        %v7739 = vld [vmem:[%s3935 + $0x8] sm:$0xf]
        %v7740 = vld [vmem:[%s3935 + $0xc] sm:$0xf]
        %v7741 = vld [vmem:[%s3935 + $0x10] sm:$0xf]
        %v7742 = vld [vmem:[%s3935 + $0x14] sm:$0xf]
        %v7743 = vld [vmem:[%s3935 + $0x18] sm:$0xf]
        %v7744 = vld [vmem:[%s3935 + $0x1c] sm:$0xf]
        %v7745 = vld [vmem:[%s3935 + $0x20] sm:$0xf]
        %v7746 = vld [vmem:[%s3935 + $0x24] sm:$0xf]
        %v7747 = vld [vmem:[%s3935 + $0x28] sm:$0xf]
        %v7748 = vld [vmem:[%s3935 + $0x2c] sm:$0xf]
        %v7749 = vld [vmem:[%s3935 + $0x30] sm:$0xf]
        %v7750 = vld [vmem:[%s3935 + $0x34] sm:$0xf]
        %v7751 = vld [vmem:[%s3935 + $0x38] sm:$0xf]
        %v7752 = vld [vmem:[%s3935 + $0x3c] sm:$0xf]
        %v7753 = vld [vmem:[%s3952] sm:$0xff]
        %v7754 = vld [vmem:[%s3952 + $0x8] sm:$0xff]
        %v7755 = vld [vmem:[%s3952 + $0x10] sm:$0xff]
        %v7756 = vld [vmem:[%s3952 + $0x18] sm:$0xff]
        %v7757 = vld [vmem:[%s3952 + $0x20] sm:$0xff]
        %v7758 = vld [vmem:[%s3952 + $0x28] sm:$0xff]
        %v7759 = vld [vmem:[%s3952 + $0x30] sm:$0xff]
        %v7760 = vld [vmem:[%s3952 + $0x38] sm:$0xff]
        %v7761 = vld [vmem:[%s3952 + $0x40] sm:$0xff]
        %v7762 = vld [vmem:[%s3952 + $0x48] sm:$0xff]
        %v7763 = vld [vmem:[%s3952 + $0x50] sm:$0xff]
        %v7764 = vld [vmem:[%s3952 + $0x58] sm:$0xff]
        %v7765 = vld [vmem:[%s3952 + $0x60] sm:$0xff]
        %v7766 = vld [vmem:[%s3952 + $0x68] sm:$0xff]
        %v7767 = vld [vmem:[%s3952 + $0x70] sm:$0xff]
        %v7768 = vld [vmem:[%s3952 + $0x78] sm:$0xff]
        %v7769 = vpack.c.bf16 %v7722, %v7721
        %v7770 = vpack.c.bf16 %v7724, %v7723
        %v7771 = vpack.c.bf16 %v7726, %v7725
        %v7772 = vpack.c.bf16 %v7728, %v7727
        %v7773 = vpack.c.bf16 %v7730, %v7729
        %v7774 = vpack.c.bf16 %v7732, %v7731
        %v7775 = vpack.c.bf16 %v7734, %v7733
        %v7776 = vpack.c.bf16 %v7736, %v7735
        %7778 = vset.pattern.permute.xlu0 0
        %7779 = vperm.xlu0 %7778, %v7753
        %v7780 = vpop.permute.xlu0 %7779
        %7783 = vset.pattern.permute.xlu0 0
        %7784 = vperm.xlu0 %7783, %v7754
        %v7785 = vpop.permute.xlu0 %7784
        %7788 = vset.pattern.permute.xlu0 0
        %7789 = vperm.xlu0 %7788, %v7755
        %v7790 = vpop.permute.xlu0 %7789
        %7793 = vset.pattern.permute.xlu0 0
        %7794 = vperm.xlu0 %7793, %v7756
        %v7795 = vpop.permute.xlu0 %7794
        %7798 = vset.pattern.permute.xlu0 0
        %7799 = vperm.xlu0 %7798, %v7757
        %v7800 = vpop.permute.xlu0 %7799
        %7803 = vset.pattern.permute.xlu0 0
        %7804 = vperm.xlu0 %7803, %v7758
        %v7805 = vpop.permute.xlu0 %7804
        %7808 = vset.pattern.permute.xlu0 0
        %7809 = vperm.xlu0 %7808, %v7759
        %v7810 = vpop.permute.xlu0 %7809
        %7813 = vset.pattern.permute.xlu0 0
        %7814 = vperm.xlu0 %7813, %v7760
        %v7815 = vpop.permute.xlu0 %7814
        %7818 = vset.pattern.permute.xlu0 0
        %7819 = vperm.xlu0 %7818, %v7761
        %v7820 = vpop.permute.xlu0 %7819
        %7823 = vset.pattern.permute.xlu0 0
        %7824 = vperm.xlu0 %7823, %v7762
        %v7825 = vpop.permute.xlu0 %7824
        %7828 = vset.pattern.permute.xlu0 0
        %7829 = vperm.xlu0 %7828, %v7763
        %v7830 = vpop.permute.xlu0 %7829
        %7833 = vset.pattern.permute.xlu0 0
        %7834 = vperm.xlu0 %7833, %v7764
        %v7835 = vpop.permute.xlu0 %7834
        %7838 = vset.pattern.permute.xlu0 0
        %7839 = vperm.xlu0 %7838, %v7765
        %v7840 = vpop.permute.xlu0 %7839
        %7843 = vset.pattern.permute.xlu0 0
        %7844 = vperm.xlu0 %7843, %v7766
        %v7845 = vpop.permute.xlu0 %7844
        %7848 = vset.pattern.permute.xlu0 0
        %7849 = vperm.xlu0 %7848, %v7767
        %v7850 = vpop.permute.xlu0 %7849
        %7853 = vset.pattern.permute.xlu0 0
        %7854 = vperm.xlu0 %7853, %v7768
        %v7855 = vpop.permute.xlu0 %7854
        %v7873 = vunpack.c.l.b16 %v7737
        %v7874 = vunpack.c.l.b16 %v7738
        %v7875 = vunpack.c.l.b16 %v7739
        %v7876 = vunpack.c.l.b16 %v7740
        %v7877 = vunpack.c.l.b16 %v7741
        %v7878 = vunpack.c.l.b16 %v7742
        %v7879 = vunpack.c.l.b16 %v7743
        %v7880 = vunpack.c.l.b16 %v7744
        %v7881 = vunpack.c.l.b16 %v7745
        %v7882 = vunpack.c.l.b16 %v7746
        %v7883 = vunpack.c.l.b16 %v7747
        %v7884 = vunpack.c.l.b16 %v7748
        %v7885 = vunpack.c.l.b16 %v7749
        %v7886 = vunpack.c.l.b16 %v7750
        %v7887 = vunpack.c.l.b16 %v7751
        %v7888 = vunpack.c.l.b16 %v7752
        %v7889 = vpack.c.b16 %v7874, %v7873
        %v7890 = vpack.c.b16 %v7876, %v7875
        %v7891 = vpack.c.b16 %v7878, %v7877
        %v7892 = vpack.c.b16 %v7880, %v7879
        %v7893 = vpack.c.b16 %v7882, %v7881
        %v7894 = vpack.c.b16 %v7884, %v7883
        %v7895 = vpack.c.b16 %v7886, %v7885
        %v7896 = vpack.c.b16 %v7888, %v7887
        %7905 = vmatpush.bf16.msra.mxu0 %v7776
        %7906 = vmatpush.bf16.msra.mxu0 %v7775
        %7907 = vmatpush.bf16.msra.mxu0 %v7774
        %7908 = vmatpush.bf16.msra.mxu0 %v7773
        %7909 = vmatpush.bf16.msra.mxu0 %v7772
        %7910 = vmatpush.bf16.msra.mxu0 %v7771
        %7911 = vmatpush.bf16.msra.mxu0 %v7770
        %7912 = vmatpush.bf16.msra.mxu0 %v7769
        %7913 = vmatmul.bf16.gmra.mxu0 %v7889
        %v7914 = vpop.f32.mrf.mxu0
        %v7915 = vadd.f32 %v7780, %v7914
        %v7916 = vpop.f32.mrf.mxu0
        %v7917 = vadd.f32 %v7785, %v7916
        %7918 = vmatmul.bf16.gmra.mxu0 %v7890
        %v7919 = vpop.f32.mrf.mxu0
        %v7920 = vadd.f32 %v7790, %v7919
        %v7921 = vpop.f32.mrf.mxu0
        %v7922 = vadd.f32 %v7795, %v7921
        %7923 = vmatmul.bf16.gmra.mxu0 %v7891
        %v7924 = vpop.f32.mrf.mxu0
        %v7925 = vadd.f32 %v7800, %v7924
        %v7926 = vpop.f32.mrf.mxu0
        %v7927 = vadd.f32 %v7805, %v7926
        %7928 = vmatmul.bf16.gmra.mxu0 %v7892
        %v7929 = vpop.f32.mrf.mxu0
        %v7930 = vadd.f32 %v7810, %v7929
        %v7931 = vpop.f32.mrf.mxu0
        %v7932 = vadd.f32 %v7815, %v7931
        %7933 = vmatmul.bf16.gmra.mxu0 %v7893
        %v7934 = vpop.f32.mrf.mxu0
        %v7935 = vadd.f32 %v7820, %v7934
        %v7936 = vpop.f32.mrf.mxu0
        %v7937 = vadd.f32 %v7825, %v7936
        %7938 = vmatmul.bf16.gmra.mxu0 %v7894
        %v7939 = vpop.f32.mrf.mxu0
        %v7940 = vadd.f32 %v7830, %v7939
        %v7941 = vpop.f32.mrf.mxu0
        %v7942 = vadd.f32 %v7835, %v7941
        %7943 = vmatmul.bf16.gmra.mxu0 %v7895
        %v7944 = vpop.f32.mrf.mxu0
        %v7945 = vadd.f32 %v7840, %v7944
        %v7946 = vpop.f32.mrf.mxu0
        %v7947 = vadd.f32 %v7845, %v7946
        %7948 = vmatmul.bf16.gmra.mxu0 %v7896
        %v7949 = vpop.f32.mrf.mxu0
        %v7950 = vadd.f32 %v7850, %v7949
        %v7951 = vpop.f32.mrf.mxu0
        %v7952 = vadd.f32 %v7855, %v7951
        %7953 = vdwg.mxu0
        %v7954 = vmax.f32 %v7915, 0.0
        %v7955 = vmax.f32 %v7917, 0.0
        %v7956 = vmax.f32 %v7920, 0.0
        %v7957 = vmax.f32 %v7922, 0.0
        %v7958 = vmax.f32 %v7925, 0.0
        %v7959 = vmax.f32 %v7927, 0.0
        %v7960 = vmax.f32 %v7930, 0.0
        %v7961 = vmax.f32 %v7932, 0.0
        %v7962 = vmax.f32 %v7935, 0.0
        %v7963 = vmax.f32 %v7937, 0.0
        %v7964 = vmax.f32 %v7940, 0.0
        %v7965 = vmax.f32 %v7942, 0.0
        %v7966 = vmax.f32 %v7945, 0.0
        %v7967 = vmax.f32 %v7947, 0.0
        %v7968 = vmax.f32 %v7950, 0.0
        %v7969 = vmax.f32 %v7952, 0.0
        %v7970 = vld [vmem:[%s4170] sm:$0xf]
        %v7971 = vld [vmem:[%s4170 + $0x4] sm:$0xf]
        %v7972 = vld [vmem:[%s4170 + $0x8] sm:$0xf]
        %v7973 = vld [vmem:[%s4170 + $0xc] sm:$0xf]
        %v7974 = vld [vmem:[%s4170 + $0x10] sm:$0xf]
        %v7975 = vld [vmem:[%s4170 + $0x14] sm:$0xf]
        %v7976 = vld [vmem:[%s4170 + $0x18] sm:$0xf]
        %v7977 = vld [vmem:[%s4170 + $0x1c] sm:$0xf]
        %v7978 = vld [vmem:[%s4170 + $0x20] sm:$0xf]
        %v7979 = vld [vmem:[%s4170 + $0x24] sm:$0xf]
        %v7980 = vld [vmem:[%s4170 + $0x28] sm:$0xf]
        %v7981 = vld [vmem:[%s4170 + $0x2c] sm:$0xf]
        %v7982 = vld [vmem:[%s4170 + $0x30] sm:$0xf]
        %v7983 = vld [vmem:[%s4170 + $0x34] sm:$0xf]
        %v7984 = vld [vmem:[%s4170 + $0x38] sm:$0xf]
        %v7985 = vld [vmem:[%s4170 + $0x3c] sm:$0xf]
        %v7986 = vld [vmem:[%s4187] sm:$0xff]
        %v7987 = vld [vmem:[%s4187 + $0x8] sm:$0xff]
        %v7988 = vld [vmem:[%s4187 + $0x10] sm:$0xff]
        %v7989 = vld [vmem:[%s4187 + $0x18] sm:$0xff]
        %v7990 = vld [vmem:[%s4187 + $0x20] sm:$0xff]
        %v7991 = vld [vmem:[%s4187 + $0x28] sm:$0xff]
        %v7992 = vld [vmem:[%s4187 + $0x30] sm:$0xff]
        %v7993 = vld [vmem:[%s4187 + $0x38] sm:$0xff]
        %v7994 = vld [vmem:[%s4187 + $0x40] sm:$0xff]
        %v7995 = vld [vmem:[%s4187 + $0x48] sm:$0xff]
        %v7996 = vld [vmem:[%s4187 + $0x50] sm:$0xff]
        %v7997 = vld [vmem:[%s4187 + $0x58] sm:$0xff]
        %v7998 = vld [vmem:[%s4187 + $0x60] sm:$0xff]
        %v7999 = vld [vmem:[%s4187 + $0x68] sm:$0xff]
        %v8000 = vld [vmem:[%s4187 + $0x70] sm:$0xff]
        %v8001 = vld [vmem:[%s4187 + $0x78] sm:$0xff]
        %v8002 = vpack.c.bf16 %v7955, %v7954
        %v8003 = vpack.c.bf16 %v7957, %v7956
        %v8004 = vpack.c.bf16 %v7959, %v7958
        %v8005 = vpack.c.bf16 %v7961, %v7960
        %v8006 = vpack.c.bf16 %v7963, %v7962
        %v8007 = vpack.c.bf16 %v7965, %v7964
        %v8008 = vpack.c.bf16 %v7967, %v7966
        %v8009 = vpack.c.bf16 %v7969, %v7968
        %8011 = vset.pattern.permute.xlu0 0
        %8012 = vperm.xlu0 %8011, %v7986
        %v8013 = vpop.permute.xlu0 %8012
        %8016 = vset.pattern.permute.xlu0 0
        %8017 = vperm.xlu0 %8016, %v7987
        %v8018 = vpop.permute.xlu0 %8017
        %8021 = vset.pattern.permute.xlu0 0
        %8022 = vperm.xlu0 %8021, %v7988
        %v8023 = vpop.permute.xlu0 %8022
        %8026 = vset.pattern.permute.xlu0 0
        %8027 = vperm.xlu0 %8026, %v7989
        %v8028 = vpop.permute.xlu0 %8027
        %8031 = vset.pattern.permute.xlu0 0
        %8032 = vperm.xlu0 %8031, %v7990
        %v8033 = vpop.permute.xlu0 %8032
        %8036 = vset.pattern.permute.xlu0 0
        %8037 = vperm.xlu0 %8036, %v7991
        %v8038 = vpop.permute.xlu0 %8037
        %8041 = vset.pattern.permute.xlu0 0
        %8042 = vperm.xlu0 %8041, %v7992
        %v8043 = vpop.permute.xlu0 %8042
        %8046 = vset.pattern.permute.xlu0 0
        %8047 = vperm.xlu0 %8046, %v7993
        %v8048 = vpop.permute.xlu0 %8047
        %8051 = vset.pattern.permute.xlu0 0
        %8052 = vperm.xlu0 %8051, %v7994
        %v8053 = vpop.permute.xlu0 %8052
        %8056 = vset.pattern.permute.xlu0 0
        %8057 = vperm.xlu0 %8056, %v7995
        %v8058 = vpop.permute.xlu0 %8057
        %8061 = vset.pattern.permute.xlu0 0
        %8062 = vperm.xlu0 %8061, %v7996
        %v8063 = vpop.permute.xlu0 %8062
        %8066 = vset.pattern.permute.xlu0 0
        %8067 = vperm.xlu0 %8066, %v7997
        %v8068 = vpop.permute.xlu0 %8067
        %8071 = vset.pattern.permute.xlu0 0
        %8072 = vperm.xlu0 %8071, %v7998
        %v8073 = vpop.permute.xlu0 %8072
        %8076 = vset.pattern.permute.xlu0 0
        %8077 = vperm.xlu0 %8076, %v7999
        %v8078 = vpop.permute.xlu0 %8077
        %8081 = vset.pattern.permute.xlu0 0
        %8082 = vperm.xlu0 %8081, %v8000
        %v8083 = vpop.permute.xlu0 %8082
        %8086 = vset.pattern.permute.xlu0 0
        %8087 = vperm.xlu0 %8086, %v8001
        %v8088 = vpop.permute.xlu0 %8087
        %v8106 = vunpack.c.l.b16 %v7970
        %v8107 = vunpack.c.l.b16 %v7971
        %v8108 = vunpack.c.l.b16 %v7972
        %v8109 = vunpack.c.l.b16 %v7973
        %v8110 = vunpack.c.l.b16 %v7974
        %v8111 = vunpack.c.l.b16 %v7975
        %v8112 = vunpack.c.l.b16 %v7976
        %v8113 = vunpack.c.l.b16 %v7977
        %v8114 = vunpack.c.l.b16 %v7978
        %v8115 = vunpack.c.l.b16 %v7979
        %v8116 = vunpack.c.l.b16 %v7980
        %v8117 = vunpack.c.l.b16 %v7981
        %v8118 = vunpack.c.l.b16 %v7982
        %v8119 = vunpack.c.l.b16 %v7983
        %v8120 = vunpack.c.l.b16 %v7984
        %v8121 = vunpack.c.l.b16 %v7985
        %v8122 = vpack.c.b16 %v8107, %v8106
        %v8123 = vpack.c.b16 %v8109, %v8108
        %v8124 = vpack.c.b16 %v8111, %v8110
        %v8125 = vpack.c.b16 %v8113, %v8112
        %v8126 = vpack.c.b16 %v8115, %v8114
        %v8127 = vpack.c.b16 %v8117, %v8116
        %v8128 = vpack.c.b16 %v8119, %v8118
        %v8129 = vpack.c.b16 %v8121, %v8120
        %8138 = vmatpush.bf16.msra.mxu0 %v8009
        %8139 = vmatpush.bf16.msra.mxu0 %v8008
        %8140 = vmatpush.bf16.msra.mxu0 %v8007
        %8141 = vmatpush.bf16.msra.mxu0 %v8006
        %8142 = vmatpush.bf16.msra.mxu0 %v8005
        %8143 = vmatpush.bf16.msra.mxu0 %v8004
        %8144 = vmatpush.bf16.msra.mxu0 %v8003
        %8145 = vmatpush.bf16.msra.mxu0 %v8002
        %8146 = vmatmul.bf16.gmra.mxu0 %v8122
        %v8147 = vpop.f32.mrf.mxu0
        %v8148 = vadd.f32 %v8013, %v8147
        %v8149 = vpop.f32.mrf.mxu0
        %v8150 = vadd.f32 %v8018, %v8149
        %8151 = vmatmul.bf16.gmra.mxu0 %v8123
        %v8152 = vpop.f32.mrf.mxu0
        %v8153 = vadd.f32 %v8023, %v8152
        %v8154 = vpop.f32.mrf.mxu0
        %v8155 = vadd.f32 %v8028, %v8154
        %8156 = vmatmul.bf16.gmra.mxu0 %v8124
        %v8157 = vpop.f32.mrf.mxu0
        %v8158 = vadd.f32 %v8033, %v8157
        %v8159 = vpop.f32.mrf.mxu0
        %v8160 = vadd.f32 %v8038, %v8159
        %8161 = vmatmul.bf16.gmra.mxu0 %v8125
        %v8162 = vpop.f32.mrf.mxu0
        %v8163 = vadd.f32 %v8043, %v8162
        %v8164 = vpop.f32.mrf.mxu0
        %v8165 = vadd.f32 %v8048, %v8164
        %8166 = vmatmul.bf16.gmra.mxu0 %v8126
        %v8167 = vpop.f32.mrf.mxu0
        %v8168 = vadd.f32 %v8053, %v8167
        %v8169 = vpop.f32.mrf.mxu0
        %v8170 = vadd.f32 %v8058, %v8169
        %8171 = vmatmul.bf16.gmra.mxu0 %v8127
        %v8172 = vpop.f32.mrf.mxu0
        %v8173 = vadd.f32 %v8063, %v8172
        %v8174 = vpop.f32.mrf.mxu0
        %v8175 = vadd.f32 %v8068, %v8174
        %8176 = vmatmul.bf16.gmra.mxu0 %v8128
        %v8177 = vpop.f32.mrf.mxu0
        %v8178 = vadd.f32 %v8073, %v8177
        %v8179 = vpop.f32.mrf.mxu0
        %v8180 = vadd.f32 %v8078, %v8179
        %8181 = vmatmul.bf16.gmra.mxu0 %v8129
        %v8182 = vpop.f32.mrf.mxu0
        %v8183 = vadd.f32 %v8083, %v8182
        %v8184 = vpop.f32.mrf.mxu0
        %v8185 = vadd.f32 %v8088, %v8184
        %8186 = vdwg.mxu0
        %v8187 = vmax.f32 %v8148, 0.0
        %v8188 = vmax.f32 %v8150, 0.0
        %v8189 = vmax.f32 %v8153, 0.0
        %v8190 = vmax.f32 %v8155, 0.0
        %v8191 = vmax.f32 %v8158, 0.0
        %v8192 = vmax.f32 %v8160, 0.0
        %v8193 = vmax.f32 %v8163, 0.0
        %v8194 = vmax.f32 %v8165, 0.0
        %v8195 = vmax.f32 %v8168, 0.0
        %v8196 = vmax.f32 %v8170, 0.0
        %v8197 = vmax.f32 %v8173, 0.0
        %v8198 = vmax.f32 %v8175, 0.0
        %v8199 = vmax.f32 %v8178, 0.0
        %v8200 = vmax.f32 %v8180, 0.0
        %v8201 = vmax.f32 %v8183, 0.0
        %v8202 = vmax.f32 %v8185, 0.0
        %v8203 = vld [vmem:[%s7] sm:$0xf]
        %v8204 = vpack.c.bf16 %v8188, %v8187
        %v8205 = vpack.c.bf16 %v8190, %v8189
        %v8206 = vpack.c.bf16 %v8192, %v8191
        %v8207 = vpack.c.bf16 %v8194, %v8193
        %v8208 = vpack.c.bf16 %v8196, %v8195
        %v8209 = vpack.c.bf16 %v8198, %v8197
        %v8210 = vpack.c.bf16 %v8200, %v8199
        %v8211 = vpack.c.bf16 %v8202, %v8201
        %v8212 = vld [vmem:[%s8] sm:$0xff]
        %8214 = vset.pattern.permute.xlu0 0
        %8215 = vperm.xlu0 %8214, %v8212
        %v8216 = vpop.permute.xlu0 %8215
        %8218 = vmatpush.bf16.msra.mxu0 %v8211
        %8219 = vmatpush.bf16.msra.mxu0 %v8210
        %8220 = vmatpush.bf16.msra.mxu0 %v8209
        %8221 = vmatpush.bf16.msra.mxu0 %v8208
        %8222 = vmatpush.bf16.msra.mxu0 %v8207
        %8223 = vmatpush.bf16.msra.mxu0 %v8206
        %8224 = vmatpush.bf16.msra.mxu0 %v8205
        %8225 = vmatpush.bf16.msra.mxu0 %v8204
        %8226 = vmatmul.bf16.gmra.mxu0 %v8203
        %v8227 = vpop.f32.mrf.mxu0
        %v8228 = vadd.f32 %v8216, %v8227
        %v8229 = vpop.f32.mrf.mxu0
        %8230 = vdwg.mxu0
        %v8231 = vxor.u32 %v8228, 2147483648
        %v8232 = vmul.f32 %v8231, 1.442695
        %v8233 = vpow.pop %v8232
        %v8234 = vadd.f32 %v8233, 1.0
        %v8235 = vrcp.pop %v8234
        %v8236 = vmul.f32 %v8234, %v8235
        %v8237 = vsub.f32 1.0, %v8236
        %v8238 = vmul.f32 %v8235, %v8237
        %v8239 = vadd.f32 %v8235, %v8238
        %vm8240 = vweird.f32 %v8234
        %vm8241 = vweird.f32 %v8235
        %vm8242 = vmor %vm8240, %vm8241
        %v8243 = vsel %vm8242, %v8235, %v8239
        %v8244 = vand.u32 2147483647, %v8234
        %vm8245 = vcmp.eq.f32.partialorder %v8244, 8.507059e+37
        %v8246 = vand.u32 %v8234, 2147483648
        %v8247 = vor.u32 1.1754944e-38, %v8246
        %v8248 = vsel %vm8245, %v8247, %v8243
        %v8249 = vmul.f32 1.0, %v8248
        %v8250 = vmax.f32 %v8228, 0.0
        %v8251 = vsel %vm4435, %v8249, %v8250
        %8252 = vst [vmem:[%s326 + $0x8] sm:$0xff] %v8251
        %s8253 = sand.u32 %s225, 1
        %s8254 = scalar_lea.sflag [#allocation3], %s8253
        %s8255 = sand.u32 %s225, 1
        %s8256 = smul.addr %s8255, 16
        %s8257 = scalar_lea.vmem [#allocation2], %s8256
        // Predicated region
        $region57: #{tpu_custom_call.1} parent=55 // pred_check
          %p8258 = pneg %p235
        $region58: #{tpu_custom_call.1} parent=55 // pred_check_branch
          %8260 = sbr.rel (%p8258) target = $region60
        $region59: #{tpu_custom_call.1} parent=55 // pred_region
          %s8261 = smul.u32 2, %s23
          %8263 = vsyncadd %s8254, 0
          %s8264 = smul.addr %s8261, 8
          %s8265 = scalar_lea.hbm %s9, %s8264
          %s8267 = sshll.u32 %s8257, 4
          %s8268 = int_to_ptr.vmem [resolvable:$true] %s8267
          %s8269 = sshll.u32 %s8265, 4
          %s8270 = int_to_ptr.hbm [resolvable:$true] %s8269
          %8272 = dma.vmem_to_hbm [thread:$0]  %s8268, 256, %s8270, %s8254
        $region60: #{tpu_custom_call.1} parent=55 // pred_fallthru
          _
      $region56: #{tpu_custom_call.1} parent=5 // pred_fallthru
        _
      %p8273 = scmp.le.s32.totalorder 2, %s18
      // Predicated region
      $region61: #{tpu_custom_call.1} parent=5 // pred_check
        %p8274 = pneg %p8273
      $region62: #{tpu_custom_call.1} parent=5 // pred_check_branch
        %8276 = sbr.rel (%p8274) target = $region64
      $region63: #{tpu_custom_call.1} parent=5 // pred_region
        %s8277 = ssub.s32 %s18, 2
        // Predicated region
        $region65: #{tpu_custom_call.1} parent=63 // pred_check
          %p8278 = pneg %p241
        $region66: #{tpu_custom_call.1} parent=63 // pred_check_branch
          %8280 = sbr.rel (%p8278) target = $region68
        $region67: #{tpu_custom_call.1} parent=63 // pred_region
          %s8281 = sand.u32 %s226, 1
          %s8282 = scalar_lea.sflag [#allocation3], %s8281
          %s8283 = sand.u32 %s226, 1
          %s8284 = smul.addr %s8283, 16
          %s8285 = scalar_lea.vmem [#allocation2], %s8284
          %8287 = dma.done %s8282, 256
        $region68: #{tpu_custom_call.1} parent=63 // pred_fallthru
          _
      $region64: #{tpu_custom_call.1} parent=5 // pred_fallthru
        _
    $region6: #{tpu_custom_call.1} parent=1 // loop_footer
      %s22 = sadd.s32 1, %s18
    $region7: #{tpu_custom_call.1} parent=1 // loop_footer_branch
      %17 = sbr.rel target = $region3
    $region8: #{tpu_custom_call.1} parent=1 // loop_exit
      _
    %8288 = vsyncpa [#allocation3], 1
    %s8289 = scalar_lea.sflag [#allocation3], 1
    %8290 = vsyncpa %s8289, 1

</llo_original>
